<compile_context>
chip_gen: v7x
topology: tpu7x:2x2x1
jax: 0.10.0
libtpu: 0.0.40
codegen_flags: <defaults>
</compile_context>

<pallas_src>
import functools

import numpy as np
import jax
import jax.numpy as jnp
from jax.experimental import pallas as pl
from jax.experimental.pallas import tpu as pltpu

HIDDEN = 64  # hardcoded in the PyTorch module


def _round_up(x, m):
    return (x + m - 1) // m * m


def _fused_cnn_kernel(x_ref, mask_ref, w1_ref, b1_ref, w2_ref, b2_ref,
                      w3_ref, b3_ref, o_ref, *, Wp, Mp, cin, hidden, cout_p):
    """One batch element: conv1+relu -> conv2+relu -> conv3+relu, all in VMEM.

    x_ref   : (1, Mp, cin)  f32   input in flat padded coords (zero halo/tail)
    mask_ref: (Mp, 1)       f32   1.0 on interior padded positions, else 0.0
    w1_ref  : (9, cin, hidden)    f32
    w2_ref  : (9, hidden, hidden) bf16
    w3_ref  : (9, hidden, cout_p) bf16  (output channels zero-padded to 128)
    b*_ref  : (1, C)        f32
    o_ref   : (1, Mp, cout_p) f32  rows are output coords k = y*(W+2) + x
    """
    offs = [dy * Wp + dx for dy in range(3) for dx in range(3)]
    pad_shift = Wp + 1                      # output coords -> padded coords
    mask = mask_ref[...]                    # (Mp, 1)

    def shifted(a, off):
        # a[k + off] realized as a circular sublane roll (XLU); wrap-around
        # garbage never lands on valid output rows (k + off < Hp*Wp <= Mp).
        return a if off == 0 else pltpu.roll(a, shift=Mp - off, axis=0)

    # ---------------- conv1 + ReLU ----------------
    x0 = x_ref[0]                           # (Mp, cin)
    acc1 = jnp.zeros((Mp, hidden), jnp.float32)
    if cin == 1:
        # Cin == 1: a K=1 matmul would waste the MXU -> 9 VPU broadcast MACs.
        # Broadcast the single channel across the 64 lanes once so every tap
        # shift is an ordinary 64-lane sublane roll.
        x0b = jnp.broadcast_to(x0, (Mp, hidden))
        for t, off in enumerate(offs):
            acc1 = acc1 + shifted(x0b, off) * w1_ref[t]        # (1,hidden) bcast
    else:
        for t, off in enumerate(offs):
            s = shifted(x0, off).astype(jnp.bfloat16)
            acc1 = acc1 + jnp.dot(s, w1_ref[t].astype(jnp.bfloat16),
                                  preferred_element_type=jnp.float32)
    a1 = jnp.maximum(acc1 + b1_ref[...], 0.0)
    # re-pad: shift into padded coords and zero the halo + tail rows
    a1 = pltpu.roll(a1, shift=pad_shift, axis=0) * mask

    # ---------------- conv2 + ReLU ----------------  (bf16 MXU, f32 acc)
    acc2 = jnp.zeros((Mp, hidden), jnp.float32)
    for t, off in enumerate(offs):
        s = shifted(a1, off).astype(jnp.bfloat16)
        acc2 = acc2 + jnp.dot(s, w2_ref[t], preferred_element_type=jnp.float32)
    a2 = jnp.maximum(acc2 + b2_ref[...], 0.0)
    a2 = pltpu.roll(a2, shift=pad_shift, axis=0) * mask

    # ---------------- conv3 + ReLU ----------------  (lane-dense 128-wide out)
    acc3 = jnp.zeros((Mp, cout_p), jnp.float32)
    for t, off in enumerate(offs):
        s = shifted(a2, off).astype(jnp.bfloat16)
        acc3 = acc3 + jnp.dot(s, w3_ref[t], preferred_element_type=jnp.float32)
    o_ref[0] = jnp.maximum(acc3 + b3_ref[...], 0.0).astype(o_ref.dtype)


def _prep_flat_input(x_nchw, Hp, Wp, Mp):
    """NCHW -> zero-padded NHWC -> flat padded coords (N, Mp, Cin).

    This touches only the tiny raw input once; every intermediate activation
    stays inside the kernel's VMEM.
    """
    N, cin, H, W = x_nchw.shape
    x = jnp.transpose(x_nchw, (0, 2, 3, 1))                 # (N, H, W, Cin)
    x = jnp.pad(x, ((0, 0), (1, 1), (1, 1), (0, 0)))        # (N, Hp, Wp, Cin)
    x = x.reshape(N, Hp * Wp, cin)
    return jnp.pad(x, ((0, 0), (0, Mp - Hp * Wp), (0, 0)))  # (N, Mp, Cin)


def _interior_mask(H, W, Wp, Mp):
    """0/1 mask over flat padded coords: 1 on interior (non-halo) positions."""
    m = np.zeros((Mp, 1), np.float32)
    for i in range(1, H + 1):
        m[i * Wp + 1: i * Wp + 1 + W, 0] = 1.0
    return jnp.asarray(m)


def cnn_forward_pallas(x_nchw, w1, b1, w2, b2, w3, b3):
    """Forward pass of the CNN module. Weights are HWIO f32, biases (C,)."""
    N, cin, H, W = x_nchw.shape
    hidden = w1.shape[-1]
    cout = w3.shape[-1]
    Hp, Wp = H + 2, W + 2
    Mp = _round_up(Hp * Wp, 8)
    cout_p = _round_up(cout, 128)           # lane-dense final store

    x_flat = _prep_flat_input(x_nchw, Hp, Wp, Mp)
    mask = _interior_mask(H, W, Wp, Mp)

    # Kernel-side weight layouts: taps flattened to 9 rows (dy-major).
    w1k = w1.reshape(9, cin, hidden).astype(jnp.float32)
    w2k = w2.reshape(9, hidden, hidden).astype(jnp.bfloat16)
    w3k = jnp.pad(w3, ((0, 0), (0, 0), (0, 0), (0, cout_p - cout)))
    w3k = w3k.reshape(9, hidden, cout_p).astype(jnp.bfloat16)
    b1k = b1.reshape(1, hidden).astype(jnp.float32)
    b2k = b2.reshape(1, hidden).astype(jnp.float32)
    b3k = jnp.pad(b3, (0, cout_p - cout)).reshape(1, cout_p).astype(jnp.float32)

    kernel = functools.partial(_fused_cnn_kernel, Wp=Wp, Mp=Mp, cin=cin,
                               hidden=hidden, cout_p=cout_p)

    out = pl.pallas_call(
        kernel,
        out_shape=jax.ShapeDtypeStruct((N, Mp, cout_p), jnp.float32),
        grid=(N,),
        in_specs=[
            pl.BlockSpec((1, Mp, cin), lambda n: (n, 0, 0)),
            pl.BlockSpec((Mp, 1), lambda n: (0, 0)),
            pl.BlockSpec((9, cin, hidden), lambda n: (0, 0, 0)),
            pl.BlockSpec((1, hidden), lambda n: (0, 0)),
            pl.BlockSpec((9, hidden, hidden), lambda n: (0, 0, 0)),
            pl.BlockSpec((1, hidden), lambda n: (0, 0)),
            pl.BlockSpec((9, hidden, cout_p), lambda n: (0, 0, 0)),
            pl.BlockSpec((1, cout_p), lambda n: (0, 0)),
        ],
        out_specs=pl.BlockSpec((1, Mp, cout_p), lambda n: (n, 0, 0)),
        compiler_params=pltpu.CompilerParams(
            dimension_semantics=("parallel",)),   # 2-way split across v7x TCs
    )(x_flat, mask, w1k, b1k, w2k, b2k, w3k, b3k)

    # Flat output coords (stride Wp) -> (N, cout, H, W). Tiny XLA slice/reshape.
    out = out[:, :Hp * Wp, :cout].reshape(N, Hp, Wp, cout)[:, :H, :W, :]
    return jnp.transpose(out, (0, 3, 1, 2))


def cnn_forward_reference(x_nchw, w1, b1, w2, b2, w3, b3):
    """Pure-JAX reference (lax.conv) for numerical validation."""
    x = jnp.transpose(x_nchw, (0, 2, 3, 1))
    for w, b in ((w1, b1), (w2, b2), (w3, b3)):
        x = jax.lax.conv_general_dilated(
            x, w, window_strides=(1, 1), padding="SAME",
            dimension_numbers=("NHWC", "HWIO", "NHWC"))
        x = jnp.maximum(x + b, 0.0)
    return jnp.transpose(x, (0, 3, 1, 2))


class CNNPallas:
    """Equivalent of the PyTorch CNN: conv1->ReLU->conv2->ReLU->conv3->ReLU."""

    def __init__(self, in_channels=1, out=2, key=jax.random.PRNGKey(42)):
        ks = jax.random.split(key, 6)

        def init_conv(kw, kb, cin, cout):
            fan_in = cin * 9
            w = jax.random.normal(kw, (3, 3, cin, cout), jnp.float32)
            w = w * (1.0 / jnp.sqrt(fan_in))
            b = jax.random.normal(kb, (cout,), jnp.float32) * 0.01
            return w, b

        self.w1, self.b1 = init_conv(ks[0], ks[1], in_channels, HIDDEN)
        self.w2, self.b2 = init_conv(ks[2], ks[3], HIDDEN, HIDDEN)
        self.w3, self.b3 = init_conv(ks[4], ks[5], HIDDEN, out)
        self._fwd = jax.jit(cnn_forward_pallas)

    def __call__(self, x_nchw):
        return self._fwd(x_nchw, self.w1, self.b1, self.w2, self.b2,
                         self.w3, self.b3)


if __name__ == "__main__":
    key = jax.random.PRNGKey(0)
    # Small shapes consistent with the module: batch=2, in_channels=1, 16x16.
    x = jax.random.normal(key, (2, 1, 16, 16), jnp.float32)

    model = CNNPallas(in_channels=1, out=2)
    y = jax.block_until_ready(model(x))

    assert y.shape == (2, 2, 16, 16), y.shape
    assert bool(jnp.all(y >= 0.0))            # ReLU output is non-negative

    # Numerical check vs a pure-JAX reference (bf16 MXU inputs, f32 accumulate).
    y_ref = cnn_forward_reference(x, model.w1, model.b1, model.w2, model.b2,
                                  model.w3, model.b3)
    max_err = float(jnp.max(jnp.abs(y - y_ref)))
    assert max_err < 1e-1, f"max abs error vs reference: {max_err}"

    print("KERNEL_OK")
</pallas_src>

<mosaic_0001>
module attributes {stable_mosaic.version = 11 : i64} {
  func.func @_fused_cnn_kernel(%arg0: i32, %arg1: memref<1x328x1xf32, #tpu.memory_space<vmem>>, %arg2: memref<328x1xf32, #tpu.memory_space<vmem>>, %arg3: memref<9x1x64xf32, #tpu.memory_space<vmem>>, %arg4: memref<1x64xf32, #tpu.memory_space<vmem>>, %arg5: memref<9x64x64xbf16, #tpu.memory_space<vmem>>, %arg6: memref<1x64xf32, #tpu.memory_space<vmem>>, %arg7: memref<9x64x128xbf16, #tpu.memory_space<vmem>>, %arg8: memref<1x128xf32, #tpu.memory_space<vmem>>, %arg9: memref<1x328x128xf32, #tpu.memory_space<vmem>>) attributes {dimension_semantics = [#tpu.dimension_semantics<parallel>], iteration_bounds = array<i64: 2>, scalar_prefetch = 0 : i64, scratch_operands = 0 : i64, tpu.core_type = #tpu.core_type<tc>, window_params = [{transform_indices = @transform_0, window_bounds = array<i64: 1, 328, 1>}, {pipeline_mode = #tpu.pipeline_mode<synchronous>, transform_indices = @transform_1, window_bounds = array<i64: 328, 1>}, {pipeline_mode = #tpu.pipeline_mode<synchronous>, transform_indices = @transform_2, window_bounds = array<i64: 9, 1, 64>}, {pipeline_mode = #tpu.pipeline_mode<synchronous>, transform_indices = @transform_3, window_bounds = array<i64: 1, 64>}, {pipeline_mode = #tpu.pipeline_mode<synchronous>, transform_indices = @transform_4, window_bounds = array<i64: 9, 64, 64>}, {pipeline_mode = #tpu.pipeline_mode<synchronous>, transform_indices = @transform_5, window_bounds = array<i64: 1, 64>}, {pipeline_mode = #tpu.pipeline_mode<synchronous>, transform_indices = @transform_6, window_bounds = array<i64: 9, 64, 128>}, {pipeline_mode = #tpu.pipeline_mode<synchronous>, transform_indices = @transform_7, window_bounds = array<i64: 1, 128>}, {transform_indices = @transform_8, window_bounds = array<i64: 1, 328, 128>}]} {
    %c0 = arith.constant 0 : index
    %c0_0 = arith.constant 0 : index
    %0 = vector.load %arg2[%c0, %c0_0] : memref<328x1xf32, #tpu.memory_space<vmem>>, vector<328x1xf32>
    %c0_1 = arith.constant 0 : index
    %c0_2 = arith.constant 0 : index
    %c0_3 = arith.constant 0 : index
    %1 = vector.load %arg1[%c0_1, %c0_2, %c0_3] : memref<1x328x1xf32, #tpu.memory_space<vmem>>, vector<1x328x1xf32>
    %2 = vector.shape_cast %1 : vector<1x328x1xf32> to vector<328x1xf32>
    %cst = arith.constant 0.000000e+00 : f32
    %3 = vector.broadcast %cst : f32 to vector<328x64xf32>
    %4 = vector.shape_cast %2 : vector<328x1xf32> to vector<328x1xf32>
    %5 = vector.broadcast %4 : vector<328x1xf32> to vector<328x64xf32>
    %c0_4 = arith.constant 0 : index
    %c0_5 = arith.constant 0 : index
    %c0_6 = arith.constant 0 : index
    %6 = vector.load %arg3[%c0_4, %c0_5, %c0_6] : memref<9x1x64xf32, #tpu.memory_space<vmem>>, vector<1x1x64xf32>
    %7 = vector.shape_cast %6 : vector<1x1x64xf32> to vector<1x64xf32>
    %8 = vector.broadcast %7 : vector<1x64xf32> to vector<328x64xf32>
    %9 = arith.mulf %5, %8 : vector<328x64xf32>
    %10 = arith.addf %3, %9 : vector<328x64xf32>
    %c327_i32 = arith.constant 327 : i32
    %11 = tpu.dynamic_rotate %5 by %c327_i32 dim 0 : vector<328x64xf32>, i32 -> vector<328x64xf32>
    %c1 = arith.constant 1 : index
    %c0_7 = arith.constant 0 : index
    %c0_8 = arith.constant 0 : index
    %12 = vector.load %arg3[%c1, %c0_7, %c0_8] : memref<9x1x64xf32, #tpu.memory_space<vmem>>, vector<1x1x64xf32>
    %13 = vector.shape_cast %12 : vector<1x1x64xf32> to vector<1x64xf32>
    %14 = vector.broadcast %13 : vector<1x64xf32> to vector<328x64xf32>
    %15 = arith.mulf %11, %14 : vector<328x64xf32>
    %16 = arith.addf %10, %15 : vector<328x64xf32>
    %c326_i32 = arith.constant 326 : i32
    %17 = tpu.dynamic_rotate %5 by %c326_i32 dim 0 : vector<328x64xf32>, i32 -> vector<328x64xf32>
    %c2 = arith.constant 2 : index
    %c0_9 = arith.constant 0 : index
    %c0_10 = arith.constant 0 : index
    %18 = vector.load %arg3[%c2, %c0_9, %c0_10] : memref<9x1x64xf32, #tpu.memory_space<vmem>>, vector<1x1x64xf32>
    %19 = vector.shape_cast %18 : vector<1x1x64xf32> to vector<1x64xf32>
    %20 = vector.broadcast %19 : vector<1x64xf32> to vector<328x64xf32>
    %21 = arith.mulf %17, %20 : vector<328x64xf32>
    %22 = arith.addf %16, %21 : vector<328x64xf32>
    %c310_i32 = arith.constant 310 : i32
    %23 = tpu.dynamic_rotate %5 by %c310_i32 dim 0 : vector<328x64xf32>, i32 -> vector<328x64xf32>
    %c3 = arith.constant 3 : index
    %c0_11 = arith.constant 0 : index
    %c0_12 = arith.constant 0 : index
    %24 = vector.load %arg3[%c3, %c0_11, %c0_12] : memref<9x1x64xf32, #tpu.memory_space<vmem>>, vector<1x1x64xf32>
    %25 = vector.shape_cast %24 : vector<1x1x64xf32> to vector<1x64xf32>
    %26 = vector.broadcast %25 : vector<1x64xf32> to vector<328x64xf32>
    %27 = arith.mulf %23, %26 : vector<328x64xf32>
    %28 = arith.addf %22, %27 : vector<328x64xf32>
    %c309_i32 = arith.constant 309 : i32
    %29 = tpu.dynamic_rotate %5 by %c309_i32 dim 0 : vector<328x64xf32>, i32 -> vector<328x64xf32>
    %c4 = arith.constant 4 : index
    %c0_13 = arith.constant 0 : index
    %c0_14 = arith.constant 0 : index
    %30 = vector.load %arg3[%c4, %c0_13, %c0_14] : memref<9x1x64xf32, #tpu.memory_space<vmem>>, vector<1x1x64xf32>
    %31 = vector.shape_cast %30 : vector<1x1x64xf32> to vector<1x64xf32>
    %32 = vector.broadcast %31 : vector<1x64xf32> to vector<328x64xf32>
    %33 = arith.mulf %29, %32 : vector<328x64xf32>
    %34 = arith.addf %28, %33 : vector<328x64xf32>
    %c308_i32 = arith.constant 308 : i32
    %35 = tpu.dynamic_rotate %5 by %c308_i32 dim 0 : vector<328x64xf32>, i32 -> vector<328x64xf32>
    %c5 = arith.constant 5 : index
    %c0_15 = arith.constant 0 : index
    %c0_16 = arith.constant 0 : index
    %36 = vector.load %arg3[%c5, %c0_15, %c0_16] : memref<9x1x64xf32, #tpu.memory_space<vmem>>, vector<1x1x64xf32>
    %37 = vector.shape_cast %36 : vector<1x1x64xf32> to vector<1x64xf32>
    %38 = vector.broadcast %37 : vector<1x64xf32> to vector<328x64xf32>
    %39 = arith.mulf %35, %38 : vector<328x64xf32>
    %40 = arith.addf %34, %39 : vector<328x64xf32>
    %c292_i32 = arith.constant 292 : i32
    %41 = tpu.dynamic_rotate %5 by %c292_i32 dim 0 : vector<328x64xf32>, i32 -> vector<328x64xf32>
    %c6 = arith.constant 6 : index
    %c0_17 = arith.constant 0 : index
    %c0_18 = arith.constant 0 : index
    %42 = vector.load %arg3[%c6, %c0_17, %c0_18] : memref<9x1x64xf32, #tpu.memory_space<vmem>>, vector<1x1x64xf32>
    %43 = vector.shape_cast %42 : vector<1x1x64xf32> to vector<1x64xf32>
    %44 = vector.broadcast %43 : vector<1x64xf32> to vector<328x64xf32>
    %45 = arith.mulf %41, %44 : vector<328x64xf32>
    %46 = arith.addf %40, %45 : vector<328x64xf32>
    %c291_i32 = arith.constant 291 : i32
    %47 = tpu.dynamic_rotate %5 by %c291_i32 dim 0 : vector<328x64xf32>, i32 -> vector<328x64xf32>
    %c7 = arith.constant 7 : index
    %c0_19 = arith.constant 0 : index
    %c0_20 = arith.constant 0 : index
    %48 = vector.load %arg3[%c7, %c0_19, %c0_20] : memref<9x1x64xf32, #tpu.memory_space<vmem>>, vector<1x1x64xf32>
    %49 = vector.shape_cast %48 : vector<1x1x64xf32> to vector<1x64xf32>
    %50 = vector.broadcast %49 : vector<1x64xf32> to vector<328x64xf32>
    %51 = arith.mulf %47, %50 : vector<328x64xf32>
    %52 = arith.addf %46, %51 : vector<328x64xf32>
    %c290_i32 = arith.constant 290 : i32
    %53 = tpu.dynamic_rotate %5 by %c290_i32 dim 0 : vector<328x64xf32>, i32 -> vector<328x64xf32>
    %c8 = arith.constant 8 : index
    %c0_21 = arith.constant 0 : index
    %c0_22 = arith.constant 0 : index
    %54 = vector.load %arg3[%c8, %c0_21, %c0_22] : memref<9x1x64xf32, #tpu.memory_space<vmem>>, vector<1x1x64xf32>
    %55 = vector.shape_cast %54 : vector<1x1x64xf32> to vector<1x64xf32>
    %56 = vector.broadcast %55 : vector<1x64xf32> to vector<328x64xf32>
    %57 = arith.mulf %53, %56 : vector<328x64xf32>
    %58 = arith.addf %52, %57 : vector<328x64xf32>
    %c0_23 = arith.constant 0 : index
    %c0_24 = arith.constant 0 : index
    %59 = vector.load %arg4[%c0_23, %c0_24] : memref<1x64xf32, #tpu.memory_space<vmem>>, vector<1x64xf32>
    %60 = vector.broadcast %59 : vector<1x64xf32> to vector<328x64xf32>
    %61 = arith.addf %58, %60 : vector<328x64xf32>
    %cst_25 = arith.constant 0.000000e+00 : f32
    %62 = vector.broadcast %cst_25 : f32 to vector<328x64xf32>
    %63 = arith.maximumf %61, %62 : vector<328x64xf32>
    %c19_i32 = arith.constant 19 : i32
    %64 = tpu.dynamic_rotate %63 by %c19_i32 dim 0 : vector<328x64xf32>, i32 -> vector<328x64xf32>
    %65 = vector.broadcast %0 : vector<328x1xf32> to vector<328x64xf32>
    %66 = arith.mulf %64, %65 : vector<328x64xf32>
    %cst_26 = arith.constant 0.000000e+00 : f32
    %67 = vector.broadcast %cst_26 : f32 to vector<328x64xf32>
    %68 = arith.truncf %66 : vector<328x64xf32> to vector<328x64xbf16>
    %c0_27 = arith.constant 0 : index
    %c0_28 = arith.constant 0 : index
    %c0_29 = arith.constant 0 : index
    %69 = vector.load %arg5[%c0_27, %c0_28, %c0_29] : memref<9x64x64xbf16, #tpu.memory_space<vmem>>, vector<1x64x64xbf16>
    %70 = vector.shape_cast %69 : vector<1x64x64xbf16> to vector<64x64xbf16>
    %cst_30 = arith.constant dense<0.000000e+00> : vector<328x64xf32>
    %71 = tpu.matmul %68, %70, %cst_30 {dimension_numbers = #tpu.dot_dimension_numbers<[1], [0], [0], [1], [0, 0, 1, 1], [], []>} : vector<328x64xbf16>, vector<64x64xbf16>, vector<328x64xf32> -> vector<328x64xf32>
    %72 = arith.addf %67, %71 : vector<328x64xf32>
    %c327_i32_31 = arith.constant 327 : i32
    %73 = tpu.dynamic_rotate %66 by %c327_i32_31 dim 0 : vector<328x64xf32>, i32 -> vector<328x64xf32>
    %74 = arith.truncf %73 : vector<328x64xf32> to vector<328x64xbf16>
    %c1_32 = arith.constant 1 : index
    %c0_33 = arith.constant 0 : index
    %c0_34 = arith.constant 0 : index
    %75 = vector.load %arg5[%c1_32, %c0_33, %c0_34] : memref<9x64x64xbf16, #tpu.memory_space<vmem>>, vector<1x64x64xbf16>
    %76 = vector.shape_cast %75 : vector<1x64x64xbf16> to vector<64x64xbf16>
    %cst_35 = arith.constant dense<0.000000e+00> : vector<328x64xf32>
    %77 = tpu.matmul %74, %76, %cst_35 {dimension_numbers = #tpu.dot_dimension_numbers<[1], [0], [0], [1], [0, 0, 1, 1], [], []>} : vector<328x64xbf16>, vector<64x64xbf16>, vector<328x64xf32> -> vector<328x64xf32>
    %78 = arith.addf %72, %77 : vector<328x64xf32>
    %c326_i32_36 = arith.constant 326 : i32
    %79 = tpu.dynamic_rotate %66 by %c326_i32_36 dim 0 : vector<328x64xf32>, i32 -> vector<328x64xf32>
    %80 = arith.truncf %79 : vector<328x64xf32> to vector<328x64xbf16>
    %c2_37 = arith.constant 2 : index
    %c0_38 = arith.constant 0 : index
    %c0_39 = arith.constant 0 : index
    %81 = vector.load %arg5[%c2_37, %c0_38, %c0_39] : memref<9x64x64xbf16, #tpu.memory_space<vmem>>, vector<1x64x64xbf16>
    %82 = vector.shape_cast %81 : vector<1x64x64xbf16> to vector<64x64xbf16>
    %cst_40 = arith.constant dense<0.000000e+00> : vector<328x64xf32>
    %83 = tpu.matmul %80, %82, %cst_40 {dimension_numbers = #tpu.dot_dimension_numbers<[1], [0], [0], [1], [0, 0, 1, 1], [], []>} : vector<328x64xbf16>, vector<64x64xbf16>, vector<328x64xf32> -> vector<328x64xf32>
    %84 = arith.addf %78, %83 : vector<328x64xf32>
    %c310_i32_41 = arith.constant 310 : i32
    %85 = tpu.dynamic_rotate %66 by %c310_i32_41 dim 0 : vector<328x64xf32>, i32 -> vector<328x64xf32>
    %86 = arith.truncf %85 : vector<328x64xf32> to vector<328x64xbf16>
    %c3_42 = arith.constant 3 : index
    %c0_43 = arith.constant 0 : index
    %c0_44 = arith.constant 0 : index
    %87 = vector.load %arg5[%c3_42, %c0_43, %c0_44] : memref<9x64x64xbf16, #tpu.memory_space<vmem>>, vector<1x64x64xbf16>
    %88 = vector.shape_cast %87 : vector<1x64x64xbf16> to vector<64x64xbf16>
    %cst_45 = arith.constant dense<0.000000e+00> : vector<328x64xf32>
    %89 = tpu.matmul %86, %88, %cst_45 {dimension_numbers = #tpu.dot_dimension_numbers<[1], [0], [0], [1], [0, 0, 1, 1], [], []>} : vector<328x64xbf16>, vector<64x64xbf16>, vector<328x64xf32> -> vector<328x64xf32>
    %90 = arith.addf %84, %89 : vector<328x64xf32>
    %c309_i32_46 = arith.constant 309 : i32
    %91 = tpu.dynamic_rotate %66 by %c309_i32_46 dim 0 : vector<328x64xf32>, i32 -> vector<328x64xf32>
    %92 = arith.truncf %91 : vector<328x64xf32> to vector<328x64xbf16>
    %c4_47 = arith.constant 4 : index
    %c0_48 = arith.constant 0 : index
    %c0_49 = arith.constant 0 : index
    %93 = vector.load %arg5[%c4_47, %c0_48, %c0_49] : memref<9x64x64xbf16, #tpu.memory_space<vmem>>, vector<1x64x64xbf16>
    %94 = vector.shape_cast %93 : vector<1x64x64xbf16> to vector<64x64xbf16>
    %cst_50 = arith.constant dense<0.000000e+00> : vector<328x64xf32>
    %95 = tpu.matmul %92, %94, %cst_50 {dimension_numbers = #tpu.dot_dimension_numbers<[1], [0], [0], [1], [0, 0, 1, 1], [], []>} : vector<328x64xbf16>, vector<64x64xbf16>, vector<328x64xf32> -> vector<328x64xf32>
    %96 = arith.addf %90, %95 : vector<328x64xf32>
    %c308_i32_51 = arith.constant 308 : i32
    %97 = tpu.dynamic_rotate %66 by %c308_i32_51 dim 0 : vector<328x64xf32>, i32 -> vector<328x64xf32>
    %98 = arith.truncf %97 : vector<328x64xf32> to vector<328x64xbf16>
    %c5_52 = arith.constant 5 : index
    %c0_53 = arith.constant 0 : index
    %c0_54 = arith.constant 0 : index
    %99 = vector.load %arg5[%c5_52, %c0_53, %c0_54] : memref<9x64x64xbf16, #tpu.memory_space<vmem>>, vector<1x64x64xbf16>
    %100 = vector.shape_cast %99 : vector<1x64x64xbf16> to vector<64x64xbf16>
    %cst_55 = arith.constant dense<0.000000e+00> : vector<328x64xf32>
    %101 = tpu.matmul %98, %100, %cst_55 {dimension_numbers = #tpu.dot_dimension_numbers<[1], [0], [0], [1], [0, 0, 1, 1], [], []>} : vector<328x64xbf16>, vector<64x64xbf16>, vector<328x64xf32> -> vector<328x64xf32>
    %102 = arith.addf %96, %101 : vector<328x64xf32>
    %c292_i32_56 = arith.constant 292 : i32
    %103 = tpu.dynamic_rotate %66 by %c292_i32_56 dim 0 : vector<328x64xf32>, i32 -> vector<328x64xf32>
    %104 = arith.truncf %103 : vector<328x64xf32> to vector<328x64xbf16>
    %c6_57 = arith.constant 6 : index
    %c0_58 = arith.constant 0 : index
    %c0_59 = arith.constant 0 : index
    %105 = vector.load %arg5[%c6_57, %c0_58, %c0_59] : memref<9x64x64xbf16, #tpu.memory_space<vmem>>, vector<1x64x64xbf16>
    %106 = vector.shape_cast %105 : vector<1x64x64xbf16> to vector<64x64xbf16>
    %cst_60 = arith.constant dense<0.000000e+00> : vector<328x64xf32>
    %107 = tpu.matmul %104, %106, %cst_60 {dimension_numbers = #tpu.dot_dimension_numbers<[1], [0], [0], [1], [0, 0, 1, 1], [], []>} : vector<328x64xbf16>, vector<64x64xbf16>, vector<328x64xf32> -> vector<328x64xf32>
    %108 = arith.addf %102, %107 : vector<328x64xf32>
    %c291_i32_61 = arith.constant 291 : i32
    %109 = tpu.dynamic_rotate %66 by %c291_i32_61 dim 0 : vector<328x64xf32>, i32 -> vector<328x64xf32>
    %110 = arith.truncf %109 : vector<328x64xf32> to vector<328x64xbf16>
    %c7_62 = arith.constant 7 : index
    %c0_63 = arith.constant 0 : index
    %c0_64 = arith.constant 0 : index
    %111 = vector.load %arg5[%c7_62, %c0_63, %c0_64] : memref<9x64x64xbf16, #tpu.memory_space<vmem>>, vector<1x64x64xbf16>
    %112 = vector.shape_cast %111 : vector<1x64x64xbf16> to vector<64x64xbf16>
    %cst_65 = arith.constant dense<0.000000e+00> : vector<328x64xf32>
    %113 = tpu.matmul %110, %112, %cst_65 {dimension_numbers = #tpu.dot_dimension_numbers<[1], [0], [0], [1], [0, 0, 1, 1], [], []>} : vector<328x64xbf16>, vector<64x64xbf16>, vector<328x64xf32> -> vector<328x64xf32>
    %114 = arith.addf %108, %113 : vector<328x64xf32>
    %c290_i32_66 = arith.constant 290 : i32
    %115 = tpu.dynamic_rotate %66 by %c290_i32_66 dim 0 : vector<328x64xf32>, i32 -> vector<328x64xf32>
    %116 = arith.truncf %115 : vector<328x64xf32> to vector<328x64xbf16>
    %c8_67 = arith.constant 8 : index
    %c0_68 = arith.constant 0 : index
    %c0_69 = arith.constant 0 : index
    %117 = vector.load %arg5[%c8_67, %c0_68, %c0_69] : memref<9x64x64xbf16, #tpu.memory_space<vmem>>, vector<1x64x64xbf16>
    %118 = vector.shape_cast %117 : vector<1x64x64xbf16> to vector<64x64xbf16>
    %cst_70 = arith.constant dense<0.000000e+00> : vector<328x64xf32>
    %119 = tpu.matmul %116, %118, %cst_70 {dimension_numbers = #tpu.dot_dimension_numbers<[1], [0], [0], [1], [0, 0, 1, 1], [], []>} : vector<328x64xbf16>, vector<64x64xbf16>, vector<328x64xf32> -> vector<328x64xf32>
    %120 = arith.addf %114, %119 : vector<328x64xf32>
    %c0_71 = arith.constant 0 : index
    %c0_72 = arith.constant 0 : index
    %121 = vector.load %arg6[%c0_71, %c0_72] : memref<1x64xf32, #tpu.memory_space<vmem>>, vector<1x64xf32>
    %122 = vector.broadcast %121 : vector<1x64xf32> to vector<328x64xf32>
    %123 = arith.addf %120, %122 : vector<328x64xf32>
    %cst_73 = arith.constant 0.000000e+00 : f32
    %124 = vector.broadcast %cst_73 : f32 to vector<328x64xf32>
    %125 = arith.maximumf %123, %124 : vector<328x64xf32>
    %c19_i32_74 = arith.constant 19 : i32
    %126 = tpu.dynamic_rotate %125 by %c19_i32_74 dim 0 : vector<328x64xf32>, i32 -> vector<328x64xf32>
    %127 = vector.broadcast %0 : vector<328x1xf32> to vector<328x64xf32>
    %128 = arith.mulf %126, %127 : vector<328x64xf32>
    %cst_75 = arith.constant 0.000000e+00 : f32
    %129 = vector.broadcast %cst_75 : f32 to vector<328x128xf32>
    %130 = arith.truncf %128 : vector<328x64xf32> to vector<328x64xbf16>
    %c0_76 = arith.constant 0 : index
    %c0_77 = arith.constant 0 : index
    %c0_78 = arith.constant 0 : index
    %131 = vector.load %arg7[%c0_76, %c0_77, %c0_78] : memref<9x64x128xbf16, #tpu.memory_space<vmem>>, vector<1x64x128xbf16>
    %132 = vector.shape_cast %131 : vector<1x64x128xbf16> to vector<64x128xbf16>
    %cst_79 = arith.constant dense<0.000000e+00> : vector<328x128xf32>
    %133 = tpu.matmul %130, %132, %cst_79 {dimension_numbers = #tpu.dot_dimension_numbers<[1], [0], [0], [1], [0, 0, 1, 1], [], []>} : vector<328x64xbf16>, vector<64x128xbf16>, vector<328x128xf32> -> vector<328x128xf32>
    %134 = arith.addf %129, %133 : vector<328x128xf32>
    %c327_i32_80 = arith.constant 327 : i32
    %135 = tpu.dynamic_rotate %128 by %c327_i32_80 dim 0 : vector<328x64xf32>, i32 -> vector<328x64xf32>
    %136 = arith.truncf %135 : vector<328x64xf32> to vector<328x64xbf16>
    %c1_81 = arith.constant 1 : index
    %c0_82 = arith.constant 0 : index
    %c0_83 = arith.constant 0 : index
    %137 = vector.load %arg7[%c1_81, %c0_82, %c0_83] : memref<9x64x128xbf16, #tpu.memory_space<vmem>>, vector<1x64x128xbf16>
    %138 = vector.shape_cast %137 : vector<1x64x128xbf16> to vector<64x128xbf16>
    %cst_84 = arith.constant dense<0.000000e+00> : vector<328x128xf32>
    %139 = tpu.matmul %136, %138, %cst_84 {dimension_numbers = #tpu.dot_dimension_numbers<[1], [0], [0], [1], [0, 0, 1, 1], [], []>} : vector<328x64xbf16>, vector<64x128xbf16>, vector<328x128xf32> -> vector<328x128xf32>
    %140 = arith.addf %134, %139 : vector<328x128xf32>
    %c326_i32_85 = arith.constant 326 : i32
    %141 = tpu.dynamic_rotate %128 by %c326_i32_85 dim 0 : vector<328x64xf32>, i32 -> vector<328x64xf32>
    %142 = arith.truncf %141 : vector<328x64xf32> to vector<328x64xbf16>
    %c2_86 = arith.constant 2 : index
    %c0_87 = arith.constant 0 : index
    %c0_88 = arith.constant 0 : index
    %143 = vector.load %arg7[%c2_86, %c0_87, %c0_88] : memref<9x64x128xbf16, #tpu.memory_space<vmem>>, vector<1x64x128xbf16>
    %144 = vector.shape_cast %143 : vector<1x64x128xbf16> to vector<64x128xbf16>
    %cst_89 = arith.constant dense<0.000000e+00> : vector<328x128xf32>
    %145 = tpu.matmul %142, %144, %cst_89 {dimension_numbers = #tpu.dot_dimension_numbers<[1], [0], [0], [1], [0, 0, 1, 1], [], []>} : vector<328x64xbf16>, vector<64x128xbf16>, vector<328x128xf32> -> vector<328x128xf32>
    %146 = arith.addf %140, %145 : vector<328x128xf32>
    %c310_i32_90 = arith.constant 310 : i32
    %147 = tpu.dynamic_rotate %128 by %c310_i32_90 dim 0 : vector<328x64xf32>, i32 -> vector<328x64xf32>
    %148 = arith.truncf %147 : vector<328x64xf32> to vector<328x64xbf16>
    %c3_91 = arith.constant 3 : index
    %c0_92 = arith.constant 0 : index
    %c0_93 = arith.constant 0 : index
    %149 = vector.load %arg7[%c3_91, %c0_92, %c0_93] : memref<9x64x128xbf16, #tpu.memory_space<vmem>>, vector<1x64x128xbf16>
    %150 = vector.shape_cast %149 : vector<1x64x128xbf16> to vector<64x128xbf16>
    %cst_94 = arith.constant dense<0.000000e+00> : vector<328x128xf32>
    %151 = tpu.matmul %148, %150, %cst_94 {dimension_numbers = #tpu.dot_dimension_numbers<[1], [0], [0], [1], [0, 0, 1, 1], [], []>} : vector<328x64xbf16>, vector<64x128xbf16>, vector<328x128xf32> -> vector<328x128xf32>
    %152 = arith.addf %146, %151 : vector<328x128xf32>
    %c309_i32_95 = arith.constant 309 : i32
    %153 = tpu.dynamic_rotate %128 by %c309_i32_95 dim 0 : vector<328x64xf32>, i32 -> vector<328x64xf32>
    %154 = arith.truncf %153 : vector<328x64xf32> to vector<328x64xbf16>
    %c4_96 = arith.constant 4 : index
    %c0_97 = arith.constant 0 : index
    %c0_98 = arith.constant 0 : index
    %155 = vector.load %arg7[%c4_96, %c0_97, %c0_98] : memref<9x64x128xbf16, #tpu.memory_space<vmem>>, vector<1x64x128xbf16>
    %156 = vector.shape_cast %155 : vector<1x64x128xbf16> to vector<64x128xbf16>
    %cst_99 = arith.constant dense<0.000000e+00> : vector<328x128xf32>
    %157 = tpu.matmul %154, %156, %cst_99 {dimension_numbers = #tpu.dot_dimension_numbers<[1], [0], [0], [1], [0, 0, 1, 1], [], []>} : vector<328x64xbf16>, vector<64x128xbf16>, vector<328x128xf32> -> vector<328x128xf32>
    %158 = arith.addf %152, %157 : vector<328x128xf32>
    %c308_i32_100 = arith.constant 308 : i32
    %159 = tpu.dynamic_rotate %128 by %c308_i32_100 dim 0 : vector<328x64xf32>, i32 -> vector<328x64xf32>
    %160 = arith.truncf %159 : vector<328x64xf32> to vector<328x64xbf16>
    %c5_101 = arith.constant 5 : index
    %c0_102 = arith.constant 0 : index
    %c0_103 = arith.constant 0 : index
    %161 = vector.load %arg7[%c5_101, %c0_102, %c0_103] : memref<9x64x128xbf16, #tpu.memory_space<vmem>>, vector<1x64x128xbf16>
    %162 = vector.shape_cast %161 : vector<1x64x128xbf16> to vector<64x128xbf16>
    %cst_104 = arith.constant dense<0.000000e+00> : vector<328x128xf32>
    %163 = tpu.matmul %160, %162, %cst_104 {dimension_numbers = #tpu.dot_dimension_numbers<[1], [0], [0], [1], [0, 0, 1, 1], [], []>} : vector<328x64xbf16>, vector<64x128xbf16>, vector<328x128xf32> -> vector<328x128xf32>
    %164 = arith.addf %158, %163 : vector<328x128xf32>
    %c292_i32_105 = arith.constant 292 : i32
    %165 = tpu.dynamic_rotate %128 by %c292_i32_105 dim 0 : vector<328x64xf32>, i32 -> vector<328x64xf32>
    %166 = arith.truncf %165 : vector<328x64xf32> to vector<328x64xbf16>
    %c6_106 = arith.constant 6 : index
    %c0_107 = arith.constant 0 : index
    %c0_108 = arith.constant 0 : index
    %167 = vector.load %arg7[%c6_106, %c0_107, %c0_108] : memref<9x64x128xbf16, #tpu.memory_space<vmem>>, vector<1x64x128xbf16>
    %168 = vector.shape_cast %167 : vector<1x64x128xbf16> to vector<64x128xbf16>
    %cst_109 = arith.constant dense<0.000000e+00> : vector<328x128xf32>
    %169 = tpu.matmul %166, %168, %cst_109 {dimension_numbers = #tpu.dot_dimension_numbers<[1], [0], [0], [1], [0, 0, 1, 1], [], []>} : vector<328x64xbf16>, vector<64x128xbf16>, vector<328x128xf32> -> vector<328x128xf32>
    %170 = arith.addf %164, %169 : vector<328x128xf32>
    %c291_i32_110 = arith.constant 291 : i32
    %171 = tpu.dynamic_rotate %128 by %c291_i32_110 dim 0 : vector<328x64xf32>, i32 -> vector<328x64xf32>
    %172 = arith.truncf %171 : vector<328x64xf32> to vector<328x64xbf16>
    %c7_111 = arith.constant 7 : index
    %c0_112 = arith.constant 0 : index
    %c0_113 = arith.constant 0 : index
    %173 = vector.load %arg7[%c7_111, %c0_112, %c0_113] : memref<9x64x128xbf16, #tpu.memory_space<vmem>>, vector<1x64x128xbf16>
    %174 = vector.shape_cast %173 : vector<1x64x128xbf16> to vector<64x128xbf16>
    %cst_114 = arith.constant dense<0.000000e+00> : vector<328x128xf32>
    %175 = tpu.matmul %172, %174, %cst_114 {dimension_numbers = #tpu.dot_dimension_numbers<[1], [0], [0], [1], [0, 0, 1, 1], [], []>} : vector<328x64xbf16>, vector<64x128xbf16>, vector<328x128xf32> -> vector<328x128xf32>
    %176 = arith.addf %170, %175 : vector<328x128xf32>
    %c290_i32_115 = arith.constant 290 : i32
    %177 = tpu.dynamic_rotate %128 by %c290_i32_115 dim 0 : vector<328x64xf32>, i32 -> vector<328x64xf32>
    %178 = arith.truncf %177 : vector<328x64xf32> to vector<328x64xbf16>
    %c8_116 = arith.constant 8 : index
    %c0_117 = arith.constant 0 : index
    %c0_118 = arith.constant 0 : index
    %179 = vector.load %arg7[%c8_116, %c0_117, %c0_118] : memref<9x64x128xbf16, #tpu.memory_space<vmem>>, vector<1x64x128xbf16>
    %180 = vector.shape_cast %179 : vector<1x64x128xbf16> to vector<64x128xbf16>
    %cst_119 = arith.constant dense<0.000000e+00> : vector<328x128xf32>
    %181 = tpu.matmul %178, %180, %cst_119 {dimension_numbers = #tpu.dot_dimension_numbers<[1], [0], [0], [1], [0, 0, 1, 1], [], []>} : vector<328x64xbf16>, vector<64x128xbf16>, vector<328x128xf32> -> vector<328x128xf32>
    %182 = arith.addf %176, %181 : vector<328x128xf32>
    %c0_120 = arith.constant 0 : index
    %c0_121 = arith.constant 0 : index
    %183 = vector.load %arg8[%c0_120, %c0_121] : memref<1x128xf32, #tpu.memory_space<vmem>>, vector<1x128xf32>
    %184 = vector.broadcast %183 : vector<1x128xf32> to vector<328x128xf32>
    %185 = arith.addf %182, %184 : vector<328x128xf32>
    %cst_122 = arith.constant 0.000000e+00 : f32
    %186 = vector.broadcast %cst_122 : f32 to vector<328x128xf32>
    %187 = arith.maximumf %185, %186 : vector<328x128xf32>
    %c0_123 = arith.constant 0 : index
    %c0_124 = arith.constant 0 : index
    %c0_125 = arith.constant 0 : index
    %188 = vector.load %arg9[%c0_123, %c0_124, %c0_125] : memref<1x328x128xf32, #tpu.memory_space<vmem>>, vector<1x328x128xf32>
    %189 = vector.shape_cast %188 : vector<1x328x128xf32> to vector<328x128xf32>
    %190 = vector.shape_cast %187 : vector<328x128xf32> to vector<1x328x128xf32>
    tpu.vector_store %arg9[%c0_123, %c0_124, %c0_125], %190 {strides = array<i32>} : memref<1x328x128xf32, #tpu.memory_space<vmem>>, vector<1x328x128xf32>,
    return
  }
  func.func @transform_0(%arg0: i32) -> (i32, i32, i32) {
    %c0_i32 = arith.constant 0 : i32
    %c0_i32_0 = arith.constant 0 : i32
    %c0_i32_1 = arith.constant 0 : i32
    return %arg0, %c0_i32, %c0_i32_0 : i32, i32, i32
  }
  func.func @transform_1(%arg0: i32) -> (i32, i32) {
    %c0_i32 = arith.constant 0 : i32
    %c0_i32_0 = arith.constant 0 : i32
    %c0_i32_1 = arith.constant 0 : i32
    return %c0_i32, %c0_i32_0 : i32, i32
  }
  func.func @transform_2(%arg0: i32) -> (i32, i32, i32) {
    %c0_i32 = arith.constant 0 : i32
    %c0_i32_0 = arith.constant 0 : i32
    %c0_i32_1 = arith.constant 0 : i32
    %c0_i32_2 = arith.constant 0 : i32
    return %c0_i32, %c0_i32_0, %c0_i32_1 : i32, i32, i32
  }
  func.func @transform_3(%arg0: i32) -> (i32, i32) {
    %c0_i32 = arith.constant 0 : i32
    %c0_i32_0 = arith.constant 0 : i32
    %c0_i32_1 = arith.constant 0 : i32
    return %c0_i32, %c0_i32_0 : i32, i32
  }
  func.func @transform_4(%arg0: i32) -> (i32, i32, i32) {
    %c0_i32 = arith.constant 0 : i32
    %c0_i32_0 = arith.constant 0 : i32
    %c0_i32_1 = arith.constant 0 : i32
    %c0_i32_2 = arith.constant 0 : i32
    return %c0_i32, %c0_i32_0, %c0_i32_1 : i32, i32, i32
  }
  func.func @transform_5(%arg0: i32) -> (i32, i32) {
    %c0_i32 = arith.constant 0 : i32
    %c0_i32_0 = arith.constant 0 : i32
    %c0_i32_1 = arith.constant 0 : i32
    return %c0_i32, %c0_i32_0 : i32, i32
  }
  func.func @transform_6(%arg0: i32) -> (i32, i32, i32) {
    %c0_i32 = arith.constant 0 : i32
    %c0_i32_0 = arith.constant 0 : i32
    %c0_i32_1 = arith.constant 0 : i32
    %c0_i32_2 = arith.constant 0 : i32
    return %c0_i32, %c0_i32_0, %c0_i32_1 : i32, i32, i32
  }
  func.func @transform_7(%arg0: i32) -> (i32, i32) {
    %c0_i32 = arith.constant 0 : i32
    %c0_i32_0 = arith.constant 0 : i32
    %c0_i32_1 = arith.constant 0 : i32
    return %c0_i32, %c0_i32_0 : i32, i32
  }
  func.func @transform_8(%arg0: i32) -> (i32, i32, i32) {
    %c0_i32 = arith.constant 0 : i32
    %c0_i32_0 = arith.constant 0 : i32
    %c0_i32_1 = arith.constant 0 : i32
    return %arg0, %c0_i32, %c0_i32_0 : i32, i32, i32
  }
}

</mosaic_0001>

<llo_original>
// kernel: cnn_forward_pallas.1
$region0: #{cnn_forward_pallas.1}
  #allocation0 [shape = 'u32[]', space=smem, size = 0x4, offset = 0x4, fixed_abs, tag = 'smem constant byte address 0x4 - core index']
  #allocation1 [shape = 'u32[144,128]{1,0:T(1,128)}', space=vmem, size = 0x12000, scoped, tag = 'internal scratch']
  %s0 = inlined_call_operand.vmem [shape: f32[2,328,1], index: 0, kind: input, shape index: {}]
  %s1 = inlined_call_operand.vmem [shape: f32[328,1], index: 1, kind: input, shape index: {}]
  %s2 = inlined_call_operand.vmem [shape: f32[9,1,64], index: 2, kind: input, shape index: {}]
  %s3 = inlined_call_operand.vmem [shape: f32[1,64], index: 3, kind: input, shape index: {}]
  %s4 = inlined_call_operand.vmem [shape: bf16[9,64,64], index: 4, kind: input, shape index: {}]
  %s5 = inlined_call_operand.vmem [shape: f32[1,64], index: 5, kind: input, shape index: {}]
  %s6 = inlined_call_operand.vmem [shape: bf16[9,64,128], index: 6, kind: input, shape index: {}]
  %s7 = inlined_call_operand.vmem [shape: f32[1,128], index: 7, kind: input, shape index: {}]
  %s8 = inlined_call_operand.vmem [shape: f32[2,328,128], index: 8, kind: output, shape index: {}]
  %s9 = sld [smem:[#allocation0]]
  $region65: #{cnn_forward_pallas.1} parent=0
    _
  %s11 = ssub.s32 1, %s9
  %s12 = scalar_select 0, %s11, %s9
  loop: start=0, step=1, limit=4
  $region2: #{cnn_forward_pallas.1} parent=0 // loop_pre_header
    _
  $region3: #{cnn_forward_pallas.1} parent=0 // loop_header
    %s14 = sphi 0, %s18
    %p15 = scmp.ge.s32.totalorder %s14, 4
    %s24 = sphi 0, %s26
    %s27 = sphi 0, %s24
    %s28 = sphi 0, %s27
    %s44 = sphi 0, %s28
    %s48 = sphi 0, %s48
    %s50 = sphi 0, %s48
    %s51 = sphi 0, %s50
    %s65 = sphi 0, %s51
    %s69 = sphi 0, %s69
    %s71 = sphi 0, %s69
    %s72 = sphi 0, %s71
    %s86 = sphi 0, %s72
    %s90 = sphi 0, %s90
    %s92 = sphi 0, %s90
    %s93 = sphi 0, %s92
    %s107 = sphi 0, %s93
    %s111 = sphi 0, %s111
    %s113 = sphi 0, %s111
    %s114 = sphi 0, %s113
    %s128 = sphi 0, %s114
    %s132 = sphi 0, %s132
    %s134 = sphi 0, %s132
    %s135 = sphi 0, %s134
    %s149 = sphi 0, %s135
    %s153 = sphi 0, %s153
    %s155 = sphi 0, %s153
    %s156 = sphi 0, %s155
    %s170 = sphi 0, %s156
    %s174 = sphi 0, %s174
    %s176 = sphi 0, %s174
    %s177 = sphi 0, %s176
    %s191 = sphi 0, %s177
    %s197 = sphi 0, %s199
    %s200 = sphi 0, %s197
    %s201 = sphi 0, %s200
    %s217 = sphi 0, %s201
  $region4: #{cnn_forward_pallas.1} parent=0 // loop_header_branch
    %17 = sbr.rel (%p15) target = $region8
  $region5: #{cnn_forward_pallas.1} parent=0 // loop_body
    %s19 = ssub.s32 %s14, 1
    %s20 = ssub.s32 %s14, 2
    %s21 = sadd.s32 %s14, 1
    %s22 = ssub.s32 %s14, %s21
    %p23 = scmp.eq.s32.totalorder %s22, 0
    %s25 = sadd.s32 %s24, 1
    %s26 = scalar_select %p23, %s24, %s25
    %p29 = pneg %p23
    %p30 = scmp.eq.s32.totalorder %s14, 1
    %p31 = por %p29, %p30
    %p32 = scmp.ne.s32.totalorder %s24, %s27
    %p33 = scmp.eq.s32.totalorder %s14, 0
    %p34 = por %p32, %p33
    %p35 = scmp.ne.s32.totalorder %s24, %s27
    %p36 = scmp.eq.s32.totalorder %s19, 1
    %p37 = por %p35, %p36
    %p38 = scmp.ne.s32.totalorder %s27, %s28
    %p39 = scmp.eq.s32.totalorder %s19, 0
    %p40 = por %p38, %p39
    %p41 = scmp.ne.s32.totalorder %s27, %s28
    %p42 = scmp.eq.s32.totalorder %s20, 1
    %p43 = por %p41, %p42
    %p45 = scmp.ne.s32.totalorder %s28, %s44
    %p46 = scmp.eq.s32.totalorder %s20, 0
    %p47 = por %p45, %p46
    %s49 = sadd.s32 %s48, 1
    %p52 = scmp.eq.s32.totalorder %s14, 1
    %p53 = scmp.ne.s32.totalorder %s48, %s50
    %p54 = scmp.eq.s32.totalorder %s14, 0
    %p55 = por %p53, %p54
    %p56 = scmp.ne.s32.totalorder %s48, %s50
    %p57 = scmp.eq.s32.totalorder %s19, 1
    %p58 = por %p56, %p57
    %p59 = scmp.ne.s32.totalorder %s50, %s51
    %p60 = scmp.eq.s32.totalorder %s19, 0
    %p61 = por %p59, %p60
    %p62 = scmp.ne.s32.totalorder %s50, %s51
    %p63 = scmp.eq.s32.totalorder %s20, 1
    %p64 = por %p62, %p63
    %p66 = scmp.ne.s32.totalorder %s51, %s65
    %p67 = scmp.eq.s32.totalorder %s20, 0
    %p68 = por %p66, %p67
    %s70 = sadd.s32 %s69, 1
    %p73 = scmp.eq.s32.totalorder %s14, 1
    %p74 = scmp.ne.s32.totalorder %s69, %s71
    %p75 = scmp.eq.s32.totalorder %s14, 0
    %p76 = por %p74, %p75
    %p77 = scmp.ne.s32.totalorder %s69, %s71
    %p78 = scmp.eq.s32.totalorder %s19, 1
    %p79 = por %p77, %p78
    %p80 = scmp.ne.s32.totalorder %s71, %s72
    %p81 = scmp.eq.s32.totalorder %s19, 0
    %p82 = por %p80, %p81
    %p83 = scmp.ne.s32.totalorder %s71, %s72
    %p84 = scmp.eq.s32.totalorder %s20, 1
    %p85 = por %p83, %p84
    %p87 = scmp.ne.s32.totalorder %s72, %s86
    %p88 = scmp.eq.s32.totalorder %s20, 0
    %p89 = por %p87, %p88
    %s91 = sadd.s32 %s90, 1
    %p94 = scmp.eq.s32.totalorder %s14, 1
    %p95 = scmp.ne.s32.totalorder %s90, %s92
    %p96 = scmp.eq.s32.totalorder %s14, 0
    %p97 = por %p95, %p96
    %p98 = scmp.ne.s32.totalorder %s90, %s92
    %p99 = scmp.eq.s32.totalorder %s19, 1
    %p100 = por %p98, %p99
    %p101 = scmp.ne.s32.totalorder %s92, %s93
    %p102 = scmp.eq.s32.totalorder %s19, 0
    %p103 = por %p101, %p102
    %p104 = scmp.ne.s32.totalorder %s92, %s93
    %p105 = scmp.eq.s32.totalorder %s20, 1
    %p106 = por %p104, %p105
    %p108 = scmp.ne.s32.totalorder %s93, %s107
    %p109 = scmp.eq.s32.totalorder %s20, 0
    %p110 = por %p108, %p109
    %s112 = sadd.s32 %s111, 1
    %p115 = scmp.eq.s32.totalorder %s14, 1
    %p116 = scmp.ne.s32.totalorder %s111, %s113
    %p117 = scmp.eq.s32.totalorder %s14, 0
    %p118 = por %p116, %p117
    %p119 = scmp.ne.s32.totalorder %s111, %s113
    %p120 = scmp.eq.s32.totalorder %s19, 1
    %p121 = por %p119, %p120
    %p122 = scmp.ne.s32.totalorder %s113, %s114
    %p123 = scmp.eq.s32.totalorder %s19, 0
    %p124 = por %p122, %p123
    %p125 = scmp.ne.s32.totalorder %s113, %s114
    %p126 = scmp.eq.s32.totalorder %s20, 1
    %p127 = por %p125, %p126
    %p129 = scmp.ne.s32.totalorder %s114, %s128
    %p130 = scmp.eq.s32.totalorder %s20, 0
    %p131 = por %p129, %p130
    %s133 = sadd.s32 %s132, 1
    %p136 = scmp.eq.s32.totalorder %s14, 1
    %p137 = scmp.ne.s32.totalorder %s132, %s134
    %p138 = scmp.eq.s32.totalorder %s14, 0
    %p139 = por %p137, %p138
    %p140 = scmp.ne.s32.totalorder %s132, %s134
    %p141 = scmp.eq.s32.totalorder %s19, 1
    %p142 = por %p140, %p141
    %p143 = scmp.ne.s32.totalorder %s134, %s135
    %p144 = scmp.eq.s32.totalorder %s19, 0
    %p145 = por %p143, %p144
    %p146 = scmp.ne.s32.totalorder %s134, %s135
    %p147 = scmp.eq.s32.totalorder %s20, 1
    %p148 = por %p146, %p147
    %p150 = scmp.ne.s32.totalorder %s135, %s149
    %p151 = scmp.eq.s32.totalorder %s20, 0
    %p152 = por %p150, %p151
    %s154 = sadd.s32 %s153, 1
    %p157 = scmp.eq.s32.totalorder %s14, 1
    %p158 = scmp.ne.s32.totalorder %s153, %s155
    %p159 = scmp.eq.s32.totalorder %s14, 0
    %p160 = por %p158, %p159
    %p161 = scmp.ne.s32.totalorder %s153, %s155
    %p162 = scmp.eq.s32.totalorder %s19, 1
    %p163 = por %p161, %p162
    %p164 = scmp.ne.s32.totalorder %s155, %s156
    %p165 = scmp.eq.s32.totalorder %s19, 0
    %p166 = por %p164, %p165
    %p167 = scmp.ne.s32.totalorder %s155, %s156
    %p168 = scmp.eq.s32.totalorder %s20, 1
    %p169 = por %p167, %p168
    %p171 = scmp.ne.s32.totalorder %s156, %s170
    %p172 = scmp.eq.s32.totalorder %s20, 0
    %p173 = por %p171, %p172
    %s175 = sadd.s32 %s174, 1
    %p178 = scmp.eq.s32.totalorder %s14, 1
    %p179 = scmp.ne.s32.totalorder %s174, %s176
    %p180 = scmp.eq.s32.totalorder %s14, 0
    %p181 = por %p179, %p180
    %p182 = scmp.ne.s32.totalorder %s174, %s176
    %p183 = scmp.eq.s32.totalorder %s19, 1
    %p184 = por %p182, %p183
    %p185 = scmp.ne.s32.totalorder %s176, %s177
    %p186 = scmp.eq.s32.totalorder %s19, 0
    %p187 = por %p185, %p186
    %p188 = scmp.ne.s32.totalorder %s176, %s177
    %p189 = scmp.eq.s32.totalorder %s20, 1
    %p190 = por %p188, %p189
    %p192 = scmp.ne.s32.totalorder %s177, %s191
    %p193 = scmp.eq.s32.totalorder %s20, 0
    %p194 = por %p192, %p193
    %s195 = ssub.s32 %s14, %s21
    %p196 = scmp.eq.s32.totalorder %s195, 0
    %s198 = sadd.s32 %s197, 1
    %s199 = scalar_select %p196, %s197, %s198
    %p202 = pneg %p196
    %p203 = scmp.eq.s32.totalorder %s14, 1
    %p204 = por %p202, %p203
    %p205 = scmp.ne.s32.totalorder %s197, %s200
    %p206 = scmp.eq.s32.totalorder %s14, 0
    %p207 = por %p205, %p206
    %p208 = scmp.ne.s32.totalorder %s197, %s200
    %p209 = scmp.eq.s32.totalorder %s19, 1
    %p210 = por %p208, %p209
    %p211 = scmp.ne.s32.totalorder %s200, %s201
    %p212 = scmp.eq.s32.totalorder %s19, 0
    %p213 = por %p211, %p212
    %p214 = scmp.ne.s32.totalorder %s200, %s201
    %p215 = scmp.eq.s32.totalorder %s20, 1
    %p216 = por %p214, %p215
    %p218 = scmp.ne.s32.totalorder %s201, %s217
    %p219 = scmp.eq.s32.totalorder %s20, 0
    %p220 = por %p218, %p219
    %p221 = scmp.le.s32.totalorder 1, %s14
    %p222 = scmp.lt.s32.totalorder %s14, 3
    %p223 = pnand %p221, %p222
    %p224 = pneg %p223
    // Predicated region
    $region9: #{cnn_forward_pallas.1} parent=5 // pred_check
      _
    $region10: #{cnn_forward_pallas.1} parent=5 // pred_check_branch
      %226 = sbr.rel (%p223) target = $region12
    $region11: #{cnn_forward_pallas.1} parent=5 // pred_region
      %s227 = ssub.s32 %s14, 1
      // Predicated region
      $region13: #{cnn_forward_pallas.1} parent=11 // pred_check
        %p228 = pneg %p61
      $region14: #{cnn_forward_pallas.1} parent=11 // pred_check_branch
        %230 = sbr.rel (%p228) target = $region16
      $region15: #{cnn_forward_pallas.1} parent=11 // pred_region
        _
      $region16: #{cnn_forward_pallas.1} parent=11 // pred_fallthru
        _
      // Predicated region
      $region17: #{cnn_forward_pallas.1} parent=11 // pred_check
        %p231 = pneg %p82
      $region18: #{cnn_forward_pallas.1} parent=11 // pred_check_branch
        %233 = sbr.rel (%p231) target = $region20
      $region19: #{cnn_forward_pallas.1} parent=11 // pred_region
        _
      $region20: #{cnn_forward_pallas.1} parent=11 // pred_fallthru
        _
      // Predicated region
      $region21: #{cnn_forward_pallas.1} parent=11 // pred_check
        %p234 = pneg %p103
      $region22: #{cnn_forward_pallas.1} parent=11 // pred_check_branch
        %236 = sbr.rel (%p234) target = $region24
      $region23: #{cnn_forward_pallas.1} parent=11 // pred_region
        _
      $region24: #{cnn_forward_pallas.1} parent=11 // pred_fallthru
        _
      // Predicated region
      $region25: #{cnn_forward_pallas.1} parent=11 // pred_check
        %p237 = pneg %p124
      $region26: #{cnn_forward_pallas.1} parent=11 // pred_check_branch
        %239 = sbr.rel (%p237) target = $region28
      $region27: #{cnn_forward_pallas.1} parent=11 // pred_region
        _
      $region28: #{cnn_forward_pallas.1} parent=11 // pred_fallthru
        _
      // Predicated region
      $region29: #{cnn_forward_pallas.1} parent=11 // pred_check
        %p240 = pneg %p145
      $region30: #{cnn_forward_pallas.1} parent=11 // pred_check_branch
        %242 = sbr.rel (%p240) target = $region32
      $region31: #{cnn_forward_pallas.1} parent=11 // pred_region
        _
      $region32: #{cnn_forward_pallas.1} parent=11 // pred_fallthru
        _
      // Predicated region
      $region33: #{cnn_forward_pallas.1} parent=11 // pred_check
        %p243 = pneg %p166
      $region34: #{cnn_forward_pallas.1} parent=11 // pred_check_branch
        %245 = sbr.rel (%p243) target = $region36
      $region35: #{cnn_forward_pallas.1} parent=11 // pred_region
        _
      $region36: #{cnn_forward_pallas.1} parent=11 // pred_fallthru
        _
      // Predicated region
      $region37: #{cnn_forward_pallas.1} parent=11 // pred_check
        %p246 = pneg %p187
      $region38: #{cnn_forward_pallas.1} parent=11 // pred_check_branch
        %248 = sbr.rel (%p246) target = $region40
      $region39: #{cnn_forward_pallas.1} parent=11 // pred_region
        _
      $region40: #{cnn_forward_pallas.1} parent=11 // pred_fallthru
        _
    $region12: #{cnn_forward_pallas.1} parent=5 // pred_fallthru
      _
    %p249 = scmp.lt.s32.totalorder %s14, 2
    // Predicated region
    $region41: #{cnn_forward_pallas.1} parent=5 // pred_check
      %p250 = pneg %p249
    $region42: #{cnn_forward_pallas.1} parent=5 // pred_check_branch
      %252 = sbr.rel (%p250) target = $region44
    $region43: #{cnn_forward_pallas.1} parent=5 // pred_region
      // Predicated region
      $region45: #{cnn_forward_pallas.1} parent=43 // pred_check
        %p253 = pneg %p34
      $region46: #{cnn_forward_pallas.1} parent=43 // pred_check_branch
        %255 = sbr.rel (%p253) target = $region48
      $region47: #{cnn_forward_pallas.1} parent=43 // pred_region
        %p256 = scmp.lt.s32.totalorder %s14, 1
        %s257 = scalar_select %p256, %s14, 1
        %s258 = smul.addr %s257, 41
        %s259 = smul.addr %s258, 8
        %s260 = scalar_lea.vmem %s0, %s259
      $region48: #{cnn_forward_pallas.1} parent=43 // pred_fallthru
        _
    $region44: #{cnn_forward_pallas.1} parent=5 // pred_fallthru
      _
    %p261 = scmp.le.s32.totalorder 1, %s14
    %p262 = scmp.lt.s32.totalorder %s14, 3
    %p263 = pnand %p261, %p262
    %p264 = pneg %p263
    // Predicated region
    $region49: #{cnn_forward_pallas.1} parent=5 // pred_check
      _
    $region50: #{cnn_forward_pallas.1} parent=5 // pred_check_branch
      %266 = sbr.rel (%p263) target = $region52
    $region51: #{cnn_forward_pallas.1} parent=5 // pred_region
      %s267 = ssub.s32 %s14, 1
      %p268 = scmp.lt.s32.totalorder %s19, 1
      %s269 = scalar_select %p268, %s19, 1
      %s270 = smul.addr %s269, 41
      %s271 = smul.addr %s270, 8
      %s272 = scalar_lea.vmem %s0, %s271
      %p273 = pneg %p40
      %p274 = pneg %p37
      %p275 = pneg %p61
      %p276 = pneg %p58
      %p277 = pneg %p82
      %p278 = pneg %p79
      %p279 = pneg %p103
      %p280 = pneg %p100
      %p281 = pneg %p124
      %p282 = pneg %p121
      %p283 = pneg %p145
      %p284 = pneg %p142
      %p285 = pneg %p166
      %p286 = pneg %p163
      %p287 = pneg %p187
      %p288 = pneg %p184
      %p289 = pneg %p213
      %p290 = pneg %p210
      %p291 = scmp.lt.s32.totalorder %s19, 1
      %s292 = scalar_select %p291, %s19, 1
      %s293 = smul.addr %s292, 41
      %s294 = smul.addr %s293, 8
      %s295 = scalar_lea.vmem %s8, %s294
      %p296 = scmp.lt.s32.totalorder %s19, 1
      %s297 = scalar_select %p296, %s19, 1
      %s298 = smul.addr %s297, 41
      %s299 = smul.addr %s298, 8
      %s300 = scalar_lea.vmem %s0, %s299
      %p301 = scmp.lt.s32.totalorder %s19, 1
      %s302 = scalar_select %p301, %s19, 1
      %s303 = smul.addr %s302, 41
      %s304 = smul.addr %s303, 8
      %s305 = scalar_lea.vmem %s8, %s304
      %v307 = vld [vmem:[%s1] sm:$0xff]
      %v308 = vld [vmem:[%s1 + $0x8] sm:$0xff]
      %v309 = vld [vmem:[%s1 + $0x10] sm:$0xff]
      %v310 = vld [vmem:[%s1 + $0x18] sm:$0xff]
      %v311 = vld [vmem:[%s1 + $0x20] sm:$0xff]
      %v312 = vld [vmem:[%s1 + $0x28] sm:$0xff]
      %v313 = vld [vmem:[%s1 + $0x30] sm:$0xff]
      %v314 = vld [vmem:[%s1 + $0x38] sm:$0xff]
      %v315 = vld [vmem:[%s1 + $0x40] sm:$0xff]
      %v316 = vld [vmem:[%s1 + $0x48] sm:$0xff]
      %v317 = vld [vmem:[%s1 + $0x50] sm:$0xff]
      %v318 = vld [vmem:[%s1 + $0x58] sm:$0xff]
      %v319 = vld [vmem:[%s1 + $0x60] sm:$0xff]
      %v320 = vld [vmem:[%s1 + $0x68] sm:$0xff]
      %v321 = vld [vmem:[%s1 + $0x70] sm:$0xff]
      %v322 = vld [vmem:[%s1 + $0x78] sm:$0xff]
      %v323 = vld [vmem:[%s1 + $0x80] sm:$0xff]
      %v324 = vld [vmem:[%s1 + $0x88] sm:$0xff]
      %v325 = vld [vmem:[%s1 + $0x90] sm:$0xff]
      %v326 = vld [vmem:[%s1 + $0x98] sm:$0xff]
      %v327 = vld [vmem:[%s1 + $0xa0] sm:$0xff]
      %v328 = vld [vmem:[%s1 + $0xa8] sm:$0xff]
      %v329 = vld [vmem:[%s1 + $0xb0] sm:$0xff]
      %v330 = vld [vmem:[%s1 + $0xb8] sm:$0xff]
      %v331 = vld [vmem:[%s1 + $0xc0] sm:$0xff]
      %v332 = vld [vmem:[%s1 + $0xc8] sm:$0xff]
      %v333 = vld [vmem:[%s1 + $0xd0] sm:$0xff]
      %v334 = vld [vmem:[%s1 + $0xd8] sm:$0xff]
      %v335 = vld [vmem:[%s1 + $0xe0] sm:$0xff]
      %v336 = vld [vmem:[%s1 + $0xe8] sm:$0xff]
      %v337 = vld [vmem:[%s1 + $0xf0] sm:$0xff]
      %v338 = vld [vmem:[%s1 + $0xf8] sm:$0xff]
      %v339 = vld [vmem:[%s1 + $0x100] sm:$0xff]
      %v340 = vld [vmem:[%s1 + $0x108] sm:$0xff]
      %v341 = vld [vmem:[%s1 + $0x110] sm:$0xff]
      %v342 = vld [vmem:[%s1 + $0x118] sm:$0xff]
      %v343 = vld [vmem:[%s1 + $0x120] sm:$0xff]
      %v344 = vld [vmem:[%s1 + $0x128] sm:$0xff]
      %v345 = vld [vmem:[%s1 + $0x130] sm:$0xff]
      %v346 = vld [vmem:[%s1 + $0x138] sm:$0xff]
      %v347 = vld [vmem:[%s1 + $0x140] sm:$0xff]
      %v348 = vld [vmem:[%s300] sm:$0xff]
      %v349 = vld [vmem:[%s300 + $0x8] sm:$0xff]
      %v350 = vld [vmem:[%s300 + $0x10] sm:$0xff]
      %v351 = vld [vmem:[%s300 + $0x18] sm:$0xff]
      %v352 = vld [vmem:[%s300 + $0x20] sm:$0xff]
      %v353 = vld [vmem:[%s300 + $0x28] sm:$0xff]
      %v354 = vld [vmem:[%s300 + $0x30] sm:$0xff]
      %v355 = vld [vmem:[%s300 + $0x38] sm:$0xff]
      %v356 = vld [vmem:[%s300 + $0x40] sm:$0xff]
      %v357 = vld [vmem:[%s300 + $0x48] sm:$0xff]
      %v358 = vld [vmem:[%s300 + $0x50] sm:$0xff]
      %v359 = vld [vmem:[%s300 + $0x58] sm:$0xff]
      %v360 = vld [vmem:[%s300 + $0x60] sm:$0xff]
      %v361 = vld [vmem:[%s300 + $0x68] sm:$0xff]
      %v362 = vld [vmem:[%s300 + $0x70] sm:$0xff]
      %v363 = vld [vmem:[%s300 + $0x78] sm:$0xff]
      %v364 = vld [vmem:[%s300 + $0x80] sm:$0xff]
      %v365 = vld [vmem:[%s300 + $0x88] sm:$0xff]
      %v366 = vld [vmem:[%s300 + $0x90] sm:$0xff]
      %v367 = vld [vmem:[%s300 + $0x98] sm:$0xff]
      %v368 = vld [vmem:[%s300 + $0xa0] sm:$0xff]
      %v369 = vld [vmem:[%s300 + $0xa8] sm:$0xff]
      %v370 = vld [vmem:[%s300 + $0xb0] sm:$0xff]
      %v371 = vld [vmem:[%s300 + $0xb8] sm:$0xff]
      %v372 = vld [vmem:[%s300 + $0xc0] sm:$0xff]
      %v373 = vld [vmem:[%s300 + $0xc8] sm:$0xff]
      %v374 = vld [vmem:[%s300 + $0xd0] sm:$0xff]
      %v375 = vld [vmem:[%s300 + $0xd8] sm:$0xff]
      %v376 = vld [vmem:[%s300 + $0xe0] sm:$0xff]
      %v377 = vld [vmem:[%s300 + $0xe8] sm:$0xff]
      %v378 = vld [vmem:[%s300 + $0xf0] sm:$0xff]
      %v379 = vld [vmem:[%s300 + $0xf8] sm:$0xff]
      %v380 = vld [vmem:[%s300 + $0x100] sm:$0xff]
      %v381 = vld [vmem:[%s300 + $0x108] sm:$0xff]
      %v382 = vld [vmem:[%s300 + $0x110] sm:$0xff]
      %v383 = vld [vmem:[%s300 + $0x118] sm:$0xff]
      %v384 = vld [vmem:[%s300 + $0x120] sm:$0xff]
      %v385 = vld [vmem:[%s300 + $0x128] sm:$0xff]
      %v386 = vld [vmem:[%s300 + $0x130] sm:$0xff]
      %v387 = vld [vmem:[%s300 + $0x138] sm:$0xff]
      %v388 = vld [vmem:[%s300 + $0x140] sm:$0xff]
      %390 = vset.pattern.permute.xlu0 0
      %391 = vperm.xlu0 %390, %v348
      %v392 = vpop.permute.xlu0 %391
      %395 = vset.pattern.permute.xlu0 0
      %396 = vperm.xlu0 %395, %v349
      %v397 = vpop.permute.xlu0 %396
      %400 = vset.pattern.permute.xlu0 0
      %401 = vperm.xlu0 %400, %v350
      %v402 = vpop.permute.xlu0 %401
      %405 = vset.pattern.permute.xlu0 0
      %406 = vperm.xlu0 %405, %v351
      %v407 = vpop.permute.xlu0 %406
      %410 = vset.pattern.permute.xlu0 0
      %411 = vperm.xlu0 %410, %v352
      %v412 = vpop.permute.xlu0 %411
      %415 = vset.pattern.permute.xlu0 0
      %416 = vperm.xlu0 %415, %v353
      %v417 = vpop.permute.xlu0 %416
      %420 = vset.pattern.permute.xlu0 0
      %421 = vperm.xlu0 %420, %v354
      %v422 = vpop.permute.xlu0 %421
      %425 = vset.pattern.permute.xlu0 0
      %426 = vperm.xlu0 %425, %v355
      %v427 = vpop.permute.xlu0 %426
      %430 = vset.pattern.permute.xlu0 0
      %431 = vperm.xlu0 %430, %v356
      %v432 = vpop.permute.xlu0 %431
      %435 = vset.pattern.permute.xlu0 0
      %436 = vperm.xlu0 %435, %v357
      %v437 = vpop.permute.xlu0 %436
      %440 = vset.pattern.permute.xlu0 0
      %441 = vperm.xlu0 %440, %v358
      %v442 = vpop.permute.xlu0 %441
      %445 = vset.pattern.permute.xlu0 0
      %446 = vperm.xlu0 %445, %v359
      %v447 = vpop.permute.xlu0 %446
      %450 = vset.pattern.permute.xlu0 0
      %451 = vperm.xlu0 %450, %v360
      %v452 = vpop.permute.xlu0 %451
      %455 = vset.pattern.permute.xlu0 0
      %456 = vperm.xlu0 %455, %v361
      %v457 = vpop.permute.xlu0 %456
      %460 = vset.pattern.permute.xlu0 0
      %461 = vperm.xlu0 %460, %v362
      %v462 = vpop.permute.xlu0 %461
      %465 = vset.pattern.permute.xlu0 0
      %466 = vperm.xlu0 %465, %v363
      %v467 = vpop.permute.xlu0 %466
      %470 = vset.pattern.permute.xlu0 0
      %471 = vperm.xlu0 %470, %v364
      %v472 = vpop.permute.xlu0 %471
      %475 = vset.pattern.permute.xlu0 0
      %476 = vperm.xlu0 %475, %v365
      %v477 = vpop.permute.xlu0 %476
      %480 = vset.pattern.permute.xlu0 0
      %481 = vperm.xlu0 %480, %v366
      %v482 = vpop.permute.xlu0 %481
      %485 = vset.pattern.permute.xlu0 0
      %486 = vperm.xlu0 %485, %v367
      %v487 = vpop.permute.xlu0 %486
      %490 = vset.pattern.permute.xlu0 0
      %491 = vperm.xlu0 %490, %v368
      %v492 = vpop.permute.xlu0 %491
      %495 = vset.pattern.permute.xlu0 0
      %496 = vperm.xlu0 %495, %v369
      %v497 = vpop.permute.xlu0 %496
      %500 = vset.pattern.permute.xlu0 0
      %501 = vperm.xlu0 %500, %v370
      %v502 = vpop.permute.xlu0 %501
      %505 = vset.pattern.permute.xlu0 0
      %506 = vperm.xlu0 %505, %v371
      %v507 = vpop.permute.xlu0 %506
      %510 = vset.pattern.permute.xlu0 0
      %511 = vperm.xlu0 %510, %v372
      %v512 = vpop.permute.xlu0 %511
      %515 = vset.pattern.permute.xlu0 0
      %516 = vperm.xlu0 %515, %v373
      %v517 = vpop.permute.xlu0 %516
      %520 = vset.pattern.permute.xlu0 0
      %521 = vperm.xlu0 %520, %v374
      %v522 = vpop.permute.xlu0 %521
      %525 = vset.pattern.permute.xlu0 0
      %526 = vperm.xlu0 %525, %v375
      %v527 = vpop.permute.xlu0 %526
      %530 = vset.pattern.permute.xlu0 0
      %531 = vperm.xlu0 %530, %v376
      %v532 = vpop.permute.xlu0 %531
      %535 = vset.pattern.permute.xlu0 0
      %536 = vperm.xlu0 %535, %v377
      %v537 = vpop.permute.xlu0 %536
      %540 = vset.pattern.permute.xlu0 0
      %541 = vperm.xlu0 %540, %v378
      %v542 = vpop.permute.xlu0 %541
      %545 = vset.pattern.permute.xlu0 0
      %546 = vperm.xlu0 %545, %v379
      %v547 = vpop.permute.xlu0 %546
      %550 = vset.pattern.permute.xlu0 0
      %551 = vperm.xlu0 %550, %v380
      %v552 = vpop.permute.xlu0 %551
      %555 = vset.pattern.permute.xlu0 0
      %556 = vperm.xlu0 %555, %v381
      %v557 = vpop.permute.xlu0 %556
      %560 = vset.pattern.permute.xlu0 0
      %561 = vperm.xlu0 %560, %v382
      %v562 = vpop.permute.xlu0 %561
      %565 = vset.pattern.permute.xlu0 0
      %566 = vperm.xlu0 %565, %v383
      %v567 = vpop.permute.xlu0 %566
      %570 = vset.pattern.permute.xlu0 0
      %571 = vperm.xlu0 %570, %v384
      %v572 = vpop.permute.xlu0 %571
      %575 = vset.pattern.permute.xlu0 0
      %576 = vperm.xlu0 %575, %v385
      %v577 = vpop.permute.xlu0 %576
      %580 = vset.pattern.permute.xlu0 0
      %581 = vperm.xlu0 %580, %v386
      %v582 = vpop.permute.xlu0 %581
      %585 = vset.pattern.permute.xlu0 0
      %586 = vperm.xlu0 %585, %v387
      %v587 = vpop.permute.xlu0 %586
      %590 = vset.pattern.permute.xlu0 0
      %591 = vperm.xlu0 %590, %v388
      %v592 = vpop.permute.xlu0 %591
      %v594 = vld [vmem:[%s2] sm:$0x1]
      %v596 = vlaneseq
      %v597 = vshrl.u32 %v596, 7
      %v598 = vsub.s32 0, %v597
      %v599 = vrot.slane %v594, %v598
      %v601 = vmul.f32 %v392, %v599
      %v602 = vmul.f32 %v397, %v599
      %v603 = vmul.f32 %v402, %v599
      %v604 = vmul.f32 %v407, %v599
      %v605 = vmul.f32 %v412, %v599
      %v606 = vmul.f32 %v417, %v599
      %v607 = vmul.f32 %v422, %v599
      %v608 = vmul.f32 %v427, %v599
      %v609 = vmul.f32 %v432, %v599
      %v610 = vmul.f32 %v437, %v599
      %v611 = vmul.f32 %v442, %v599
      %v612 = vmul.f32 %v447, %v599
      %v613 = vmul.f32 %v452, %v599
      %v614 = vmul.f32 %v457, %v599
      %v615 = vmul.f32 %v462, %v599
      %v616 = vmul.f32 %v467, %v599
      %v617 = vmul.f32 %v472, %v599
      %v618 = vmul.f32 %v477, %v599
      %v619 = vmul.f32 %v482, %v599
      %v620 = vmul.f32 %v487, %v599
      %v621 = vmul.f32 %v492, %v599
      %v622 = vmul.f32 %v497, %v599
      %v623 = vmul.f32 %v502, %v599
      %v624 = vmul.f32 %v507, %v599
      %v625 = vmul.f32 %v512, %v599
      %v626 = vmul.f32 %v517, %v599
      %v627 = vmul.f32 %v522, %v599
      %v628 = vmul.f32 %v527, %v599
      %v629 = vmul.f32 %v532, %v599
      %v630 = vmul.f32 %v537, %v599
      %v631 = vmul.f32 %v542, %v599
      %v632 = vmul.f32 %v547, %v599
      %v633 = vmul.f32 %v552, %v599
      %v634 = vmul.f32 %v557, %v599
      %v635 = vmul.f32 %v562, %v599
      %v636 = vmul.f32 %v567, %v599
      %v637 = vmul.f32 %v572, %v599
      %v638 = vmul.f32 %v577, %v599
      %v639 = vmul.f32 %v582, %v599
      %v640 = vmul.f32 %v587, %v599
      %v641 = vmul.f32 %v592, %v599
      %v642 = vadd.f32 %v601, 0.0
      %v643 = vadd.f32 %v602, 0.0
      %v644 = vadd.f32 %v603, 0.0
      %v645 = vadd.f32 %v604, 0.0
      %v646 = vadd.f32 %v605, 0.0
      %v647 = vadd.f32 %v606, 0.0
      %v648 = vadd.f32 %v607, 0.0
      %v649 = vadd.f32 %v608, 0.0
      %v650 = vadd.f32 %v609, 0.0
      %v651 = vadd.f32 %v610, 0.0
      %v652 = vadd.f32 %v611, 0.0
      %v653 = vadd.f32 %v612, 0.0
      %v654 = vadd.f32 %v613, 0.0
      %v655 = vadd.f32 %v614, 0.0
      %v656 = vadd.f32 %v615, 0.0
      %v657 = vadd.f32 %v616, 0.0
      %v658 = vadd.f32 %v617, 0.0
      %v659 = vadd.f32 %v618, 0.0
      %v660 = vadd.f32 %v619, 0.0
      %v661 = vadd.f32 %v620, 0.0
      %v662 = vadd.f32 %v621, 0.0
      %v663 = vadd.f32 %v622, 0.0
      %v664 = vadd.f32 %v623, 0.0
      %v665 = vadd.f32 %v624, 0.0
      %v666 = vadd.f32 %v625, 0.0
      %v667 = vadd.f32 %v626, 0.0
      %v668 = vadd.f32 %v627, 0.0
      %v669 = vadd.f32 %v628, 0.0
      %v670 = vadd.f32 %v629, 0.0
      %v671 = vadd.f32 %v630, 0.0
      %v672 = vadd.f32 %v631, 0.0
      %v673 = vadd.f32 %v632, 0.0
      %v674 = vadd.f32 %v633, 0.0
      %v675 = vadd.f32 %v634, 0.0
      %v676 = vadd.f32 %v635, 0.0
      %v677 = vadd.f32 %v636, 0.0
      %v678 = vadd.f32 %v637, 0.0
      %v679 = vadd.f32 %v638, 0.0
      %v680 = vadd.f32 %v639, 0.0
      %v681 = vadd.f32 %v640, 0.0
      %v682 = vadd.f32 %v641, 0.0
      %v683 = vrot.slane %v392, 1
      %v684 = vrot.slane %v397, 1
      %v685 = vrot.slane %v402, 1
      %v686 = vrot.slane %v407, 1
      %v687 = vrot.slane %v412, 1
      %v688 = vrot.slane %v417, 1
      %v689 = vrot.slane %v422, 1
      %v690 = vrot.slane %v427, 1
      %v691 = vrot.slane %v432, 1
      %v692 = vrot.slane %v437, 1
      %v693 = vrot.slane %v442, 1
      %v694 = vrot.slane %v447, 1
      %v695 = vrot.slane %v452, 1
      %v696 = vrot.slane %v457, 1
      %v697 = vrot.slane %v462, 1
      %v698 = vrot.slane %v467, 1
      %v699 = vrot.slane %v472, 1
      %v700 = vrot.slane %v477, 1
      %v701 = vrot.slane %v482, 1
      %v702 = vrot.slane %v487, 1
      %v703 = vrot.slane %v492, 1
      %v704 = vrot.slane %v497, 1
      %v705 = vrot.slane %v502, 1
      %v706 = vrot.slane %v507, 1
      %v707 = vrot.slane %v512, 1
      %v708 = vrot.slane %v517, 1
      %v709 = vrot.slane %v522, 1
      %v710 = vrot.slane %v527, 1
      %v711 = vrot.slane %v532, 1
      %v712 = vrot.slane %v537, 1
      %v713 = vrot.slane %v542, 1
      %v714 = vrot.slane %v547, 1
      %v715 = vrot.slane %v552, 1
      %v716 = vrot.slane %v557, 1
      %v717 = vrot.slane %v562, 1
      %v718 = vrot.slane %v567, 1
      %v719 = vrot.slane %v572, 1
      %v720 = vrot.slane %v577, 1
      %v721 = vrot.slane %v582, 1
      %v722 = vrot.slane %v587, 1
      %v723 = vrot.slane %v592, 1
      %v724 = vlaneseq
      %v725 = vshrl.u32 %v724, 7
      %vm726 = vcmp.lt.s32.totalorder %v725, 7
      %v727 = vsel %vm726, %v722, %v723
      %v728 = vsel %vm726, %v721, %v722
      %v729 = vsel %vm726, %v720, %v721
      %v730 = vsel %vm726, %v719, %v720
      %v731 = vsel %vm726, %v718, %v719
      %v732 = vsel %vm726, %v717, %v718
      %v733 = vsel %vm726, %v716, %v717
      %v734 = vsel %vm726, %v715, %v716
      %v735 = vsel %vm726, %v714, %v715
      %v736 = vsel %vm726, %v713, %v714
      %v737 = vsel %vm726, %v712, %v713
      %v738 = vsel %vm726, %v711, %v712
      %v739 = vsel %vm726, %v710, %v711
      %v740 = vsel %vm726, %v709, %v710
      %v741 = vsel %vm726, %v708, %v709
      %v742 = vsel %vm726, %v707, %v708
      %v743 = vsel %vm726, %v706, %v707
      %v744 = vsel %vm726, %v705, %v706
      %v745 = vsel %vm726, %v704, %v705
      %v746 = vsel %vm726, %v703, %v704
      %v747 = vsel %vm726, %v702, %v703
      %v748 = vsel %vm726, %v701, %v702
      %v749 = vsel %vm726, %v700, %v701
      %v750 = vsel %vm726, %v699, %v700
      %v751 = vsel %vm726, %v698, %v699
      %v752 = vsel %vm726, %v697, %v698
      %v753 = vsel %vm726, %v696, %v697
      %v754 = vsel %vm726, %v695, %v696
      %v755 = vsel %vm726, %v694, %v695
      %v756 = vsel %vm726, %v693, %v694
      %v757 = vsel %vm726, %v692, %v693
      %v758 = vsel %vm726, %v691, %v692
      %v759 = vsel %vm726, %v690, %v691
      %v760 = vsel %vm726, %v689, %v690
      %v761 = vsel %vm726, %v688, %v689
      %v762 = vsel %vm726, %v687, %v688
      %v763 = vsel %vm726, %v686, %v687
      %v764 = vsel %vm726, %v685, %v686
      %v765 = vsel %vm726, %v684, %v685
      %v766 = vsel %vm726, %v683, %v684
      %v767 = vsel %vm726, %v723, %v683
      %s768 = scalar_lea.vmem %s2, 1
      %v769 = vld [vmem:[%s768] sm:$0x1]
      %v771 = vlaneseq
      %v772 = vshrl.u32 %v771, 7
      %v773 = vsub.s32 0, %v772
      %v774 = vrot.slane %v769, %v773
      %v776 = vmul.f32 %v766, %v774
      %v777 = vmul.f32 %v765, %v774
      %v778 = vmul.f32 %v764, %v774
      %v779 = vmul.f32 %v763, %v774
      %v780 = vmul.f32 %v762, %v774
      %v781 = vmul.f32 %v761, %v774
      %v782 = vmul.f32 %v760, %v774
      %v783 = vmul.f32 %v759, %v774
      %v784 = vmul.f32 %v758, %v774
      %v785 = vmul.f32 %v757, %v774
      %v786 = vmul.f32 %v756, %v774
      %v787 = vmul.f32 %v755, %v774
      %v788 = vmul.f32 %v754, %v774
      %v789 = vmul.f32 %v753, %v774
      %v790 = vmul.f32 %v752, %v774
      %v791 = vmul.f32 %v751, %v774
      %v792 = vmul.f32 %v750, %v774
      %v793 = vmul.f32 %v749, %v774
      %v794 = vmul.f32 %v748, %v774
      %v795 = vmul.f32 %v747, %v774
      %v796 = vmul.f32 %v746, %v774
      %v797 = vmul.f32 %v745, %v774
      %v798 = vmul.f32 %v744, %v774
      %v799 = vmul.f32 %v743, %v774
      %v800 = vmul.f32 %v742, %v774
      %v801 = vmul.f32 %v741, %v774
      %v802 = vmul.f32 %v740, %v774
      %v803 = vmul.f32 %v739, %v774
      %v804 = vmul.f32 %v738, %v774
      %v805 = vmul.f32 %v737, %v774
      %v806 = vmul.f32 %v736, %v774
      %v807 = vmul.f32 %v735, %v774
      %v808 = vmul.f32 %v734, %v774
      %v809 = vmul.f32 %v733, %v774
      %v810 = vmul.f32 %v732, %v774
      %v811 = vmul.f32 %v731, %v774
      %v812 = vmul.f32 %v730, %v774
      %v813 = vmul.f32 %v729, %v774
      %v814 = vmul.f32 %v728, %v774
      %v815 = vmul.f32 %v727, %v774
      %v816 = vmul.f32 %v767, %v774
      %v817 = vadd.f32 %v642, %v776
      %v818 = vadd.f32 %v643, %v777
      %v819 = vadd.f32 %v644, %v778
      %v820 = vadd.f32 %v645, %v779
      %v821 = vadd.f32 %v646, %v780
      %v822 = vadd.f32 %v647, %v781
      %v823 = vadd.f32 %v648, %v782
      %v824 = vadd.f32 %v649, %v783
      %v825 = vadd.f32 %v650, %v784
      %v826 = vadd.f32 %v651, %v785
      %v827 = vadd.f32 %v652, %v786
      %v828 = vadd.f32 %v653, %v787
      %v829 = vadd.f32 %v654, %v788
      %v830 = vadd.f32 %v655, %v789
      %v831 = vadd.f32 %v656, %v790
      %v832 = vadd.f32 %v657, %v791
      %v833 = vadd.f32 %v658, %v792
      %v834 = vadd.f32 %v659, %v793
      %v835 = vadd.f32 %v660, %v794
      %v836 = vadd.f32 %v661, %v795
      %v837 = vadd.f32 %v662, %v796
      %v838 = vadd.f32 %v663, %v797
      %v839 = vadd.f32 %v664, %v798
      %v840 = vadd.f32 %v665, %v799
      %v841 = vadd.f32 %v666, %v800
      %v842 = vadd.f32 %v667, %v801
      %v843 = vadd.f32 %v668, %v802
      %v844 = vadd.f32 %v669, %v803
      %v845 = vadd.f32 %v670, %v804
      %v846 = vadd.f32 %v671, %v805
      %v847 = vadd.f32 %v672, %v806
      %v848 = vadd.f32 %v673, %v807
      %v849 = vadd.f32 %v674, %v808
      %v850 = vadd.f32 %v675, %v809
      %v851 = vadd.f32 %v676, %v810
      %v852 = vadd.f32 %v677, %v811
      %v853 = vadd.f32 %v678, %v812
      %v854 = vadd.f32 %v679, %v813
      %v855 = vadd.f32 %v680, %v814
      %v856 = vadd.f32 %v681, %v815
      %v857 = vadd.f32 %v682, %v816
      %v858 = vrot.slane %v392, 2
      %v859 = vrot.slane %v397, 2
      %v860 = vrot.slane %v402, 2
      %v861 = vrot.slane %v407, 2
      %v862 = vrot.slane %v412, 2
      %v863 = vrot.slane %v417, 2
      %v864 = vrot.slane %v422, 2
      %v865 = vrot.slane %v427, 2
      %v866 = vrot.slane %v432, 2
      %v867 = vrot.slane %v437, 2
      %v868 = vrot.slane %v442, 2
      %v869 = vrot.slane %v447, 2
      %v870 = vrot.slane %v452, 2
      %v871 = vrot.slane %v457, 2
      %v872 = vrot.slane %v462, 2
      %v873 = vrot.slane %v467, 2
      %v874 = vrot.slane %v472, 2
      %v875 = vrot.slane %v477, 2
      %v876 = vrot.slane %v482, 2
      %v877 = vrot.slane %v487, 2
      %v878 = vrot.slane %v492, 2
      %v879 = vrot.slane %v497, 2
      %v880 = vrot.slane %v502, 2
      %v881 = vrot.slane %v507, 2
      %v882 = vrot.slane %v512, 2
      %v883 = vrot.slane %v517, 2
      %v884 = vrot.slane %v522, 2
      %v885 = vrot.slane %v527, 2
      %v886 = vrot.slane %v532, 2
      %v887 = vrot.slane %v537, 2
      %v888 = vrot.slane %v542, 2
      %v889 = vrot.slane %v547, 2
      %v890 = vrot.slane %v552, 2
      %v891 = vrot.slane %v557, 2
      %v892 = vrot.slane %v562, 2
      %v893 = vrot.slane %v567, 2
      %v894 = vrot.slane %v572, 2
      %v895 = vrot.slane %v577, 2
      %v896 = vrot.slane %v582, 2
      %v897 = vrot.slane %v587, 2
      %v898 = vrot.slane %v592, 2
      %vm899 = vcmp.lt.s32.totalorder %v725, 6
      %v900 = vsel %vm899, %v897, %v898
      %v901 = vsel %vm899, %v896, %v897
      %v902 = vsel %vm899, %v895, %v896
      %v903 = vsel %vm899, %v894, %v895
      %v904 = vsel %vm899, %v893, %v894
      %v905 = vsel %vm899, %v892, %v893
      %v906 = vsel %vm899, %v891, %v892
      %v907 = vsel %vm899, %v890, %v891
      %v908 = vsel %vm899, %v889, %v890
      %v909 = vsel %vm899, %v888, %v889
      %v910 = vsel %vm899, %v887, %v888
      %v911 = vsel %vm899, %v886, %v887
      %v912 = vsel %vm899, %v885, %v886
      %v913 = vsel %vm899, %v884, %v885
      %v914 = vsel %vm899, %v883, %v884
      %v915 = vsel %vm899, %v882, %v883
      %v916 = vsel %vm899, %v881, %v882
      %v917 = vsel %vm899, %v880, %v881
      %v918 = vsel %vm899, %v879, %v880
      %v919 = vsel %vm899, %v878, %v879
      %v920 = vsel %vm899, %v877, %v878
      %v921 = vsel %vm899, %v876, %v877
      %v922 = vsel %vm899, %v875, %v876
      %v923 = vsel %vm899, %v874, %v875
      %v924 = vsel %vm899, %v873, %v874
      %v925 = vsel %vm899, %v872, %v873
      %v926 = vsel %vm899, %v871, %v872
      %v927 = vsel %vm899, %v870, %v871
      %v928 = vsel %vm899, %v869, %v870
      %v929 = vsel %vm899, %v868, %v869
      %v930 = vsel %vm899, %v867, %v868
      %v931 = vsel %vm899, %v866, %v867
      %v932 = vsel %vm899, %v865, %v866
      %v933 = vsel %vm899, %v864, %v865
      %v934 = vsel %vm899, %v863, %v864
      %v935 = vsel %vm899, %v862, %v863
      %v936 = vsel %vm899, %v861, %v862
      %v937 = vsel %vm899, %v860, %v861
      %v938 = vsel %vm899, %v859, %v860
      %v939 = vsel %vm899, %v858, %v859
      %v940 = vsel %vm899, %v898, %v858
      %s941 = scalar_lea.vmem %s2, 2
      %v942 = vld [vmem:[%s941] sm:$0x1]
      %v944 = vlaneseq
      %v945 = vshrl.u32 %v944, 7
      %v946 = vsub.s32 0, %v945
      %v947 = vrot.slane %v942, %v946
      %v949 = vmul.f32 %v939, %v947
      %v950 = vmul.f32 %v938, %v947
      %v951 = vmul.f32 %v937, %v947
      %v952 = vmul.f32 %v936, %v947
      %v953 = vmul.f32 %v935, %v947
      %v954 = vmul.f32 %v934, %v947
      %v955 = vmul.f32 %v933, %v947
      %v956 = vmul.f32 %v932, %v947
      %v957 = vmul.f32 %v931, %v947
      %v958 = vmul.f32 %v930, %v947
      %v959 = vmul.f32 %v929, %v947
      %v960 = vmul.f32 %v928, %v947
      %v961 = vmul.f32 %v927, %v947
      %v962 = vmul.f32 %v926, %v947
      %v963 = vmul.f32 %v925, %v947
      %v964 = vmul.f32 %v924, %v947
      %v965 = vmul.f32 %v923, %v947
      %v966 = vmul.f32 %v922, %v947
      %v967 = vmul.f32 %v921, %v947
      %v968 = vmul.f32 %v920, %v947
      %v969 = vmul.f32 %v919, %v947
      %v970 = vmul.f32 %v918, %v947
      %v971 = vmul.f32 %v917, %v947
      %v972 = vmul.f32 %v916, %v947
      %v973 = vmul.f32 %v915, %v947
      %v974 = vmul.f32 %v914, %v947
      %v975 = vmul.f32 %v913, %v947
      %v976 = vmul.f32 %v912, %v947
      %v977 = vmul.f32 %v911, %v947
      %v978 = vmul.f32 %v910, %v947
      %v979 = vmul.f32 %v909, %v947
      %v980 = vmul.f32 %v908, %v947
      %v981 = vmul.f32 %v907, %v947
      %v982 = vmul.f32 %v906, %v947
      %v983 = vmul.f32 %v905, %v947
      %v984 = vmul.f32 %v904, %v947
      %v985 = vmul.f32 %v903, %v947
      %v986 = vmul.f32 %v902, %v947
      %v987 = vmul.f32 %v901, %v947
      %v988 = vmul.f32 %v900, %v947
      %v989 = vmul.f32 %v940, %v947
      %v990 = vadd.f32 %v817, %v949
      %v991 = vadd.f32 %v818, %v950
      %v992 = vadd.f32 %v819, %v951
      %v993 = vadd.f32 %v820, %v952
      %v994 = vadd.f32 %v821, %v953
      %v995 = vadd.f32 %v822, %v954
      %v996 = vadd.f32 %v823, %v955
      %v997 = vadd.f32 %v824, %v956
      %v998 = vadd.f32 %v825, %v957
      %v999 = vadd.f32 %v826, %v958
      %v1000 = vadd.f32 %v827, %v959
      %v1001 = vadd.f32 %v828, %v960
      %v1002 = vadd.f32 %v829, %v961
      %v1003 = vadd.f32 %v830, %v962
      %v1004 = vadd.f32 %v831, %v963
      %v1005 = vadd.f32 %v832, %v964
      %v1006 = vadd.f32 %v833, %v965
      %v1007 = vadd.f32 %v834, %v966
      %v1008 = vadd.f32 %v835, %v967
      %v1009 = vadd.f32 %v836, %v968
      %v1010 = vadd.f32 %v837, %v969
      %v1011 = vadd.f32 %v838, %v970
      %v1012 = vadd.f32 %v839, %v971
      %v1013 = vadd.f32 %v840, %v972
      %v1014 = vadd.f32 %v841, %v973
      %v1015 = vadd.f32 %v842, %v974
      %v1016 = vadd.f32 %v843, %v975
      %v1017 = vadd.f32 %v844, %v976
      %v1018 = vadd.f32 %v845, %v977
      %v1019 = vadd.f32 %v846, %v978
      %v1020 = vadd.f32 %v847, %v979
      %v1021 = vadd.f32 %v848, %v980
      %v1022 = vadd.f32 %v849, %v981
      %v1023 = vadd.f32 %v850, %v982
      %v1024 = vadd.f32 %v851, %v983
      %v1025 = vadd.f32 %v852, %v984
      %v1026 = vadd.f32 %v853, %v985
      %v1027 = vadd.f32 %v854, %v986
      %v1028 = vadd.f32 %v855, %v987
      %v1029 = vadd.f32 %v856, %v988
      %v1030 = vadd.f32 %v857, %v989
      %s1031 = scalar_lea.vmem %s2, 3
      %v1032 = vld [vmem:[%s1031] sm:$0x1]
      %v1034 = vlaneseq
      %v1035 = vshrl.u32 %v1034, 7
      %v1036 = vsub.s32 0, %v1035
      %v1037 = vrot.slane %v1032, %v1036
      %v1039 = vmul.f32 %v937, %v1037
      %v1040 = vmul.f32 %v936, %v1037
      %v1041 = vmul.f32 %v935, %v1037
      %v1042 = vmul.f32 %v934, %v1037
      %v1043 = vmul.f32 %v933, %v1037
      %v1044 = vmul.f32 %v932, %v1037
      %v1045 = vmul.f32 %v931, %v1037
      %v1046 = vmul.f32 %v930, %v1037
      %v1047 = vmul.f32 %v929, %v1037
      %v1048 = vmul.f32 %v928, %v1037
      %v1049 = vmul.f32 %v927, %v1037
      %v1050 = vmul.f32 %v926, %v1037
      %v1051 = vmul.f32 %v925, %v1037
      %v1052 = vmul.f32 %v924, %v1037
      %v1053 = vmul.f32 %v923, %v1037
      %v1054 = vmul.f32 %v922, %v1037
      %v1055 = vmul.f32 %v921, %v1037
      %v1056 = vmul.f32 %v920, %v1037
      %v1057 = vmul.f32 %v919, %v1037
      %v1058 = vmul.f32 %v918, %v1037
      %v1059 = vmul.f32 %v917, %v1037
      %v1060 = vmul.f32 %v916, %v1037
      %v1061 = vmul.f32 %v915, %v1037
      %v1062 = vmul.f32 %v914, %v1037
      %v1063 = vmul.f32 %v913, %v1037
      %v1064 = vmul.f32 %v912, %v1037
      %v1065 = vmul.f32 %v911, %v1037
      %v1066 = vmul.f32 %v910, %v1037
      %v1067 = vmul.f32 %v909, %v1037
      %v1068 = vmul.f32 %v908, %v1037
      %v1069 = vmul.f32 %v907, %v1037
      %v1070 = vmul.f32 %v906, %v1037
      %v1071 = vmul.f32 %v905, %v1037
      %v1072 = vmul.f32 %v904, %v1037
      %v1073 = vmul.f32 %v903, %v1037
      %v1074 = vmul.f32 %v902, %v1037
      %v1075 = vmul.f32 %v901, %v1037
      %v1076 = vmul.f32 %v900, %v1037
      %v1077 = vmul.f32 %v940, %v1037
      %v1078 = vmul.f32 %v939, %v1037
      %v1079 = vmul.f32 %v938, %v1037
      %v1080 = vadd.f32 %v990, %v1039
      %v1081 = vadd.f32 %v991, %v1040
      %v1082 = vadd.f32 %v992, %v1041
      %v1083 = vadd.f32 %v993, %v1042
      %v1084 = vadd.f32 %v994, %v1043
      %v1085 = vadd.f32 %v995, %v1044
      %v1086 = vadd.f32 %v996, %v1045
      %v1087 = vadd.f32 %v997, %v1046
      %v1088 = vadd.f32 %v998, %v1047
      %v1089 = vadd.f32 %v999, %v1048
      %v1090 = vadd.f32 %v1000, %v1049
      %v1091 = vadd.f32 %v1001, %v1050
      %v1092 = vadd.f32 %v1002, %v1051
      %v1093 = vadd.f32 %v1003, %v1052
      %v1094 = vadd.f32 %v1004, %v1053
      %v1095 = vadd.f32 %v1005, %v1054
      %v1096 = vadd.f32 %v1006, %v1055
      %v1097 = vadd.f32 %v1007, %v1056
      %v1098 = vadd.f32 %v1008, %v1057
      %v1099 = vadd.f32 %v1009, %v1058
      %v1100 = vadd.f32 %v1010, %v1059
      %v1101 = vadd.f32 %v1011, %v1060
      %v1102 = vadd.f32 %v1012, %v1061
      %v1103 = vadd.f32 %v1013, %v1062
      %v1104 = vadd.f32 %v1014, %v1063
      %v1105 = vadd.f32 %v1015, %v1064
      %v1106 = vadd.f32 %v1016, %v1065
      %v1107 = vadd.f32 %v1017, %v1066
      %v1108 = vadd.f32 %v1018, %v1067
      %v1109 = vadd.f32 %v1019, %v1068
      %v1110 = vadd.f32 %v1020, %v1069
      %v1111 = vadd.f32 %v1021, %v1070
      %v1112 = vadd.f32 %v1022, %v1071
      %v1113 = vadd.f32 %v1023, %v1072
      %v1114 = vadd.f32 %v1024, %v1073
      %v1115 = vadd.f32 %v1025, %v1074
      %v1116 = vadd.f32 %v1026, %v1075
      %v1117 = vadd.f32 %v1027, %v1076
      %v1118 = vadd.f32 %v1028, %v1077
      %v1119 = vadd.f32 %v1029, %v1078
      %v1120 = vadd.f32 %v1030, %v1079
      %v1121 = vrot.slane %v392, 3
      %v1122 = vrot.slane %v397, 3
      %v1123 = vrot.slane %v402, 3
      %v1124 = vrot.slane %v407, 3
      %v1125 = vrot.slane %v412, 3
      %v1126 = vrot.slane %v417, 3
      %v1127 = vrot.slane %v422, 3
      %v1128 = vrot.slane %v427, 3
      %v1129 = vrot.slane %v432, 3
      %v1130 = vrot.slane %v437, 3
      %v1131 = vrot.slane %v442, 3
      %v1132 = vrot.slane %v447, 3
      %v1133 = vrot.slane %v452, 3
      %v1134 = vrot.slane %v457, 3
      %v1135 = vrot.slane %v462, 3
      %v1136 = vrot.slane %v467, 3
      %v1137 = vrot.slane %v472, 3
      %v1138 = vrot.slane %v477, 3
      %v1139 = vrot.slane %v482, 3
      %v1140 = vrot.slane %v487, 3
      %v1141 = vrot.slane %v492, 3
      %v1142 = vrot.slane %v497, 3
      %v1143 = vrot.slane %v502, 3
      %v1144 = vrot.slane %v507, 3
      %v1145 = vrot.slane %v512, 3
      %v1146 = vrot.slane %v517, 3
      %v1147 = vrot.slane %v522, 3
      %v1148 = vrot.slane %v527, 3
      %v1149 = vrot.slane %v532, 3
      %v1150 = vrot.slane %v537, 3
      %v1151 = vrot.slane %v542, 3
      %v1152 = vrot.slane %v547, 3
      %v1153 = vrot.slane %v552, 3
      %v1154 = vrot.slane %v557, 3
      %v1155 = vrot.slane %v562, 3
      %v1156 = vrot.slane %v567, 3
      %v1157 = vrot.slane %v572, 3
      %v1158 = vrot.slane %v577, 3
      %v1159 = vrot.slane %v582, 3
      %v1160 = vrot.slane %v587, 3
      %v1161 = vrot.slane %v592, 3
      %vm1162 = vcmp.lt.s32.totalorder %v725, 5
      %v1163 = vsel %vm1162, %v1160, %v1161
      %v1164 = vsel %vm1162, %v1159, %v1160
      %v1165 = vsel %vm1162, %v1158, %v1159
      %v1166 = vsel %vm1162, %v1157, %v1158
      %v1167 = vsel %vm1162, %v1156, %v1157
      %v1168 = vsel %vm1162, %v1155, %v1156
      %v1169 = vsel %vm1162, %v1154, %v1155
      %v1170 = vsel %vm1162, %v1153, %v1154
      %v1171 = vsel %vm1162, %v1152, %v1153
      %v1172 = vsel %vm1162, %v1151, %v1152
      %v1173 = vsel %vm1162, %v1150, %v1151
      %v1174 = vsel %vm1162, %v1149, %v1150
      %v1175 = vsel %vm1162, %v1148, %v1149
      %v1176 = vsel %vm1162, %v1147, %v1148
      %v1177 = vsel %vm1162, %v1146, %v1147
      %v1178 = vsel %vm1162, %v1145, %v1146
      %v1179 = vsel %vm1162, %v1144, %v1145
      %v1180 = vsel %vm1162, %v1143, %v1144
      %v1181 = vsel %vm1162, %v1142, %v1143
      %v1182 = vsel %vm1162, %v1141, %v1142
      %v1183 = vsel %vm1162, %v1140, %v1141
      %v1184 = vsel %vm1162, %v1139, %v1140
      %v1185 = vsel %vm1162, %v1138, %v1139
      %v1186 = vsel %vm1162, %v1137, %v1138
      %v1187 = vsel %vm1162, %v1136, %v1137
      %v1188 = vsel %vm1162, %v1135, %v1136
      %v1189 = vsel %vm1162, %v1134, %v1135
      %v1190 = vsel %vm1162, %v1133, %v1134
      %v1191 = vsel %vm1162, %v1132, %v1133
      %v1192 = vsel %vm1162, %v1131, %v1132
      %v1193 = vsel %vm1162, %v1130, %v1131
      %v1194 = vsel %vm1162, %v1129, %v1130
      %v1195 = vsel %vm1162, %v1128, %v1129
      %v1196 = vsel %vm1162, %v1127, %v1128
      %v1197 = vsel %vm1162, %v1126, %v1127
      %v1198 = vsel %vm1162, %v1125, %v1126
      %v1199 = vsel %vm1162, %v1124, %v1125
      %v1200 = vsel %vm1162, %v1123, %v1124
      %v1201 = vsel %vm1162, %v1122, %v1123
      %v1202 = vsel %vm1162, %v1121, %v1122
      %v1203 = vsel %vm1162, %v1161, %v1121
      %s1204 = scalar_lea.vmem %s2, 4
      %v1205 = vld [vmem:[%s1204] sm:$0x1]
      %v1207 = vlaneseq
      %v1208 = vshrl.u32 %v1207, 7
      %v1209 = vsub.s32 0, %v1208
      %v1210 = vrot.slane %v1205, %v1209
      %v1212 = vmul.f32 %v1200, %v1210
      %v1213 = vmul.f32 %v1199, %v1210
      %v1214 = vmul.f32 %v1198, %v1210
      %v1215 = vmul.f32 %v1197, %v1210
      %v1216 = vmul.f32 %v1196, %v1210
      %v1217 = vmul.f32 %v1195, %v1210
      %v1218 = vmul.f32 %v1194, %v1210
      %v1219 = vmul.f32 %v1193, %v1210
      %v1220 = vmul.f32 %v1192, %v1210
      %v1221 = vmul.f32 %v1191, %v1210
      %v1222 = vmul.f32 %v1190, %v1210
      %v1223 = vmul.f32 %v1189, %v1210
      %v1224 = vmul.f32 %v1188, %v1210
      %v1225 = vmul.f32 %v1187, %v1210
      %v1226 = vmul.f32 %v1186, %v1210
      %v1227 = vmul.f32 %v1185, %v1210
      %v1228 = vmul.f32 %v1184, %v1210
      %v1229 = vmul.f32 %v1183, %v1210
      %v1230 = vmul.f32 %v1182, %v1210
      %v1231 = vmul.f32 %v1181, %v1210
      %v1232 = vmul.f32 %v1180, %v1210
      %v1233 = vmul.f32 %v1179, %v1210
      %v1234 = vmul.f32 %v1178, %v1210
      %v1235 = vmul.f32 %v1177, %v1210
      %v1236 = vmul.f32 %v1176, %v1210
      %v1237 = vmul.f32 %v1175, %v1210
      %v1238 = vmul.f32 %v1174, %v1210
      %v1239 = vmul.f32 %v1173, %v1210
      %v1240 = vmul.f32 %v1172, %v1210
      %v1241 = vmul.f32 %v1171, %v1210
      %v1242 = vmul.f32 %v1170, %v1210
      %v1243 = vmul.f32 %v1169, %v1210
      %v1244 = vmul.f32 %v1168, %v1210
      %v1245 = vmul.f32 %v1167, %v1210
      %v1246 = vmul.f32 %v1166, %v1210
      %v1247 = vmul.f32 %v1165, %v1210
      %v1248 = vmul.f32 %v1164, %v1210
      %v1249 = vmul.f32 %v1163, %v1210
      %v1250 = vmul.f32 %v1203, %v1210
      %v1251 = vmul.f32 %v1202, %v1210
      %v1252 = vmul.f32 %v1201, %v1210
      %v1253 = vadd.f32 %v1080, %v1212
      %v1254 = vadd.f32 %v1081, %v1213
      %v1255 = vadd.f32 %v1082, %v1214
      %v1256 = vadd.f32 %v1083, %v1215
      %v1257 = vadd.f32 %v1084, %v1216
      %v1258 = vadd.f32 %v1085, %v1217
      %v1259 = vadd.f32 %v1086, %v1218
      %v1260 = vadd.f32 %v1087, %v1219
      %v1261 = vadd.f32 %v1088, %v1220
      %v1262 = vadd.f32 %v1089, %v1221
      %v1263 = vadd.f32 %v1090, %v1222
      %v1264 = vadd.f32 %v1091, %v1223
      %v1265 = vadd.f32 %v1092, %v1224
      %v1266 = vadd.f32 %v1093, %v1225
      %v1267 = vadd.f32 %v1094, %v1226
      %v1268 = vadd.f32 %v1095, %v1227
      %v1269 = vadd.f32 %v1096, %v1228
      %v1270 = vadd.f32 %v1097, %v1229
      %v1271 = vadd.f32 %v1098, %v1230
      %v1272 = vadd.f32 %v1099, %v1231
      %v1273 = vadd.f32 %v1100, %v1232
      %v1274 = vadd.f32 %v1101, %v1233
      %v1275 = vadd.f32 %v1102, %v1234
      %v1276 = vadd.f32 %v1103, %v1235
      %v1277 = vadd.f32 %v1104, %v1236
      %v1278 = vadd.f32 %v1105, %v1237
      %v1279 = vadd.f32 %v1106, %v1238
      %v1280 = vadd.f32 %v1107, %v1239
      %v1281 = vadd.f32 %v1108, %v1240
      %v1282 = vadd.f32 %v1109, %v1241
      %v1283 = vadd.f32 %v1110, %v1242
      %v1284 = vadd.f32 %v1111, %v1243
      %v1285 = vadd.f32 %v1112, %v1244
      %v1286 = vadd.f32 %v1113, %v1245
      %v1287 = vadd.f32 %v1114, %v1246
      %v1288 = vadd.f32 %v1115, %v1247
      %v1289 = vadd.f32 %v1116, %v1248
      %v1290 = vadd.f32 %v1117, %v1249
      %v1291 = vadd.f32 %v1118, %v1250
      %v1292 = vadd.f32 %v1119, %v1251
      %v1293 = vadd.f32 %v1120, %v1252
      %v1294 = vrot.slane %v392, 4
      %v1295 = vrot.slane %v397, 4
      %v1296 = vrot.slane %v402, 4
      %v1297 = vrot.slane %v407, 4
      %v1298 = vrot.slane %v412, 4
      %v1299 = vrot.slane %v417, 4
      %v1300 = vrot.slane %v422, 4
      %v1301 = vrot.slane %v427, 4
      %v1302 = vrot.slane %v432, 4
      %v1303 = vrot.slane %v437, 4
      %v1304 = vrot.slane %v442, 4
      %v1305 = vrot.slane %v447, 4
      %v1306 = vrot.slane %v452, 4
      %v1307 = vrot.slane %v457, 4
      %v1308 = vrot.slane %v462, 4
      %v1309 = vrot.slane %v467, 4
      %v1310 = vrot.slane %v472, 4
      %v1311 = vrot.slane %v477, 4
      %v1312 = vrot.slane %v482, 4
      %v1313 = vrot.slane %v487, 4
      %v1314 = vrot.slane %v492, 4
      %v1315 = vrot.slane %v497, 4
      %v1316 = vrot.slane %v502, 4
      %v1317 = vrot.slane %v507, 4
      %v1318 = vrot.slane %v512, 4
      %v1319 = vrot.slane %v517, 4
      %v1320 = vrot.slane %v522, 4
      %v1321 = vrot.slane %v527, 4
      %v1322 = vrot.slane %v532, 4
      %v1323 = vrot.slane %v537, 4
      %v1324 = vrot.slane %v542, 4
      %v1325 = vrot.slane %v547, 4
      %v1326 = vrot.slane %v552, 4
      %v1327 = vrot.slane %v557, 4
      %v1328 = vrot.slane %v562, 4
      %v1329 = vrot.slane %v567, 4
      %v1330 = vrot.slane %v572, 4
      %v1331 = vrot.slane %v577, 4
      %v1332 = vrot.slane %v582, 4
      %v1333 = vrot.slane %v587, 4
      %v1334 = vrot.slane %v592, 4
      %vm1335 = vcmp.lt.s32.totalorder %v725, 4
      %v1336 = vsel %vm1335, %v1333, %v1334
      %v1337 = vsel %vm1335, %v1332, %v1333
      %v1338 = vsel %vm1335, %v1331, %v1332
      %v1339 = vsel %vm1335, %v1330, %v1331
      %v1340 = vsel %vm1335, %v1329, %v1330
      %v1341 = vsel %vm1335, %v1328, %v1329
      %v1342 = vsel %vm1335, %v1327, %v1328
      %v1343 = vsel %vm1335, %v1326, %v1327
      %v1344 = vsel %vm1335, %v1325, %v1326
      %v1345 = vsel %vm1335, %v1324, %v1325
      %v1346 = vsel %vm1335, %v1323, %v1324
      %v1347 = vsel %vm1335, %v1322, %v1323
      %v1348 = vsel %vm1335, %v1321, %v1322
      %v1349 = vsel %vm1335, %v1320, %v1321
      %v1350 = vsel %vm1335, %v1319, %v1320
      %v1351 = vsel %vm1335, %v1318, %v1319
      %v1352 = vsel %vm1335, %v1317, %v1318
      %v1353 = vsel %vm1335, %v1316, %v1317
      %v1354 = vsel %vm1335, %v1315, %v1316
      %v1355 = vsel %vm1335, %v1314, %v1315
      %v1356 = vsel %vm1335, %v1313, %v1314
      %v1357 = vsel %vm1335, %v1312, %v1313
      %v1358 = vsel %vm1335, %v1311, %v1312
      %v1359 = vsel %vm1335, %v1310, %v1311
      %v1360 = vsel %vm1335, %v1309, %v1310
      %v1361 = vsel %vm1335, %v1308, %v1309
      %v1362 = vsel %vm1335, %v1307, %v1308
      %v1363 = vsel %vm1335, %v1306, %v1307
      %v1364 = vsel %vm1335, %v1305, %v1306
      %v1365 = vsel %vm1335, %v1304, %v1305
      %v1366 = vsel %vm1335, %v1303, %v1304
      %v1367 = vsel %vm1335, %v1302, %v1303
      %v1368 = vsel %vm1335, %v1301, %v1302
      %v1369 = vsel %vm1335, %v1300, %v1301
      %v1370 = vsel %vm1335, %v1299, %v1300
      %v1371 = vsel %vm1335, %v1298, %v1299
      %v1372 = vsel %vm1335, %v1297, %v1298
      %v1373 = vsel %vm1335, %v1296, %v1297
      %v1374 = vsel %vm1335, %v1295, %v1296
      %v1375 = vsel %vm1335, %v1294, %v1295
      %v1376 = vsel %vm1335, %v1334, %v1294
      %s1377 = scalar_lea.vmem %s2, 5
      %v1378 = vld [vmem:[%s1377] sm:$0x1]
      %v1380 = vlaneseq
      %v1381 = vshrl.u32 %v1380, 7
      %v1382 = vsub.s32 0, %v1381
      %v1383 = vrot.slane %v1378, %v1382
      %v1385 = vmul.f32 %v1373, %v1383
      %v1386 = vmul.f32 %v1372, %v1383
      %v1387 = vmul.f32 %v1371, %v1383
      %v1388 = vmul.f32 %v1370, %v1383
      %v1389 = vmul.f32 %v1369, %v1383
      %v1390 = vmul.f32 %v1368, %v1383
      %v1391 = vmul.f32 %v1367, %v1383
      %v1392 = vmul.f32 %v1366, %v1383
      %v1393 = vmul.f32 %v1365, %v1383
      %v1394 = vmul.f32 %v1364, %v1383
      %v1395 = vmul.f32 %v1363, %v1383
      %v1396 = vmul.f32 %v1362, %v1383
      %v1397 = vmul.f32 %v1361, %v1383
      %v1398 = vmul.f32 %v1360, %v1383
      %v1399 = vmul.f32 %v1359, %v1383
      %v1400 = vmul.f32 %v1358, %v1383
      %v1401 = vmul.f32 %v1357, %v1383
      %v1402 = vmul.f32 %v1356, %v1383
      %v1403 = vmul.f32 %v1355, %v1383
      %v1404 = vmul.f32 %v1354, %v1383
      %v1405 = vmul.f32 %v1353, %v1383
      %v1406 = vmul.f32 %v1352, %v1383
      %v1407 = vmul.f32 %v1351, %v1383
      %v1408 = vmul.f32 %v1350, %v1383
      %v1409 = vmul.f32 %v1349, %v1383
      %v1410 = vmul.f32 %v1348, %v1383
      %v1411 = vmul.f32 %v1347, %v1383
      %v1412 = vmul.f32 %v1346, %v1383
      %v1413 = vmul.f32 %v1345, %v1383
      %v1414 = vmul.f32 %v1344, %v1383
      %v1415 = vmul.f32 %v1343, %v1383
      %v1416 = vmul.f32 %v1342, %v1383
      %v1417 = vmul.f32 %v1341, %v1383
      %v1418 = vmul.f32 %v1340, %v1383
      %v1419 = vmul.f32 %v1339, %v1383
      %v1420 = vmul.f32 %v1338, %v1383
      %v1421 = vmul.f32 %v1337, %v1383
      %v1422 = vmul.f32 %v1336, %v1383
      %v1423 = vmul.f32 %v1376, %v1383
      %v1424 = vmul.f32 %v1375, %v1383
      %v1425 = vmul.f32 %v1374, %v1383
      %v1426 = vadd.f32 %v1253, %v1385
      %v1427 = vadd.f32 %v1254, %v1386
      %v1428 = vadd.f32 %v1255, %v1387
      %v1429 = vadd.f32 %v1256, %v1388
      %v1430 = vadd.f32 %v1257, %v1389
      %v1431 = vadd.f32 %v1258, %v1390
      %v1432 = vadd.f32 %v1259, %v1391
      %v1433 = vadd.f32 %v1260, %v1392
      %v1434 = vadd.f32 %v1261, %v1393
      %v1435 = vadd.f32 %v1262, %v1394
      %v1436 = vadd.f32 %v1263, %v1395
      %v1437 = vadd.f32 %v1264, %v1396
      %v1438 = vadd.f32 %v1265, %v1397
      %v1439 = vadd.f32 %v1266, %v1398
      %v1440 = vadd.f32 %v1267, %v1399
      %v1441 = vadd.f32 %v1268, %v1400
      %v1442 = vadd.f32 %v1269, %v1401
      %v1443 = vadd.f32 %v1270, %v1402
      %v1444 = vadd.f32 %v1271, %v1403
      %v1445 = vadd.f32 %v1272, %v1404
      %v1446 = vadd.f32 %v1273, %v1405
      %v1447 = vadd.f32 %v1274, %v1406
      %v1448 = vadd.f32 %v1275, %v1407
      %v1449 = vadd.f32 %v1276, %v1408
      %v1450 = vadd.f32 %v1277, %v1409
      %v1451 = vadd.f32 %v1278, %v1410
      %v1452 = vadd.f32 %v1279, %v1411
      %v1453 = vadd.f32 %v1280, %v1412
      %v1454 = vadd.f32 %v1281, %v1413
      %v1455 = vadd.f32 %v1282, %v1414
      %v1456 = vadd.f32 %v1283, %v1415
      %v1457 = vadd.f32 %v1284, %v1416
      %v1458 = vadd.f32 %v1285, %v1417
      %v1459 = vadd.f32 %v1286, %v1418
      %v1460 = vadd.f32 %v1287, %v1419
      %v1461 = vadd.f32 %v1288, %v1420
      %v1462 = vadd.f32 %v1289, %v1421
      %v1463 = vadd.f32 %v1290, %v1422
      %v1464 = vadd.f32 %v1291, %v1423
      %v1465 = vadd.f32 %v1292, %v1424
      %v1466 = vadd.f32 %v1293, %v1425
      %s1467 = scalar_lea.vmem %s2, 6
      %v1468 = vld [vmem:[%s1467] sm:$0x1]
      %v1470 = vlaneseq
      %v1471 = vshrl.u32 %v1470, 7
      %v1472 = vsub.s32 0, %v1471
      %v1473 = vrot.slane %v1468, %v1472
      %v1475 = vmul.f32 %v1371, %v1473
      %v1476 = vmul.f32 %v1370, %v1473
      %v1477 = vmul.f32 %v1369, %v1473
      %v1478 = vmul.f32 %v1368, %v1473
      %v1479 = vmul.f32 %v1367, %v1473
      %v1480 = vmul.f32 %v1366, %v1473
      %v1481 = vmul.f32 %v1365, %v1473
      %v1482 = vmul.f32 %v1364, %v1473
      %v1483 = vmul.f32 %v1363, %v1473
      %v1484 = vmul.f32 %v1362, %v1473
      %v1485 = vmul.f32 %v1361, %v1473
      %v1486 = vmul.f32 %v1360, %v1473
      %v1487 = vmul.f32 %v1359, %v1473
      %v1488 = vmul.f32 %v1358, %v1473
      %v1489 = vmul.f32 %v1357, %v1473
      %v1490 = vmul.f32 %v1356, %v1473
      %v1491 = vmul.f32 %v1355, %v1473
      %v1492 = vmul.f32 %v1354, %v1473
      %v1493 = vmul.f32 %v1353, %v1473
      %v1494 = vmul.f32 %v1352, %v1473
      %v1495 = vmul.f32 %v1351, %v1473
      %v1496 = vmul.f32 %v1350, %v1473
      %v1497 = vmul.f32 %v1349, %v1473
      %v1498 = vmul.f32 %v1348, %v1473
      %v1499 = vmul.f32 %v1347, %v1473
      %v1500 = vmul.f32 %v1346, %v1473
      %v1501 = vmul.f32 %v1345, %v1473
      %v1502 = vmul.f32 %v1344, %v1473
      %v1503 = vmul.f32 %v1343, %v1473
      %v1504 = vmul.f32 %v1342, %v1473
      %v1505 = vmul.f32 %v1341, %v1473
      %v1506 = vmul.f32 %v1340, %v1473
      %v1507 = vmul.f32 %v1339, %v1473
      %v1508 = vmul.f32 %v1338, %v1473
      %v1509 = vmul.f32 %v1337, %v1473
      %v1510 = vmul.f32 %v1336, %v1473
      %v1511 = vmul.f32 %v1376, %v1473
      %v1512 = vmul.f32 %v1375, %v1473
      %v1513 = vmul.f32 %v1374, %v1473
      %v1514 = vmul.f32 %v1373, %v1473
      %v1515 = vmul.f32 %v1372, %v1473
      %v1516 = vadd.f32 %v1426, %v1475
      %v1517 = vadd.f32 %v1427, %v1476
      %v1518 = vadd.f32 %v1428, %v1477
      %v1519 = vadd.f32 %v1429, %v1478
      %v1520 = vadd.f32 %v1430, %v1479
      %v1521 = vadd.f32 %v1431, %v1480
      %v1522 = vadd.f32 %v1432, %v1481
      %v1523 = vadd.f32 %v1433, %v1482
      %v1524 = vadd.f32 %v1434, %v1483
      %v1525 = vadd.f32 %v1435, %v1484
      %v1526 = vadd.f32 %v1436, %v1485
      %v1527 = vadd.f32 %v1437, %v1486
      %v1528 = vadd.f32 %v1438, %v1487
      %v1529 = vadd.f32 %v1439, %v1488
      %v1530 = vadd.f32 %v1440, %v1489
      %v1531 = vadd.f32 %v1441, %v1490
      %v1532 = vadd.f32 %v1442, %v1491
      %v1533 = vadd.f32 %v1443, %v1492
      %v1534 = vadd.f32 %v1444, %v1493
      %v1535 = vadd.f32 %v1445, %v1494
      %v1536 = vadd.f32 %v1446, %v1495
      %v1537 = vadd.f32 %v1447, %v1496
      %v1538 = vadd.f32 %v1448, %v1497
      %v1539 = vadd.f32 %v1449, %v1498
      %v1540 = vadd.f32 %v1450, %v1499
      %v1541 = vadd.f32 %v1451, %v1500
      %v1542 = vadd.f32 %v1452, %v1501
      %v1543 = vadd.f32 %v1453, %v1502
      %v1544 = vadd.f32 %v1454, %v1503
      %v1545 = vadd.f32 %v1455, %v1504
      %v1546 = vadd.f32 %v1456, %v1505
      %v1547 = vadd.f32 %v1457, %v1506
      %v1548 = vadd.f32 %v1458, %v1507
      %v1549 = vadd.f32 %v1459, %v1508
      %v1550 = vadd.f32 %v1460, %v1509
      %v1551 = vadd.f32 %v1461, %v1510
      %v1552 = vadd.f32 %v1462, %v1511
      %v1553 = vadd.f32 %v1463, %v1512
      %v1554 = vadd.f32 %v1464, %v1513
      %v1555 = vadd.f32 %v1465, %v1514
      %v1556 = vadd.f32 %v1466, %v1515
      %v1557 = vrot.slane %v392, 5
      %v1558 = vrot.slane %v397, 5
      %v1559 = vrot.slane %v402, 5
      %v1560 = vrot.slane %v407, 5
      %v1561 = vrot.slane %v412, 5
      %v1562 = vrot.slane %v417, 5
      %v1563 = vrot.slane %v422, 5
      %v1564 = vrot.slane %v427, 5
      %v1565 = vrot.slane %v432, 5
      %v1566 = vrot.slane %v437, 5
      %v1567 = vrot.slane %v442, 5
      %v1568 = vrot.slane %v447, 5
      %v1569 = vrot.slane %v452, 5
      %v1570 = vrot.slane %v457, 5
      %v1571 = vrot.slane %v462, 5
      %v1572 = vrot.slane %v467, 5
      %v1573 = vrot.slane %v472, 5
      %v1574 = vrot.slane %v477, 5
      %v1575 = vrot.slane %v482, 5
      %v1576 = vrot.slane %v487, 5
      %v1577 = vrot.slane %v492, 5
      %v1578 = vrot.slane %v497, 5
      %v1579 = vrot.slane %v502, 5
      %v1580 = vrot.slane %v507, 5
      %v1581 = vrot.slane %v512, 5
      %v1582 = vrot.slane %v517, 5
      %v1583 = vrot.slane %v522, 5
      %v1584 = vrot.slane %v527, 5
      %v1585 = vrot.slane %v532, 5
      %v1586 = vrot.slane %v537, 5
      %v1587 = vrot.slane %v542, 5
      %v1588 = vrot.slane %v547, 5
      %v1589 = vrot.slane %v552, 5
      %v1590 = vrot.slane %v557, 5
      %v1591 = vrot.slane %v562, 5
      %v1592 = vrot.slane %v567, 5
      %v1593 = vrot.slane %v572, 5
      %v1594 = vrot.slane %v577, 5
      %v1595 = vrot.slane %v582, 5
      %v1596 = vrot.slane %v587, 5
      %v1597 = vrot.slane %v592, 5
      %vm1598 = vcmp.lt.s32.totalorder %v725, 3
      %v1599 = vsel %vm1598, %v1596, %v1597
      %v1600 = vsel %vm1598, %v1595, %v1596
      %v1601 = vsel %vm1598, %v1594, %v1595
      %v1602 = vsel %vm1598, %v1593, %v1594
      %v1603 = vsel %vm1598, %v1592, %v1593
      %v1604 = vsel %vm1598, %v1591, %v1592
      %v1605 = vsel %vm1598, %v1590, %v1591
      %v1606 = vsel %vm1598, %v1589, %v1590
      %v1607 = vsel %vm1598, %v1588, %v1589
      %v1608 = vsel %vm1598, %v1587, %v1588
      %v1609 = vsel %vm1598, %v1586, %v1587
      %v1610 = vsel %vm1598, %v1585, %v1586
      %v1611 = vsel %vm1598, %v1584, %v1585
      %v1612 = vsel %vm1598, %v1583, %v1584
      %v1613 = vsel %vm1598, %v1582, %v1583
      %v1614 = vsel %vm1598, %v1581, %v1582
      %v1615 = vsel %vm1598, %v1580, %v1581
      %v1616 = vsel %vm1598, %v1579, %v1580
      %v1617 = vsel %vm1598, %v1578, %v1579
      %v1618 = vsel %vm1598, %v1577, %v1578
      %v1619 = vsel %vm1598, %v1576, %v1577
      %v1620 = vsel %vm1598, %v1575, %v1576
      %v1621 = vsel %vm1598, %v1574, %v1575
      %v1622 = vsel %vm1598, %v1573, %v1574
      %v1623 = vsel %vm1598, %v1572, %v1573
      %v1624 = vsel %vm1598, %v1571, %v1572
      %v1625 = vsel %vm1598, %v1570, %v1571
      %v1626 = vsel %vm1598, %v1569, %v1570
      %v1627 = vsel %vm1598, %v1568, %v1569
      %v1628 = vsel %vm1598, %v1567, %v1568
      %v1629 = vsel %vm1598, %v1566, %v1567
      %v1630 = vsel %vm1598, %v1565, %v1566
      %v1631 = vsel %vm1598, %v1564, %v1565
      %v1632 = vsel %vm1598, %v1563, %v1564
      %v1633 = vsel %vm1598, %v1562, %v1563
      %v1634 = vsel %vm1598, %v1561, %v1562
      %v1635 = vsel %vm1598, %v1560, %v1561
      %v1636 = vsel %vm1598, %v1559, %v1560
      %v1637 = vsel %vm1598, %v1558, %v1559
      %v1638 = vsel %vm1598, %v1557, %v1558
      %v1639 = vsel %vm1598, %v1597, %v1557
      %s1640 = scalar_lea.vmem %s2, 7
      %v1641 = vld [vmem:[%s1640] sm:$0x1]
      %v1643 = vlaneseq
      %v1644 = vshrl.u32 %v1643, 7
      %v1645 = vsub.s32 0, %v1644
      %v1646 = vrot.slane %v1641, %v1645
      %v1648 = vmul.f32 %v1634, %v1646
      %v1649 = vmul.f32 %v1633, %v1646
      %v1650 = vmul.f32 %v1632, %v1646
      %v1651 = vmul.f32 %v1631, %v1646
      %v1652 = vmul.f32 %v1630, %v1646
      %v1653 = vmul.f32 %v1629, %v1646
      %v1654 = vmul.f32 %v1628, %v1646
      %v1655 = vmul.f32 %v1627, %v1646
      %v1656 = vmul.f32 %v1626, %v1646
      %v1657 = vmul.f32 %v1625, %v1646
      %v1658 = vmul.f32 %v1624, %v1646
      %v1659 = vmul.f32 %v1623, %v1646
      %v1660 = vmul.f32 %v1622, %v1646
      %v1661 = vmul.f32 %v1621, %v1646
      %v1662 = vmul.f32 %v1620, %v1646
      %v1663 = vmul.f32 %v1619, %v1646
      %v1664 = vmul.f32 %v1618, %v1646
      %v1665 = vmul.f32 %v1617, %v1646
      %v1666 = vmul.f32 %v1616, %v1646
      %v1667 = vmul.f32 %v1615, %v1646
      %v1668 = vmul.f32 %v1614, %v1646
      %v1669 = vmul.f32 %v1613, %v1646
      %v1670 = vmul.f32 %v1612, %v1646
      %v1671 = vmul.f32 %v1611, %v1646
      %v1672 = vmul.f32 %v1610, %v1646
      %v1673 = vmul.f32 %v1609, %v1646
      %v1674 = vmul.f32 %v1608, %v1646
      %v1675 = vmul.f32 %v1607, %v1646
      %v1676 = vmul.f32 %v1606, %v1646
      %v1677 = vmul.f32 %v1605, %v1646
      %v1678 = vmul.f32 %v1604, %v1646
      %v1679 = vmul.f32 %v1603, %v1646
      %v1680 = vmul.f32 %v1602, %v1646
      %v1681 = vmul.f32 %v1601, %v1646
      %v1682 = vmul.f32 %v1600, %v1646
      %v1683 = vmul.f32 %v1599, %v1646
      %v1684 = vmul.f32 %v1639, %v1646
      %v1685 = vmul.f32 %v1638, %v1646
      %v1686 = vmul.f32 %v1637, %v1646
      %v1687 = vmul.f32 %v1636, %v1646
      %v1688 = vmul.f32 %v1635, %v1646
      %v1689 = vadd.f32 %v1516, %v1648
      %v1690 = vadd.f32 %v1517, %v1649
      %v1691 = vadd.f32 %v1518, %v1650
      %v1692 = vadd.f32 %v1519, %v1651
      %v1693 = vadd.f32 %v1520, %v1652
      %v1694 = vadd.f32 %v1521, %v1653
      %v1695 = vadd.f32 %v1522, %v1654
      %v1696 = vadd.f32 %v1523, %v1655
      %v1697 = vadd.f32 %v1524, %v1656
      %v1698 = vadd.f32 %v1525, %v1657
      %v1699 = vadd.f32 %v1526, %v1658
      %v1700 = vadd.f32 %v1527, %v1659
      %v1701 = vadd.f32 %v1528, %v1660
      %v1702 = vadd.f32 %v1529, %v1661
      %v1703 = vadd.f32 %v1530, %v1662
      %v1704 = vadd.f32 %v1531, %v1663
      %v1705 = vadd.f32 %v1532, %v1664
      %v1706 = vadd.f32 %v1533, %v1665
      %v1707 = vadd.f32 %v1534, %v1666
      %v1708 = vadd.f32 %v1535, %v1667
      %v1709 = vadd.f32 %v1536, %v1668
      %v1710 = vadd.f32 %v1537, %v1669
      %v1711 = vadd.f32 %v1538, %v1670
      %v1712 = vadd.f32 %v1539, %v1671
      %v1713 = vadd.f32 %v1540, %v1672
      %v1714 = vadd.f32 %v1541, %v1673
      %v1715 = vadd.f32 %v1542, %v1674
      %v1716 = vadd.f32 %v1543, %v1675
      %v1717 = vadd.f32 %v1544, %v1676
      %v1718 = vadd.f32 %v1545, %v1677
      %v1719 = vadd.f32 %v1546, %v1678
      %v1720 = vadd.f32 %v1547, %v1679
      %v1721 = vadd.f32 %v1548, %v1680
      %v1722 = vadd.f32 %v1549, %v1681
      %v1723 = vadd.f32 %v1550, %v1682
      %v1724 = vadd.f32 %v1551, %v1683
      %v1725 = vadd.f32 %v1552, %v1684
      %v1726 = vadd.f32 %v1553, %v1685
      %v1727 = vadd.f32 %v1554, %v1686
      %v1728 = vadd.f32 %v1555, %v1687
      %v1729 = vadd.f32 %v1556, %v1688
      %v1730 = vrot.slane %v392, 6
      %v1731 = vrot.slane %v397, 6
      %v1732 = vrot.slane %v402, 6
      %v1733 = vrot.slane %v407, 6
      %v1734 = vrot.slane %v412, 6
      %v1735 = vrot.slane %v417, 6
      %v1736 = vrot.slane %v422, 6
      %v1737 = vrot.slane %v427, 6
      %v1738 = vrot.slane %v432, 6
      %v1739 = vrot.slane %v437, 6
      %v1740 = vrot.slane %v442, 6
      %v1741 = vrot.slane %v447, 6
      %v1742 = vrot.slane %v452, 6
      %v1743 = vrot.slane %v457, 6
      %v1744 = vrot.slane %v462, 6
      %v1745 = vrot.slane %v467, 6
      %v1746 = vrot.slane %v472, 6
      %v1747 = vrot.slane %v477, 6
      %v1748 = vrot.slane %v482, 6
      %v1749 = vrot.slane %v487, 6
      %v1750 = vrot.slane %v492, 6
      %v1751 = vrot.slane %v497, 6
      %v1752 = vrot.slane %v502, 6
      %v1753 = vrot.slane %v507, 6
      %v1754 = vrot.slane %v512, 6
      %v1755 = vrot.slane %v517, 6
      %v1756 = vrot.slane %v522, 6
      %v1757 = vrot.slane %v527, 6
      %v1758 = vrot.slane %v532, 6
      %v1759 = vrot.slane %v537, 6
      %v1760 = vrot.slane %v542, 6
      %v1761 = vrot.slane %v547, 6
      %v1762 = vrot.slane %v552, 6
      %v1763 = vrot.slane %v557, 6
      %v1764 = vrot.slane %v562, 6
      %v1765 = vrot.slane %v567, 6
      %v1766 = vrot.slane %v572, 6
      %v1767 = vrot.slane %v577, 6
      %v1768 = vrot.slane %v582, 6
      %v1769 = vrot.slane %v587, 6
      %v1770 = vrot.slane %v592, 6
      %vm1771 = vcmp.lt.s32.totalorder %v725, 2
      %v1772 = vsel %vm1771, %v1769, %v1770
      %v1773 = vsel %vm1771, %v1768, %v1769
      %v1774 = vsel %vm1771, %v1767, %v1768
      %v1775 = vsel %vm1771, %v1766, %v1767
      %v1776 = vsel %vm1771, %v1765, %v1766
      %v1777 = vsel %vm1771, %v1764, %v1765
      %v1778 = vsel %vm1771, %v1763, %v1764
      %v1779 = vsel %vm1771, %v1762, %v1763
      %v1780 = vsel %vm1771, %v1761, %v1762
      %v1781 = vsel %vm1771, %v1760, %v1761
      %v1782 = vsel %vm1771, %v1759, %v1760
      %v1783 = vsel %vm1771, %v1758, %v1759
      %v1784 = vsel %vm1771, %v1757, %v1758
      %v1785 = vsel %vm1771, %v1756, %v1757
      %v1786 = vsel %vm1771, %v1755, %v1756
      %v1787 = vsel %vm1771, %v1754, %v1755
      %v1788 = vsel %vm1771, %v1753, %v1754
      %v1789 = vsel %vm1771, %v1752, %v1753
      %v1790 = vsel %vm1771, %v1751, %v1752
      %v1791 = vsel %vm1771, %v1750, %v1751
      %v1792 = vsel %vm1771, %v1749, %v1750
      %v1793 = vsel %vm1771, %v1748, %v1749
      %v1794 = vsel %vm1771, %v1747, %v1748
      %v1795 = vsel %vm1771, %v1746, %v1747
      %v1796 = vsel %vm1771, %v1745, %v1746
      %v1797 = vsel %vm1771, %v1744, %v1745
      %v1798 = vsel %vm1771, %v1743, %v1744
      %v1799 = vsel %vm1771, %v1742, %v1743
      %v1800 = vsel %vm1771, %v1741, %v1742
      %v1801 = vsel %vm1771, %v1740, %v1741
      %v1802 = vsel %vm1771, %v1739, %v1740
      %v1803 = vsel %vm1771, %v1738, %v1739
      %v1804 = vsel %vm1771, %v1737, %v1738
      %v1805 = vsel %vm1771, %v1736, %v1737
      %v1806 = vsel %vm1771, %v1735, %v1736
      %v1807 = vsel %vm1771, %v1734, %v1735
      %v1808 = vsel %vm1771, %v1733, %v1734
      %v1809 = vsel %vm1771, %v1732, %v1733
      %v1810 = vsel %vm1771, %v1731, %v1732
      %v1811 = vsel %vm1771, %v1730, %v1731
      %v1812 = vsel %vm1771, %v1770, %v1730
      %s1813 = scalar_lea.vmem %s2, 8
      %v1814 = vld [vmem:[%s1813] sm:$0x1]
      %v1816 = vlaneseq
      %v1817 = vshrl.u32 %v1816, 7
      %v1818 = vsub.s32 0, %v1817
      %v1819 = vrot.slane %v1814, %v1818
      %v1821 = vmul.f32 %v1807, %v1819
      %v1822 = vmul.f32 %v1806, %v1819
      %v1823 = vmul.f32 %v1805, %v1819
      %v1824 = vmul.f32 %v1804, %v1819
      %v1825 = vmul.f32 %v1803, %v1819
      %v1826 = vmul.f32 %v1802, %v1819
      %v1827 = vmul.f32 %v1801, %v1819
      %v1828 = vmul.f32 %v1800, %v1819
      %v1829 = vmul.f32 %v1799, %v1819
      %v1830 = vmul.f32 %v1798, %v1819
      %v1831 = vmul.f32 %v1797, %v1819
      %v1832 = vmul.f32 %v1796, %v1819
      %v1833 = vmul.f32 %v1795, %v1819
      %v1834 = vmul.f32 %v1794, %v1819
      %v1835 = vmul.f32 %v1793, %v1819
      %v1836 = vmul.f32 %v1792, %v1819
      %v1837 = vmul.f32 %v1791, %v1819
      %v1838 = vmul.f32 %v1790, %v1819
      %v1839 = vmul.f32 %v1789, %v1819
      %v1840 = vmul.f32 %v1788, %v1819
      %v1841 = vmul.f32 %v1787, %v1819
      %v1842 = vmul.f32 %v1786, %v1819
      %v1843 = vmul.f32 %v1785, %v1819
      %v1844 = vmul.f32 %v1784, %v1819
      %v1845 = vmul.f32 %v1783, %v1819
      %v1846 = vmul.f32 %v1782, %v1819
      %v1847 = vmul.f32 %v1781, %v1819
      %v1848 = vmul.f32 %v1780, %v1819
      %v1849 = vmul.f32 %v1779, %v1819
      %v1850 = vmul.f32 %v1778, %v1819
      %v1851 = vmul.f32 %v1777, %v1819
      %v1852 = vmul.f32 %v1776, %v1819
      %v1853 = vmul.f32 %v1775, %v1819
      %v1854 = vmul.f32 %v1774, %v1819
      %v1855 = vmul.f32 %v1773, %v1819
      %v1856 = vmul.f32 %v1772, %v1819
      %v1857 = vmul.f32 %v1812, %v1819
      %v1858 = vmul.f32 %v1811, %v1819
      %v1859 = vmul.f32 %v1810, %v1819
      %v1860 = vmul.f32 %v1809, %v1819
      %v1861 = vmul.f32 %v1808, %v1819
      %v1862 = vadd.f32 %v1689, %v1821
      %v1863 = vadd.f32 %v1690, %v1822
      %v1864 = vadd.f32 %v1691, %v1823
      %v1865 = vadd.f32 %v1692, %v1824
      %v1866 = vadd.f32 %v1693, %v1825
      %v1867 = vadd.f32 %v1694, %v1826
      %v1868 = vadd.f32 %v1695, %v1827
      %v1869 = vadd.f32 %v1696, %v1828
      %v1870 = vadd.f32 %v1697, %v1829
      %v1871 = vadd.f32 %v1698, %v1830
      %v1872 = vadd.f32 %v1699, %v1831
      %v1873 = vadd.f32 %v1700, %v1832
      %v1874 = vadd.f32 %v1701, %v1833
      %v1875 = vadd.f32 %v1702, %v1834
      %v1876 = vadd.f32 %v1703, %v1835
      %v1877 = vadd.f32 %v1704, %v1836
      %v1878 = vadd.f32 %v1705, %v1837
      %v1879 = vadd.f32 %v1706, %v1838
      %v1880 = vadd.f32 %v1707, %v1839
      %v1881 = vadd.f32 %v1708, %v1840
      %v1882 = vadd.f32 %v1709, %v1841
      %v1883 = vadd.f32 %v1710, %v1842
      %v1884 = vadd.f32 %v1711, %v1843
      %v1885 = vadd.f32 %v1712, %v1844
      %v1886 = vadd.f32 %v1713, %v1845
      %v1887 = vadd.f32 %v1714, %v1846
      %v1888 = vadd.f32 %v1715, %v1847
      %v1889 = vadd.f32 %v1716, %v1848
      %v1890 = vadd.f32 %v1717, %v1849
      %v1891 = vadd.f32 %v1718, %v1850
      %v1892 = vadd.f32 %v1719, %v1851
      %v1893 = vadd.f32 %v1720, %v1852
      %v1894 = vadd.f32 %v1721, %v1853
      %v1895 = vadd.f32 %v1722, %v1854
      %v1896 = vadd.f32 %v1723, %v1855
      %v1897 = vadd.f32 %v1724, %v1856
      %v1898 = vadd.f32 %v1725, %v1857
      %v1899 = vadd.f32 %v1726, %v1858
      %v1900 = vadd.f32 %v1727, %v1859
      %v1901 = vadd.f32 %v1728, %v1860
      %v1902 = vadd.f32 %v1729, %v1861
      %v1903 = vld [vmem:[%s3] sm:$0x1]
      %v1905 = vlaneseq
      %v1906 = vshrl.u32 %v1905, 7
      %v1907 = vsub.s32 0, %v1906
      %v1908 = vrot.slane %v1903, %v1907
      %v1910 = vadd.f32 %v1862, %v1908
      %v1911 = vadd.f32 %v1863, %v1908
      %v1912 = vadd.f32 %v1864, %v1908
      %v1913 = vadd.f32 %v1865, %v1908
      %v1914 = vadd.f32 %v1866, %v1908
      %v1915 = vadd.f32 %v1867, %v1908
      %v1916 = vadd.f32 %v1868, %v1908
      %v1917 = vadd.f32 %v1869, %v1908
      %v1918 = vadd.f32 %v1870, %v1908
      %v1919 = vadd.f32 %v1871, %v1908
      %v1920 = vadd.f32 %v1872, %v1908
      %v1921 = vadd.f32 %v1873, %v1908
      %v1922 = vadd.f32 %v1874, %v1908
      %v1923 = vadd.f32 %v1875, %v1908
      %v1924 = vadd.f32 %v1876, %v1908
      %v1925 = vadd.f32 %v1877, %v1908
      %v1926 = vadd.f32 %v1878, %v1908
      %v1927 = vadd.f32 %v1879, %v1908
      %v1928 = vadd.f32 %v1880, %v1908
      %v1929 = vadd.f32 %v1881, %v1908
      %v1930 = vadd.f32 %v1882, %v1908
      %v1931 = vadd.f32 %v1883, %v1908
      %v1932 = vadd.f32 %v1884, %v1908
      %v1933 = vadd.f32 %v1885, %v1908
      %v1934 = vadd.f32 %v1886, %v1908
      %v1935 = vadd.f32 %v1887, %v1908
      %v1936 = vadd.f32 %v1888, %v1908
      %v1937 = vadd.f32 %v1889, %v1908
      %v1938 = vadd.f32 %v1890, %v1908
      %v1939 = vadd.f32 %v1891, %v1908
      %v1940 = vadd.f32 %v1892, %v1908
      %v1941 = vadd.f32 %v1893, %v1908
      %v1942 = vadd.f32 %v1894, %v1908
      %v1943 = vadd.f32 %v1895, %v1908
      %v1944 = vadd.f32 %v1896, %v1908
      %v1945 = vadd.f32 %v1897, %v1908
      %v1946 = vadd.f32 %v1898, %v1908
      %v1947 = vadd.f32 %v1899, %v1908
      %v1948 = vadd.f32 %v1900, %v1908
      %v1949 = vadd.f32 %v1901, %v1908
      %v1950 = vadd.f32 %v1902, %v1908
      %v1951 = vmax.f32 %v1910, 0.0
      %v1952 = vmax.f32 %v1911, 0.0
      %v1953 = vmax.f32 %v1912, 0.0
      %v1954 = vmax.f32 %v1913, 0.0
      %v1955 = vmax.f32 %v1914, 0.0
      %v1956 = vmax.f32 %v1915, 0.0
      %v1957 = vmax.f32 %v1916, 0.0
      %v1958 = vmax.f32 %v1917, 0.0
      %v1959 = vmax.f32 %v1918, 0.0
      %v1960 = vmax.f32 %v1919, 0.0
      %v1961 = vmax.f32 %v1920, 0.0
      %v1962 = vmax.f32 %v1921, 0.0
      %v1963 = vmax.f32 %v1922, 0.0
      %v1964 = vmax.f32 %v1923, 0.0
      %v1965 = vmax.f32 %v1924, 0.0
      %v1966 = vmax.f32 %v1925, 0.0
      %v1967 = vmax.f32 %v1926, 0.0
      %v1968 = vmax.f32 %v1927, 0.0
      %v1969 = vmax.f32 %v1928, 0.0
      %v1970 = vmax.f32 %v1929, 0.0
      %v1971 = vmax.f32 %v1930, 0.0
      %v1972 = vmax.f32 %v1931, 0.0
      %v1973 = vmax.f32 %v1932, 0.0
      %v1974 = vmax.f32 %v1933, 0.0
      %v1975 = vmax.f32 %v1934, 0.0
      %v1976 = vmax.f32 %v1935, 0.0
      %v1977 = vmax.f32 %v1936, 0.0
      %v1978 = vmax.f32 %v1937, 0.0
      %v1979 = vmax.f32 %v1938, 0.0
      %v1980 = vmax.f32 %v1939, 0.0
      %v1981 = vmax.f32 %v1940, 0.0
      %v1982 = vmax.f32 %v1941, 0.0
      %v1983 = vmax.f32 %v1942, 0.0
      %v1984 = vmax.f32 %v1943, 0.0
      %v1985 = vmax.f32 %v1944, 0.0
      %v1986 = vmax.f32 %v1945, 0.0
      %v1987 = vmax.f32 %v1946, 0.0
      %v1988 = vmax.f32 %v1947, 0.0
      %v1989 = vmax.f32 %v1948, 0.0
      %v1990 = vmax.f32 %v1949, 0.0
      %v1991 = vmax.f32 %v1950, 0.0
      %v1992 = vrot.slane %v1951, 5
      %v1993 = vrot.slane %v1952, 5
      %v1994 = vrot.slane %v1953, 5
      %v1995 = vrot.slane %v1954, 5
      %v1996 = vrot.slane %v1955, 5
      %v1997 = vrot.slane %v1956, 5
      %v1998 = vrot.slane %v1957, 5
      %v1999 = vrot.slane %v1958, 5
      %v2000 = vrot.slane %v1959, 5
      %v2001 = vrot.slane %v1960, 5
      %v2002 = vrot.slane %v1961, 5
      %v2003 = vrot.slane %v1962, 5
      %v2004 = vrot.slane %v1963, 5
      %v2005 = vrot.slane %v1964, 5
      %v2006 = vrot.slane %v1965, 5
      %v2007 = vrot.slane %v1966, 5
      %v2008 = vrot.slane %v1967, 5
      %v2009 = vrot.slane %v1968, 5
      %v2010 = vrot.slane %v1969, 5
      %v2011 = vrot.slane %v1970, 5
      %v2012 = vrot.slane %v1971, 5
      %v2013 = vrot.slane %v1972, 5
      %v2014 = vrot.slane %v1973, 5
      %v2015 = vrot.slane %v1974, 5
      %v2016 = vrot.slane %v1975, 5
      %v2017 = vrot.slane %v1976, 5
      %v2018 = vrot.slane %v1977, 5
      %v2019 = vrot.slane %v1978, 5
      %v2020 = vrot.slane %v1979, 5
      %v2021 = vrot.slane %v1980, 5
      %v2022 = vrot.slane %v1981, 5
      %v2023 = vrot.slane %v1982, 5
      %v2024 = vrot.slane %v1983, 5
      %v2025 = vrot.slane %v1984, 5
      %v2026 = vrot.slane %v1985, 5
      %v2027 = vrot.slane %v1986, 5
      %v2028 = vrot.slane %v1987, 5
      %v2029 = vrot.slane %v1988, 5
      %v2030 = vrot.slane %v1989, 5
      %v2031 = vrot.slane %v1990, 5
      %v2032 = vrot.slane %v1991, 5
      %v2033 = vsel %vm1598, %v2031, %v2032
      %v2034 = vsel %vm1598, %v2030, %v2031
      %v2035 = vsel %vm1598, %v2029, %v2030
      %v2036 = vsel %vm1598, %v2028, %v2029
      %v2037 = vsel %vm1598, %v2027, %v2028
      %v2038 = vsel %vm1598, %v2026, %v2027
      %v2039 = vsel %vm1598, %v2025, %v2026
      %v2040 = vsel %vm1598, %v2024, %v2025
      %v2041 = vsel %vm1598, %v2023, %v2024
      %v2042 = vsel %vm1598, %v2022, %v2023
      %v2043 = vsel %vm1598, %v2021, %v2022
      %v2044 = vsel %vm1598, %v2020, %v2021
      %v2045 = vsel %vm1598, %v2019, %v2020
      %v2046 = vsel %vm1598, %v2018, %v2019
      %v2047 = vsel %vm1598, %v2017, %v2018
      %v2048 = vsel %vm1598, %v2016, %v2017
      %v2049 = vsel %vm1598, %v2015, %v2016
      %v2050 = vsel %vm1598, %v2014, %v2015
      %v2051 = vsel %vm1598, %v2013, %v2014
      %v2052 = vsel %vm1598, %v2012, %v2013
      %v2053 = vsel %vm1598, %v2011, %v2012
      %v2054 = vsel %vm1598, %v2010, %v2011
      %v2055 = vsel %vm1598, %v2009, %v2010
      %v2056 = vsel %vm1598, %v2008, %v2009
      %v2057 = vsel %vm1598, %v2007, %v2008
      %v2058 = vsel %vm1598, %v2006, %v2007
      %v2059 = vsel %vm1598, %v2005, %v2006
      %v2060 = vsel %vm1598, %v2004, %v2005
      %v2061 = vsel %vm1598, %v2003, %v2004
      %v2062 = vsel %vm1598, %v2002, %v2003
      %v2063 = vsel %vm1598, %v2001, %v2002
      %v2064 = vsel %vm1598, %v2000, %v2001
      %v2065 = vsel %vm1598, %v1999, %v2000
      %v2066 = vsel %vm1598, %v1998, %v1999
      %v2067 = vsel %vm1598, %v1997, %v1998
      %v2068 = vsel %vm1598, %v1996, %v1997
      %v2069 = vsel %vm1598, %v1995, %v1996
      %v2070 = vsel %vm1598, %v1994, %v1995
      %v2071 = vsel %vm1598, %v1993, %v1994
      %v2072 = vsel %vm1598, %v1992, %v1993
      %v2073 = vsel %vm1598, %v2032, %v1992
      %2075 = vset.pattern.permute.xlu0 0
      %2076 = vperm.xlu0 %2075, %v307
      %v2077 = vpop.permute.xlu0 %2076
      %2080 = vset.pattern.permute.xlu0 0
      %2081 = vperm.xlu0 %2080, %v308
      %v2082 = vpop.permute.xlu0 %2081
      %2085 = vset.pattern.permute.xlu0 0
      %2086 = vperm.xlu0 %2085, %v309
      %v2087 = vpop.permute.xlu0 %2086
      %2090 = vset.pattern.permute.xlu0 0
      %2091 = vperm.xlu0 %2090, %v310
      %v2092 = vpop.permute.xlu0 %2091
      %2095 = vset.pattern.permute.xlu0 0
      %2096 = vperm.xlu0 %2095, %v311
      %v2097 = vpop.permute.xlu0 %2096
      %2100 = vset.pattern.permute.xlu0 0
      %2101 = vperm.xlu0 %2100, %v312
      %v2102 = vpop.permute.xlu0 %2101
      %2105 = vset.pattern.permute.xlu0 0
      %2106 = vperm.xlu0 %2105, %v313
      %v2107 = vpop.permute.xlu0 %2106
      %2110 = vset.pattern.permute.xlu0 0
      %2111 = vperm.xlu0 %2110, %v314
      %v2112 = vpop.permute.xlu0 %2111
      %2115 = vset.pattern.permute.xlu0 0
      %2116 = vperm.xlu0 %2115, %v315
      %v2117 = vpop.permute.xlu0 %2116
      %2120 = vset.pattern.permute.xlu0 0
      %2121 = vperm.xlu0 %2120, %v316
      %v2122 = vpop.permute.xlu0 %2121
      %2125 = vset.pattern.permute.xlu0 0
      %2126 = vperm.xlu0 %2125, %v317
      %v2127 = vpop.permute.xlu0 %2126
      %2130 = vset.pattern.permute.xlu0 0
      %2131 = vperm.xlu0 %2130, %v318
      %v2132 = vpop.permute.xlu0 %2131
      %2135 = vset.pattern.permute.xlu0 0
      %2136 = vperm.xlu0 %2135, %v319
      %v2137 = vpop.permute.xlu0 %2136
      %2140 = vset.pattern.permute.xlu0 0
      %2141 = vperm.xlu0 %2140, %v320
      %v2142 = vpop.permute.xlu0 %2141
      %2145 = vset.pattern.permute.xlu0 0
      %2146 = vperm.xlu0 %2145, %v321
      %v2147 = vpop.permute.xlu0 %2146
      %2150 = vset.pattern.permute.xlu0 0
      %2151 = vperm.xlu0 %2150, %v322
      %v2152 = vpop.permute.xlu0 %2151
      %2155 = vset.pattern.permute.xlu0 0
      %2156 = vperm.xlu0 %2155, %v323
      %v2157 = vpop.permute.xlu0 %2156
      %2160 = vset.pattern.permute.xlu0 0
      %2161 = vperm.xlu0 %2160, %v324
      %v2162 = vpop.permute.xlu0 %2161
      %2165 = vset.pattern.permute.xlu0 0
      %2166 = vperm.xlu0 %2165, %v325
      %v2167 = vpop.permute.xlu0 %2166
      %2170 = vset.pattern.permute.xlu0 0
      %2171 = vperm.xlu0 %2170, %v326
      %v2172 = vpop.permute.xlu0 %2171
      %2175 = vset.pattern.permute.xlu0 0
      %2176 = vperm.xlu0 %2175, %v327
      %v2177 = vpop.permute.xlu0 %2176
      %2180 = vset.pattern.permute.xlu0 0
      %2181 = vperm.xlu0 %2180, %v328
      %v2182 = vpop.permute.xlu0 %2181
      %2185 = vset.pattern.permute.xlu0 0
      %2186 = vperm.xlu0 %2185, %v329
      %v2187 = vpop.permute.xlu0 %2186
      %2190 = vset.pattern.permute.xlu0 0
      %2191 = vperm.xlu0 %2190, %v330
      %v2192 = vpop.permute.xlu0 %2191
      %2195 = vset.pattern.permute.xlu0 0
      %2196 = vperm.xlu0 %2195, %v331
      %v2197 = vpop.permute.xlu0 %2196
      %2200 = vset.pattern.permute.xlu0 0
      %2201 = vperm.xlu0 %2200, %v332
      %v2202 = vpop.permute.xlu0 %2201
      %2205 = vset.pattern.permute.xlu0 0
      %2206 = vperm.xlu0 %2205, %v333
      %v2207 = vpop.permute.xlu0 %2206
      %2210 = vset.pattern.permute.xlu0 0
      %2211 = vperm.xlu0 %2210, %v334
      %v2212 = vpop.permute.xlu0 %2211
      %2215 = vset.pattern.permute.xlu0 0
      %2216 = vperm.xlu0 %2215, %v335
      %v2217 = vpop.permute.xlu0 %2216
      %2220 = vset.pattern.permute.xlu0 0
      %2221 = vperm.xlu0 %2220, %v336
      %v2222 = vpop.permute.xlu0 %2221
      %2225 = vset.pattern.permute.xlu0 0
      %2226 = vperm.xlu0 %2225, %v337
      %v2227 = vpop.permute.xlu0 %2226
      %2230 = vset.pattern.permute.xlu0 0
      %2231 = vperm.xlu0 %2230, %v338
      %v2232 = vpop.permute.xlu0 %2231
      %2235 = vset.pattern.permute.xlu0 0
      %2236 = vperm.xlu0 %2235, %v339
      %v2237 = vpop.permute.xlu0 %2236
      %2240 = vset.pattern.permute.xlu0 0
      %2241 = vperm.xlu0 %2240, %v340
      %v2242 = vpop.permute.xlu0 %2241
      %2245 = vset.pattern.permute.xlu0 0
      %2246 = vperm.xlu0 %2245, %v341
      %v2247 = vpop.permute.xlu0 %2246
      %2250 = vset.pattern.permute.xlu0 0
      %2251 = vperm.xlu0 %2250, %v342
      %v2252 = vpop.permute.xlu0 %2251
      %2255 = vset.pattern.permute.xlu0 0
      %2256 = vperm.xlu0 %2255, %v343
      %v2257 = vpop.permute.xlu0 %2256
      %2260 = vset.pattern.permute.xlu0 0
      %2261 = vperm.xlu0 %2260, %v344
      %v2262 = vpop.permute.xlu0 %2261
      %2265 = vset.pattern.permute.xlu0 0
      %2266 = vperm.xlu0 %2265, %v345
      %v2267 = vpop.permute.xlu0 %2266
      %2270 = vset.pattern.permute.xlu0 0
      %2271 = vperm.xlu0 %2270, %v346
      %v2272 = vpop.permute.xlu0 %2271
      %2275 = vset.pattern.permute.xlu0 0
      %2276 = vperm.xlu0 %2275, %v347
      %v2277 = vpop.permute.xlu0 %2276
      %v2279 = vmul.f32 %v2034, %v2077
      %v2280 = vmul.f32 %v2033, %v2082
      %v2281 = vmul.f32 %v2073, %v2087
      %v2282 = vmul.f32 %v2072, %v2092
      %v2283 = vmul.f32 %v2071, %v2097
      %v2284 = vmul.f32 %v2070, %v2102
      %v2285 = vmul.f32 %v2069, %v2107
      %v2286 = vmul.f32 %v2068, %v2112
      %v2287 = vmul.f32 %v2067, %v2117
      %v2288 = vmul.f32 %v2066, %v2122
      %v2289 = vmul.f32 %v2065, %v2127
      %v2290 = vmul.f32 %v2064, %v2132
      %v2291 = vmul.f32 %v2063, %v2137
      %v2292 = vmul.f32 %v2062, %v2142
      %v2293 = vmul.f32 %v2061, %v2147
      %v2294 = vmul.f32 %v2060, %v2152
      %v2295 = vmul.f32 %v2059, %v2157
      %v2296 = vmul.f32 %v2058, %v2162
      %v2297 = vmul.f32 %v2057, %v2167
      %v2298 = vmul.f32 %v2056, %v2172
      %v2299 = vmul.f32 %v2055, %v2177
      %v2300 = vmul.f32 %v2054, %v2182
      %v2301 = vmul.f32 %v2053, %v2187
      %v2302 = vmul.f32 %v2052, %v2192
      %v2303 = vmul.f32 %v2051, %v2197
      %v2304 = vmul.f32 %v2050, %v2202
      %v2305 = vmul.f32 %v2049, %v2207
      %v2306 = vmul.f32 %v2048, %v2212
      %v2307 = vmul.f32 %v2047, %v2217
      %v2308 = vmul.f32 %v2046, %v2222
      %v2309 = vmul.f32 %v2045, %v2227
      %v2310 = vmul.f32 %v2044, %v2232
      %v2311 = vmul.f32 %v2043, %v2237
      %v2312 = vmul.f32 %v2042, %v2242
      %v2313 = vmul.f32 %v2041, %v2247
      %v2314 = vmul.f32 %v2040, %v2252
      %v2315 = vmul.f32 %v2039, %v2257
      %v2316 = vmul.f32 %v2038, %v2262
      %v2317 = vmul.f32 %v2037, %v2267
      %v2318 = vmul.f32 %v2036, %v2272
      %v2319 = vmul.f32 %v2035, %v2277
      %v2320 = vpack.c.bf16 %v2280, %v2279
      %v2321 = vpack.c.bf16 %v2282, %v2281
      %v2322 = vpack.c.bf16 %v2284, %v2283
      %v2323 = vpack.c.bf16 %v2286, %v2285
      %v2324 = vpack.c.bf16 %v2288, %v2287
      %v2325 = vpack.c.bf16 %v2290, %v2289
      %v2326 = vpack.c.bf16 %v2292, %v2291
      %v2327 = vpack.c.bf16 %v2294, %v2293
      %v2328 = vpack.c.bf16 %v2296, %v2295
      %v2329 = vpack.c.bf16 %v2298, %v2297
      %v2330 = vpack.c.bf16 %v2300, %v2299
      %v2331 = vpack.c.bf16 %v2302, %v2301
      %v2332 = vpack.c.bf16 %v2304, %v2303
      %v2333 = vpack.c.bf16 %v2306, %v2305
      %v2334 = vpack.c.bf16 %v2308, %v2307
      %v2335 = vpack.c.bf16 %v2310, %v2309
      %v2336 = vpack.c.bf16 %v2312, %v2311
      %v2337 = vpack.c.bf16 %v2314, %v2313
      %v2338 = vpack.c.bf16 %v2316, %v2315
      %v2339 = vpack.c.bf16 %v2318, %v2317
      %v2340 = vpack.c.bf16 %v2319, %v2319
      %v2341 = vld [vmem:[%s4] sm:$0xf]
      %v2342 = vld [vmem:[%s4 + $0x4] sm:$0xf]
      %v2343 = vld [vmem:[%s4 + $0x8] sm:$0xf]
      %v2344 = vld [vmem:[%s4 + $0xc] sm:$0xf]
      %v2345 = vld [vmem:[%s4 + $0x10] sm:$0xf]
      %v2346 = vld [vmem:[%s4 + $0x14] sm:$0xf]
      %v2347 = vld [vmem:[%s4 + $0x18] sm:$0xf]
      %v2348 = vld [vmem:[%s4 + $0x1c] sm:$0xf]
      %v2349 = vrot.slane %v2279, 1
      %v2350 = vrot.slane %v2280, 1
      %v2351 = vrot.slane %v2281, 1
      %v2352 = vrot.slane %v2282, 1
      %v2353 = vrot.slane %v2283, 1
      %v2354 = vrot.slane %v2284, 1
      %v2355 = vrot.slane %v2285, 1
      %v2356 = vrot.slane %v2286, 1
      %v2357 = vrot.slane %v2287, 1
      %v2358 = vrot.slane %v2288, 1
      %v2359 = vrot.slane %v2289, 1
      %v2360 = vrot.slane %v2290, 1
      %v2361 = vrot.slane %v2291, 1
      %v2362 = vrot.slane %v2292, 1
      %v2363 = vrot.slane %v2293, 1
      %v2364 = vrot.slane %v2294, 1
      %v2365 = vrot.slane %v2295, 1
      %v2366 = vrot.slane %v2296, 1
      %v2367 = vrot.slane %v2297, 1
      %v2368 = vrot.slane %v2298, 1
      %v2369 = vrot.slane %v2299, 1
      %v2370 = vrot.slane %v2300, 1
      %v2371 = vrot.slane %v2301, 1
      %v2372 = vrot.slane %v2302, 1
      %v2373 = vrot.slane %v2303, 1
      %v2374 = vrot.slane %v2304, 1
      %v2375 = vrot.slane %v2305, 1
      %v2376 = vrot.slane %v2306, 1
      %v2377 = vrot.slane %v2307, 1
      %v2378 = vrot.slane %v2308, 1
      %v2379 = vrot.slane %v2309, 1
      %v2380 = vrot.slane %v2310, 1
      %v2381 = vrot.slane %v2311, 1
      %v2382 = vrot.slane %v2312, 1
      %v2383 = vrot.slane %v2313, 1
      %v2384 = vrot.slane %v2314, 1
      %v2385 = vrot.slane %v2315, 1
      %v2386 = vrot.slane %v2316, 1
      %v2387 = vrot.slane %v2317, 1
      %v2388 = vrot.slane %v2318, 1
      %v2389 = vrot.slane %v2319, 1
      %v2390 = vsel %vm726, %v2388, %v2389
      %v2391 = vsel %vm726, %v2387, %v2388
      %v2392 = vsel %vm726, %v2386, %v2387
      %v2393 = vsel %vm726, %v2385, %v2386
      %v2394 = vsel %vm726, %v2384, %v2385
      %v2395 = vsel %vm726, %v2383, %v2384
      %v2396 = vsel %vm726, %v2382, %v2383
      %v2397 = vsel %vm726, %v2381, %v2382
      %v2398 = vsel %vm726, %v2380, %v2381
      %v2399 = vsel %vm726, %v2379, %v2380
      %v2400 = vsel %vm726, %v2378, %v2379
      %v2401 = vsel %vm726, %v2377, %v2378
      %v2402 = vsel %vm726, %v2376, %v2377
      %v2403 = vsel %vm726, %v2375, %v2376
      %v2404 = vsel %vm726, %v2374, %v2375
      %v2405 = vsel %vm726, %v2373, %v2374
      %v2406 = vsel %vm726, %v2372, %v2373
      %v2407 = vsel %vm726, %v2371, %v2372
      %v2408 = vsel %vm726, %v2370, %v2371
      %v2409 = vsel %vm726, %v2369, %v2370
      %v2410 = vsel %vm726, %v2368, %v2369
      %v2411 = vsel %vm726, %v2367, %v2368
      %v2412 = vsel %vm726, %v2366, %v2367
      %v2413 = vsel %vm726, %v2365, %v2366
      %v2414 = vsel %vm726, %v2364, %v2365
      %v2415 = vsel %vm726, %v2363, %v2364
      %v2416 = vsel %vm726, %v2362, %v2363
      %v2417 = vsel %vm726, %v2361, %v2362
      %v2418 = vsel %vm726, %v2360, %v2361
      %v2419 = vsel %vm726, %v2359, %v2360
      %v2420 = vsel %vm726, %v2358, %v2359
      %v2421 = vsel %vm726, %v2357, %v2358
      %v2422 = vsel %vm726, %v2356, %v2357
      %v2423 = vsel %vm726, %v2355, %v2356
      %v2424 = vsel %vm726, %v2354, %v2355
      %v2425 = vsel %vm726, %v2353, %v2354
      %v2426 = vsel %vm726, %v2352, %v2353
      %v2427 = vsel %vm726, %v2351, %v2352
      %v2428 = vsel %vm726, %v2350, %v2351
      %v2429 = vsel %vm726, %v2349, %v2350
      %v2430 = vsel %vm726, %v2389, %v2349
      %v2431 = vpack.c.bf16 %v2428, %v2429
      %v2432 = vpack.c.bf16 %v2426, %v2427
      %v2433 = vpack.c.bf16 %v2424, %v2425
      %v2434 = vpack.c.bf16 %v2422, %v2423
      %v2435 = vpack.c.bf16 %v2420, %v2421
      %v2436 = vpack.c.bf16 %v2418, %v2419
      %v2437 = vpack.c.bf16 %v2416, %v2417
      %v2438 = vpack.c.bf16 %v2414, %v2415
      %v2439 = vpack.c.bf16 %v2412, %v2413
      %v2440 = vpack.c.bf16 %v2410, %v2411
      %v2441 = vpack.c.bf16 %v2408, %v2409
      %v2442 = vpack.c.bf16 %v2406, %v2407
      %v2443 = vpack.c.bf16 %v2404, %v2405
      %v2444 = vpack.c.bf16 %v2402, %v2403
      %v2445 = vpack.c.bf16 %v2400, %v2401
      %v2446 = vpack.c.bf16 %v2398, %v2399
      %v2447 = vpack.c.bf16 %v2396, %v2397
      %v2448 = vpack.c.bf16 %v2394, %v2395
      %v2449 = vpack.c.bf16 %v2392, %v2393
      %v2450 = vpack.c.bf16 %v2390, %v2391
      %v2451 = vpack.c.bf16 %v2430, %v2430
      %s2452 = scalar_lea.vmem %s4, 32
      %v2453 = vld [vmem:[%s2452] sm:$0xf]
      %v2454 = vld [vmem:[%s2452 + $0x4] sm:$0xf]
      %v2455 = vld [vmem:[%s2452 + $0x8] sm:$0xf]
      %v2456 = vld [vmem:[%s2452 + $0xc] sm:$0xf]
      %v2457 = vld [vmem:[%s2452 + $0x10] sm:$0xf]
      %v2458 = vld [vmem:[%s2452 + $0x14] sm:$0xf]
      %v2459 = vld [vmem:[%s2452 + $0x18] sm:$0xf]
      %v2460 = vld [vmem:[%s2452 + $0x1c] sm:$0xf]
      %v2469 = vunpack.c.l.b16 %v2453
      %v2470 = vunpack.c.l.b16 %v2454
      %v2471 = vunpack.c.l.b16 %v2455
      %v2472 = vunpack.c.l.b16 %v2456
      %v2473 = vunpack.c.l.b16 %v2457
      %v2474 = vunpack.c.l.b16 %v2458
      %v2475 = vunpack.c.l.b16 %v2459
      %v2476 = vunpack.c.l.b16 %v2460
      %v2477 = vpack.c.b16 %v2470, %v2469
      %v2478 = vpack.c.b16 %v2472, %v2471
      %v2479 = vpack.c.b16 %v2474, %v2473
      %v2480 = vpack.c.b16 %v2476, %v2475
      %vm2485 = vcmask 523264
      %v2487 = vsel %vm2485, %v2431, 0
      %v2490 = vsel %vm2485, %v2432, 0
      %v2493 = vsel %vm2485, %v2433, 0
      %v2496 = vsel %vm2485, %v2434, 0
      %v2499 = vsel %vm2485, %v2435, 0
      %v2502 = vsel %vm2485, %v2436, 0
      %v2505 = vsel %vm2485, %v2437, 0
      %v2508 = vsel %vm2485, %v2438, 0
      %v2511 = vsel %vm2485, %v2439, 0
      %v2514 = vsel %vm2485, %v2440, 0
      %v2517 = vsel %vm2485, %v2441, 0
      %v2520 = vsel %vm2485, %v2442, 0
      %v2523 = vsel %vm2485, %v2443, 0
      %v2526 = vsel %vm2485, %v2444, 0
      %v2529 = vsel %vm2485, %v2445, 0
      %v2532 = vsel %vm2485, %v2446, 0
      %v2535 = vsel %vm2485, %v2447, 0
      %v2538 = vsel %vm2485, %v2448, 0
      %v2541 = vsel %vm2485, %v2449, 0
      %v2544 = vsel %vm2485, %v2450, 0
      %v2547 = vsel %vm2485, %v2451, 0
      %2549 = vmatprep.subr.bf16.mxu0 0
      %2550 = vmatpush1.bf16.msra.mxu0 %v2477
      %2551 = vmatprep.subr.bf16.mxu0 0
      %2552 = vmatpush1.bf16.msra.mxu0 %v2478
      %2553 = vmatprep.subr.bf16.mxu0 0
      %2554 = vmatpush1.bf16.msra.mxu0 %v2479
      %2555 = vmatprep.subr.bf16.mxu0 0
      %2556 = vmatpush1.bf16.msra.mxu0 %v2480
      %2557 = vmatprep.subr.bf16.mxu0 0
      %2558 = vmatpush1.bf16.msra.mxu0 0
      %2559 = vmatprep.subr.bf16.mxu0 0
      %2560 = vmatpush1.bf16.msra.mxu0 0
      %2561 = vmatprep.subr.bf16.mxu0 0
      %2562 = vmatpush1.bf16.msra.mxu0 0
      %2563 = vmatprep.subr.bf16.mxu0 0
      %2564 = vmatpush1.bf16.msra.mxu0 0
      %2565 = vmatprep.subr.bf16.mxu0 0
      %2566 = vmatpush1.bf16.msra.mxu0 0
      %2567 = vmatprep.subr.bf16.mxu0 0
      %2568 = vmatpush1.bf16.msra.mxu0 0
      %2569 = vmatprep.subr.bf16.mxu0 0
      %2570 = vmatpush1.bf16.msra.mxu0 0
      %2571 = vmatprep.subr.bf16.mxu0 0
      %2572 = vmatpush1.bf16.msra.mxu0 0
      %2573 = vmatprep.subr.bf16.mxu0 0
      %2574 = vmatpush1.bf16.msra.mxu0 0
      %2575 = vmatprep.subr.bf16.mxu0 0
      %2576 = vmatpush1.bf16.msra.mxu0 0
      %2577 = vmatprep.subr.bf16.mxu0 0
      %2578 = vmatpush1.bf16.msra.mxu0 0
      %2579 = vmatprep.subr.bf16.mxu0 0
      %2580 = vmatpush1.bf16.msra.mxu0 0
      %2581 = vmatprep.mubr.bf16.mxu0 0
      %2582 = vmatmul.mubr.bf16.gmra.mrb[0].mxu0 %v2487
      %v2583 = vpop.f32.mrb[0].mxu0
      %v2584 = vadd.f32 0.0, %v2583
      %v2585 = vpop.f32.mrb[0].mxu0
      %v2586 = vpop.f32.mrb[0].mxu0
      %v2587 = vadd.f32 0.0, %v2586
      %v2588 = vpop.f32.mrb[0].mxu0
      %2589 = vmatprep.mubr.bf16.mxu0 0
      %2590 = vmatmul.mubr.bf16.gmra.mrb[0].mxu0 %v2490
      %v2591 = vpop.f32.mrb[0].mxu0
      %v2592 = vadd.f32 0.0, %v2591
      %v2593 = vpop.f32.mrb[0].mxu0
      %v2594 = vpop.f32.mrb[0].mxu0
      %v2595 = vadd.f32 0.0, %v2594
      %v2596 = vpop.f32.mrb[0].mxu0
      %2597 = vmatprep.mubr.bf16.mxu0 0
      %2598 = vmatmul.mubr.bf16.gmra.mrb[0].mxu0 %v2493
      %v2599 = vpop.f32.mrb[0].mxu0
      %v2600 = vadd.f32 0.0, %v2599
      %v2601 = vpop.f32.mrb[0].mxu0
      %v2602 = vpop.f32.mrb[0].mxu0
      %v2603 = vadd.f32 0.0, %v2602
      %v2604 = vpop.f32.mrb[0].mxu0
      %2605 = vmatprep.mubr.bf16.mxu0 0
      %2606 = vmatmul.mubr.bf16.gmra.mrb[0].mxu0 %v2496
      %v2607 = vpop.f32.mrb[0].mxu0
      %v2608 = vadd.f32 0.0, %v2607
      %v2609 = vpop.f32.mrb[0].mxu0
      %v2610 = vpop.f32.mrb[0].mxu0
      %v2611 = vadd.f32 0.0, %v2610
      %v2612 = vpop.f32.mrb[0].mxu0
      %2613 = vmatprep.mubr.bf16.mxu0 0
      %2614 = vmatmul.mubr.bf16.gmra.mrb[0].mxu0 %v2499
      %v2615 = vpop.f32.mrb[0].mxu0
      %v2616 = vadd.f32 0.0, %v2615
      %v2617 = vpop.f32.mrb[0].mxu0
      %v2618 = vpop.f32.mrb[0].mxu0
      %v2619 = vadd.f32 0.0, %v2618
      %v2620 = vpop.f32.mrb[0].mxu0
      %2621 = vmatprep.mubr.bf16.mxu0 0
      %2622 = vmatmul.mubr.bf16.gmra.mrb[0].mxu0 %v2502
      %v2623 = vpop.f32.mrb[0].mxu0
      %v2624 = vadd.f32 0.0, %v2623
      %v2625 = vpop.f32.mrb[0].mxu0
      %v2626 = vpop.f32.mrb[0].mxu0
      %v2627 = vadd.f32 0.0, %v2626
      %v2628 = vpop.f32.mrb[0].mxu0
      %2629 = vmatprep.mubr.bf16.mxu0 0
      %2630 = vmatmul.mubr.bf16.gmra.mrb[0].mxu0 %v2505
      %v2631 = vpop.f32.mrb[0].mxu0
      %v2632 = vadd.f32 0.0, %v2631
      %v2633 = vpop.f32.mrb[0].mxu0
      %v2634 = vpop.f32.mrb[0].mxu0
      %v2635 = vadd.f32 0.0, %v2634
      %v2636 = vpop.f32.mrb[0].mxu0
      %2637 = vmatprep.mubr.bf16.mxu0 0
      %2638 = vmatmul.mubr.bf16.gmra.mrb[0].mxu0 %v2508
      %v2639 = vpop.f32.mrb[0].mxu0
      %v2640 = vadd.f32 0.0, %v2639
      %v2641 = vpop.f32.mrb[0].mxu0
      %v2642 = vpop.f32.mrb[0].mxu0
      %v2643 = vadd.f32 0.0, %v2642
      %v2644 = vpop.f32.mrb[0].mxu0
      %2645 = vmatprep.mubr.bf16.mxu0 0
      %2646 = vmatmul.mubr.bf16.gmra.mrb[0].mxu0 %v2511
      %v2647 = vpop.f32.mrb[0].mxu0
      %v2648 = vadd.f32 0.0, %v2647
      %v2649 = vpop.f32.mrb[0].mxu0
      %v2650 = vpop.f32.mrb[0].mxu0
      %v2651 = vadd.f32 0.0, %v2650
      %v2652 = vpop.f32.mrb[0].mxu0
      %2653 = vmatprep.mubr.bf16.mxu0 0
      %2654 = vmatmul.mubr.bf16.gmra.mrb[0].mxu0 %v2514
      %v2655 = vpop.f32.mrb[0].mxu0
      %v2656 = vadd.f32 0.0, %v2655
      %v2657 = vpop.f32.mrb[0].mxu0
      %v2658 = vpop.f32.mrb[0].mxu0
      %v2659 = vadd.f32 0.0, %v2658
      %v2660 = vpop.f32.mrb[0].mxu0
      %2661 = vmatprep.mubr.bf16.mxu0 0
      %2662 = vmatmul.mubr.bf16.gmra.mrb[0].mxu0 %v2517
      %v2663 = vpop.f32.mrb[0].mxu0
      %v2664 = vadd.f32 0.0, %v2663
      %v2665 = vpop.f32.mrb[0].mxu0
      %v2666 = vpop.f32.mrb[0].mxu0
      %v2667 = vadd.f32 0.0, %v2666
      %v2668 = vpop.f32.mrb[0].mxu0
      %2669 = vmatprep.mubr.bf16.mxu0 0
      %2670 = vmatmul.mubr.bf16.gmra.mrb[0].mxu0 %v2520
      %v2671 = vpop.f32.mrb[0].mxu0
      %v2672 = vadd.f32 0.0, %v2671
      %v2673 = vpop.f32.mrb[0].mxu0
      %v2674 = vpop.f32.mrb[0].mxu0
      %v2675 = vadd.f32 0.0, %v2674
      %v2676 = vpop.f32.mrb[0].mxu0
      %2677 = vmatprep.mubr.bf16.mxu0 0
      %2678 = vmatmul.mubr.bf16.gmra.mrb[0].mxu0 %v2523
      %v2679 = vpop.f32.mrb[0].mxu0
      %v2680 = vadd.f32 0.0, %v2679
      %v2681 = vpop.f32.mrb[0].mxu0
      %v2682 = vpop.f32.mrb[0].mxu0
      %v2683 = vadd.f32 0.0, %v2682
      %v2684 = vpop.f32.mrb[0].mxu0
      %2685 = vmatprep.mubr.bf16.mxu0 0
      %2686 = vmatmul.mubr.bf16.gmra.mrb[0].mxu0 %v2526
      %v2687 = vpop.f32.mrb[0].mxu0
      %v2688 = vadd.f32 0.0, %v2687
      %v2689 = vpop.f32.mrb[0].mxu0
      %v2690 = vpop.f32.mrb[0].mxu0
      %v2691 = vadd.f32 0.0, %v2690
      %v2692 = vpop.f32.mrb[0].mxu0
      %2693 = vmatprep.mubr.bf16.mxu0 0
      %2694 = vmatmul.mubr.bf16.gmra.mrb[0].mxu0 %v2529
      %v2695 = vpop.f32.mrb[0].mxu0
      %v2696 = vadd.f32 0.0, %v2695
      %v2697 = vpop.f32.mrb[0].mxu0
      %v2698 = vpop.f32.mrb[0].mxu0
      %v2699 = vadd.f32 0.0, %v2698
      %v2700 = vpop.f32.mrb[0].mxu0
      %2701 = vmatprep.mubr.bf16.mxu0 0
      %2702 = vmatmul.mubr.bf16.gmra.mrb[0].mxu0 %v2532
      %v2703 = vpop.f32.mrb[0].mxu0
      %v2704 = vadd.f32 0.0, %v2703
      %v2705 = vpop.f32.mrb[0].mxu0
      %v2706 = vpop.f32.mrb[0].mxu0
      %v2707 = vadd.f32 0.0, %v2706
      %v2708 = vpop.f32.mrb[0].mxu0
      %2709 = vmatprep.mubr.bf16.mxu0 0
      %2710 = vmatmul.mubr.bf16.gmra.mrb[0].mxu0 %v2535
      %v2711 = vpop.f32.mrb[0].mxu0
      %v2712 = vadd.f32 0.0, %v2711
      %v2713 = vpop.f32.mrb[0].mxu0
      %v2714 = vpop.f32.mrb[0].mxu0
      %v2715 = vadd.f32 0.0, %v2714
      %v2716 = vpop.f32.mrb[0].mxu0
      %2717 = vmatprep.mubr.bf16.mxu0 0
      %2718 = vmatmul.mubr.bf16.gmra.mrb[0].mxu0 %v2538
      %v2719 = vpop.f32.mrb[0].mxu0
      %v2720 = vadd.f32 0.0, %v2719
      %v2721 = vpop.f32.mrb[0].mxu0
      %v2722 = vpop.f32.mrb[0].mxu0
      %v2723 = vadd.f32 0.0, %v2722
      %v2724 = vpop.f32.mrb[0].mxu0
      %2725 = vmatprep.mubr.bf16.mxu0 0
      %2726 = vmatmul.mubr.bf16.gmra.mrb[0].mxu0 %v2541
      %v2727 = vpop.f32.mrb[0].mxu0
      %v2728 = vadd.f32 0.0, %v2727
      %v2729 = vpop.f32.mrb[0].mxu0
      %v2730 = vpop.f32.mrb[0].mxu0
      %v2731 = vadd.f32 0.0, %v2730
      %v2732 = vpop.f32.mrb[0].mxu0
      %2733 = vmatprep.mubr.bf16.mxu0 0
      %2734 = vmatmul.mubr.bf16.gmra.mrb[0].mxu0 %v2544
      %v2735 = vpop.f32.mrb[0].mxu0
      %v2736 = vadd.f32 0.0, %v2735
      %v2737 = vpop.f32.mrb[0].mxu0
      %v2738 = vpop.f32.mrb[0].mxu0
      %v2739 = vadd.f32 0.0, %v2738
      %v2740 = vpop.f32.mrb[0].mxu0
      %2741 = vmatprep.mubr.bf16.mxu0 0
      %2742 = vmatmul.mubr.bf16.gmra.mrb[0].mxu0 %v2547
      %v2743 = vpop.f32.mrb[0].mxu0
      %v2744 = vadd.f32 0.0, %v2743
      %v2745 = vpop.f32.mrb[0].mxu0
      %v2746 = vpop.f32.mrb[0].mxu0
      %v2747 = vpop.f32.mrb[0].mxu0
      %2748 = vdwg.mxu0
      %v2757 = vunpack.c.l.b16 %v2341
      %v2758 = vunpack.c.l.b16 %v2342
      %v2759 = vunpack.c.l.b16 %v2343
      %v2760 = vunpack.c.l.b16 %v2344
      %v2761 = vunpack.c.l.b16 %v2345
      %v2762 = vunpack.c.l.b16 %v2346
      %v2763 = vunpack.c.l.b16 %v2347
      %v2764 = vunpack.c.l.b16 %v2348
      %v2765 = vpack.c.b16 %v2758, %v2757
      %v2766 = vpack.c.b16 %v2760, %v2759
      %v2767 = vpack.c.b16 %v2762, %v2761
      %v2768 = vpack.c.b16 %v2764, %v2763
      %v2774 = vsel %vm2485, %v2320, 0
      %v2777 = vsel %vm2485, %v2321, 0
      %v2780 = vsel %vm2485, %v2322, 0
      %v2783 = vsel %vm2485, %v2323, 0
      %v2786 = vsel %vm2485, %v2324, 0
      %v2789 = vsel %vm2485, %v2325, 0
      %v2792 = vsel %vm2485, %v2326, 0
      %v2795 = vsel %vm2485, %v2327, 0
      %v2798 = vsel %vm2485, %v2328, 0
      %v2801 = vsel %vm2485, %v2329, 0
      %v2804 = vsel %vm2485, %v2330, 0
      %v2807 = vsel %vm2485, %v2331, 0
      %v2810 = vsel %vm2485, %v2332, 0
      %v2813 = vsel %vm2485, %v2333, 0
      %v2816 = vsel %vm2485, %v2334, 0
      %v2819 = vsel %vm2485, %v2335, 0
      %v2822 = vsel %vm2485, %v2336, 0
      %v2825 = vsel %vm2485, %v2337, 0
      %v2828 = vsel %vm2485, %v2338, 0
      %v2831 = vsel %vm2485, %v2339, 0
      %v2834 = vsel %vm2485, %v2340, 0
      %2836 = vmatprep.subr.bf16.mxu0 0
      %2837 = vmatpush1.bf16.msra.mxu0 %v2765
      %2838 = vmatprep.subr.bf16.mxu0 0
      %2839 = vmatpush1.bf16.msra.mxu0 %v2766
      %2840 = vmatprep.subr.bf16.mxu0 0
      %2841 = vmatpush1.bf16.msra.mxu0 %v2767
      %2842 = vmatprep.subr.bf16.mxu0 0
      %2843 = vmatpush1.bf16.msra.mxu0 %v2768
      %2844 = vmatprep.subr.bf16.mxu0 0
      %2845 = vmatpush1.bf16.msra.mxu0 0
      %2846 = vmatprep.subr.bf16.mxu0 0
      %2847 = vmatpush1.bf16.msra.mxu0 0
      %2848 = vmatprep.subr.bf16.mxu0 0
      %2849 = vmatpush1.bf16.msra.mxu0 0
      %2850 = vmatprep.subr.bf16.mxu0 0
      %2851 = vmatpush1.bf16.msra.mxu0 0
      %2852 = vmatprep.subr.bf16.mxu0 0
      %2853 = vmatpush1.bf16.msra.mxu0 0
      %2854 = vmatprep.subr.bf16.mxu0 0
      %2855 = vmatpush1.bf16.msra.mxu0 0
      %2856 = vmatprep.subr.bf16.mxu0 0
      %2857 = vmatpush1.bf16.msra.mxu0 0
      %2858 = vmatprep.subr.bf16.mxu0 0
      %2859 = vmatpush1.bf16.msra.mxu0 0
      %2860 = vmatprep.subr.bf16.mxu0 0
      %2861 = vmatpush1.bf16.msra.mxu0 0
      %2862 = vmatprep.subr.bf16.mxu0 0
      %2863 = vmatpush1.bf16.msra.mxu0 0
      %2864 = vmatprep.subr.bf16.mxu0 0
      %2865 = vmatpush1.bf16.msra.mxu0 0
      %2866 = vmatprep.subr.bf16.mxu0 0
      %2867 = vmatpush1.bf16.msra.mxu0 0
      %2868 = vmatprep.mubr.bf16.mxu0 0
      %2869 = vmatmul.mubr.bf16.gmra.mrb[0].mxu0 %v2774
      %v2870 = vpop.f32.mrb[0].mxu0
      %v2871 = vadd.f32 %v2584, %v2870
      %v2872 = vpop.f32.mrb[0].mxu0
      %v2873 = vpop.f32.mrb[0].mxu0
      %v2874 = vadd.f32 %v2587, %v2873
      %v2875 = vpop.f32.mrb[0].mxu0
      %2876 = vmatprep.mubr.bf16.mxu0 0
      %2877 = vmatmul.mubr.bf16.gmra.mrb[0].mxu0 %v2777
      %v2878 = vpop.f32.mrb[0].mxu0
      %v2879 = vadd.f32 %v2592, %v2878
      %v2880 = vpop.f32.mrb[0].mxu0
      %v2881 = vpop.f32.mrb[0].mxu0
      %v2882 = vadd.f32 %v2595, %v2881
      %v2883 = vpop.f32.mrb[0].mxu0
      %2884 = vmatprep.mubr.bf16.mxu0 0
      %2885 = vmatmul.mubr.bf16.gmra.mrb[0].mxu0 %v2780
      %v2886 = vpop.f32.mrb[0].mxu0
      %v2887 = vadd.f32 %v2600, %v2886
      %v2888 = vpop.f32.mrb[0].mxu0
      %v2889 = vpop.f32.mrb[0].mxu0
      %v2890 = vadd.f32 %v2603, %v2889
      %v2891 = vpop.f32.mrb[0].mxu0
      %2892 = vmatprep.mubr.bf16.mxu0 0
      %2893 = vmatmul.mubr.bf16.gmra.mrb[0].mxu0 %v2783
      %v2894 = vpop.f32.mrb[0].mxu0
      %v2895 = vadd.f32 %v2608, %v2894
      %v2896 = vpop.f32.mrb[0].mxu0
      %v2897 = vpop.f32.mrb[0].mxu0
      %v2898 = vadd.f32 %v2611, %v2897
      %v2899 = vpop.f32.mrb[0].mxu0
      %2900 = vmatprep.mubr.bf16.mxu0 0
      %2901 = vmatmul.mubr.bf16.gmra.mrb[0].mxu0 %v2786
      %v2902 = vpop.f32.mrb[0].mxu0
      %v2903 = vadd.f32 %v2616, %v2902
      %v2904 = vpop.f32.mrb[0].mxu0
      %v2905 = vpop.f32.mrb[0].mxu0
      %v2906 = vadd.f32 %v2619, %v2905
      %v2907 = vpop.f32.mrb[0].mxu0
      %2908 = vmatprep.mubr.bf16.mxu0 0
      %2909 = vmatmul.mubr.bf16.gmra.mrb[0].mxu0 %v2789
      %v2910 = vpop.f32.mrb[0].mxu0
      %v2911 = vadd.f32 %v2624, %v2910
      %v2912 = vpop.f32.mrb[0].mxu0
      %v2913 = vpop.f32.mrb[0].mxu0
      %v2914 = vadd.f32 %v2627, %v2913
      %v2915 = vpop.f32.mrb[0].mxu0
      %2916 = vmatprep.mubr.bf16.mxu0 0
      %2917 = vmatmul.mubr.bf16.gmra.mrb[0].mxu0 %v2792
      %v2918 = vpop.f32.mrb[0].mxu0
      %v2919 = vadd.f32 %v2632, %v2918
      %v2920 = vpop.f32.mrb[0].mxu0
      %v2921 = vpop.f32.mrb[0].mxu0
      %v2922 = vadd.f32 %v2635, %v2921
      %v2923 = vpop.f32.mrb[0].mxu0
      %2924 = vmatprep.mubr.bf16.mxu0 0
      %2925 = vmatmul.mubr.bf16.gmra.mrb[0].mxu0 %v2795
      %v2926 = vpop.f32.mrb[0].mxu0
      %v2927 = vadd.f32 %v2640, %v2926
      %v2928 = vpop.f32.mrb[0].mxu0
      %v2929 = vpop.f32.mrb[0].mxu0
      %v2930 = vadd.f32 %v2643, %v2929
      %v2931 = vpop.f32.mrb[0].mxu0
      %2932 = vmatprep.mubr.bf16.mxu0 0
      %2933 = vmatmul.mubr.bf16.gmra.mrb[0].mxu0 %v2798
      %v2934 = vpop.f32.mrb[0].mxu0
      %v2935 = vadd.f32 %v2648, %v2934
      %v2936 = vpop.f32.mrb[0].mxu0
      %v2937 = vpop.f32.mrb[0].mxu0
      %v2938 = vadd.f32 %v2651, %v2937
      %v2939 = vpop.f32.mrb[0].mxu0
      %2940 = vmatprep.mubr.bf16.mxu0 0
      %2941 = vmatmul.mubr.bf16.gmra.mrb[0].mxu0 %v2801
      %v2942 = vpop.f32.mrb[0].mxu0
      %v2943 = vadd.f32 %v2656, %v2942
      %v2944 = vpop.f32.mrb[0].mxu0
      %v2945 = vpop.f32.mrb[0].mxu0
      %v2946 = vadd.f32 %v2659, %v2945
      %v2947 = vpop.f32.mrb[0].mxu0
      %2948 = vmatprep.mubr.bf16.mxu0 0
      %2949 = vmatmul.mubr.bf16.gmra.mrb[0].mxu0 %v2804
      %v2950 = vpop.f32.mrb[0].mxu0
      %v2951 = vadd.f32 %v2664, %v2950
      %v2952 = vpop.f32.mrb[0].mxu0
      %v2953 = vpop.f32.mrb[0].mxu0
      %v2954 = vadd.f32 %v2667, %v2953
      %v2955 = vpop.f32.mrb[0].mxu0
      %2956 = vmatprep.mubr.bf16.mxu0 0
      %2957 = vmatmul.mubr.bf16.gmra.mrb[0].mxu0 %v2807
      %v2958 = vpop.f32.mrb[0].mxu0
      %v2959 = vadd.f32 %v2672, %v2958
      %v2960 = vpop.f32.mrb[0].mxu0
      %v2961 = vpop.f32.mrb[0].mxu0
      %v2962 = vadd.f32 %v2675, %v2961
      %v2963 = vpop.f32.mrb[0].mxu0
      %2964 = vmatprep.mubr.bf16.mxu0 0
      %2965 = vmatmul.mubr.bf16.gmra.mrb[0].mxu0 %v2810
      %v2966 = vpop.f32.mrb[0].mxu0
      %v2967 = vadd.f32 %v2680, %v2966
      %v2968 = vpop.f32.mrb[0].mxu0
      %v2969 = vpop.f32.mrb[0].mxu0
      %v2970 = vadd.f32 %v2683, %v2969
      %v2971 = vpop.f32.mrb[0].mxu0
      %2972 = vmatprep.mubr.bf16.mxu0 0
      %2973 = vmatmul.mubr.bf16.gmra.mrb[0].mxu0 %v2813
      %v2974 = vpop.f32.mrb[0].mxu0
      %v2975 = vadd.f32 %v2688, %v2974
      %v2976 = vpop.f32.mrb[0].mxu0
      %v2977 = vpop.f32.mrb[0].mxu0
      %v2978 = vadd.f32 %v2691, %v2977
      %v2979 = vpop.f32.mrb[0].mxu0
      %2980 = vmatprep.mubr.bf16.mxu0 0
      %2981 = vmatmul.mubr.bf16.gmra.mrb[0].mxu0 %v2816
      %v2982 = vpop.f32.mrb[0].mxu0
      %v2983 = vadd.f32 %v2696, %v2982
      %v2984 = vpop.f32.mrb[0].mxu0
      %v2985 = vpop.f32.mrb[0].mxu0
      %v2986 = vadd.f32 %v2699, %v2985
      %v2987 = vpop.f32.mrb[0].mxu0
      %2988 = vmatprep.mubr.bf16.mxu0 0
      %2989 = vmatmul.mubr.bf16.gmra.mrb[0].mxu0 %v2819
      %v2990 = vpop.f32.mrb[0].mxu0
      %v2991 = vadd.f32 %v2704, %v2990
      %v2992 = vpop.f32.mrb[0].mxu0
      %v2993 = vpop.f32.mrb[0].mxu0
      %v2994 = vadd.f32 %v2707, %v2993
      %v2995 = vpop.f32.mrb[0].mxu0
      %2996 = vmatprep.mubr.bf16.mxu0 0
      %2997 = vmatmul.mubr.bf16.gmra.mrb[0].mxu0 %v2822
      %v2998 = vpop.f32.mrb[0].mxu0
      %v2999 = vadd.f32 %v2712, %v2998
      %v3000 = vpop.f32.mrb[0].mxu0
      %v3001 = vpop.f32.mrb[0].mxu0
      %v3002 = vadd.f32 %v2715, %v3001
      %v3003 = vpop.f32.mrb[0].mxu0
      %3004 = vmatprep.mubr.bf16.mxu0 0
      %3005 = vmatmul.mubr.bf16.gmra.mrb[0].mxu0 %v2825
      %v3006 = vpop.f32.mrb[0].mxu0
      %v3007 = vadd.f32 %v2720, %v3006
      %v3008 = vpop.f32.mrb[0].mxu0
      %v3009 = vpop.f32.mrb[0].mxu0
      %v3010 = vadd.f32 %v2723, %v3009
      %v3011 = vpop.f32.mrb[0].mxu0
      %3012 = vmatprep.mubr.bf16.mxu0 0
      %3013 = vmatmul.mubr.bf16.gmra.mrb[0].mxu0 %v2828
      %v3014 = vpop.f32.mrb[0].mxu0
      %v3015 = vadd.f32 %v2728, %v3014
      %v3016 = vpop.f32.mrb[0].mxu0
      %v3017 = vpop.f32.mrb[0].mxu0
      %v3018 = vadd.f32 %v2731, %v3017
      %v3019 = vpop.f32.mrb[0].mxu0
      %3020 = vmatprep.mubr.bf16.mxu0 0
      %3021 = vmatmul.mubr.bf16.gmra.mrb[0].mxu0 %v2831
      %v3022 = vpop.f32.mrb[0].mxu0
      %v3023 = vadd.f32 %v2736, %v3022
      %v3024 = vpop.f32.mrb[0].mxu0
      %v3025 = vpop.f32.mrb[0].mxu0
      %v3026 = vadd.f32 %v2739, %v3025
      %v3027 = vpop.f32.mrb[0].mxu0
      %3028 = vmatprep.mubr.bf16.mxu0 0
      %3029 = vmatmul.mubr.bf16.gmra.mrb[0].mxu0 %v2834
      %v3030 = vpop.f32.mrb[0].mxu0
      %v3031 = vadd.f32 %v2744, %v3030
      %v3032 = vpop.f32.mrb[0].mxu0
      %v3033 = vpop.f32.mrb[0].mxu0
      %v3034 = vpop.f32.mrb[0].mxu0
      %3035 = vdwg.mxu0
      %v3036 = vrot.slane %v2279, 2
      %v3037 = vrot.slane %v2280, 2
      %v3038 = vrot.slane %v2281, 2
      %v3039 = vrot.slane %v2282, 2
      %v3040 = vrot.slane %v2283, 2
      %v3041 = vrot.slane %v2284, 2
      %v3042 = vrot.slane %v2285, 2
      %v3043 = vrot.slane %v2286, 2
      %v3044 = vrot.slane %v2287, 2
      %v3045 = vrot.slane %v2288, 2
      %v3046 = vrot.slane %v2289, 2
      %v3047 = vrot.slane %v2290, 2
      %v3048 = vrot.slane %v2291, 2
      %v3049 = vrot.slane %v2292, 2
      %v3050 = vrot.slane %v2293, 2
      %v3051 = vrot.slane %v2294, 2
      %v3052 = vrot.slane %v2295, 2
      %v3053 = vrot.slane %v2296, 2
      %v3054 = vrot.slane %v2297, 2
      %v3055 = vrot.slane %v2298, 2
      %v3056 = vrot.slane %v2299, 2
      %v3057 = vrot.slane %v2300, 2
      %v3058 = vrot.slane %v2301, 2
      %v3059 = vrot.slane %v2302, 2
      %v3060 = vrot.slane %v2303, 2
      %v3061 = vrot.slane %v2304, 2
      %v3062 = vrot.slane %v2305, 2
      %v3063 = vrot.slane %v2306, 2
      %v3064 = vrot.slane %v2307, 2
      %v3065 = vrot.slane %v2308, 2
      %v3066 = vrot.slane %v2309, 2
      %v3067 = vrot.slane %v2310, 2
      %v3068 = vrot.slane %v2311, 2
      %v3069 = vrot.slane %v2312, 2
      %v3070 = vrot.slane %v2313, 2
      %v3071 = vrot.slane %v2314, 2
      %v3072 = vrot.slane %v2315, 2
      %v3073 = vrot.slane %v2316, 2
      %v3074 = vrot.slane %v2317, 2
      %v3075 = vrot.slane %v2318, 2
      %v3076 = vrot.slane %v2319, 2
      %v3077 = vsel %vm899, %v3075, %v3076
      %v3078 = vsel %vm899, %v3074, %v3075
      %v3079 = vsel %vm899, %v3073, %v3074
      %v3080 = vsel %vm899, %v3072, %v3073
      %v3081 = vsel %vm899, %v3071, %v3072
      %v3082 = vsel %vm899, %v3070, %v3071
      %v3083 = vsel %vm899, %v3069, %v3070
      %v3084 = vsel %vm899, %v3068, %v3069
      %v3085 = vsel %vm899, %v3067, %v3068
      %v3086 = vsel %vm899, %v3066, %v3067
      %v3087 = vsel %vm899, %v3065, %v3066
      %v3088 = vsel %vm899, %v3064, %v3065
      %v3089 = vsel %vm899, %v3063, %v3064
      %v3090 = vsel %vm899, %v3062, %v3063
      %v3091 = vsel %vm899, %v3061, %v3062
      %v3092 = vsel %vm899, %v3060, %v3061
      %v3093 = vsel %vm899, %v3059, %v3060
      %v3094 = vsel %vm899, %v3058, %v3059
      %v3095 = vsel %vm899, %v3057, %v3058
      %v3096 = vsel %vm899, %v3056, %v3057
      %v3097 = vsel %vm899, %v3055, %v3056
      %v3098 = vsel %vm899, %v3054, %v3055
      %v3099 = vsel %vm899, %v3053, %v3054
      %v3100 = vsel %vm899, %v3052, %v3053
      %v3101 = vsel %vm899, %v3051, %v3052
      %v3102 = vsel %vm899, %v3050, %v3051
      %v3103 = vsel %vm899, %v3049, %v3050
      %v3104 = vsel %vm899, %v3048, %v3049
      %v3105 = vsel %vm899, %v3047, %v3048
      %v3106 = vsel %vm899, %v3046, %v3047
      %v3107 = vsel %vm899, %v3045, %v3046
      %v3108 = vsel %vm899, %v3044, %v3045
      %v3109 = vsel %vm899, %v3043, %v3044
      %v3110 = vsel %vm899, %v3042, %v3043
      %v3111 = vsel %vm899, %v3041, %v3042
      %v3112 = vsel %vm899, %v3040, %v3041
      %v3113 = vsel %vm899, %v3039, %v3040
      %v3114 = vsel %vm899, %v3038, %v3039
      %v3115 = vsel %vm899, %v3037, %v3038
      %v3116 = vsel %vm899, %v3036, %v3037
      %v3117 = vsel %vm899, %v3076, %v3036
      %v3118 = vpack.c.bf16 %v3115, %v3116
      %v3119 = vpack.c.bf16 %v3113, %v3114
      %v3120 = vpack.c.bf16 %v3111, %v3112
      %v3121 = vpack.c.bf16 %v3109, %v3110
      %v3122 = vpack.c.bf16 %v3107, %v3108
      %v3123 = vpack.c.bf16 %v3105, %v3106
      %v3124 = vpack.c.bf16 %v3103, %v3104
      %v3125 = vpack.c.bf16 %v3101, %v3102
      %v3126 = vpack.c.bf16 %v3099, %v3100
      %v3127 = vpack.c.bf16 %v3097, %v3098
      %v3128 = vpack.c.bf16 %v3095, %v3096
      %v3129 = vpack.c.bf16 %v3093, %v3094
      %v3130 = vpack.c.bf16 %v3091, %v3092
      %v3131 = vpack.c.bf16 %v3089, %v3090
      %v3132 = vpack.c.bf16 %v3087, %v3088
      %v3133 = vpack.c.bf16 %v3085, %v3086
      %v3134 = vpack.c.bf16 %v3083, %v3084
      %v3135 = vpack.c.bf16 %v3081, %v3082
      %v3136 = vpack.c.bf16 %v3079, %v3080
      %v3137 = vpack.c.bf16 %v3077, %v3078
      %v3138 = vpack.c.bf16 %v3117, %v3117
      %s3139 = scalar_lea.vmem %s4, 64
      %v3140 = vld [vmem:[%s3139] sm:$0xf]
      %v3141 = vld [vmem:[%s3139 + $0x4] sm:$0xf]
      %v3142 = vld [vmem:[%s3139 + $0x8] sm:$0xf]
      %v3143 = vld [vmem:[%s3139 + $0xc] sm:$0xf]
      %v3144 = vld [vmem:[%s3139 + $0x10] sm:$0xf]
      %v3145 = vld [vmem:[%s3139 + $0x14] sm:$0xf]
      %v3146 = vld [vmem:[%s3139 + $0x18] sm:$0xf]
      %v3147 = vld [vmem:[%s3139 + $0x1c] sm:$0xf]
      %v3156 = vunpack.c.l.b16 %v3140
      %v3157 = vunpack.c.l.b16 %v3141
      %v3158 = vunpack.c.l.b16 %v3142
      %v3159 = vunpack.c.l.b16 %v3143
      %v3160 = vunpack.c.l.b16 %v3144
      %v3161 = vunpack.c.l.b16 %v3145
      %v3162 = vunpack.c.l.b16 %v3146
      %v3163 = vunpack.c.l.b16 %v3147
      %v3164 = vpack.c.b16 %v3157, %v3156
      %v3165 = vpack.c.b16 %v3159, %v3158
      %v3166 = vpack.c.b16 %v3161, %v3160
      %v3167 = vpack.c.b16 %v3163, %v3162
      %v3173 = vsel %vm2485, %v3118, 0
      %v3176 = vsel %vm2485, %v3119, 0
      %v3179 = vsel %vm2485, %v3120, 0
      %v3182 = vsel %vm2485, %v3121, 0
      %v3185 = vsel %vm2485, %v3122, 0
      %v3188 = vsel %vm2485, %v3123, 0
      %v3191 = vsel %vm2485, %v3124, 0
      %v3194 = vsel %vm2485, %v3125, 0
      %v3197 = vsel %vm2485, %v3126, 0
      %v3200 = vsel %vm2485, %v3127, 0
      %v3203 = vsel %vm2485, %v3128, 0
      %v3206 = vsel %vm2485, %v3129, 0
      %v3209 = vsel %vm2485, %v3130, 0
      %v3212 = vsel %vm2485, %v3131, 0
      %v3215 = vsel %vm2485, %v3132, 0
      %v3218 = vsel %vm2485, %v3133, 0
      %v3221 = vsel %vm2485, %v3134, 0
      %v3224 = vsel %vm2485, %v3135, 0
      %v3227 = vsel %vm2485, %v3136, 0
      %v3230 = vsel %vm2485, %v3137, 0
      %v3233 = vsel %vm2485, %v3138, 0
      %3235 = vmatprep.subr.bf16.mxu0 0
      %3236 = vmatpush1.bf16.msra.mxu0 %v3164
      %3237 = vmatprep.subr.bf16.mxu0 0
      %3238 = vmatpush1.bf16.msra.mxu0 %v3165
      %3239 = vmatprep.subr.bf16.mxu0 0
      %3240 = vmatpush1.bf16.msra.mxu0 %v3166
      %3241 = vmatprep.subr.bf16.mxu0 0
      %3242 = vmatpush1.bf16.msra.mxu0 %v3167
      %3243 = vmatprep.subr.bf16.mxu0 0
      %3244 = vmatpush1.bf16.msra.mxu0 0
      %3245 = vmatprep.subr.bf16.mxu0 0
      %3246 = vmatpush1.bf16.msra.mxu0 0
      %3247 = vmatprep.subr.bf16.mxu0 0
      %3248 = vmatpush1.bf16.msra.mxu0 0
      %3249 = vmatprep.subr.bf16.mxu0 0
      %3250 = vmatpush1.bf16.msra.mxu0 0
      %3251 = vmatprep.subr.bf16.mxu0 0
      %3252 = vmatpush1.bf16.msra.mxu0 0
      %3253 = vmatprep.subr.bf16.mxu0 0
      %3254 = vmatpush1.bf16.msra.mxu0 0
      %3255 = vmatprep.subr.bf16.mxu0 0
      %3256 = vmatpush1.bf16.msra.mxu0 0
      %3257 = vmatprep.subr.bf16.mxu0 0
      %3258 = vmatpush1.bf16.msra.mxu0 0
      %3259 = vmatprep.subr.bf16.mxu0 0
      %3260 = vmatpush1.bf16.msra.mxu0 0
      %3261 = vmatprep.subr.bf16.mxu0 0
      %3262 = vmatpush1.bf16.msra.mxu0 0
      %3263 = vmatprep.subr.bf16.mxu0 0
      %3264 = vmatpush1.bf16.msra.mxu0 0
      %3265 = vmatprep.subr.bf16.mxu0 0
      %3266 = vmatpush1.bf16.msra.mxu0 0
      %3267 = vmatprep.mubr.bf16.mxu0 0
      %3268 = vmatmul.mubr.bf16.gmra.mrb[0].mxu0 %v3173
      %v3269 = vpop.f32.mrb[0].mxu0
      %v3270 = vadd.f32 0.0, %v3269
      %v3271 = vpop.f32.mrb[0].mxu0
      %v3272 = vpop.f32.mrb[0].mxu0
      %v3273 = vadd.f32 0.0, %v3272
      %v3274 = vpop.f32.mrb[0].mxu0
      %3275 = vmatprep.mubr.bf16.mxu0 0
      %3276 = vmatmul.mubr.bf16.gmra.mrb[0].mxu0 %v3176
      %v3277 = vpop.f32.mrb[0].mxu0
      %v3278 = vadd.f32 0.0, %v3277
      %v3279 = vpop.f32.mrb[0].mxu0
      %v3280 = vpop.f32.mrb[0].mxu0
      %v3281 = vadd.f32 0.0, %v3280
      %v3282 = vpop.f32.mrb[0].mxu0
      %3283 = vmatprep.mubr.bf16.mxu0 0
      %3284 = vmatmul.mubr.bf16.gmra.mrb[0].mxu0 %v3179
      %v3285 = vpop.f32.mrb[0].mxu0
      %v3286 = vadd.f32 0.0, %v3285
      %v3287 = vpop.f32.mrb[0].mxu0
      %v3288 = vpop.f32.mrb[0].mxu0
      %v3289 = vadd.f32 0.0, %v3288
      %v3290 = vpop.f32.mrb[0].mxu0
      %3291 = vmatprep.mubr.bf16.mxu0 0
      %3292 = vmatmul.mubr.bf16.gmra.mrb[0].mxu0 %v3182
      %v3293 = vpop.f32.mrb[0].mxu0
      %v3294 = vadd.f32 0.0, %v3293
      %v3295 = vpop.f32.mrb[0].mxu0
      %v3296 = vpop.f32.mrb[0].mxu0
      %v3297 = vadd.f32 0.0, %v3296
      %v3298 = vpop.f32.mrb[0].mxu0
      %3299 = vmatprep.mubr.bf16.mxu0 0
      %3300 = vmatmul.mubr.bf16.gmra.mrb[0].mxu0 %v3185
      %v3301 = vpop.f32.mrb[0].mxu0
      %v3302 = vadd.f32 0.0, %v3301
      %v3303 = vpop.f32.mrb[0].mxu0
      %v3304 = vpop.f32.mrb[0].mxu0
      %v3305 = vadd.f32 0.0, %v3304
      %v3306 = vpop.f32.mrb[0].mxu0
      %3307 = vmatprep.mubr.bf16.mxu0 0
      %3308 = vmatmul.mubr.bf16.gmra.mrb[0].mxu0 %v3188
      %v3309 = vpop.f32.mrb[0].mxu0
      %v3310 = vadd.f32 0.0, %v3309
      %v3311 = vpop.f32.mrb[0].mxu0
      %v3312 = vpop.f32.mrb[0].mxu0
      %v3313 = vadd.f32 0.0, %v3312
      %v3314 = vpop.f32.mrb[0].mxu0
      %3315 = vmatprep.mubr.bf16.mxu0 0
      %3316 = vmatmul.mubr.bf16.gmra.mrb[0].mxu0 %v3191
      %v3317 = vpop.f32.mrb[0].mxu0
      %v3318 = vadd.f32 0.0, %v3317
      %v3319 = vpop.f32.mrb[0].mxu0
      %v3320 = vpop.f32.mrb[0].mxu0
      %v3321 = vadd.f32 0.0, %v3320
      %v3322 = vpop.f32.mrb[0].mxu0
      %3323 = vmatprep.mubr.bf16.mxu0 0
      %3324 = vmatmul.mubr.bf16.gmra.mrb[0].mxu0 %v3194
      %v3325 = vpop.f32.mrb[0].mxu0
      %v3326 = vadd.f32 0.0, %v3325
      %v3327 = vpop.f32.mrb[0].mxu0
      %v3328 = vpop.f32.mrb[0].mxu0
      %v3329 = vadd.f32 0.0, %v3328
      %v3330 = vpop.f32.mrb[0].mxu0
      %3331 = vmatprep.mubr.bf16.mxu0 0
      %3332 = vmatmul.mubr.bf16.gmra.mrb[0].mxu0 %v3197
      %v3333 = vpop.f32.mrb[0].mxu0
      %v3334 = vadd.f32 0.0, %v3333
      %v3335 = vpop.f32.mrb[0].mxu0
      %v3336 = vpop.f32.mrb[0].mxu0
      %v3337 = vadd.f32 0.0, %v3336
      %v3338 = vpop.f32.mrb[0].mxu0
      %3339 = vmatprep.mubr.bf16.mxu0 0
      %3340 = vmatmul.mubr.bf16.gmra.mrb[0].mxu0 %v3200
      %v3341 = vpop.f32.mrb[0].mxu0
      %v3342 = vadd.f32 0.0, %v3341
      %v3343 = vpop.f32.mrb[0].mxu0
      %v3344 = vpop.f32.mrb[0].mxu0
      %v3345 = vadd.f32 0.0, %v3344
      %v3346 = vpop.f32.mrb[0].mxu0
      %3347 = vmatprep.mubr.bf16.mxu0 0
      %3348 = vmatmul.mubr.bf16.gmra.mrb[0].mxu0 %v3203
      %v3349 = vpop.f32.mrb[0].mxu0
      %v3350 = vadd.f32 0.0, %v3349
      %v3351 = vpop.f32.mrb[0].mxu0
      %v3352 = vpop.f32.mrb[0].mxu0
      %v3353 = vadd.f32 0.0, %v3352
      %v3354 = vpop.f32.mrb[0].mxu0
      %3355 = vmatprep.mubr.bf16.mxu0 0
      %3356 = vmatmul.mubr.bf16.gmra.mrb[0].mxu0 %v3206
      %v3357 = vpop.f32.mrb[0].mxu0
      %v3358 = vadd.f32 0.0, %v3357
      %v3359 = vpop.f32.mrb[0].mxu0
      %v3360 = vpop.f32.mrb[0].mxu0
      %v3361 = vadd.f32 0.0, %v3360
      %v3362 = vpop.f32.mrb[0].mxu0
      %3363 = vmatprep.mubr.bf16.mxu0 0
      %3364 = vmatmul.mubr.bf16.gmra.mrb[0].mxu0 %v3209
      %v3365 = vpop.f32.mrb[0].mxu0
      %v3366 = vadd.f32 0.0, %v3365
      %v3367 = vpop.f32.mrb[0].mxu0
      %v3368 = vpop.f32.mrb[0].mxu0
      %v3369 = vadd.f32 0.0, %v3368
      %v3370 = vpop.f32.mrb[0].mxu0
      %3371 = vmatprep.mubr.bf16.mxu0 0
      %3372 = vmatmul.mubr.bf16.gmra.mrb[0].mxu0 %v3212
      %v3373 = vpop.f32.mrb[0].mxu0
      %v3374 = vadd.f32 0.0, %v3373
      %v3375 = vpop.f32.mrb[0].mxu0
      %v3376 = vpop.f32.mrb[0].mxu0
      %v3377 = vadd.f32 0.0, %v3376
      %v3378 = vpop.f32.mrb[0].mxu0
      %3379 = vmatprep.mubr.bf16.mxu0 0
      %3380 = vmatmul.mubr.bf16.gmra.mrb[0].mxu0 %v3215
      %v3381 = vpop.f32.mrb[0].mxu0
      %v3382 = vadd.f32 0.0, %v3381
      %v3383 = vpop.f32.mrb[0].mxu0
      %v3384 = vpop.f32.mrb[0].mxu0
      %v3385 = vadd.f32 0.0, %v3384
      %v3386 = vpop.f32.mrb[0].mxu0
      %3387 = vmatprep.mubr.bf16.mxu0 0
      %3388 = vmatmul.mubr.bf16.gmra.mrb[0].mxu0 %v3218
      %v3389 = vpop.f32.mrb[0].mxu0
      %v3390 = vadd.f32 0.0, %v3389
      %v3391 = vpop.f32.mrb[0].mxu0
      %v3392 = vpop.f32.mrb[0].mxu0
      %v3393 = vadd.f32 0.0, %v3392
      %v3394 = vpop.f32.mrb[0].mxu0
      %3395 = vmatprep.mubr.bf16.mxu0 0
      %3396 = vmatmul.mubr.bf16.gmra.mrb[0].mxu0 %v3221
      %v3397 = vpop.f32.mrb[0].mxu0
      %v3398 = vadd.f32 0.0, %v3397
      %v3399 = vpop.f32.mrb[0].mxu0
      %v3400 = vpop.f32.mrb[0].mxu0
      %v3401 = vadd.f32 0.0, %v3400
      %v3402 = vpop.f32.mrb[0].mxu0
      %3403 = vmatprep.mubr.bf16.mxu0 0
      %3404 = vmatmul.mubr.bf16.gmra.mrb[0].mxu0 %v3224
      %v3405 = vpop.f32.mrb[0].mxu0
      %v3406 = vadd.f32 0.0, %v3405
      %v3407 = vpop.f32.mrb[0].mxu0
      %v3408 = vpop.f32.mrb[0].mxu0
      %v3409 = vadd.f32 0.0, %v3408
      %v3410 = vpop.f32.mrb[0].mxu0
      %3411 = vmatprep.mubr.bf16.mxu0 0
      %3412 = vmatmul.mubr.bf16.gmra.mrb[0].mxu0 %v3227
      %v3413 = vpop.f32.mrb[0].mxu0
      %v3414 = vadd.f32 0.0, %v3413
      %v3415 = vpop.f32.mrb[0].mxu0
      %v3416 = vpop.f32.mrb[0].mxu0
      %v3417 = vadd.f32 0.0, %v3416
      %v3418 = vpop.f32.mrb[0].mxu0
      %3419 = vmatprep.mubr.bf16.mxu0 0
      %3420 = vmatmul.mubr.bf16.gmra.mrb[0].mxu0 %v3230
      %v3421 = vpop.f32.mrb[0].mxu0
      %v3422 = vadd.f32 0.0, %v3421
      %v3423 = vpop.f32.mrb[0].mxu0
      %v3424 = vpop.f32.mrb[0].mxu0
      %v3425 = vadd.f32 0.0, %v3424
      %v3426 = vpop.f32.mrb[0].mxu0
      %3427 = vmatprep.mubr.bf16.mxu0 0
      %3428 = vmatmul.mubr.bf16.gmra.mrb[0].mxu0 %v3233
      %v3429 = vpop.f32.mrb[0].mxu0
      %v3430 = vadd.f32 0.0, %v3429
      %v3431 = vpop.f32.mrb[0].mxu0
      %v3432 = vpop.f32.mrb[0].mxu0
      %v3433 = vpop.f32.mrb[0].mxu0
      %3434 = vdwg.mxu0
      %v3435 = vadd.f32 %v2871, %v3270
      %v3436 = vadd.f32 %v2874, %v3273
      %v3437 = vadd.f32 %v2879, %v3278
      %v3438 = vadd.f32 %v2882, %v3281
      %v3439 = vadd.f32 %v2887, %v3286
      %v3440 = vadd.f32 %v2890, %v3289
      %v3441 = vadd.f32 %v2895, %v3294
      %v3442 = vadd.f32 %v2898, %v3297
      %v3443 = vadd.f32 %v2903, %v3302
      %v3444 = vadd.f32 %v2906, %v3305
      %v3445 = vadd.f32 %v2911, %v3310
      %v3446 = vadd.f32 %v2914, %v3313
      %v3447 = vadd.f32 %v2919, %v3318
      %v3448 = vadd.f32 %v2922, %v3321
      %v3449 = vadd.f32 %v2927, %v3326
      %v3450 = vadd.f32 %v2930, %v3329
      %v3451 = vadd.f32 %v2935, %v3334
      %v3452 = vadd.f32 %v2938, %v3337
      %v3453 = vadd.f32 %v2943, %v3342
      %v3454 = vadd.f32 %v2946, %v3345
      %v3455 = vadd.f32 %v2951, %v3350
      %v3456 = vadd.f32 %v2954, %v3353
      %v3457 = vadd.f32 %v2959, %v3358
      %v3458 = vadd.f32 %v2962, %v3361
      %v3459 = vadd.f32 %v2967, %v3366
      %v3460 = vadd.f32 %v2970, %v3369
      %v3461 = vadd.f32 %v2975, %v3374
      %v3462 = vadd.f32 %v2978, %v3377
      %v3463 = vadd.f32 %v2983, %v3382
      %v3464 = vadd.f32 %v2986, %v3385
      %v3465 = vadd.f32 %v2991, %v3390
      %v3466 = vadd.f32 %v2994, %v3393
      %v3467 = vadd.f32 %v2999, %v3398
      %v3468 = vadd.f32 %v3002, %v3401
      %v3469 = vadd.f32 %v3007, %v3406
      %v3470 = vadd.f32 %v3010, %v3409
      %v3471 = vadd.f32 %v3015, %v3414
      %v3472 = vadd.f32 %v3018, %v3417
      %v3473 = vadd.f32 %v3023, %v3422
      %v3474 = vadd.f32 %v3026, %v3425
      %v3475 = vadd.f32 %v3031, %v3430
      %v3476 = vpack.c.bf16 %v3116, %v3117
      %v3477 = vpack.c.bf16 %v3115, %v3115
      %s3478 = scalar_lea.vmem %s4, 96
      %v3479 = vld [vmem:[%s3478] sm:$0xf]
      %v3480 = vld [vmem:[%s3478 + $0x4] sm:$0xf]
      %v3481 = vld [vmem:[%s3478 + $0x8] sm:$0xf]
      %v3482 = vld [vmem:[%s3478 + $0xc] sm:$0xf]
      %v3483 = vld [vmem:[%s3478 + $0x10] sm:$0xf]
      %v3484 = vld [vmem:[%s3478 + $0x14] sm:$0xf]
      %v3485 = vld [vmem:[%s3478 + $0x18] sm:$0xf]
      %v3486 = vld [vmem:[%s3478 + $0x1c] sm:$0xf]
      %v3495 = vunpack.c.l.b16 %v3479
      %v3496 = vunpack.c.l.b16 %v3480
      %v3497 = vunpack.c.l.b16 %v3481
      %v3498 = vunpack.c.l.b16 %v3482
      %v3499 = vunpack.c.l.b16 %v3483
      %v3500 = vunpack.c.l.b16 %v3484
      %v3501 = vunpack.c.l.b16 %v3485
      %v3502 = vunpack.c.l.b16 %v3486
      %v3503 = vpack.c.b16 %v3496, %v3495
      %v3504 = vpack.c.b16 %v3498, %v3497
      %v3505 = vpack.c.b16 %v3500, %v3499
      %v3506 = vpack.c.b16 %v3502, %v3501
      %v3512 = vsel %vm2485, %v3476, 0
      %v3515 = vsel %vm2485, %v3477, 0
      %3517 = vmatprep.subr.bf16.mxu0 0
      %3518 = vmatpush1.bf16.msra.mxu0 %v3503
      %3519 = vmatprep.subr.bf16.mxu0 0
      %3520 = vmatpush1.bf16.msra.mxu0 %v3504
      %3521 = vmatprep.subr.bf16.mxu0 0
      %3522 = vmatpush1.bf16.msra.mxu0 %v3505
      %3523 = vmatprep.subr.bf16.mxu0 0
      %3524 = vmatpush1.bf16.msra.mxu0 %v3506
      %3525 = vmatprep.subr.bf16.mxu0 0
      %3526 = vmatpush1.bf16.msra.mxu0 0
      %3527 = vmatprep.subr.bf16.mxu0 0
      %3528 = vmatpush1.bf16.msra.mxu0 0
      %3529 = vmatprep.subr.bf16.mxu0 0
      %3530 = vmatpush1.bf16.msra.mxu0 0
      %3531 = vmatprep.subr.bf16.mxu0 0
      %3532 = vmatpush1.bf16.msra.mxu0 0
      %3533 = vmatprep.subr.bf16.mxu0 0
      %3534 = vmatpush1.bf16.msra.mxu0 0
      %3535 = vmatprep.subr.bf16.mxu0 0
      %3536 = vmatpush1.bf16.msra.mxu0 0
      %3537 = vmatprep.subr.bf16.mxu0 0
      %3538 = vmatpush1.bf16.msra.mxu0 0
      %3539 = vmatprep.subr.bf16.mxu0 0
      %3540 = vmatpush1.bf16.msra.mxu0 0
      %3541 = vmatprep.subr.bf16.mxu0 0
      %3542 = vmatpush1.bf16.msra.mxu0 0
      %3543 = vmatprep.subr.bf16.mxu0 0
      %3544 = vmatpush1.bf16.msra.mxu0 0
      %3545 = vmatprep.subr.bf16.mxu0 0
      %3546 = vmatpush1.bf16.msra.mxu0 0
      %3547 = vmatprep.subr.bf16.mxu0 0
      %3548 = vmatpush1.bf16.msra.mxu0 0
      %3549 = vmatprep.mubr.bf16.mxu0 0
      %3550 = vmatmul.mubr.bf16.gmra.mrb[0].mxu0 %v3176
      %v3551 = vpop.f32.mrb[0].mxu0
      %v3552 = vadd.f32 0.0, %v3551
      %v3553 = vpop.f32.mrb[0].mxu0
      %v3554 = vpop.f32.mrb[0].mxu0
      %v3555 = vadd.f32 0.0, %v3554
      %v3556 = vpop.f32.mrb[0].mxu0
      %3557 = vmatprep.mubr.bf16.mxu0 0
      %3558 = vmatmul.mubr.bf16.gmra.mrb[0].mxu0 %v3179
      %v3559 = vpop.f32.mrb[0].mxu0
      %v3560 = vadd.f32 0.0, %v3559
      %v3561 = vpop.f32.mrb[0].mxu0
      %v3562 = vpop.f32.mrb[0].mxu0
      %v3563 = vadd.f32 0.0, %v3562
      %v3564 = vpop.f32.mrb[0].mxu0
      %3565 = vmatprep.mubr.bf16.mxu0 0
      %3566 = vmatmul.mubr.bf16.gmra.mrb[0].mxu0 %v3182
      %v3567 = vpop.f32.mrb[0].mxu0
      %v3568 = vadd.f32 0.0, %v3567
      %v3569 = vpop.f32.mrb[0].mxu0
      %v3570 = vpop.f32.mrb[0].mxu0
      %v3571 = vadd.f32 0.0, %v3570
      %v3572 = vpop.f32.mrb[0].mxu0
      %3573 = vmatprep.mubr.bf16.mxu0 0
      %3574 = vmatmul.mubr.bf16.gmra.mrb[0].mxu0 %v3185
      %v3575 = vpop.f32.mrb[0].mxu0
      %v3576 = vadd.f32 0.0, %v3575
      %v3577 = vpop.f32.mrb[0].mxu0
      %v3578 = vpop.f32.mrb[0].mxu0
      %v3579 = vadd.f32 0.0, %v3578
      %v3580 = vpop.f32.mrb[0].mxu0
      %3581 = vmatprep.mubr.bf16.mxu0 0
      %3582 = vmatmul.mubr.bf16.gmra.mrb[0].mxu0 %v3188
      %v3583 = vpop.f32.mrb[0].mxu0
      %v3584 = vadd.f32 0.0, %v3583
      %v3585 = vpop.f32.mrb[0].mxu0
      %v3586 = vpop.f32.mrb[0].mxu0
      %v3587 = vadd.f32 0.0, %v3586
      %v3588 = vpop.f32.mrb[0].mxu0
      %3589 = vmatprep.mubr.bf16.mxu0 0
      %3590 = vmatmul.mubr.bf16.gmra.mrb[0].mxu0 %v3191
      %v3591 = vpop.f32.mrb[0].mxu0
      %v3592 = vadd.f32 0.0, %v3591
      %v3593 = vpop.f32.mrb[0].mxu0
      %v3594 = vpop.f32.mrb[0].mxu0
      %v3595 = vadd.f32 0.0, %v3594
      %v3596 = vpop.f32.mrb[0].mxu0
      %3597 = vmatprep.mubr.bf16.mxu0 0
      %3598 = vmatmul.mubr.bf16.gmra.mrb[0].mxu0 %v3194
      %v3599 = vpop.f32.mrb[0].mxu0
      %v3600 = vadd.f32 0.0, %v3599
      %v3601 = vpop.f32.mrb[0].mxu0
      %v3602 = vpop.f32.mrb[0].mxu0
      %v3603 = vadd.f32 0.0, %v3602
      %v3604 = vpop.f32.mrb[0].mxu0
      %3605 = vmatprep.mubr.bf16.mxu0 0
      %3606 = vmatmul.mubr.bf16.gmra.mrb[0].mxu0 %v3197
      %v3607 = vpop.f32.mrb[0].mxu0
      %v3608 = vadd.f32 0.0, %v3607
      %v3609 = vpop.f32.mrb[0].mxu0
      %v3610 = vpop.f32.mrb[0].mxu0
      %v3611 = vadd.f32 0.0, %v3610
      %v3612 = vpop.f32.mrb[0].mxu0
      %3613 = vmatprep.mubr.bf16.mxu0 0
      %3614 = vmatmul.mubr.bf16.gmra.mrb[0].mxu0 %v3200
      %v3615 = vpop.f32.mrb[0].mxu0
      %v3616 = vadd.f32 0.0, %v3615
      %v3617 = vpop.f32.mrb[0].mxu0
      %v3618 = vpop.f32.mrb[0].mxu0
      %v3619 = vadd.f32 0.0, %v3618
      %v3620 = vpop.f32.mrb[0].mxu0
      %3621 = vmatprep.mubr.bf16.mxu0 0
      %3622 = vmatmul.mubr.bf16.gmra.mrb[0].mxu0 %v3203
      %v3623 = vpop.f32.mrb[0].mxu0
      %v3624 = vadd.f32 0.0, %v3623
      %v3625 = vpop.f32.mrb[0].mxu0
      %v3626 = vpop.f32.mrb[0].mxu0
      %v3627 = vadd.f32 0.0, %v3626
      %v3628 = vpop.f32.mrb[0].mxu0
      %3629 = vmatprep.mubr.bf16.mxu0 0
      %3630 = vmatmul.mubr.bf16.gmra.mrb[0].mxu0 %v3206
      %v3631 = vpop.f32.mrb[0].mxu0
      %v3632 = vadd.f32 0.0, %v3631
      %v3633 = vpop.f32.mrb[0].mxu0
      %v3634 = vpop.f32.mrb[0].mxu0
      %v3635 = vadd.f32 0.0, %v3634
      %v3636 = vpop.f32.mrb[0].mxu0
      %3637 = vmatprep.mubr.bf16.mxu0 0
      %3638 = vmatmul.mubr.bf16.gmra.mrb[0].mxu0 %v3209
      %v3639 = vpop.f32.mrb[0].mxu0
      %v3640 = vadd.f32 0.0, %v3639
      %v3641 = vpop.f32.mrb[0].mxu0
      %v3642 = vpop.f32.mrb[0].mxu0
      %v3643 = vadd.f32 0.0, %v3642
      %v3644 = vpop.f32.mrb[0].mxu0
      %3645 = vmatprep.mubr.bf16.mxu0 0
      %3646 = vmatmul.mubr.bf16.gmra.mrb[0].mxu0 %v3212
      %v3647 = vpop.f32.mrb[0].mxu0
      %v3648 = vadd.f32 0.0, %v3647
      %v3649 = vpop.f32.mrb[0].mxu0
      %v3650 = vpop.f32.mrb[0].mxu0
      %v3651 = vadd.f32 0.0, %v3650
      %v3652 = vpop.f32.mrb[0].mxu0
      %3653 = vmatprep.mubr.bf16.mxu0 0
      %3654 = vmatmul.mubr.bf16.gmra.mrb[0].mxu0 %v3215
      %v3655 = vpop.f32.mrb[0].mxu0
      %v3656 = vadd.f32 0.0, %v3655
      %v3657 = vpop.f32.mrb[0].mxu0
      %v3658 = vpop.f32.mrb[0].mxu0
      %v3659 = vadd.f32 0.0, %v3658
      %v3660 = vpop.f32.mrb[0].mxu0
      %3661 = vmatprep.mubr.bf16.mxu0 0
      %3662 = vmatmul.mubr.bf16.gmra.mrb[0].mxu0 %v3218
      %v3663 = vpop.f32.mrb[0].mxu0
      %v3664 = vadd.f32 0.0, %v3663
      %v3665 = vpop.f32.mrb[0].mxu0
      %v3666 = vpop.f32.mrb[0].mxu0
      %v3667 = vadd.f32 0.0, %v3666
      %v3668 = vpop.f32.mrb[0].mxu0
      %3669 = vmatprep.mubr.bf16.mxu0 0
      %3670 = vmatmul.mubr.bf16.gmra.mrb[0].mxu0 %v3221
      %v3671 = vpop.f32.mrb[0].mxu0
      %v3672 = vadd.f32 0.0, %v3671
      %v3673 = vpop.f32.mrb[0].mxu0
      %v3674 = vpop.f32.mrb[0].mxu0
      %v3675 = vadd.f32 0.0, %v3674
      %v3676 = vpop.f32.mrb[0].mxu0
      %3677 = vmatprep.mubr.bf16.mxu0 0
      %3678 = vmatmul.mubr.bf16.gmra.mrb[0].mxu0 %v3224
      %v3679 = vpop.f32.mrb[0].mxu0
      %v3680 = vadd.f32 0.0, %v3679
      %v3681 = vpop.f32.mrb[0].mxu0
      %v3682 = vpop.f32.mrb[0].mxu0
      %v3683 = vadd.f32 0.0, %v3682
      %v3684 = vpop.f32.mrb[0].mxu0
      %3685 = vmatprep.mubr.bf16.mxu0 0
      %3686 = vmatmul.mubr.bf16.gmra.mrb[0].mxu0 %v3227
      %v3687 = vpop.f32.mrb[0].mxu0
      %v3688 = vadd.f32 0.0, %v3687
      %v3689 = vpop.f32.mrb[0].mxu0
      %v3690 = vpop.f32.mrb[0].mxu0
      %v3691 = vadd.f32 0.0, %v3690
      %v3692 = vpop.f32.mrb[0].mxu0
      %3693 = vmatprep.mubr.bf16.mxu0 0
      %3694 = vmatmul.mubr.bf16.gmra.mrb[0].mxu0 %v3230
      %v3695 = vpop.f32.mrb[0].mxu0
      %v3696 = vadd.f32 0.0, %v3695
      %v3697 = vpop.f32.mrb[0].mxu0
      %v3698 = vpop.f32.mrb[0].mxu0
      %v3699 = vadd.f32 0.0, %v3698
      %v3700 = vpop.f32.mrb[0].mxu0
      %3701 = vmatprep.mubr.bf16.mxu0 0
      %3702 = vmatmul.mubr.bf16.gmra.mrb[0].mxu0 %v3512
      %v3703 = vpop.f32.mrb[0].mxu0
      %v3704 = vadd.f32 0.0, %v3703
      %v3705 = vpop.f32.mrb[0].mxu0
      %v3706 = vpop.f32.mrb[0].mxu0
      %v3707 = vadd.f32 0.0, %v3706
      %v3708 = vpop.f32.mrb[0].mxu0
      %3709 = vmatprep.mubr.bf16.mxu0 0
      %3710 = vmatmul.mubr.bf16.gmra.mrb[0].mxu0 %v3515
      %v3711 = vpop.f32.mrb[0].mxu0
      %v3712 = vadd.f32 0.0, %v3711
      %v3713 = vpop.f32.mrb[0].mxu0
      %v3714 = vpop.f32.mrb[0].mxu0
      %v3715 = vpop.f32.mrb[0].mxu0
      %3716 = vdwg.mxu0
      %v3717 = vadd.f32 %v3435, %v3552
      %v3718 = vadd.f32 %v3436, %v3555
      %v3719 = vadd.f32 %v3437, %v3560
      %v3720 = vadd.f32 %v3438, %v3563
      %v3721 = vadd.f32 %v3439, %v3568
      %v3722 = vadd.f32 %v3440, %v3571
      %v3723 = vadd.f32 %v3441, %v3576
      %v3724 = vadd.f32 %v3442, %v3579
      %v3725 = vadd.f32 %v3443, %v3584
      %v3726 = vadd.f32 %v3444, %v3587
      %v3727 = vadd.f32 %v3445, %v3592
      %v3728 = vadd.f32 %v3446, %v3595
      %v3729 = vadd.f32 %v3447, %v3600
      %v3730 = vadd.f32 %v3448, %v3603
      %v3731 = vadd.f32 %v3449, %v3608
      %v3732 = vadd.f32 %v3450, %v3611
      %v3733 = vadd.f32 %v3451, %v3616
      %v3734 = vadd.f32 %v3452, %v3619
      %v3735 = vadd.f32 %v3453, %v3624
      %v3736 = vadd.f32 %v3454, %v3627
      %v3737 = vadd.f32 %v3455, %v3632
      %v3738 = vadd.f32 %v3456, %v3635
      %v3739 = vadd.f32 %v3457, %v3640
      %v3740 = vadd.f32 %v3458, %v3643
      %v3741 = vadd.f32 %v3459, %v3648
      %v3742 = vadd.f32 %v3460, %v3651
      %v3743 = vadd.f32 %v3461, %v3656
      %v3744 = vadd.f32 %v3462, %v3659
      %v3745 = vadd.f32 %v3463, %v3664
      %v3746 = vadd.f32 %v3464, %v3667
      %v3747 = vadd.f32 %v3465, %v3672
      %v3748 = vadd.f32 %v3466, %v3675
      %v3749 = vadd.f32 %v3467, %v3680
      %v3750 = vadd.f32 %v3468, %v3683
      %v3751 = vadd.f32 %v3469, %v3688
      %v3752 = vadd.f32 %v3470, %v3691
      %v3753 = vadd.f32 %v3471, %v3696
      %v3754 = vadd.f32 %v3472, %v3699
      %v3755 = vadd.f32 %v3473, %v3704
      %v3756 = vadd.f32 %v3474, %v3707
      %v3757 = vadd.f32 %v3475, %v3712
      %v3758 = vrot.slane %v2279, 3
      %v3759 = vrot.slane %v2280, 3
      %v3760 = vrot.slane %v2281, 3
      %v3761 = vrot.slane %v2282, 3
      %v3762 = vrot.slane %v2283, 3
      %v3763 = vrot.slane %v2284, 3
      %v3764 = vrot.slane %v2285, 3
      %v3765 = vrot.slane %v2286, 3
      %v3766 = vrot.slane %v2287, 3
      %v3767 = vrot.slane %v2288, 3
      %v3768 = vrot.slane %v2289, 3
      %v3769 = vrot.slane %v2290, 3
      %v3770 = vrot.slane %v2291, 3
      %v3771 = vrot.slane %v2292, 3
      %v3772 = vrot.slane %v2293, 3
      %v3773 = vrot.slane %v2294, 3
      %v3774 = vrot.slane %v2295, 3
      %v3775 = vrot.slane %v2296, 3
      %v3776 = vrot.slane %v2297, 3
      %v3777 = vrot.slane %v2298, 3
      %v3778 = vrot.slane %v2299, 3
      %v3779 = vrot.slane %v2300, 3
      %v3780 = vrot.slane %v2301, 3
      %v3781 = vrot.slane %v2302, 3
      %v3782 = vrot.slane %v2303, 3
      %v3783 = vrot.slane %v2304, 3
      %v3784 = vrot.slane %v2305, 3
      %v3785 = vrot.slane %v2306, 3
      %v3786 = vrot.slane %v2307, 3
      %v3787 = vrot.slane %v2308, 3
      %v3788 = vrot.slane %v2309, 3
      %v3789 = vrot.slane %v2310, 3
      %v3790 = vrot.slane %v2311, 3
      %v3791 = vrot.slane %v2312, 3
      %v3792 = vrot.slane %v2313, 3
      %v3793 = vrot.slane %v2314, 3
      %v3794 = vrot.slane %v2315, 3
      %v3795 = vrot.slane %v2316, 3
      %v3796 = vrot.slane %v2317, 3
      %v3797 = vrot.slane %v2318, 3
      %v3798 = vrot.slane %v2319, 3
      %v3799 = vsel %vm1162, %v3797, %v3798
      %v3800 = vsel %vm1162, %v3796, %v3797
      %v3801 = vsel %vm1162, %v3795, %v3796
      %v3802 = vsel %vm1162, %v3794, %v3795
      %v3803 = vsel %vm1162, %v3793, %v3794
      %v3804 = vsel %vm1162, %v3792, %v3793
      %v3805 = vsel %vm1162, %v3791, %v3792
      %v3806 = vsel %vm1162, %v3790, %v3791
      %v3807 = vsel %vm1162, %v3789, %v3790
      %v3808 = vsel %vm1162, %v3788, %v3789
      %v3809 = vsel %vm1162, %v3787, %v3788
      %v3810 = vsel %vm1162, %v3786, %v3787
      %v3811 = vsel %vm1162, %v3785, %v3786
      %v3812 = vsel %vm1162, %v3784, %v3785
      %v3813 = vsel %vm1162, %v3783, %v3784
      %v3814 = vsel %vm1162, %v3782, %v3783
      %v3815 = vsel %vm1162, %v3781, %v3782
      %v3816 = vsel %vm1162, %v3780, %v3781
      %v3817 = vsel %vm1162, %v3779, %v3780
      %v3818 = vsel %vm1162, %v3778, %v3779
      %v3819 = vsel %vm1162, %v3777, %v3778
      %v3820 = vsel %vm1162, %v3776, %v3777
      %v3821 = vsel %vm1162, %v3775, %v3776
      %v3822 = vsel %vm1162, %v3774, %v3775
      %v3823 = vsel %vm1162, %v3773, %v3774
      %v3824 = vsel %vm1162, %v3772, %v3773
      %v3825 = vsel %vm1162, %v3771, %v3772
      %v3826 = vsel %vm1162, %v3770, %v3771
      %v3827 = vsel %vm1162, %v3769, %v3770
      %v3828 = vsel %vm1162, %v3768, %v3769
      %v3829 = vsel %vm1162, %v3767, %v3768
      %v3830 = vsel %vm1162, %v3766, %v3767
      %v3831 = vsel %vm1162, %v3765, %v3766
      %v3832 = vsel %vm1162, %v3764, %v3765
      %v3833 = vsel %vm1162, %v3763, %v3764
      %v3834 = vsel %vm1162, %v3762, %v3763
      %v3835 = vsel %vm1162, %v3761, %v3762
      %v3836 = vsel %vm1162, %v3760, %v3761
      %v3837 = vsel %vm1162, %v3759, %v3760
      %v3838 = vsel %vm1162, %v3758, %v3759
      %v3839 = vsel %vm1162, %v3798, %v3758
      %v3840 = vpack.c.bf16 %v3835, %v3836
      %v3841 = vpack.c.bf16 %v3833, %v3834
      %v3842 = vpack.c.bf16 %v3831, %v3832
      %v3843 = vpack.c.bf16 %v3829, %v3830
      %v3844 = vpack.c.bf16 %v3827, %v3828
      %v3845 = vpack.c.bf16 %v3825, %v3826
      %v3846 = vpack.c.bf16 %v3823, %v3824
      %v3847 = vpack.c.bf16 %v3821, %v3822
      %v3848 = vpack.c.bf16 %v3819, %v3820
      %v3849 = vpack.c.bf16 %v3817, %v3818
      %v3850 = vpack.c.bf16 %v3815, %v3816
      %v3851 = vpack.c.bf16 %v3813, %v3814
      %v3852 = vpack.c.bf16 %v3811, %v3812
      %v3853 = vpack.c.bf16 %v3809, %v3810
      %v3854 = vpack.c.bf16 %v3807, %v3808
      %v3855 = vpack.c.bf16 %v3805, %v3806
      %v3856 = vpack.c.bf16 %v3803, %v3804
      %v3857 = vpack.c.bf16 %v3801, %v3802
      %v3858 = vpack.c.bf16 %v3799, %v3800
      %v3859 = vpack.c.bf16 %v3838, %v3839
      %v3860 = vpack.c.bf16 %v3837, %v3837
      %s3861 = scalar_lea.vmem %s4, 128
      %v3862 = vld [vmem:[%s3861] sm:$0xf]
      %v3863 = vld [vmem:[%s3861 + $0x4] sm:$0xf]
      %v3864 = vld [vmem:[%s3861 + $0x8] sm:$0xf]
      %v3865 = vld [vmem:[%s3861 + $0xc] sm:$0xf]
      %v3866 = vld [vmem:[%s3861 + $0x10] sm:$0xf]
      %v3867 = vld [vmem:[%s3861 + $0x14] sm:$0xf]
      %v3868 = vld [vmem:[%s3861 + $0x18] sm:$0xf]
      %v3869 = vld [vmem:[%s3861 + $0x1c] sm:$0xf]
      %v3878 = vunpack.c.l.b16 %v3862
      %v3879 = vunpack.c.l.b16 %v3863
      %v3880 = vunpack.c.l.b16 %v3864
      %v3881 = vunpack.c.l.b16 %v3865
      %v3882 = vunpack.c.l.b16 %v3866
      %v3883 = vunpack.c.l.b16 %v3867
      %v3884 = vunpack.c.l.b16 %v3868
      %v3885 = vunpack.c.l.b16 %v3869
      %v3886 = vpack.c.b16 %v3879, %v3878
      %v3887 = vpack.c.b16 %v3881, %v3880
      %v3888 = vpack.c.b16 %v3883, %v3882
      %v3889 = vpack.c.b16 %v3885, %v3884
      %v3895 = vsel %vm2485, %v3840, 0
      %v3898 = vsel %vm2485, %v3841, 0
      %v3901 = vsel %vm2485, %v3842, 0
      %v3904 = vsel %vm2485, %v3843, 0
      %v3907 = vsel %vm2485, %v3844, 0
      %v3910 = vsel %vm2485, %v3845, 0
      %v3913 = vsel %vm2485, %v3846, 0
      %v3916 = vsel %vm2485, %v3847, 0
      %v3919 = vsel %vm2485, %v3848, 0
      %v3922 = vsel %vm2485, %v3849, 0
      %v3925 = vsel %vm2485, %v3850, 0
      %v3928 = vsel %vm2485, %v3851, 0
      %v3931 = vsel %vm2485, %v3852, 0
      %v3934 = vsel %vm2485, %v3853, 0
      %v3937 = vsel %vm2485, %v3854, 0
      %v3940 = vsel %vm2485, %v3855, 0
      %v3943 = vsel %vm2485, %v3856, 0
      %v3946 = vsel %vm2485, %v3857, 0
      %v3949 = vsel %vm2485, %v3858, 0
      %v3952 = vsel %vm2485, %v3859, 0
      %v3955 = vsel %vm2485, %v3860, 0
      %3957 = vmatprep.subr.bf16.mxu0 0
      %3958 = vmatpush1.bf16.msra.mxu0 %v3886
      %3959 = vmatprep.subr.bf16.mxu0 0
      %3960 = vmatpush1.bf16.msra.mxu0 %v3887
      %3961 = vmatprep.subr.bf16.mxu0 0
      %3962 = vmatpush1.bf16.msra.mxu0 %v3888
      %3963 = vmatprep.subr.bf16.mxu0 0
      %3964 = vmatpush1.bf16.msra.mxu0 %v3889
      %3965 = vmatprep.subr.bf16.mxu0 0
      %3966 = vmatpush1.bf16.msra.mxu0 0
      %3967 = vmatprep.subr.bf16.mxu0 0
      %3968 = vmatpush1.bf16.msra.mxu0 0
      %3969 = vmatprep.subr.bf16.mxu0 0
      %3970 = vmatpush1.bf16.msra.mxu0 0
      %3971 = vmatprep.subr.bf16.mxu0 0
      %3972 = vmatpush1.bf16.msra.mxu0 0
      %3973 = vmatprep.subr.bf16.mxu0 0
      %3974 = vmatpush1.bf16.msra.mxu0 0
      %3975 = vmatprep.subr.bf16.mxu0 0
      %3976 = vmatpush1.bf16.msra.mxu0 0
      %3977 = vmatprep.subr.bf16.mxu0 0
      %3978 = vmatpush1.bf16.msra.mxu0 0
      %3979 = vmatprep.subr.bf16.mxu0 0
      %3980 = vmatpush1.bf16.msra.mxu0 0
      %3981 = vmatprep.subr.bf16.mxu0 0
      %3982 = vmatpush1.bf16.msra.mxu0 0
      %3983 = vmatprep.subr.bf16.mxu0 0
      %3984 = vmatpush1.bf16.msra.mxu0 0
      %3985 = vmatprep.subr.bf16.mxu0 0
      %3986 = vmatpush1.bf16.msra.mxu0 0
      %3987 = vmatprep.subr.bf16.mxu0 0
      %3988 = vmatpush1.bf16.msra.mxu0 0
      %3989 = vmatprep.mubr.bf16.mxu0 0
      %3990 = vmatmul.mubr.bf16.gmra.mrb[0].mxu0 %v3895
      %v3991 = vpop.f32.mrb[0].mxu0
      %v3992 = vadd.f32 0.0, %v3991
      %v3993 = vpop.f32.mrb[0].mxu0
      %v3994 = vpop.f32.mrb[0].mxu0
      %v3995 = vadd.f32 0.0, %v3994
      %v3996 = vpop.f32.mrb[0].mxu0
      %3997 = vmatprep.mubr.bf16.mxu0 0
      %3998 = vmatmul.mubr.bf16.gmra.mrb[0].mxu0 %v3898
      %v3999 = vpop.f32.mrb[0].mxu0
      %v4000 = vadd.f32 0.0, %v3999
      %v4001 = vpop.f32.mrb[0].mxu0
      %v4002 = vpop.f32.mrb[0].mxu0
      %v4003 = vadd.f32 0.0, %v4002
      %v4004 = vpop.f32.mrb[0].mxu0
      %4005 = vmatprep.mubr.bf16.mxu0 0
      %4006 = vmatmul.mubr.bf16.gmra.mrb[0].mxu0 %v3901
      %v4007 = vpop.f32.mrb[0].mxu0
      %v4008 = vadd.f32 0.0, %v4007
      %v4009 = vpop.f32.mrb[0].mxu0
      %v4010 = vpop.f32.mrb[0].mxu0
      %v4011 = vadd.f32 0.0, %v4010
      %v4012 = vpop.f32.mrb[0].mxu0
      %4013 = vmatprep.mubr.bf16.mxu0 0
      %4014 = vmatmul.mubr.bf16.gmra.mrb[0].mxu0 %v3904
      %v4015 = vpop.f32.mrb[0].mxu0
      %v4016 = vadd.f32 0.0, %v4015
      %v4017 = vpop.f32.mrb[0].mxu0
      %v4018 = vpop.f32.mrb[0].mxu0
      %v4019 = vadd.f32 0.0, %v4018
      %v4020 = vpop.f32.mrb[0].mxu0
      %4021 = vmatprep.mubr.bf16.mxu0 0
      %4022 = vmatmul.mubr.bf16.gmra.mrb[0].mxu0 %v3907
      %v4023 = vpop.f32.mrb[0].mxu0
      %v4024 = vadd.f32 0.0, %v4023
      %v4025 = vpop.f32.mrb[0].mxu0
      %v4026 = vpop.f32.mrb[0].mxu0
      %v4027 = vadd.f32 0.0, %v4026
      %v4028 = vpop.f32.mrb[0].mxu0
      %4029 = vmatprep.mubr.bf16.mxu0 0
      %4030 = vmatmul.mubr.bf16.gmra.mrb[0].mxu0 %v3910
      %v4031 = vpop.f32.mrb[0].mxu0
      %v4032 = vadd.f32 0.0, %v4031
      %v4033 = vpop.f32.mrb[0].mxu0
      %v4034 = vpop.f32.mrb[0].mxu0
      %v4035 = vadd.f32 0.0, %v4034
      %v4036 = vpop.f32.mrb[0].mxu0
      %4037 = vmatprep.mubr.bf16.mxu0 0
      %4038 = vmatmul.mubr.bf16.gmra.mrb[0].mxu0 %v3913
      %v4039 = vpop.f32.mrb[0].mxu0
      %v4040 = vadd.f32 0.0, %v4039
      %v4041 = vpop.f32.mrb[0].mxu0
      %v4042 = vpop.f32.mrb[0].mxu0
      %v4043 = vadd.f32 0.0, %v4042
      %v4044 = vpop.f32.mrb[0].mxu0
      %4045 = vmatprep.mubr.bf16.mxu0 0
      %4046 = vmatmul.mubr.bf16.gmra.mrb[0].mxu0 %v3916
      %v4047 = vpop.f32.mrb[0].mxu0
      %v4048 = vadd.f32 0.0, %v4047
      %v4049 = vpop.f32.mrb[0].mxu0
      %v4050 = vpop.f32.mrb[0].mxu0
      %v4051 = vadd.f32 0.0, %v4050
      %v4052 = vpop.f32.mrb[0].mxu0
      %4053 = vmatprep.mubr.bf16.mxu0 0
      %4054 = vmatmul.mubr.bf16.gmra.mrb[0].mxu0 %v3919
      %v4055 = vpop.f32.mrb[0].mxu0
      %v4056 = vadd.f32 0.0, %v4055
      %v4057 = vpop.f32.mrb[0].mxu0
      %v4058 = vpop.f32.mrb[0].mxu0
      %v4059 = vadd.f32 0.0, %v4058
      %v4060 = vpop.f32.mrb[0].mxu0
      %4061 = vmatprep.mubr.bf16.mxu0 0
      %4062 = vmatmul.mubr.bf16.gmra.mrb[0].mxu0 %v3922
      %v4063 = vpop.f32.mrb[0].mxu0
      %v4064 = vadd.f32 0.0, %v4063
      %v4065 = vpop.f32.mrb[0].mxu0
      %v4066 = vpop.f32.mrb[0].mxu0
      %v4067 = vadd.f32 0.0, %v4066
      %v4068 = vpop.f32.mrb[0].mxu0
      %4069 = vmatprep.mubr.bf16.mxu0 0
      %4070 = vmatmul.mubr.bf16.gmra.mrb[0].mxu0 %v3925
      %v4071 = vpop.f32.mrb[0].mxu0
      %v4072 = vadd.f32 0.0, %v4071
      %v4073 = vpop.f32.mrb[0].mxu0
      %v4074 = vpop.f32.mrb[0].mxu0
      %v4075 = vadd.f32 0.0, %v4074
      %v4076 = vpop.f32.mrb[0].mxu0
      %4077 = vmatprep.mubr.bf16.mxu0 0
      %4078 = vmatmul.mubr.bf16.gmra.mrb[0].mxu0 %v3928
      %v4079 = vpop.f32.mrb[0].mxu0
      %v4080 = vadd.f32 0.0, %v4079
      %v4081 = vpop.f32.mrb[0].mxu0
      %v4082 = vpop.f32.mrb[0].mxu0
      %v4083 = vadd.f32 0.0, %v4082
      %v4084 = vpop.f32.mrb[0].mxu0
      %4085 = vmatprep.mubr.bf16.mxu0 0
      %4086 = vmatmul.mubr.bf16.gmra.mrb[0].mxu0 %v3931
      %v4087 = vpop.f32.mrb[0].mxu0
      %v4088 = vadd.f32 0.0, %v4087
      %v4089 = vpop.f32.mrb[0].mxu0
      %v4090 = vpop.f32.mrb[0].mxu0
      %v4091 = vadd.f32 0.0, %v4090
      %v4092 = vpop.f32.mrb[0].mxu0
      %4093 = vmatprep.mubr.bf16.mxu0 0
      %4094 = vmatmul.mubr.bf16.gmra.mrb[0].mxu0 %v3934
      %v4095 = vpop.f32.mrb[0].mxu0
      %v4096 = vadd.f32 0.0, %v4095
      %v4097 = vpop.f32.mrb[0].mxu0
      %v4098 = vpop.f32.mrb[0].mxu0
      %v4099 = vadd.f32 0.0, %v4098
      %v4100 = vpop.f32.mrb[0].mxu0
      %4101 = vmatprep.mubr.bf16.mxu0 0
      %4102 = vmatmul.mubr.bf16.gmra.mrb[0].mxu0 %v3937
      %v4103 = vpop.f32.mrb[0].mxu0
      %v4104 = vadd.f32 0.0, %v4103
      %v4105 = vpop.f32.mrb[0].mxu0
      %v4106 = vpop.f32.mrb[0].mxu0
      %v4107 = vadd.f32 0.0, %v4106
      %v4108 = vpop.f32.mrb[0].mxu0
      %4109 = vmatprep.mubr.bf16.mxu0 0
      %4110 = vmatmul.mubr.bf16.gmra.mrb[0].mxu0 %v3940
      %v4111 = vpop.f32.mrb[0].mxu0
      %v4112 = vadd.f32 0.0, %v4111
      %v4113 = vpop.f32.mrb[0].mxu0
      %v4114 = vpop.f32.mrb[0].mxu0
      %v4115 = vadd.f32 0.0, %v4114
      %v4116 = vpop.f32.mrb[0].mxu0
      %4117 = vmatprep.mubr.bf16.mxu0 0
      %4118 = vmatmul.mubr.bf16.gmra.mrb[0].mxu0 %v3943
      %v4119 = vpop.f32.mrb[0].mxu0
      %v4120 = vadd.f32 0.0, %v4119
      %v4121 = vpop.f32.mrb[0].mxu0
      %v4122 = vpop.f32.mrb[0].mxu0
      %v4123 = vadd.f32 0.0, %v4122
      %v4124 = vpop.f32.mrb[0].mxu0
      %4125 = vmatprep.mubr.bf16.mxu0 0
      %4126 = vmatmul.mubr.bf16.gmra.mrb[0].mxu0 %v3946
      %v4127 = vpop.f32.mrb[0].mxu0
      %v4128 = vadd.f32 0.0, %v4127
      %v4129 = vpop.f32.mrb[0].mxu0
      %v4130 = vpop.f32.mrb[0].mxu0
      %v4131 = vadd.f32 0.0, %v4130
      %v4132 = vpop.f32.mrb[0].mxu0
      %4133 = vmatprep.mubr.bf16.mxu0 0
      %4134 = vmatmul.mubr.bf16.gmra.mrb[0].mxu0 %v3949
      %v4135 = vpop.f32.mrb[0].mxu0
      %v4136 = vadd.f32 0.0, %v4135
      %v4137 = vpop.f32.mrb[0].mxu0
      %v4138 = vpop.f32.mrb[0].mxu0
      %v4139 = vadd.f32 0.0, %v4138
      %v4140 = vpop.f32.mrb[0].mxu0
      %4141 = vmatprep.mubr.bf16.mxu0 0
      %4142 = vmatmul.mubr.bf16.gmra.mrb[0].mxu0 %v3952
      %v4143 = vpop.f32.mrb[0].mxu0
      %v4144 = vadd.f32 0.0, %v4143
      %v4145 = vpop.f32.mrb[0].mxu0
      %v4146 = vpop.f32.mrb[0].mxu0
      %v4147 = vadd.f32 0.0, %v4146
      %v4148 = vpop.f32.mrb[0].mxu0
      %4149 = vmatprep.mubr.bf16.mxu0 0
      %4150 = vmatmul.mubr.bf16.gmra.mrb[0].mxu0 %v3955
      %v4151 = vpop.f32.mrb[0].mxu0
      %v4152 = vadd.f32 0.0, %v4151
      %v4153 = vpop.f32.mrb[0].mxu0
      %v4154 = vpop.f32.mrb[0].mxu0
      %v4155 = vpop.f32.mrb[0].mxu0
      %4156 = vdwg.mxu0
      %v4157 = vadd.f32 %v3717, %v3992
      %v4158 = vadd.f32 %v3718, %v3995
      %v4159 = vadd.f32 %v3719, %v4000
      %v4160 = vadd.f32 %v3720, %v4003
      %v4161 = vadd.f32 %v3721, %v4008
      %v4162 = vadd.f32 %v3722, %v4011
      %v4163 = vadd.f32 %v3723, %v4016
      %v4164 = vadd.f32 %v3724, %v4019
      %v4165 = vadd.f32 %v3725, %v4024
      %v4166 = vadd.f32 %v3726, %v4027
      %v4167 = vadd.f32 %v3727, %v4032
      %v4168 = vadd.f32 %v3728, %v4035
      %v4169 = vadd.f32 %v3729, %v4040
      %v4170 = vadd.f32 %v3730, %v4043
      %v4171 = vadd.f32 %v3731, %v4048
      %v4172 = vadd.f32 %v3732, %v4051
      %v4173 = vadd.f32 %v3733, %v4056
      %v4174 = vadd.f32 %v3734, %v4059
      %v4175 = vadd.f32 %v3735, %v4064
      %v4176 = vadd.f32 %v3736, %v4067
      %v4177 = vadd.f32 %v3737, %v4072
      %v4178 = vadd.f32 %v3738, %v4075
      %v4179 = vadd.f32 %v3739, %v4080
      %v4180 = vadd.f32 %v3740, %v4083
      %v4181 = vadd.f32 %v3741, %v4088
      %v4182 = vadd.f32 %v3742, %v4091
      %v4183 = vadd.f32 %v3743, %v4096
      %v4184 = vadd.f32 %v3744, %v4099
      %v4185 = vadd.f32 %v3745, %v4104
      %v4186 = vadd.f32 %v3746, %v4107
      %v4187 = vadd.f32 %v3747, %v4112
      %v4188 = vadd.f32 %v3748, %v4115
      %v4189 = vadd.f32 %v3749, %v4120
      %v4190 = vadd.f32 %v3750, %v4123
      %v4191 = vadd.f32 %v3751, %v4128
      %v4192 = vadd.f32 %v3752, %v4131
      %v4193 = vadd.f32 %v3753, %v4136
      %v4194 = vadd.f32 %v3754, %v4139
      %v4195 = vadd.f32 %v3755, %v4144
      %v4196 = vadd.f32 %v3756, %v4147
      %v4197 = vadd.f32 %v3757, %v4152
      %v4198 = vrot.slane %v2279, 4
      %v4199 = vrot.slane %v2280, 4
      %v4200 = vrot.slane %v2281, 4
      %v4201 = vrot.slane %v2282, 4
      %v4202 = vrot.slane %v2283, 4
      %v4203 = vrot.slane %v2284, 4
      %v4204 = vrot.slane %v2285, 4
      %v4205 = vrot.slane %v2286, 4
      %v4206 = vrot.slane %v2287, 4
      %v4207 = vrot.slane %v2288, 4
      %v4208 = vrot.slane %v2289, 4
      %v4209 = vrot.slane %v2290, 4
      %v4210 = vrot.slane %v2291, 4
      %v4211 = vrot.slane %v2292, 4
      %v4212 = vrot.slane %v2293, 4
      %v4213 = vrot.slane %v2294, 4
      %v4214 = vrot.slane %v2295, 4
      %v4215 = vrot.slane %v2296, 4
      %v4216 = vrot.slane %v2297, 4
      %v4217 = vrot.slane %v2298, 4
      %v4218 = vrot.slane %v2299, 4
      %v4219 = vrot.slane %v2300, 4
      %v4220 = vrot.slane %v2301, 4
      %v4221 = vrot.slane %v2302, 4
      %v4222 = vrot.slane %v2303, 4
      %v4223 = vrot.slane %v2304, 4
      %v4224 = vrot.slane %v2305, 4
      %v4225 = vrot.slane %v2306, 4
      %v4226 = vrot.slane %v2307, 4
      %v4227 = vrot.slane %v2308, 4
      %v4228 = vrot.slane %v2309, 4
      %v4229 = vrot.slane %v2310, 4
      %v4230 = vrot.slane %v2311, 4
      %v4231 = vrot.slane %v2312, 4
      %v4232 = vrot.slane %v2313, 4
      %v4233 = vrot.slane %v2314, 4
      %v4234 = vrot.slane %v2315, 4
      %v4235 = vrot.slane %v2316, 4
      %v4236 = vrot.slane %v2317, 4
      %v4237 = vrot.slane %v2318, 4
      %v4238 = vrot.slane %v2319, 4
      %v4239 = vsel %vm1335, %v4237, %v4238
      %v4240 = vsel %vm1335, %v4236, %v4237
      %v4241 = vsel %vm1335, %v4235, %v4236
      %v4242 = vsel %vm1335, %v4234, %v4235
      %v4243 = vsel %vm1335, %v4233, %v4234
      %v4244 = vsel %vm1335, %v4232, %v4233
      %v4245 = vsel %vm1335, %v4231, %v4232
      %v4246 = vsel %vm1335, %v4230, %v4231
      %v4247 = vsel %vm1335, %v4229, %v4230
      %v4248 = vsel %vm1335, %v4228, %v4229
      %v4249 = vsel %vm1335, %v4227, %v4228
      %v4250 = vsel %vm1335, %v4226, %v4227
      %v4251 = vsel %vm1335, %v4225, %v4226
      %v4252 = vsel %vm1335, %v4224, %v4225
      %v4253 = vsel %vm1335, %v4223, %v4224
      %v4254 = vsel %vm1335, %v4222, %v4223
      %v4255 = vsel %vm1335, %v4221, %v4222
      %v4256 = vsel %vm1335, %v4220, %v4221
      %v4257 = vsel %vm1335, %v4219, %v4220
      %v4258 = vsel %vm1335, %v4218, %v4219
      %v4259 = vsel %vm1335, %v4217, %v4218
      %v4260 = vsel %vm1335, %v4216, %v4217
      %v4261 = vsel %vm1335, %v4215, %v4216
      %v4262 = vsel %vm1335, %v4214, %v4215
      %v4263 = vsel %vm1335, %v4213, %v4214
      %v4264 = vsel %vm1335, %v4212, %v4213
      %v4265 = vsel %vm1335, %v4211, %v4212
      %v4266 = vsel %vm1335, %v4210, %v4211
      %v4267 = vsel %vm1335, %v4209, %v4210
      %v4268 = vsel %vm1335, %v4208, %v4209
      %v4269 = vsel %vm1335, %v4207, %v4208
      %v4270 = vsel %vm1335, %v4206, %v4207
      %v4271 = vsel %vm1335, %v4205, %v4206
      %v4272 = vsel %vm1335, %v4204, %v4205
      %v4273 = vsel %vm1335, %v4203, %v4204
      %v4274 = vsel %vm1335, %v4202, %v4203
      %v4275 = vsel %vm1335, %v4201, %v4202
      %v4276 = vsel %vm1335, %v4200, %v4201
      %v4277 = vsel %vm1335, %v4199, %v4200
      %v4278 = vsel %vm1335, %v4198, %v4199
      %v4279 = vsel %vm1335, %v4238, %v4198
      %v4280 = vpack.c.bf16 %v4275, %v4276
      %v4281 = vpack.c.bf16 %v4273, %v4274
      %v4282 = vpack.c.bf16 %v4271, %v4272
      %v4283 = vpack.c.bf16 %v4269, %v4270
      %v4284 = vpack.c.bf16 %v4267, %v4268
      %v4285 = vpack.c.bf16 %v4265, %v4266
      %v4286 = vpack.c.bf16 %v4263, %v4264
      %v4287 = vpack.c.bf16 %v4261, %v4262
      %v4288 = vpack.c.bf16 %v4259, %v4260
      %v4289 = vpack.c.bf16 %v4257, %v4258
      %v4290 = vpack.c.bf16 %v4255, %v4256
      %v4291 = vpack.c.bf16 %v4253, %v4254
      %v4292 = vpack.c.bf16 %v4251, %v4252
      %v4293 = vpack.c.bf16 %v4249, %v4250
      %v4294 = vpack.c.bf16 %v4247, %v4248
      %v4295 = vpack.c.bf16 %v4245, %v4246
      %v4296 = vpack.c.bf16 %v4243, %v4244
      %v4297 = vpack.c.bf16 %v4241, %v4242
      %v4298 = vpack.c.bf16 %v4239, %v4240
      %v4299 = vpack.c.bf16 %v4278, %v4279
      %v4300 = vpack.c.bf16 %v4277, %v4277
      %s4301 = scalar_lea.vmem %s4, 160
      %v4302 = vld [vmem:[%s4301] sm:$0xf]
      %v4303 = vld [vmem:[%s4301 + $0x4] sm:$0xf]
      %v4304 = vld [vmem:[%s4301 + $0x8] sm:$0xf]
      %v4305 = vld [vmem:[%s4301 + $0xc] sm:$0xf]
      %v4306 = vld [vmem:[%s4301 + $0x10] sm:$0xf]
      %v4307 = vld [vmem:[%s4301 + $0x14] sm:$0xf]
      %v4308 = vld [vmem:[%s4301 + $0x18] sm:$0xf]
      %v4309 = vld [vmem:[%s4301 + $0x1c] sm:$0xf]
      %v4318 = vunpack.c.l.b16 %v4302
      %v4319 = vunpack.c.l.b16 %v4303
      %v4320 = vunpack.c.l.b16 %v4304
      %v4321 = vunpack.c.l.b16 %v4305
      %v4322 = vunpack.c.l.b16 %v4306
      %v4323 = vunpack.c.l.b16 %v4307
      %v4324 = vunpack.c.l.b16 %v4308
      %v4325 = vunpack.c.l.b16 %v4309
      %v4326 = vpack.c.b16 %v4319, %v4318
      %v4327 = vpack.c.b16 %v4321, %v4320
      %v4328 = vpack.c.b16 %v4323, %v4322
      %v4329 = vpack.c.b16 %v4325, %v4324
      %v4335 = vsel %vm2485, %v4280, 0
      %v4338 = vsel %vm2485, %v4281, 0
      %v4341 = vsel %vm2485, %v4282, 0
      %v4344 = vsel %vm2485, %v4283, 0
      %v4347 = vsel %vm2485, %v4284, 0
      %v4350 = vsel %vm2485, %v4285, 0
      %v4353 = vsel %vm2485, %v4286, 0
      %v4356 = vsel %vm2485, %v4287, 0
      %v4359 = vsel %vm2485, %v4288, 0
      %v4362 = vsel %vm2485, %v4289, 0
      %v4365 = vsel %vm2485, %v4290, 0
      %v4368 = vsel %vm2485, %v4291, 0
      %v4371 = vsel %vm2485, %v4292, 0
      %v4374 = vsel %vm2485, %v4293, 0
      %v4377 = vsel %vm2485, %v4294, 0
      %v4380 = vsel %vm2485, %v4295, 0
      %v4383 = vsel %vm2485, %v4296, 0
      %v4386 = vsel %vm2485, %v4297, 0
      %v4389 = vsel %vm2485, %v4298, 0
      %v4392 = vsel %vm2485, %v4299, 0
      %v4395 = vsel %vm2485, %v4300, 0
      %4397 = vmatprep.subr.bf16.mxu0 0
      %4398 = vmatpush1.bf16.msra.mxu0 %v4326
      %4399 = vmatprep.subr.bf16.mxu0 0
      %4400 = vmatpush1.bf16.msra.mxu0 %v4327
      %4401 = vmatprep.subr.bf16.mxu0 0
      %4402 = vmatpush1.bf16.msra.mxu0 %v4328
      %4403 = vmatprep.subr.bf16.mxu0 0
      %4404 = vmatpush1.bf16.msra.mxu0 %v4329
      %4405 = vmatprep.subr.bf16.mxu0 0
      %4406 = vmatpush1.bf16.msra.mxu0 0
      %4407 = vmatprep.subr.bf16.mxu0 0
      %4408 = vmatpush1.bf16.msra.mxu0 0
      %4409 = vmatprep.subr.bf16.mxu0 0
      %4410 = vmatpush1.bf16.msra.mxu0 0
      %4411 = vmatprep.subr.bf16.mxu0 0
      %4412 = vmatpush1.bf16.msra.mxu0 0
      %4413 = vmatprep.subr.bf16.mxu0 0
      %4414 = vmatpush1.bf16.msra.mxu0 0
      %4415 = vmatprep.subr.bf16.mxu0 0
      %4416 = vmatpush1.bf16.msra.mxu0 0
      %4417 = vmatprep.subr.bf16.mxu0 0
      %4418 = vmatpush1.bf16.msra.mxu0 0
      %4419 = vmatprep.subr.bf16.mxu0 0
      %4420 = vmatpush1.bf16.msra.mxu0 0
      %4421 = vmatprep.subr.bf16.mxu0 0
      %4422 = vmatpush1.bf16.msra.mxu0 0
      %4423 = vmatprep.subr.bf16.mxu0 0
      %4424 = vmatpush1.bf16.msra.mxu0 0
      %4425 = vmatprep.subr.bf16.mxu0 0
      %4426 = vmatpush1.bf16.msra.mxu0 0
      %4427 = vmatprep.subr.bf16.mxu0 0
      %4428 = vmatpush1.bf16.msra.mxu0 0
      %4429 = vmatprep.mubr.bf16.mxu0 0
      %4430 = vmatmul.mubr.bf16.gmra.mrb[0].mxu0 %v4335
      %v4431 = vpop.f32.mrb[0].mxu0
      %v4432 = vadd.f32 0.0, %v4431
      %v4433 = vpop.f32.mrb[0].mxu0
      %v4434 = vpop.f32.mrb[0].mxu0
      %v4435 = vadd.f32 0.0, %v4434
      %v4436 = vpop.f32.mrb[0].mxu0
      %4437 = vmatprep.mubr.bf16.mxu0 0
      %4438 = vmatmul.mubr.bf16.gmra.mrb[0].mxu0 %v4338
      %v4439 = vpop.f32.mrb[0].mxu0
      %v4440 = vadd.f32 0.0, %v4439
      %v4441 = vpop.f32.mrb[0].mxu0
      %v4442 = vpop.f32.mrb[0].mxu0
      %v4443 = vadd.f32 0.0, %v4442
      %v4444 = vpop.f32.mrb[0].mxu0
      %4445 = vmatprep.mubr.bf16.mxu0 0
      %4446 = vmatmul.mubr.bf16.gmra.mrb[0].mxu0 %v4341
      %v4447 = vpop.f32.mrb[0].mxu0
      %v4448 = vadd.f32 0.0, %v4447
      %v4449 = vpop.f32.mrb[0].mxu0
      %v4450 = vpop.f32.mrb[0].mxu0
      %v4451 = vadd.f32 0.0, %v4450
      %v4452 = vpop.f32.mrb[0].mxu0
      %4453 = vmatprep.mubr.bf16.mxu0 0
      %4454 = vmatmul.mubr.bf16.gmra.mrb[0].mxu0 %v4344
      %v4455 = vpop.f32.mrb[0].mxu0
      %v4456 = vadd.f32 0.0, %v4455
      %v4457 = vpop.f32.mrb[0].mxu0
      %v4458 = vpop.f32.mrb[0].mxu0
      %v4459 = vadd.f32 0.0, %v4458
      %v4460 = vpop.f32.mrb[0].mxu0
      %4461 = vmatprep.mubr.bf16.mxu0 0
      %4462 = vmatmul.mubr.bf16.gmra.mrb[0].mxu0 %v4347
      %v4463 = vpop.f32.mrb[0].mxu0
      %v4464 = vadd.f32 0.0, %v4463
      %v4465 = vpop.f32.mrb[0].mxu0
      %v4466 = vpop.f32.mrb[0].mxu0
      %v4467 = vadd.f32 0.0, %v4466
      %v4468 = vpop.f32.mrb[0].mxu0
      %4469 = vmatprep.mubr.bf16.mxu0 0
      %4470 = vmatmul.mubr.bf16.gmra.mrb[0].mxu0 %v4350
      %v4471 = vpop.f32.mrb[0].mxu0
      %v4472 = vadd.f32 0.0, %v4471
      %v4473 = vpop.f32.mrb[0].mxu0
      %v4474 = vpop.f32.mrb[0].mxu0
      %v4475 = vadd.f32 0.0, %v4474
      %v4476 = vpop.f32.mrb[0].mxu0
      %4477 = vmatprep.mubr.bf16.mxu0 0
      %4478 = vmatmul.mubr.bf16.gmra.mrb[0].mxu0 %v4353
      %v4479 = vpop.f32.mrb[0].mxu0
      %v4480 = vadd.f32 0.0, %v4479
      %v4481 = vpop.f32.mrb[0].mxu0
      %v4482 = vpop.f32.mrb[0].mxu0
      %v4483 = vadd.f32 0.0, %v4482
      %v4484 = vpop.f32.mrb[0].mxu0
      %4485 = vmatprep.mubr.bf16.mxu0 0
      %4486 = vmatmul.mubr.bf16.gmra.mrb[0].mxu0 %v4356
      %v4487 = vpop.f32.mrb[0].mxu0
      %v4488 = vadd.f32 0.0, %v4487
      %v4489 = vpop.f32.mrb[0].mxu0
      %v4490 = vpop.f32.mrb[0].mxu0
      %v4491 = vadd.f32 0.0, %v4490
      %v4492 = vpop.f32.mrb[0].mxu0
      %4493 = vmatprep.mubr.bf16.mxu0 0
      %4494 = vmatmul.mubr.bf16.gmra.mrb[0].mxu0 %v4359
      %v4495 = vpop.f32.mrb[0].mxu0
      %v4496 = vadd.f32 0.0, %v4495
      %v4497 = vpop.f32.mrb[0].mxu0
      %v4498 = vpop.f32.mrb[0].mxu0
      %v4499 = vadd.f32 0.0, %v4498
      %v4500 = vpop.f32.mrb[0].mxu0
      %4501 = vmatprep.mubr.bf16.mxu0 0
      %4502 = vmatmul.mubr.bf16.gmra.mrb[0].mxu0 %v4362
      %v4503 = vpop.f32.mrb[0].mxu0
      %v4504 = vadd.f32 0.0, %v4503
      %v4505 = vpop.f32.mrb[0].mxu0
      %v4506 = vpop.f32.mrb[0].mxu0
      %v4507 = vadd.f32 0.0, %v4506
      %v4508 = vpop.f32.mrb[0].mxu0
      %4509 = vmatprep.mubr.bf16.mxu0 0
      %4510 = vmatmul.mubr.bf16.gmra.mrb[0].mxu0 %v4365
      %v4511 = vpop.f32.mrb[0].mxu0
      %v4512 = vadd.f32 0.0, %v4511
      %v4513 = vpop.f32.mrb[0].mxu0
      %v4514 = vpop.f32.mrb[0].mxu0
      %v4515 = vadd.f32 0.0, %v4514
      %v4516 = vpop.f32.mrb[0].mxu0
      %4517 = vmatprep.mubr.bf16.mxu0 0
      %4518 = vmatmul.mubr.bf16.gmra.mrb[0].mxu0 %v4368
      %v4519 = vpop.f32.mrb[0].mxu0
      %v4520 = vadd.f32 0.0, %v4519
      %v4521 = vpop.f32.mrb[0].mxu0
      %v4522 = vpop.f32.mrb[0].mxu0
      %v4523 = vadd.f32 0.0, %v4522
      %v4524 = vpop.f32.mrb[0].mxu0
      %4525 = vmatprep.mubr.bf16.mxu0 0
      %4526 = vmatmul.mubr.bf16.gmra.mrb[0].mxu0 %v4371
      %v4527 = vpop.f32.mrb[0].mxu0
      %v4528 = vadd.f32 0.0, %v4527
      %v4529 = vpop.f32.mrb[0].mxu0
      %v4530 = vpop.f32.mrb[0].mxu0
      %v4531 = vadd.f32 0.0, %v4530
      %v4532 = vpop.f32.mrb[0].mxu0
      %4533 = vmatprep.mubr.bf16.mxu0 0
      %4534 = vmatmul.mubr.bf16.gmra.mrb[0].mxu0 %v4374
      %v4535 = vpop.f32.mrb[0].mxu0
      %v4536 = vadd.f32 0.0, %v4535
      %v4537 = vpop.f32.mrb[0].mxu0
      %v4538 = vpop.f32.mrb[0].mxu0
      %v4539 = vadd.f32 0.0, %v4538
      %v4540 = vpop.f32.mrb[0].mxu0
      %4541 = vmatprep.mubr.bf16.mxu0 0
      %4542 = vmatmul.mubr.bf16.gmra.mrb[0].mxu0 %v4377
      %v4543 = vpop.f32.mrb[0].mxu0
      %v4544 = vadd.f32 0.0, %v4543
      %v4545 = vpop.f32.mrb[0].mxu0
      %v4546 = vpop.f32.mrb[0].mxu0
      %v4547 = vadd.f32 0.0, %v4546
      %v4548 = vpop.f32.mrb[0].mxu0
      %4549 = vmatprep.mubr.bf16.mxu0 0
      %4550 = vmatmul.mubr.bf16.gmra.mrb[0].mxu0 %v4380
      %v4551 = vpop.f32.mrb[0].mxu0
      %v4552 = vadd.f32 0.0, %v4551
      %v4553 = vpop.f32.mrb[0].mxu0
      %v4554 = vpop.f32.mrb[0].mxu0
      %v4555 = vadd.f32 0.0, %v4554
      %v4556 = vpop.f32.mrb[0].mxu0
      %4557 = vmatprep.mubr.bf16.mxu0 0
      %4558 = vmatmul.mubr.bf16.gmra.mrb[0].mxu0 %v4383
      %v4559 = vpop.f32.mrb[0].mxu0
      %v4560 = vadd.f32 0.0, %v4559
      %v4561 = vpop.f32.mrb[0].mxu0
      %v4562 = vpop.f32.mrb[0].mxu0
      %v4563 = vadd.f32 0.0, %v4562
      %v4564 = vpop.f32.mrb[0].mxu0
      %4565 = vmatprep.mubr.bf16.mxu0 0
      %4566 = vmatmul.mubr.bf16.gmra.mrb[0].mxu0 %v4386
      %v4567 = vpop.f32.mrb[0].mxu0
      %v4568 = vadd.f32 0.0, %v4567
      %v4569 = vpop.f32.mrb[0].mxu0
      %v4570 = vpop.f32.mrb[0].mxu0
      %v4571 = vadd.f32 0.0, %v4570
      %v4572 = vpop.f32.mrb[0].mxu0
      %4573 = vmatprep.mubr.bf16.mxu0 0
      %4574 = vmatmul.mubr.bf16.gmra.mrb[0].mxu0 %v4389
      %v4575 = vpop.f32.mrb[0].mxu0
      %v4576 = vadd.f32 0.0, %v4575
      %v4577 = vpop.f32.mrb[0].mxu0
      %v4578 = vpop.f32.mrb[0].mxu0
      %v4579 = vadd.f32 0.0, %v4578
      %v4580 = vpop.f32.mrb[0].mxu0
      %4581 = vmatprep.mubr.bf16.mxu0 0
      %4582 = vmatmul.mubr.bf16.gmra.mrb[0].mxu0 %v4392
      %v4583 = vpop.f32.mrb[0].mxu0
      %v4584 = vadd.f32 0.0, %v4583
      %v4585 = vpop.f32.mrb[0].mxu0
      %v4586 = vpop.f32.mrb[0].mxu0
      %v4587 = vadd.f32 0.0, %v4586
      %v4588 = vpop.f32.mrb[0].mxu0
      %4589 = vmatprep.mubr.bf16.mxu0 0
      %4590 = vmatmul.mubr.bf16.gmra.mrb[0].mxu0 %v4395
      %v4591 = vpop.f32.mrb[0].mxu0
      %v4592 = vadd.f32 0.0, %v4591
      %v4593 = vpop.f32.mrb[0].mxu0
      %v4594 = vpop.f32.mrb[0].mxu0
      %v4595 = vpop.f32.mrb[0].mxu0
      %4596 = vdwg.mxu0
      %v4597 = vadd.f32 %v4157, %v4432
      %v4598 = vadd.f32 %v4158, %v4435
      %v4599 = vadd.f32 %v4159, %v4440
      %v4600 = vadd.f32 %v4160, %v4443
      %v4601 = vadd.f32 %v4161, %v4448
      %v4602 = vadd.f32 %v4162, %v4451
      %v4603 = vadd.f32 %v4163, %v4456
      %v4604 = vadd.f32 %v4164, %v4459
      %v4605 = vadd.f32 %v4165, %v4464
      %v4606 = vadd.f32 %v4166, %v4467
      %v4607 = vadd.f32 %v4167, %v4472
      %v4608 = vadd.f32 %v4168, %v4475
      %v4609 = vadd.f32 %v4169, %v4480
      %v4610 = vadd.f32 %v4170, %v4483
      %v4611 = vadd.f32 %v4171, %v4488
      %v4612 = vadd.f32 %v4172, %v4491
      %v4613 = vadd.f32 %v4173, %v4496
      %v4614 = vadd.f32 %v4174, %v4499
      %v4615 = vadd.f32 %v4175, %v4504
      %v4616 = vadd.f32 %v4176, %v4507
      %v4617 = vadd.f32 %v4177, %v4512
      %v4618 = vadd.f32 %v4178, %v4515
      %v4619 = vadd.f32 %v4179, %v4520
      %v4620 = vadd.f32 %v4180, %v4523
      %v4621 = vadd.f32 %v4181, %v4528
      %v4622 = vadd.f32 %v4182, %v4531
      %v4623 = vadd.f32 %v4183, %v4536
      %v4624 = vadd.f32 %v4184, %v4539
      %v4625 = vadd.f32 %v4185, %v4544
      %v4626 = vadd.f32 %v4186, %v4547
      %v4627 = vadd.f32 %v4187, %v4552
      %v4628 = vadd.f32 %v4188, %v4555
      %v4629 = vadd.f32 %v4189, %v4560
      %v4630 = vadd.f32 %v4190, %v4563
      %v4631 = vadd.f32 %v4191, %v4568
      %v4632 = vadd.f32 %v4192, %v4571
      %v4633 = vadd.f32 %v4193, %v4576
      %v4634 = vadd.f32 %v4194, %v4579
      %v4635 = vadd.f32 %v4195, %v4584
      %v4636 = vadd.f32 %v4196, %v4587
      %v4637 = vadd.f32 %v4197, %v4592
      %v4638 = vpack.c.bf16 %v4276, %v4277
      %v4639 = vpack.c.bf16 %v4275, %v4275
      %s4640 = scalar_lea.vmem %s4, 192
      %v4641 = vld [vmem:[%s4640] sm:$0xf]
      %v4642 = vld [vmem:[%s4640 + $0x4] sm:$0xf]
      %v4643 = vld [vmem:[%s4640 + $0x8] sm:$0xf]
      %v4644 = vld [vmem:[%s4640 + $0xc] sm:$0xf]
      %v4645 = vld [vmem:[%s4640 + $0x10] sm:$0xf]
      %v4646 = vld [vmem:[%s4640 + $0x14] sm:$0xf]
      %v4647 = vld [vmem:[%s4640 + $0x18] sm:$0xf]
      %v4648 = vld [vmem:[%s4640 + $0x1c] sm:$0xf]
      %v4657 = vunpack.c.l.b16 %v4641
      %v4658 = vunpack.c.l.b16 %v4642
      %v4659 = vunpack.c.l.b16 %v4643
      %v4660 = vunpack.c.l.b16 %v4644
      %v4661 = vunpack.c.l.b16 %v4645
      %v4662 = vunpack.c.l.b16 %v4646
      %v4663 = vunpack.c.l.b16 %v4647
      %v4664 = vunpack.c.l.b16 %v4648
      %v4665 = vpack.c.b16 %v4658, %v4657
      %v4666 = vpack.c.b16 %v4660, %v4659
      %v4667 = vpack.c.b16 %v4662, %v4661
      %v4668 = vpack.c.b16 %v4664, %v4663
      %v4674 = vsel %vm2485, %v4638, 0
      %v4677 = vsel %vm2485, %v4639, 0
      %4679 = vmatprep.subr.bf16.mxu0 0
      %4680 = vmatpush1.bf16.msra.mxu0 %v4665
      %4681 = vmatprep.subr.bf16.mxu0 0
      %4682 = vmatpush1.bf16.msra.mxu0 %v4666
      %4683 = vmatprep.subr.bf16.mxu0 0
      %4684 = vmatpush1.bf16.msra.mxu0 %v4667
      %4685 = vmatprep.subr.bf16.mxu0 0
      %4686 = vmatpush1.bf16.msra.mxu0 %v4668
      %4687 = vmatprep.subr.bf16.mxu0 0
      %4688 = vmatpush1.bf16.msra.mxu0 0
      %4689 = vmatprep.subr.bf16.mxu0 0
      %4690 = vmatpush1.bf16.msra.mxu0 0
      %4691 = vmatprep.subr.bf16.mxu0 0
      %4692 = vmatpush1.bf16.msra.mxu0 0
      %4693 = vmatprep.subr.bf16.mxu0 0
      %4694 = vmatpush1.bf16.msra.mxu0 0
      %4695 = vmatprep.subr.bf16.mxu0 0
      %4696 = vmatpush1.bf16.msra.mxu0 0
      %4697 = vmatprep.subr.bf16.mxu0 0
      %4698 = vmatpush1.bf16.msra.mxu0 0
      %4699 = vmatprep.subr.bf16.mxu0 0
      %4700 = vmatpush1.bf16.msra.mxu0 0
      %4701 = vmatprep.subr.bf16.mxu0 0
      %4702 = vmatpush1.bf16.msra.mxu0 0
      %4703 = vmatprep.subr.bf16.mxu0 0
      %4704 = vmatpush1.bf16.msra.mxu0 0
      %4705 = vmatprep.subr.bf16.mxu0 0
      %4706 = vmatpush1.bf16.msra.mxu0 0
      %4707 = vmatprep.subr.bf16.mxu0 0
      %4708 = vmatpush1.bf16.msra.mxu0 0
      %4709 = vmatprep.subr.bf16.mxu0 0
      %4710 = vmatpush1.bf16.msra.mxu0 0
      %4711 = vmatprep.mubr.bf16.mxu0 0
      %4712 = vmatmul.mubr.bf16.gmra.mrb[0].mxu0 %v4338
      %v4713 = vpop.f32.mrb[0].mxu0
      %v4714 = vadd.f32 0.0, %v4713
      %v4715 = vpop.f32.mrb[0].mxu0
      %v4716 = vpop.f32.mrb[0].mxu0
      %v4717 = vadd.f32 0.0, %v4716
      %v4718 = vpop.f32.mrb[0].mxu0
      %4719 = vmatprep.mubr.bf16.mxu0 0
      %4720 = vmatmul.mubr.bf16.gmra.mrb[0].mxu0 %v4341
      %v4721 = vpop.f32.mrb[0].mxu0
      %v4722 = vadd.f32 0.0, %v4721
      %v4723 = vpop.f32.mrb[0].mxu0
      %v4724 = vpop.f32.mrb[0].mxu0
      %v4725 = vadd.f32 0.0, %v4724
      %v4726 = vpop.f32.mrb[0].mxu0
      %4727 = vmatprep.mubr.bf16.mxu0 0
      %4728 = vmatmul.mubr.bf16.gmra.mrb[0].mxu0 %v4344
      %v4729 = vpop.f32.mrb[0].mxu0
      %v4730 = vadd.f32 0.0, %v4729
      %v4731 = vpop.f32.mrb[0].mxu0
      %v4732 = vpop.f32.mrb[0].mxu0
      %v4733 = vadd.f32 0.0, %v4732
      %v4734 = vpop.f32.mrb[0].mxu0
      %4735 = vmatprep.mubr.bf16.mxu0 0
      %4736 = vmatmul.mubr.bf16.gmra.mrb[0].mxu0 %v4347
      %v4737 = vpop.f32.mrb[0].mxu0
      %v4738 = vadd.f32 0.0, %v4737
      %v4739 = vpop.f32.mrb[0].mxu0
      %v4740 = vpop.f32.mrb[0].mxu0
      %v4741 = vadd.f32 0.0, %v4740
      %v4742 = vpop.f32.mrb[0].mxu0
      %4743 = vmatprep.mubr.bf16.mxu0 0
      %4744 = vmatmul.mubr.bf16.gmra.mrb[0].mxu0 %v4350
      %v4745 = vpop.f32.mrb[0].mxu0
      %v4746 = vadd.f32 0.0, %v4745
      %v4747 = vpop.f32.mrb[0].mxu0
      %v4748 = vpop.f32.mrb[0].mxu0
      %v4749 = vadd.f32 0.0, %v4748
      %v4750 = vpop.f32.mrb[0].mxu0
      %4751 = vmatprep.mubr.bf16.mxu0 0
      %4752 = vmatmul.mubr.bf16.gmra.mrb[0].mxu0 %v4353
      %v4753 = vpop.f32.mrb[0].mxu0
      %v4754 = vadd.f32 0.0, %v4753
      %v4755 = vpop.f32.mrb[0].mxu0
      %v4756 = vpop.f32.mrb[0].mxu0
      %v4757 = vadd.f32 0.0, %v4756
      %v4758 = vpop.f32.mrb[0].mxu0
      %4759 = vmatprep.mubr.bf16.mxu0 0
      %4760 = vmatmul.mubr.bf16.gmra.mrb[0].mxu0 %v4356
      %v4761 = vpop.f32.mrb[0].mxu0
      %v4762 = vadd.f32 0.0, %v4761
      %v4763 = vpop.f32.mrb[0].mxu0
      %v4764 = vpop.f32.mrb[0].mxu0
      %v4765 = vadd.f32 0.0, %v4764
      %v4766 = vpop.f32.mrb[0].mxu0
      %4767 = vmatprep.mubr.bf16.mxu0 0
      %4768 = vmatmul.mubr.bf16.gmra.mrb[0].mxu0 %v4359
      %v4769 = vpop.f32.mrb[0].mxu0
      %v4770 = vadd.f32 0.0, %v4769
      %v4771 = vpop.f32.mrb[0].mxu0
      %v4772 = vpop.f32.mrb[0].mxu0
      %v4773 = vadd.f32 0.0, %v4772
      %v4774 = vpop.f32.mrb[0].mxu0
      %4775 = vmatprep.mubr.bf16.mxu0 0
      %4776 = vmatmul.mubr.bf16.gmra.mrb[0].mxu0 %v4362
      %v4777 = vpop.f32.mrb[0].mxu0
      %v4778 = vadd.f32 0.0, %v4777
      %v4779 = vpop.f32.mrb[0].mxu0
      %v4780 = vpop.f32.mrb[0].mxu0
      %v4781 = vadd.f32 0.0, %v4780
      %v4782 = vpop.f32.mrb[0].mxu0
      %4783 = vmatprep.mubr.bf16.mxu0 0
      %4784 = vmatmul.mubr.bf16.gmra.mrb[0].mxu0 %v4365
      %v4785 = vpop.f32.mrb[0].mxu0
      %v4786 = vadd.f32 0.0, %v4785
      %v4787 = vpop.f32.mrb[0].mxu0
      %v4788 = vpop.f32.mrb[0].mxu0
      %v4789 = vadd.f32 0.0, %v4788
      %v4790 = vpop.f32.mrb[0].mxu0
      %4791 = vmatprep.mubr.bf16.mxu0 0
      %4792 = vmatmul.mubr.bf16.gmra.mrb[0].mxu0 %v4368
      %v4793 = vpop.f32.mrb[0].mxu0
      %v4794 = vadd.f32 0.0, %v4793
      %v4795 = vpop.f32.mrb[0].mxu0
      %v4796 = vpop.f32.mrb[0].mxu0
      %v4797 = vadd.f32 0.0, %v4796
      %v4798 = vpop.f32.mrb[0].mxu0
      %4799 = vmatprep.mubr.bf16.mxu0 0
      %4800 = vmatmul.mubr.bf16.gmra.mrb[0].mxu0 %v4371
      %v4801 = vpop.f32.mrb[0].mxu0
      %v4802 = vadd.f32 0.0, %v4801
      %v4803 = vpop.f32.mrb[0].mxu0
      %v4804 = vpop.f32.mrb[0].mxu0
      %v4805 = vadd.f32 0.0, %v4804
      %v4806 = vpop.f32.mrb[0].mxu0
      %4807 = vmatprep.mubr.bf16.mxu0 0
      %4808 = vmatmul.mubr.bf16.gmra.mrb[0].mxu0 %v4374
      %v4809 = vpop.f32.mrb[0].mxu0
      %v4810 = vadd.f32 0.0, %v4809
      %v4811 = vpop.f32.mrb[0].mxu0
      %v4812 = vpop.f32.mrb[0].mxu0
      %v4813 = vadd.f32 0.0, %v4812
      %v4814 = vpop.f32.mrb[0].mxu0
      %4815 = vmatprep.mubr.bf16.mxu0 0
      %4816 = vmatmul.mubr.bf16.gmra.mrb[0].mxu0 %v4377
      %v4817 = vpop.f32.mrb[0].mxu0
      %v4818 = vadd.f32 0.0, %v4817
      %v4819 = vpop.f32.mrb[0].mxu0
      %v4820 = vpop.f32.mrb[0].mxu0
      %v4821 = vadd.f32 0.0, %v4820
      %v4822 = vpop.f32.mrb[0].mxu0
      %4823 = vmatprep.mubr.bf16.mxu0 0
      %4824 = vmatmul.mubr.bf16.gmra.mrb[0].mxu0 %v4380
      %v4825 = vpop.f32.mrb[0].mxu0
      %v4826 = vadd.f32 0.0, %v4825
      %v4827 = vpop.f32.mrb[0].mxu0
      %v4828 = vpop.f32.mrb[0].mxu0
      %v4829 = vadd.f32 0.0, %v4828
      %v4830 = vpop.f32.mrb[0].mxu0
      %4831 = vmatprep.mubr.bf16.mxu0 0
      %4832 = vmatmul.mubr.bf16.gmra.mrb[0].mxu0 %v4383
      %v4833 = vpop.f32.mrb[0].mxu0
      %v4834 = vadd.f32 0.0, %v4833
      %v4835 = vpop.f32.mrb[0].mxu0
      %v4836 = vpop.f32.mrb[0].mxu0
      %v4837 = vadd.f32 0.0, %v4836
      %v4838 = vpop.f32.mrb[0].mxu0
      %4839 = vmatprep.mubr.bf16.mxu0 0
      %4840 = vmatmul.mubr.bf16.gmra.mrb[0].mxu0 %v4386
      %v4841 = vpop.f32.mrb[0].mxu0
      %v4842 = vadd.f32 0.0, %v4841
      %v4843 = vpop.f32.mrb[0].mxu0
      %v4844 = vpop.f32.mrb[0].mxu0
      %v4845 = vadd.f32 0.0, %v4844
      %v4846 = vpop.f32.mrb[0].mxu0
      %4847 = vmatprep.mubr.bf16.mxu0 0
      %4848 = vmatmul.mubr.bf16.gmra.mrb[0].mxu0 %v4389
      %v4849 = vpop.f32.mrb[0].mxu0
      %v4850 = vadd.f32 0.0, %v4849
      %v4851 = vpop.f32.mrb[0].mxu0
      %v4852 = vpop.f32.mrb[0].mxu0
      %v4853 = vadd.f32 0.0, %v4852
      %v4854 = vpop.f32.mrb[0].mxu0
      %4855 = vmatprep.mubr.bf16.mxu0 0
      %4856 = vmatmul.mubr.bf16.gmra.mrb[0].mxu0 %v4392
      %v4857 = vpop.f32.mrb[0].mxu0
      %v4858 = vadd.f32 0.0, %v4857
      %v4859 = vpop.f32.mrb[0].mxu0
      %v4860 = vpop.f32.mrb[0].mxu0
      %v4861 = vadd.f32 0.0, %v4860
      %v4862 = vpop.f32.mrb[0].mxu0
      %4863 = vmatprep.mubr.bf16.mxu0 0
      %4864 = vmatmul.mubr.bf16.gmra.mrb[0].mxu0 %v4674
      %v4865 = vpop.f32.mrb[0].mxu0
      %v4866 = vadd.f32 0.0, %v4865
      %v4867 = vpop.f32.mrb[0].mxu0
      %v4868 = vpop.f32.mrb[0].mxu0
      %v4869 = vadd.f32 0.0, %v4868
      %v4870 = vpop.f32.mrb[0].mxu0
      %4871 = vmatprep.mubr.bf16.mxu0 0
      %4872 = vmatmul.mubr.bf16.gmra.mrb[0].mxu0 %v4677
      %v4873 = vpop.f32.mrb[0].mxu0
      %v4874 = vadd.f32 0.0, %v4873
      %v4875 = vpop.f32.mrb[0].mxu0
      %v4876 = vpop.f32.mrb[0].mxu0
      %v4877 = vpop.f32.mrb[0].mxu0
      %4878 = vdwg.mxu0
      %v4879 = vadd.f32 %v4597, %v4714
      %v4880 = vadd.f32 %v4598, %v4717
      %v4881 = vadd.f32 %v4599, %v4722
      %v4882 = vadd.f32 %v4600, %v4725
      %v4883 = vadd.f32 %v4601, %v4730
      %v4884 = vadd.f32 %v4602, %v4733
      %v4885 = vadd.f32 %v4603, %v4738
      %v4886 = vadd.f32 %v4604, %v4741
      %v4887 = vadd.f32 %v4605, %v4746
      %v4888 = vadd.f32 %v4606, %v4749
      %v4889 = vadd.f32 %v4607, %v4754
      %v4890 = vadd.f32 %v4608, %v4757
      %v4891 = vadd.f32 %v4609, %v4762
      %v4892 = vadd.f32 %v4610, %v4765
      %v4893 = vadd.f32 %v4611, %v4770
      %v4894 = vadd.f32 %v4612, %v4773
      %v4895 = vadd.f32 %v4613, %v4778
      %v4896 = vadd.f32 %v4614, %v4781
      %v4897 = vadd.f32 %v4615, %v4786
      %v4898 = vadd.f32 %v4616, %v4789
      %v4899 = vadd.f32 %v4617, %v4794
      %v4900 = vadd.f32 %v4618, %v4797
      %v4901 = vadd.f32 %v4619, %v4802
      %v4902 = vadd.f32 %v4620, %v4805
      %v4903 = vadd.f32 %v4621, %v4810
      %v4904 = vadd.f32 %v4622, %v4813
      %v4905 = vadd.f32 %v4623, %v4818
      %v4906 = vadd.f32 %v4624, %v4821
      %v4907 = vadd.f32 %v4625, %v4826
      %v4908 = vadd.f32 %v4626, %v4829
      %v4909 = vadd.f32 %v4627, %v4834
      %v4910 = vadd.f32 %v4628, %v4837
      %v4911 = vadd.f32 %v4629, %v4842
      %v4912 = vadd.f32 %v4630, %v4845
      %v4913 = vadd.f32 %v4631, %v4850
      %v4914 = vadd.f32 %v4632, %v4853
      %v4915 = vadd.f32 %v4633, %v4858
      %v4916 = vadd.f32 %v4634, %v4861
      %v4917 = vadd.f32 %v4635, %v4866
      %v4918 = vadd.f32 %v4636, %v4869
      %v4919 = vadd.f32 %v4637, %v4874
      %v4920 = vrot.slane %v2279, 5
      %v4921 = vrot.slane %v2280, 5
      %v4922 = vrot.slane %v2281, 5
      %v4923 = vrot.slane %v2282, 5
      %v4924 = vrot.slane %v2283, 5
      %v4925 = vrot.slane %v2284, 5
      %v4926 = vrot.slane %v2285, 5
      %v4927 = vrot.slane %v2286, 5
      %v4928 = vrot.slane %v2287, 5
      %v4929 = vrot.slane %v2288, 5
      %v4930 = vrot.slane %v2289, 5
      %v4931 = vrot.slane %v2290, 5
      %v4932 = vrot.slane %v2291, 5
      %v4933 = vrot.slane %v2292, 5
      %v4934 = vrot.slane %v2293, 5
      %v4935 = vrot.slane %v2294, 5
      %v4936 = vrot.slane %v2295, 5
      %v4937 = vrot.slane %v2296, 5
      %v4938 = vrot.slane %v2297, 5
      %v4939 = vrot.slane %v2298, 5
      %v4940 = vrot.slane %v2299, 5
      %v4941 = vrot.slane %v2300, 5
      %v4942 = vrot.slane %v2301, 5
      %v4943 = vrot.slane %v2302, 5
      %v4944 = vrot.slane %v2303, 5
      %v4945 = vrot.slane %v2304, 5
      %v4946 = vrot.slane %v2305, 5
      %v4947 = vrot.slane %v2306, 5
      %v4948 = vrot.slane %v2307, 5
      %v4949 = vrot.slane %v2308, 5
      %v4950 = vrot.slane %v2309, 5
      %v4951 = vrot.slane %v2310, 5
      %v4952 = vrot.slane %v2311, 5
      %v4953 = vrot.slane %v2312, 5
      %v4954 = vrot.slane %v2313, 5
      %v4955 = vrot.slane %v2314, 5
      %v4956 = vrot.slane %v2315, 5
      %v4957 = vrot.slane %v2316, 5
      %v4958 = vrot.slane %v2317, 5
      %v4959 = vrot.slane %v2318, 5
      %v4960 = vrot.slane %v2319, 5
      %v4961 = vsel %vm1598, %v4959, %v4960
      %v4962 = vsel %vm1598, %v4958, %v4959
      %v4963 = vsel %vm1598, %v4957, %v4958
      %v4964 = vsel %vm1598, %v4956, %v4957
      %v4965 = vsel %vm1598, %v4955, %v4956
      %v4966 = vsel %vm1598, %v4954, %v4955
      %v4967 = vsel %vm1598, %v4953, %v4954
      %v4968 = vsel %vm1598, %v4952, %v4953
      %v4969 = vsel %vm1598, %v4951, %v4952
      %v4970 = vsel %vm1598, %v4950, %v4951
      %v4971 = vsel %vm1598, %v4949, %v4950
      %v4972 = vsel %vm1598, %v4948, %v4949
      %v4973 = vsel %vm1598, %v4947, %v4948
      %v4974 = vsel %vm1598, %v4946, %v4947
      %v4975 = vsel %vm1598, %v4945, %v4946
      %v4976 = vsel %vm1598, %v4944, %v4945
      %v4977 = vsel %vm1598, %v4943, %v4944
      %v4978 = vsel %vm1598, %v4942, %v4943
      %v4979 = vsel %vm1598, %v4941, %v4942
      %v4980 = vsel %vm1598, %v4940, %v4941
      %v4981 = vsel %vm1598, %v4939, %v4940
      %v4982 = vsel %vm1598, %v4938, %v4939
      %v4983 = vsel %vm1598, %v4937, %v4938
      %v4984 = vsel %vm1598, %v4936, %v4937
      %v4985 = vsel %vm1598, %v4935, %v4936
      %v4986 = vsel %vm1598, %v4934, %v4935
      %v4987 = vsel %vm1598, %v4933, %v4934
      %v4988 = vsel %vm1598, %v4932, %v4933
      %v4989 = vsel %vm1598, %v4931, %v4932
      %v4990 = vsel %vm1598, %v4930, %v4931
      %v4991 = vsel %vm1598, %v4929, %v4930
      %v4992 = vsel %vm1598, %v4928, %v4929
      %v4993 = vsel %vm1598, %v4927, %v4928
      %v4994 = vsel %vm1598, %v4926, %v4927
      %v4995 = vsel %vm1598, %v4925, %v4926
      %v4996 = vsel %vm1598, %v4924, %v4925
      %v4997 = vsel %vm1598, %v4923, %v4924
      %v4998 = vsel %vm1598, %v4922, %v4923
      %v4999 = vsel %vm1598, %v4921, %v4922
      %v5000 = vsel %vm1598, %v4920, %v4921
      %v5001 = vsel %vm1598, %v4960, %v4920
      %v5002 = vpack.c.bf16 %v4995, %v4996
      %v5003 = vpack.c.bf16 %v4993, %v4994
      %v5004 = vpack.c.bf16 %v4991, %v4992
      %v5005 = vpack.c.bf16 %v4989, %v4990
      %v5006 = vpack.c.bf16 %v4987, %v4988
      %v5007 = vpack.c.bf16 %v4985, %v4986
      %v5008 = vpack.c.bf16 %v4983, %v4984
      %v5009 = vpack.c.bf16 %v4981, %v4982
      %v5010 = vpack.c.bf16 %v4979, %v4980
      %v5011 = vpack.c.bf16 %v4977, %v4978
      %v5012 = vpack.c.bf16 %v4975, %v4976
      %v5013 = vpack.c.bf16 %v4973, %v4974
      %v5014 = vpack.c.bf16 %v4971, %v4972
      %v5015 = vpack.c.bf16 %v4969, %v4970
      %v5016 = vpack.c.bf16 %v4967, %v4968
      %v5017 = vpack.c.bf16 %v4965, %v4966
      %v5018 = vpack.c.bf16 %v4963, %v4964
      %v5019 = vpack.c.bf16 %v4961, %v4962
      %v5020 = vpack.c.bf16 %v5000, %v5001
      %v5021 = vpack.c.bf16 %v4998, %v4999
      %v5022 = vpack.c.bf16 %v4997, %v4997
      %s5023 = scalar_lea.vmem %s4, 224
      %v5024 = vld [vmem:[%s5023] sm:$0xf]
      %v5025 = vld [vmem:[%s5023 + $0x4] sm:$0xf]
      %v5026 = vld [vmem:[%s5023 + $0x8] sm:$0xf]
      %v5027 = vld [vmem:[%s5023 + $0xc] sm:$0xf]
      %v5028 = vld [vmem:[%s5023 + $0x10] sm:$0xf]
      %v5029 = vld [vmem:[%s5023 + $0x14] sm:$0xf]
      %v5030 = vld [vmem:[%s5023 + $0x18] sm:$0xf]
      %v5031 = vld [vmem:[%s5023 + $0x1c] sm:$0xf]
      %v5040 = vunpack.c.l.b16 %v5024
      %v5041 = vunpack.c.l.b16 %v5025
      %v5042 = vunpack.c.l.b16 %v5026
      %v5043 = vunpack.c.l.b16 %v5027
      %v5044 = vunpack.c.l.b16 %v5028
      %v5045 = vunpack.c.l.b16 %v5029
      %v5046 = vunpack.c.l.b16 %v5030
      %v5047 = vunpack.c.l.b16 %v5031
      %v5048 = vpack.c.b16 %v5041, %v5040
      %v5049 = vpack.c.b16 %v5043, %v5042
      %v5050 = vpack.c.b16 %v5045, %v5044
      %v5051 = vpack.c.b16 %v5047, %v5046
      %v5057 = vsel %vm2485, %v5002, 0
      %v5060 = vsel %vm2485, %v5003, 0
      %v5063 = vsel %vm2485, %v5004, 0
      %v5066 = vsel %vm2485, %v5005, 0
      %v5069 = vsel %vm2485, %v5006, 0
      %v5072 = vsel %vm2485, %v5007, 0
      %v5075 = vsel %vm2485, %v5008, 0
      %v5078 = vsel %vm2485, %v5009, 0
      %v5081 = vsel %vm2485, %v5010, 0
      %v5084 = vsel %vm2485, %v5011, 0
      %v5087 = vsel %vm2485, %v5012, 0
      %v5090 = vsel %vm2485, %v5013, 0
      %v5093 = vsel %vm2485, %v5014, 0
      %v5096 = vsel %vm2485, %v5015, 0
      %v5099 = vsel %vm2485, %v5016, 0
      %v5102 = vsel %vm2485, %v5017, 0
      %v5105 = vsel %vm2485, %v5018, 0
      %v5108 = vsel %vm2485, %v5019, 0
      %v5111 = vsel %vm2485, %v5020, 0
      %v5114 = vsel %vm2485, %v5021, 0
      %v5117 = vsel %vm2485, %v5022, 0
      %5119 = vmatprep.subr.bf16.mxu0 0
      %5120 = vmatpush1.bf16.msra.mxu0 %v5048
      %5121 = vmatprep.subr.bf16.mxu0 0
      %5122 = vmatpush1.bf16.msra.mxu0 %v5049
      %5123 = vmatprep.subr.bf16.mxu0 0
      %5124 = vmatpush1.bf16.msra.mxu0 %v5050
      %5125 = vmatprep.subr.bf16.mxu0 0
      %5126 = vmatpush1.bf16.msra.mxu0 %v5051
      %5127 = vmatprep.subr.bf16.mxu0 0
      %5128 = vmatpush1.bf16.msra.mxu0 0
      %5129 = vmatprep.subr.bf16.mxu0 0
      %5130 = vmatpush1.bf16.msra.mxu0 0
      %5131 = vmatprep.subr.bf16.mxu0 0
      %5132 = vmatpush1.bf16.msra.mxu0 0
      %5133 = vmatprep.subr.bf16.mxu0 0
      %5134 = vmatpush1.bf16.msra.mxu0 0
      %5135 = vmatprep.subr.bf16.mxu0 0
      %5136 = vmatpush1.bf16.msra.mxu0 0
      %5137 = vmatprep.subr.bf16.mxu0 0
      %5138 = vmatpush1.bf16.msra.mxu0 0
      %5139 = vmatprep.subr.bf16.mxu0 0
      %5140 = vmatpush1.bf16.msra.mxu0 0
      %5141 = vmatprep.subr.bf16.mxu0 0
      %5142 = vmatpush1.bf16.msra.mxu0 0
      %5143 = vmatprep.subr.bf16.mxu0 0
      %5144 = vmatpush1.bf16.msra.mxu0 0
      %5145 = vmatprep.subr.bf16.mxu0 0
      %5146 = vmatpush1.bf16.msra.mxu0 0
      %5147 = vmatprep.subr.bf16.mxu0 0
      %5148 = vmatpush1.bf16.msra.mxu0 0
      %5149 = vmatprep.subr.bf16.mxu0 0
      %5150 = vmatpush1.bf16.msra.mxu0 0
      %5151 = vmatprep.mubr.bf16.mxu0 0
      %5152 = vmatmul.mubr.bf16.gmra.mrb[0].mxu0 %v5057
      %v5153 = vpop.f32.mrb[0].mxu0
      %v5154 = vadd.f32 0.0, %v5153
      %v5155 = vpop.f32.mrb[0].mxu0
      %v5156 = vpop.f32.mrb[0].mxu0
      %v5157 = vadd.f32 0.0, %v5156
      %v5158 = vpop.f32.mrb[0].mxu0
      %5159 = vmatprep.mubr.bf16.mxu0 0
      %5160 = vmatmul.mubr.bf16.gmra.mrb[0].mxu0 %v5060
      %v5161 = vpop.f32.mrb[0].mxu0
      %v5162 = vadd.f32 0.0, %v5161
      %v5163 = vpop.f32.mrb[0].mxu0
      %v5164 = vpop.f32.mrb[0].mxu0
      %v5165 = vadd.f32 0.0, %v5164
      %v5166 = vpop.f32.mrb[0].mxu0
      %5167 = vmatprep.mubr.bf16.mxu0 0
      %5168 = vmatmul.mubr.bf16.gmra.mrb[0].mxu0 %v5063
      %v5169 = vpop.f32.mrb[0].mxu0
      %v5170 = vadd.f32 0.0, %v5169
      %v5171 = vpop.f32.mrb[0].mxu0
      %v5172 = vpop.f32.mrb[0].mxu0
      %v5173 = vadd.f32 0.0, %v5172
      %v5174 = vpop.f32.mrb[0].mxu0
      %5175 = vmatprep.mubr.bf16.mxu0 0
      %5176 = vmatmul.mubr.bf16.gmra.mrb[0].mxu0 %v5066
      %v5177 = vpop.f32.mrb[0].mxu0
      %v5178 = vadd.f32 0.0, %v5177
      %v5179 = vpop.f32.mrb[0].mxu0
      %v5180 = vpop.f32.mrb[0].mxu0
      %v5181 = vadd.f32 0.0, %v5180
      %v5182 = vpop.f32.mrb[0].mxu0
      %5183 = vmatprep.mubr.bf16.mxu0 0
      %5184 = vmatmul.mubr.bf16.gmra.mrb[0].mxu0 %v5069
      %v5185 = vpop.f32.mrb[0].mxu0
      %v5186 = vadd.f32 0.0, %v5185
      %v5187 = vpop.f32.mrb[0].mxu0
      %v5188 = vpop.f32.mrb[0].mxu0
      %v5189 = vadd.f32 0.0, %v5188
      %v5190 = vpop.f32.mrb[0].mxu0
      %5191 = vmatprep.mubr.bf16.mxu0 0
      %5192 = vmatmul.mubr.bf16.gmra.mrb[0].mxu0 %v5072
      %v5193 = vpop.f32.mrb[0].mxu0
      %v5194 = vadd.f32 0.0, %v5193
      %v5195 = vpop.f32.mrb[0].mxu0
      %v5196 = vpop.f32.mrb[0].mxu0
      %v5197 = vadd.f32 0.0, %v5196
      %v5198 = vpop.f32.mrb[0].mxu0
      %5199 = vmatprep.mubr.bf16.mxu0 0
      %5200 = vmatmul.mubr.bf16.gmra.mrb[0].mxu0 %v5075
      %v5201 = vpop.f32.mrb[0].mxu0
      %v5202 = vadd.f32 0.0, %v5201
      %v5203 = vpop.f32.mrb[0].mxu0
      %v5204 = vpop.f32.mrb[0].mxu0
      %v5205 = vadd.f32 0.0, %v5204
      %v5206 = vpop.f32.mrb[0].mxu0
      %5207 = vmatprep.mubr.bf16.mxu0 0
      %5208 = vmatmul.mubr.bf16.gmra.mrb[0].mxu0 %v5078
      %v5209 = vpop.f32.mrb[0].mxu0
      %v5210 = vadd.f32 0.0, %v5209
      %v5211 = vpop.f32.mrb[0].mxu0
      %v5212 = vpop.f32.mrb[0].mxu0
      %v5213 = vadd.f32 0.0, %v5212
      %v5214 = vpop.f32.mrb[0].mxu0
      %5215 = vmatprep.mubr.bf16.mxu0 0
      %5216 = vmatmul.mubr.bf16.gmra.mrb[0].mxu0 %v5081
      %v5217 = vpop.f32.mrb[0].mxu0
      %v5218 = vadd.f32 0.0, %v5217
      %v5219 = vpop.f32.mrb[0].mxu0
      %v5220 = vpop.f32.mrb[0].mxu0
      %v5221 = vadd.f32 0.0, %v5220
      %v5222 = vpop.f32.mrb[0].mxu0
      %5223 = vmatprep.mubr.bf16.mxu0 0
      %5224 = vmatmul.mubr.bf16.gmra.mrb[0].mxu0 %v5084
      %v5225 = vpop.f32.mrb[0].mxu0
      %v5226 = vadd.f32 0.0, %v5225
      %v5227 = vpop.f32.mrb[0].mxu0
      %v5228 = vpop.f32.mrb[0].mxu0
      %v5229 = vadd.f32 0.0, %v5228
      %v5230 = vpop.f32.mrb[0].mxu0
      %5231 = vmatprep.mubr.bf16.mxu0 0
      %5232 = vmatmul.mubr.bf16.gmra.mrb[0].mxu0 %v5087
      %v5233 = vpop.f32.mrb[0].mxu0
      %v5234 = vadd.f32 0.0, %v5233
      %v5235 = vpop.f32.mrb[0].mxu0
      %v5236 = vpop.f32.mrb[0].mxu0
      %v5237 = vadd.f32 0.0, %v5236
      %v5238 = vpop.f32.mrb[0].mxu0
      %5239 = vmatprep.mubr.bf16.mxu0 0
      %5240 = vmatmul.mubr.bf16.gmra.mrb[0].mxu0 %v5090
      %v5241 = vpop.f32.mrb[0].mxu0
      %v5242 = vadd.f32 0.0, %v5241
      %v5243 = vpop.f32.mrb[0].mxu0
      %v5244 = vpop.f32.mrb[0].mxu0
      %v5245 = vadd.f32 0.0, %v5244
      %v5246 = vpop.f32.mrb[0].mxu0
      %5247 = vmatprep.mubr.bf16.mxu0 0
      %5248 = vmatmul.mubr.bf16.gmra.mrb[0].mxu0 %v5093
      %v5249 = vpop.f32.mrb[0].mxu0
      %v5250 = vadd.f32 0.0, %v5249
      %v5251 = vpop.f32.mrb[0].mxu0
      %v5252 = vpop.f32.mrb[0].mxu0
      %v5253 = vadd.f32 0.0, %v5252
      %v5254 = vpop.f32.mrb[0].mxu0
      %5255 = vmatprep.mubr.bf16.mxu0 0
      %5256 = vmatmul.mubr.bf16.gmra.mrb[0].mxu0 %v5096
      %v5257 = vpop.f32.mrb[0].mxu0
      %v5258 = vadd.f32 0.0, %v5257
      %v5259 = vpop.f32.mrb[0].mxu0
      %v5260 = vpop.f32.mrb[0].mxu0
      %v5261 = vadd.f32 0.0, %v5260
      %v5262 = vpop.f32.mrb[0].mxu0
      %5263 = vmatprep.mubr.bf16.mxu0 0
      %5264 = vmatmul.mubr.bf16.gmra.mrb[0].mxu0 %v5099
      %v5265 = vpop.f32.mrb[0].mxu0
      %v5266 = vadd.f32 0.0, %v5265
      %v5267 = vpop.f32.mrb[0].mxu0
      %v5268 = vpop.f32.mrb[0].mxu0
      %v5269 = vadd.f32 0.0, %v5268
      %v5270 = vpop.f32.mrb[0].mxu0
      %5271 = vmatprep.mubr.bf16.mxu0 0
      %5272 = vmatmul.mubr.bf16.gmra.mrb[0].mxu0 %v5102
      %v5273 = vpop.f32.mrb[0].mxu0
      %v5274 = vadd.f32 0.0, %v5273
      %v5275 = vpop.f32.mrb[0].mxu0
      %v5276 = vpop.f32.mrb[0].mxu0
      %v5277 = vadd.f32 0.0, %v5276
      %v5278 = vpop.f32.mrb[0].mxu0
      %5279 = vmatprep.mubr.bf16.mxu0 0
      %5280 = vmatmul.mubr.bf16.gmra.mrb[0].mxu0 %v5105
      %v5281 = vpop.f32.mrb[0].mxu0
      %v5282 = vadd.f32 0.0, %v5281
      %v5283 = vpop.f32.mrb[0].mxu0
      %v5284 = vpop.f32.mrb[0].mxu0
      %v5285 = vadd.f32 0.0, %v5284
      %v5286 = vpop.f32.mrb[0].mxu0
      %5287 = vmatprep.mubr.bf16.mxu0 0
      %5288 = vmatmul.mubr.bf16.gmra.mrb[0].mxu0 %v5108
      %v5289 = vpop.f32.mrb[0].mxu0
      %v5290 = vadd.f32 0.0, %v5289
      %v5291 = vpop.f32.mrb[0].mxu0
      %v5292 = vpop.f32.mrb[0].mxu0
      %v5293 = vadd.f32 0.0, %v5292
      %v5294 = vpop.f32.mrb[0].mxu0
      %5295 = vmatprep.mubr.bf16.mxu0 0
      %5296 = vmatmul.mubr.bf16.gmra.mrb[0].mxu0 %v5111
      %v5297 = vpop.f32.mrb[0].mxu0
      %v5298 = vadd.f32 0.0, %v5297
      %v5299 = vpop.f32.mrb[0].mxu0
      %v5300 = vpop.f32.mrb[0].mxu0
      %v5301 = vadd.f32 0.0, %v5300
      %v5302 = vpop.f32.mrb[0].mxu0
      %5303 = vmatprep.mubr.bf16.mxu0 0
      %5304 = vmatmul.mubr.bf16.gmra.mrb[0].mxu0 %v5114
      %v5305 = vpop.f32.mrb[0].mxu0
      %v5306 = vadd.f32 0.0, %v5305
      %v5307 = vpop.f32.mrb[0].mxu0
      %v5308 = vpop.f32.mrb[0].mxu0
      %v5309 = vadd.f32 0.0, %v5308
      %v5310 = vpop.f32.mrb[0].mxu0
      %5311 = vmatprep.mubr.bf16.mxu0 0
      %5312 = vmatmul.mubr.bf16.gmra.mrb[0].mxu0 %v5117
      %v5313 = vpop.f32.mrb[0].mxu0
      %v5314 = vadd.f32 0.0, %v5313
      %v5315 = vpop.f32.mrb[0].mxu0
      %v5316 = vpop.f32.mrb[0].mxu0
      %v5317 = vpop.f32.mrb[0].mxu0
      %5318 = vdwg.mxu0
      %v5319 = vadd.f32 %v4879, %v5154
      %v5320 = vadd.f32 %v4880, %v5157
      %v5321 = vadd.f32 %v4881, %v5162
      %v5322 = vadd.f32 %v4882, %v5165
      %v5323 = vadd.f32 %v4883, %v5170
      %v5324 = vadd.f32 %v4884, %v5173
      %v5325 = vadd.f32 %v4885, %v5178
      %v5326 = vadd.f32 %v4886, %v5181
      %v5327 = vadd.f32 %v4887, %v5186
      %v5328 = vadd.f32 %v4888, %v5189
      %v5329 = vadd.f32 %v4889, %v5194
      %v5330 = vadd.f32 %v4890, %v5197
      %v5331 = vadd.f32 %v4891, %v5202
      %v5332 = vadd.f32 %v4892, %v5205
      %v5333 = vadd.f32 %v4893, %v5210
      %v5334 = vadd.f32 %v4894, %v5213
      %v5335 = vadd.f32 %v4895, %v5218
      %v5336 = vadd.f32 %v4896, %v5221
      %v5337 = vadd.f32 %v4897, %v5226
      %v5338 = vadd.f32 %v4898, %v5229
      %v5339 = vadd.f32 %v4899, %v5234
      %v5340 = vadd.f32 %v4900, %v5237
      %v5341 = vadd.f32 %v4901, %v5242
      %v5342 = vadd.f32 %v4902, %v5245
      %v5343 = vadd.f32 %v4903, %v5250
      %v5344 = vadd.f32 %v4904, %v5253
      %v5345 = vadd.f32 %v4905, %v5258
      %v5346 = vadd.f32 %v4906, %v5261
      %v5347 = vadd.f32 %v4907, %v5266
      %v5348 = vadd.f32 %v4908, %v5269
      %v5349 = vadd.f32 %v4909, %v5274
      %v5350 = vadd.f32 %v4910, %v5277
      %v5351 = vadd.f32 %v4911, %v5282
      %v5352 = vadd.f32 %v4912, %v5285
      %v5353 = vadd.f32 %v4913, %v5290
      %v5354 = vadd.f32 %v4914, %v5293
      %v5355 = vadd.f32 %v4915, %v5298
      %v5356 = vadd.f32 %v4916, %v5301
      %v5357 = vadd.f32 %v4917, %v5306
      %v5358 = vadd.f32 %v4918, %v5309
      %v5359 = vadd.f32 %v4919, %v5314
      %v5360 = vrot.slane %v2279, 6
      %v5361 = vrot.slane %v2280, 6
      %v5362 = vrot.slane %v2281, 6
      %v5363 = vrot.slane %v2282, 6
      %v5364 = vrot.slane %v2283, 6
      %v5365 = vrot.slane %v2284, 6
      %v5366 = vrot.slane %v2285, 6
      %v5367 = vrot.slane %v2286, 6
      %v5368 = vrot.slane %v2287, 6
      %v5369 = vrot.slane %v2288, 6
      %v5370 = vrot.slane %v2289, 6
      %v5371 = vrot.slane %v2290, 6
      %v5372 = vrot.slane %v2291, 6
      %v5373 = vrot.slane %v2292, 6
      %v5374 = vrot.slane %v2293, 6
      %v5375 = vrot.slane %v2294, 6
      %v5376 = vrot.slane %v2295, 6
      %v5377 = vrot.slane %v2296, 6
      %v5378 = vrot.slane %v2297, 6
      %v5379 = vrot.slane %v2298, 6
      %v5380 = vrot.slane %v2299, 6
      %v5381 = vrot.slane %v2300, 6
      %v5382 = vrot.slane %v2301, 6
      %v5383 = vrot.slane %v2302, 6
      %v5384 = vrot.slane %v2303, 6
      %v5385 = vrot.slane %v2304, 6
      %v5386 = vrot.slane %v2305, 6
      %v5387 = vrot.slane %v2306, 6
      %v5388 = vrot.slane %v2307, 6
      %v5389 = vrot.slane %v2308, 6
      %v5390 = vrot.slane %v2309, 6
      %v5391 = vrot.slane %v2310, 6
      %v5392 = vrot.slane %v2311, 6
      %v5393 = vrot.slane %v2312, 6
      %v5394 = vrot.slane %v2313, 6
      %v5395 = vrot.slane %v2314, 6
      %v5396 = vrot.slane %v2315, 6
      %v5397 = vrot.slane %v2316, 6
      %v5398 = vrot.slane %v2317, 6
      %v5399 = vrot.slane %v2318, 6
      %v5400 = vrot.slane %v2319, 6
      %v5401 = vsel %vm1771, %v5399, %v5400
      %v5402 = vsel %vm1771, %v5398, %v5399
      %v5403 = vsel %vm1771, %v5397, %v5398
      %v5404 = vsel %vm1771, %v5396, %v5397
      %v5405 = vsel %vm1771, %v5395, %v5396
      %v5406 = vsel %vm1771, %v5394, %v5395
      %v5407 = vsel %vm1771, %v5393, %v5394
      %v5408 = vsel %vm1771, %v5392, %v5393
      %v5409 = vsel %vm1771, %v5391, %v5392
      %v5410 = vsel %vm1771, %v5390, %v5391
      %v5411 = vsel %vm1771, %v5389, %v5390
      %v5412 = vsel %vm1771, %v5388, %v5389
      %v5413 = vsel %vm1771, %v5387, %v5388
      %v5414 = vsel %vm1771, %v5386, %v5387
      %v5415 = vsel %vm1771, %v5385, %v5386
      %v5416 = vsel %vm1771, %v5384, %v5385
      %v5417 = vsel %vm1771, %v5383, %v5384
      %v5418 = vsel %vm1771, %v5382, %v5383
      %v5419 = vsel %vm1771, %v5381, %v5382
      %v5420 = vsel %vm1771, %v5380, %v5381
      %v5421 = vsel %vm1771, %v5379, %v5380
      %v5422 = vsel %vm1771, %v5378, %v5379
      %v5423 = vsel %vm1771, %v5377, %v5378
      %v5424 = vsel %vm1771, %v5376, %v5377
      %v5425 = vsel %vm1771, %v5375, %v5376
      %v5426 = vsel %vm1771, %v5374, %v5375
      %v5427 = vsel %vm1771, %v5373, %v5374
      %v5428 = vsel %vm1771, %v5372, %v5373
      %v5429 = vsel %vm1771, %v5371, %v5372
      %v5430 = vsel %vm1771, %v5370, %v5371
      %v5431 = vsel %vm1771, %v5369, %v5370
      %v5432 = vsel %vm1771, %v5368, %v5369
      %v5433 = vsel %vm1771, %v5367, %v5368
      %v5434 = vsel %vm1771, %v5366, %v5367
      %v5435 = vsel %vm1771, %v5365, %v5366
      %v5436 = vsel %vm1771, %v5364, %v5365
      %v5437 = vsel %vm1771, %v5363, %v5364
      %v5438 = vsel %vm1771, %v5362, %v5363
      %v5439 = vsel %vm1771, %v5361, %v5362
      %v5440 = vsel %vm1771, %v5360, %v5361
      %v5441 = vsel %vm1771, %v5400, %v5360
      %v5442 = vpack.c.bf16 %v5435, %v5436
      %v5443 = vpack.c.bf16 %v5433, %v5434
      %v5444 = vpack.c.bf16 %v5431, %v5432
      %v5445 = vpack.c.bf16 %v5429, %v5430
      %v5446 = vpack.c.bf16 %v5427, %v5428
      %v5447 = vpack.c.bf16 %v5425, %v5426
      %v5448 = vpack.c.bf16 %v5423, %v5424
      %v5449 = vpack.c.bf16 %v5421, %v5422
      %v5450 = vpack.c.bf16 %v5419, %v5420
      %v5451 = vpack.c.bf16 %v5417, %v5418
      %v5452 = vpack.c.bf16 %v5415, %v5416
      %v5453 = vpack.c.bf16 %v5413, %v5414
      %v5454 = vpack.c.bf16 %v5411, %v5412
      %v5455 = vpack.c.bf16 %v5409, %v5410
      %v5456 = vpack.c.bf16 %v5407, %v5408
      %v5457 = vpack.c.bf16 %v5405, %v5406
      %v5458 = vpack.c.bf16 %v5403, %v5404
      %v5459 = vpack.c.bf16 %v5401, %v5402
      %v5460 = vpack.c.bf16 %v5440, %v5441
      %v5461 = vpack.c.bf16 %v5438, %v5439
      %v5462 = vpack.c.bf16 %v5437, %v5437
      %s5463 = scalar_lea.vmem %s4, 256
      %v5464 = vld [vmem:[%s5463] sm:$0xf]
      %v5465 = vld [vmem:[%s5463 + $0x4] sm:$0xf]
      %v5466 = vld [vmem:[%s5463 + $0x8] sm:$0xf]
      %v5467 = vld [vmem:[%s5463 + $0xc] sm:$0xf]
      %v5468 = vld [vmem:[%s5463 + $0x10] sm:$0xf]
      %v5469 = vld [vmem:[%s5463 + $0x14] sm:$0xf]
      %v5470 = vld [vmem:[%s5463 + $0x18] sm:$0xf]
      %v5471 = vld [vmem:[%s5463 + $0x1c] sm:$0xf]
      %v5480 = vunpack.c.l.b16 %v5464
      %v5481 = vunpack.c.l.b16 %v5465
      %v5482 = vunpack.c.l.b16 %v5466
      %v5483 = vunpack.c.l.b16 %v5467
      %v5484 = vunpack.c.l.b16 %v5468
      %v5485 = vunpack.c.l.b16 %v5469
      %v5486 = vunpack.c.l.b16 %v5470
      %v5487 = vunpack.c.l.b16 %v5471
      %v5488 = vpack.c.b16 %v5481, %v5480
      %v5489 = vpack.c.b16 %v5483, %v5482
      %v5490 = vpack.c.b16 %v5485, %v5484
      %v5491 = vpack.c.b16 %v5487, %v5486
      %v5497 = vsel %vm2485, %v5442, 0
      %v5500 = vsel %vm2485, %v5443, 0
      %v5503 = vsel %vm2485, %v5444, 0
      %v5506 = vsel %vm2485, %v5445, 0
      %v5509 = vsel %vm2485, %v5446, 0
      %v5512 = vsel %vm2485, %v5447, 0
      %v5515 = vsel %vm2485, %v5448, 0
      %v5518 = vsel %vm2485, %v5449, 0
      %v5521 = vsel %vm2485, %v5450, 0
      %v5524 = vsel %vm2485, %v5451, 0
      %v5527 = vsel %vm2485, %v5452, 0
      %v5530 = vsel %vm2485, %v5453, 0
      %v5533 = vsel %vm2485, %v5454, 0
      %v5536 = vsel %vm2485, %v5455, 0
      %v5539 = vsel %vm2485, %v5456, 0
      %v5542 = vsel %vm2485, %v5457, 0
      %v5545 = vsel %vm2485, %v5458, 0
      %v5548 = vsel %vm2485, %v5459, 0
      %v5551 = vsel %vm2485, %v5460, 0
      %v5554 = vsel %vm2485, %v5461, 0
      %v5557 = vsel %vm2485, %v5462, 0
      %5559 = vmatprep.subr.bf16.mxu0 0
      %5560 = vmatpush1.bf16.msra.mxu0 %v5488
      %5561 = vmatprep.subr.bf16.mxu0 0
      %5562 = vmatpush1.bf16.msra.mxu0 %v5489
      %5563 = vmatprep.subr.bf16.mxu0 0
      %5564 = vmatpush1.bf16.msra.mxu0 %v5490
      %5565 = vmatprep.subr.bf16.mxu0 0
      %5566 = vmatpush1.bf16.msra.mxu0 %v5491
      %5567 = vmatprep.subr.bf16.mxu0 0
      %5568 = vmatpush1.bf16.msra.mxu0 0
      %5569 = vmatprep.subr.bf16.mxu0 0
      %5570 = vmatpush1.bf16.msra.mxu0 0
      %5571 = vmatprep.subr.bf16.mxu0 0
      %5572 = vmatpush1.bf16.msra.mxu0 0
      %5573 = vmatprep.subr.bf16.mxu0 0
      %5574 = vmatpush1.bf16.msra.mxu0 0
      %5575 = vmatprep.subr.bf16.mxu0 0
      %5576 = vmatpush1.bf16.msra.mxu0 0
      %5577 = vmatprep.subr.bf16.mxu0 0
      %5578 = vmatpush1.bf16.msra.mxu0 0
      %5579 = vmatprep.subr.bf16.mxu0 0
      %5580 = vmatpush1.bf16.msra.mxu0 0
      %5581 = vmatprep.subr.bf16.mxu0 0
      %5582 = vmatpush1.bf16.msra.mxu0 0
      %5583 = vmatprep.subr.bf16.mxu0 0
      %5584 = vmatpush1.bf16.msra.mxu0 0
      %5585 = vmatprep.subr.bf16.mxu0 0
      %5586 = vmatpush1.bf16.msra.mxu0 0
      %5587 = vmatprep.subr.bf16.mxu0 0
      %5588 = vmatpush1.bf16.msra.mxu0 0
      %5589 = vmatprep.subr.bf16.mxu0 0
      %5590 = vmatpush1.bf16.msra.mxu0 0
      %5591 = vmatprep.mubr.bf16.mxu0 0
      %5592 = vmatmul.mubr.bf16.gmra.mrb[0].mxu0 %v5497
      %v5593 = vpop.f32.mrb[0].mxu0
      %v5594 = vadd.f32 0.0, %v5593
      %v5595 = vpop.f32.mrb[0].mxu0
      %v5596 = vpop.f32.mrb[0].mxu0
      %v5597 = vadd.f32 0.0, %v5596
      %v5598 = vpop.f32.mrb[0].mxu0
      %5599 = vmatprep.mubr.bf16.mxu0 0
      %5600 = vmatmul.mubr.bf16.gmra.mrb[0].mxu0 %v5500
      %v5601 = vpop.f32.mrb[0].mxu0
      %v5602 = vadd.f32 0.0, %v5601
      %v5603 = vpop.f32.mrb[0].mxu0
      %v5604 = vpop.f32.mrb[0].mxu0
      %v5605 = vadd.f32 0.0, %v5604
      %v5606 = vpop.f32.mrb[0].mxu0
      %5607 = vmatprep.mubr.bf16.mxu0 0
      %5608 = vmatmul.mubr.bf16.gmra.mrb[0].mxu0 %v5503
      %v5609 = vpop.f32.mrb[0].mxu0
      %v5610 = vadd.f32 0.0, %v5609
      %v5611 = vpop.f32.mrb[0].mxu0
      %v5612 = vpop.f32.mrb[0].mxu0
      %v5613 = vadd.f32 0.0, %v5612
      %v5614 = vpop.f32.mrb[0].mxu0
      %5615 = vmatprep.mubr.bf16.mxu0 0
      %5616 = vmatmul.mubr.bf16.gmra.mrb[0].mxu0 %v5506
      %v5617 = vpop.f32.mrb[0].mxu0
      %v5618 = vadd.f32 0.0, %v5617
      %v5619 = vpop.f32.mrb[0].mxu0
      %v5620 = vpop.f32.mrb[0].mxu0
      %v5621 = vadd.f32 0.0, %v5620
      %v5622 = vpop.f32.mrb[0].mxu0
      %5623 = vmatprep.mubr.bf16.mxu0 0
      %5624 = vmatmul.mubr.bf16.gmra.mrb[0].mxu0 %v5509
      %v5625 = vpop.f32.mrb[0].mxu0
      %v5626 = vadd.f32 0.0, %v5625
      %v5627 = vpop.f32.mrb[0].mxu0
      %v5628 = vpop.f32.mrb[0].mxu0
      %v5629 = vadd.f32 0.0, %v5628
      %v5630 = vpop.f32.mrb[0].mxu0
      %5631 = vmatprep.mubr.bf16.mxu0 0
      %5632 = vmatmul.mubr.bf16.gmra.mrb[0].mxu0 %v5512
      %v5633 = vpop.f32.mrb[0].mxu0
      %v5634 = vadd.f32 0.0, %v5633
      %v5635 = vpop.f32.mrb[0].mxu0
      %v5636 = vpop.f32.mrb[0].mxu0
      %v5637 = vadd.f32 0.0, %v5636
      %v5638 = vpop.f32.mrb[0].mxu0
      %5639 = vmatprep.mubr.bf16.mxu0 0
      %5640 = vmatmul.mubr.bf16.gmra.mrb[0].mxu0 %v5515
      %v5641 = vpop.f32.mrb[0].mxu0
      %v5642 = vadd.f32 0.0, %v5641
      %v5643 = vpop.f32.mrb[0].mxu0
      %v5644 = vpop.f32.mrb[0].mxu0
      %v5645 = vadd.f32 0.0, %v5644
      %v5646 = vpop.f32.mrb[0].mxu0
      %5647 = vmatprep.mubr.bf16.mxu0 0
      %5648 = vmatmul.mubr.bf16.gmra.mrb[0].mxu0 %v5518
      %v5649 = vpop.f32.mrb[0].mxu0
      %v5650 = vadd.f32 0.0, %v5649
      %v5651 = vpop.f32.mrb[0].mxu0
      %v5652 = vpop.f32.mrb[0].mxu0
      %v5653 = vadd.f32 0.0, %v5652
      %v5654 = vpop.f32.mrb[0].mxu0
      %5655 = vmatprep.mubr.bf16.mxu0 0
      %5656 = vmatmul.mubr.bf16.gmra.mrb[0].mxu0 %v5521
      %v5657 = vpop.f32.mrb[0].mxu0
      %v5658 = vadd.f32 0.0, %v5657
      %v5659 = vpop.f32.mrb[0].mxu0
      %v5660 = vpop.f32.mrb[0].mxu0
      %v5661 = vadd.f32 0.0, %v5660
      %v5662 = vpop.f32.mrb[0].mxu0
      %5663 = vmatprep.mubr.bf16.mxu0 0
      %5664 = vmatmul.mubr.bf16.gmra.mrb[0].mxu0 %v5524
      %v5665 = vpop.f32.mrb[0].mxu0
      %v5666 = vadd.f32 0.0, %v5665
      %v5667 = vpop.f32.mrb[0].mxu0
      %v5668 = vpop.f32.mrb[0].mxu0
      %v5669 = vadd.f32 0.0, %v5668
      %v5670 = vpop.f32.mrb[0].mxu0
      %5671 = vmatprep.mubr.bf16.mxu0 0
      %5672 = vmatmul.mubr.bf16.gmra.mrb[0].mxu0 %v5527
      %v5673 = vpop.f32.mrb[0].mxu0
      %v5674 = vadd.f32 0.0, %v5673
      %v5675 = vpop.f32.mrb[0].mxu0
      %v5676 = vpop.f32.mrb[0].mxu0
      %v5677 = vadd.f32 0.0, %v5676
      %v5678 = vpop.f32.mrb[0].mxu0
      %5679 = vmatprep.mubr.bf16.mxu0 0
      %5680 = vmatmul.mubr.bf16.gmra.mrb[0].mxu0 %v5530
      %v5681 = vpop.f32.mrb[0].mxu0
      %v5682 = vadd.f32 0.0, %v5681
      %v5683 = vpop.f32.mrb[0].mxu0
      %v5684 = vpop.f32.mrb[0].mxu0
      %v5685 = vadd.f32 0.0, %v5684
      %v5686 = vpop.f32.mrb[0].mxu0
      %5687 = vmatprep.mubr.bf16.mxu0 0
      %5688 = vmatmul.mubr.bf16.gmra.mrb[0].mxu0 %v5533
      %v5689 = vpop.f32.mrb[0].mxu0
      %v5690 = vadd.f32 0.0, %v5689
      %v5691 = vpop.f32.mrb[0].mxu0
      %v5692 = vpop.f32.mrb[0].mxu0
      %v5693 = vadd.f32 0.0, %v5692
      %v5694 = vpop.f32.mrb[0].mxu0
      %5695 = vmatprep.mubr.bf16.mxu0 0
      %5696 = vmatmul.mubr.bf16.gmra.mrb[0].mxu0 %v5536
      %v5697 = vpop.f32.mrb[0].mxu0
      %v5698 = vadd.f32 0.0, %v5697
      %v5699 = vpop.f32.mrb[0].mxu0
      %v5700 = vpop.f32.mrb[0].mxu0
      %v5701 = vadd.f32 0.0, %v5700
      %v5702 = vpop.f32.mrb[0].mxu0
      %5703 = vmatprep.mubr.bf16.mxu0 0
      %5704 = vmatmul.mubr.bf16.gmra.mrb[0].mxu0 %v5539
      %v5705 = vpop.f32.mrb[0].mxu0
      %v5706 = vadd.f32 0.0, %v5705
      %v5707 = vpop.f32.mrb[0].mxu0
      %v5708 = vpop.f32.mrb[0].mxu0
      %v5709 = vadd.f32 0.0, %v5708
      %v5710 = vpop.f32.mrb[0].mxu0
      %5711 = vmatprep.mubr.bf16.mxu0 0
      %5712 = vmatmul.mubr.bf16.gmra.mrb[0].mxu0 %v5542
      %v5713 = vpop.f32.mrb[0].mxu0
      %v5714 = vadd.f32 0.0, %v5713
      %v5715 = vpop.f32.mrb[0].mxu0
      %v5716 = vpop.f32.mrb[0].mxu0
      %v5717 = vadd.f32 0.0, %v5716
      %v5718 = vpop.f32.mrb[0].mxu0
      %5719 = vmatprep.mubr.bf16.mxu0 0
      %5720 = vmatmul.mubr.bf16.gmra.mrb[0].mxu0 %v5545
      %v5721 = vpop.f32.mrb[0].mxu0
      %v5722 = vadd.f32 0.0, %v5721
      %v5723 = vpop.f32.mrb[0].mxu0
      %v5724 = vpop.f32.mrb[0].mxu0
      %v5725 = vadd.f32 0.0, %v5724
      %v5726 = vpop.f32.mrb[0].mxu0
      %5727 = vmatprep.mubr.bf16.mxu0 0
      %5728 = vmatmul.mubr.bf16.gmra.mrb[0].mxu0 %v5548
      %v5729 = vpop.f32.mrb[0].mxu0
      %v5730 = vadd.f32 0.0, %v5729
      %v5731 = vpop.f32.mrb[0].mxu0
      %v5732 = vpop.f32.mrb[0].mxu0
      %v5733 = vadd.f32 0.0, %v5732
      %v5734 = vpop.f32.mrb[0].mxu0
      %5735 = vmatprep.mubr.bf16.mxu0 0
      %5736 = vmatmul.mubr.bf16.gmra.mrb[0].mxu0 %v5551
      %v5737 = vpop.f32.mrb[0].mxu0
      %v5738 = vadd.f32 0.0, %v5737
      %v5739 = vpop.f32.mrb[0].mxu0
      %v5740 = vpop.f32.mrb[0].mxu0
      %v5741 = vadd.f32 0.0, %v5740
      %v5742 = vpop.f32.mrb[0].mxu0
      %5743 = vmatprep.mubr.bf16.mxu0 0
      %5744 = vmatmul.mubr.bf16.gmra.mrb[0].mxu0 %v5554
      %v5745 = vpop.f32.mrb[0].mxu0
      %v5746 = vadd.f32 0.0, %v5745
      %v5747 = vpop.f32.mrb[0].mxu0
      %v5748 = vpop.f32.mrb[0].mxu0
      %v5749 = vadd.f32 0.0, %v5748
      %v5750 = vpop.f32.mrb[0].mxu0
      %5751 = vmatprep.mubr.bf16.mxu0 0
      %5752 = vmatmul.mubr.bf16.gmra.mrb[0].mxu0 %v5557
      %v5753 = vpop.f32.mrb[0].mxu0
      %v5754 = vadd.f32 0.0, %v5753
      %v5755 = vpop.f32.mrb[0].mxu0
      %v5756 = vpop.f32.mrb[0].mxu0
      %v5757 = vpop.f32.mrb[0].mxu0
      %5758 = vdwg.mxu0
      %v5759 = vadd.f32 %v5319, %v5594
      %v5760 = vadd.f32 %v5320, %v5597
      %v5761 = vadd.f32 %v5321, %v5602
      %v5762 = vadd.f32 %v5322, %v5605
      %v5763 = vadd.f32 %v5323, %v5610
      %v5764 = vadd.f32 %v5324, %v5613
      %v5765 = vadd.f32 %v5325, %v5618
      %v5766 = vadd.f32 %v5326, %v5621
      %v5767 = vadd.f32 %v5327, %v5626
      %v5768 = vadd.f32 %v5328, %v5629
      %v5769 = vadd.f32 %v5329, %v5634
      %v5770 = vadd.f32 %v5330, %v5637
      %v5771 = vadd.f32 %v5331, %v5642
      %v5772 = vadd.f32 %v5332, %v5645
      %v5773 = vadd.f32 %v5333, %v5650
      %v5774 = vadd.f32 %v5334, %v5653
      %v5775 = vadd.f32 %v5335, %v5658
      %v5776 = vadd.f32 %v5336, %v5661
      %v5777 = vadd.f32 %v5337, %v5666
      %v5778 = vadd.f32 %v5338, %v5669
      %v5779 = vadd.f32 %v5339, %v5674
      %v5780 = vadd.f32 %v5340, %v5677
      %v5781 = vadd.f32 %v5341, %v5682
      %v5782 = vadd.f32 %v5342, %v5685
      %v5783 = vadd.f32 %v5343, %v5690
      %v5784 = vadd.f32 %v5344, %v5693
      %v5785 = vadd.f32 %v5345, %v5698
      %v5786 = vadd.f32 %v5346, %v5701
      %v5787 = vadd.f32 %v5347, %v5706
      %v5788 = vadd.f32 %v5348, %v5709
      %v5789 = vadd.f32 %v5349, %v5714
      %v5790 = vadd.f32 %v5350, %v5717
      %v5791 = vadd.f32 %v5351, %v5722
      %v5792 = vadd.f32 %v5352, %v5725
      %v5793 = vadd.f32 %v5353, %v5730
      %v5794 = vadd.f32 %v5354, %v5733
      %v5795 = vadd.f32 %v5355, %v5738
      %v5796 = vadd.f32 %v5356, %v5741
      %v5797 = vadd.f32 %v5357, %v5746
      %v5798 = vadd.f32 %v5358, %v5749
      %v5799 = vadd.f32 %v5359, %v5754
      %v5800 = vld [vmem:[%s5] sm:$0x1]
      %v5802 = vlaneseq
      %v5803 = vshrl.u32 %v5802, 7
      %v5804 = vsub.s32 0, %v5803
      %v5805 = vrot.slane %v5800, %v5804
      %v5807 = vadd.f32 %v5759, %v5805
      %v5808 = vadd.f32 %v5760, %v5805
      %v5809 = vadd.f32 %v5761, %v5805
      %v5810 = vadd.f32 %v5762, %v5805
      %v5811 = vadd.f32 %v5763, %v5805
      %v5812 = vadd.f32 %v5764, %v5805
      %v5813 = vadd.f32 %v5765, %v5805
      %v5814 = vadd.f32 %v5766, %v5805
      %v5815 = vadd.f32 %v5767, %v5805
      %v5816 = vadd.f32 %v5768, %v5805
      %v5817 = vadd.f32 %v5769, %v5805
      %v5818 = vadd.f32 %v5770, %v5805
      %v5819 = vadd.f32 %v5771, %v5805
      %v5820 = vadd.f32 %v5772, %v5805
      %v5821 = vadd.f32 %v5773, %v5805
      %v5822 = vadd.f32 %v5774, %v5805
      %v5823 = vadd.f32 %v5775, %v5805
      %v5824 = vadd.f32 %v5776, %v5805
      %v5825 = vadd.f32 %v5777, %v5805
      %v5826 = vadd.f32 %v5778, %v5805
      %v5827 = vadd.f32 %v5779, %v5805
      %v5828 = vadd.f32 %v5780, %v5805
      %v5829 = vadd.f32 %v5781, %v5805
      %v5830 = vadd.f32 %v5782, %v5805
      %v5831 = vadd.f32 %v5783, %v5805
      %v5832 = vadd.f32 %v5784, %v5805
      %v5833 = vadd.f32 %v5785, %v5805
      %v5834 = vadd.f32 %v5786, %v5805
      %v5835 = vadd.f32 %v5787, %v5805
      %v5836 = vadd.f32 %v5788, %v5805
      %v5837 = vadd.f32 %v5789, %v5805
      %v5838 = vadd.f32 %v5790, %v5805
      %v5839 = vadd.f32 %v5791, %v5805
      %v5840 = vadd.f32 %v5792, %v5805
      %v5841 = vadd.f32 %v5793, %v5805
      %v5842 = vadd.f32 %v5794, %v5805
      %v5843 = vadd.f32 %v5795, %v5805
      %v5844 = vadd.f32 %v5796, %v5805
      %v5845 = vadd.f32 %v5797, %v5805
      %v5846 = vadd.f32 %v5798, %v5805
      %v5847 = vadd.f32 %v5799, %v5805
      %v5848 = vmax.f32 %v5807, 0.0
      %v5849 = vmax.f32 %v5808, 0.0
      %v5850 = vmax.f32 %v5809, 0.0
      %v5851 = vmax.f32 %v5810, 0.0
      %v5852 = vmax.f32 %v5811, 0.0
      %v5853 = vmax.f32 %v5812, 0.0
      %v5854 = vmax.f32 %v5813, 0.0
      %v5855 = vmax.f32 %v5814, 0.0
      %v5856 = vmax.f32 %v5815, 0.0
      %v5857 = vmax.f32 %v5816, 0.0
      %v5858 = vmax.f32 %v5817, 0.0
      %v5859 = vmax.f32 %v5818, 0.0
      %v5860 = vmax.f32 %v5819, 0.0
      %v5861 = vmax.f32 %v5820, 0.0
      %v5862 = vmax.f32 %v5821, 0.0
      %v5863 = vmax.f32 %v5822, 0.0
      %v5864 = vmax.f32 %v5823, 0.0
      %v5865 = vmax.f32 %v5824, 0.0
      %v5866 = vmax.f32 %v5825, 0.0
      %v5867 = vmax.f32 %v5826, 0.0
      %v5868 = vmax.f32 %v5827, 0.0
      %v5869 = vmax.f32 %v5828, 0.0
      %v5870 = vmax.f32 %v5829, 0.0
      %v5871 = vmax.f32 %v5830, 0.0
      %v5872 = vmax.f32 %v5831, 0.0
      %v5873 = vmax.f32 %v5832, 0.0
      %v5874 = vmax.f32 %v5833, 0.0
      %v5875 = vmax.f32 %v5834, 0.0
      %v5876 = vmax.f32 %v5835, 0.0
      %v5877 = vmax.f32 %v5836, 0.0
      %v5878 = vmax.f32 %v5837, 0.0
      %v5879 = vmax.f32 %v5838, 0.0
      %v5880 = vmax.f32 %v5839, 0.0
      %v5881 = vmax.f32 %v5840, 0.0
      %v5882 = vmax.f32 %v5841, 0.0
      %v5883 = vmax.f32 %v5842, 0.0
      %v5884 = vmax.f32 %v5843, 0.0
      %v5885 = vmax.f32 %v5844, 0.0
      %v5886 = vmax.f32 %v5845, 0.0
      %v5887 = vmax.f32 %v5846, 0.0
      %v5888 = vmax.f32 %v5847, 0.0
      %v5889 = vrot.slane %v5848, 5
      %v5890 = vrot.slane %v5849, 5
      %v5891 = vrot.slane %v5850, 5
      %v5892 = vrot.slane %v5851, 5
      %v5893 = vrot.slane %v5852, 5
      %v5894 = vrot.slane %v5853, 5
      %v5895 = vrot.slane %v5854, 5
      %v5896 = vrot.slane %v5855, 5
      %v5897 = vrot.slane %v5856, 5
      %v5898 = vrot.slane %v5857, 5
      %v5899 = vrot.slane %v5858, 5
      %v5900 = vrot.slane %v5859, 5
      %v5901 = vrot.slane %v5860, 5
      %v5902 = vrot.slane %v5861, 5
      %v5903 = vrot.slane %v5862, 5
      %v5904 = vrot.slane %v5863, 5
      %v5905 = vrot.slane %v5864, 5
      %v5906 = vrot.slane %v5865, 5
      %v5907 = vrot.slane %v5866, 5
      %v5908 = vrot.slane %v5867, 5
      %v5909 = vrot.slane %v5868, 5
      %v5910 = vrot.slane %v5869, 5
      %v5911 = vrot.slane %v5870, 5
      %v5912 = vrot.slane %v5871, 5
      %v5913 = vrot.slane %v5872, 5
      %v5914 = vrot.slane %v5873, 5
      %v5915 = vrot.slane %v5874, 5
      %v5916 = vrot.slane %v5875, 5
      %v5917 = vrot.slane %v5876, 5
      %v5918 = vrot.slane %v5877, 5
      %v5919 = vrot.slane %v5878, 5
      %v5920 = vrot.slane %v5879, 5
      %v5921 = vrot.slane %v5880, 5
      %v5922 = vrot.slane %v5881, 5
      %v5923 = vrot.slane %v5882, 5
      %v5924 = vrot.slane %v5883, 5
      %v5925 = vrot.slane %v5884, 5
      %v5926 = vrot.slane %v5885, 5
      %v5927 = vrot.slane %v5886, 5
      %v5928 = vrot.slane %v5887, 5
      %v5929 = vrot.slane %v5888, 5
      %v5930 = vsel %vm1598, %v5928, %v5929
      %v5931 = vsel %vm1598, %v5927, %v5928
      %v5932 = vsel %vm1598, %v5926, %v5927
      %v5933 = vsel %vm1598, %v5925, %v5926
      %v5934 = vsel %vm1598, %v5924, %v5925
      %v5935 = vsel %vm1598, %v5923, %v5924
      %v5936 = vsel %vm1598, %v5922, %v5923
      %v5937 = vsel %vm1598, %v5921, %v5922
      %v5938 = vsel %vm1598, %v5920, %v5921
      %v5939 = vsel %vm1598, %v5919, %v5920
      %v5940 = vsel %vm1598, %v5918, %v5919
      %v5941 = vsel %vm1598, %v5917, %v5918
      %v5942 = vsel %vm1598, %v5916, %v5917
      %v5943 = vsel %vm1598, %v5915, %v5916
      %v5944 = vsel %vm1598, %v5914, %v5915
      %v5945 = vsel %vm1598, %v5913, %v5914
      %v5946 = vsel %vm1598, %v5912, %v5913
      %v5947 = vsel %vm1598, %v5911, %v5912
      %v5948 = vsel %vm1598, %v5910, %v5911
      %v5949 = vsel %vm1598, %v5909, %v5910
      %v5950 = vsel %vm1598, %v5908, %v5909
      %v5951 = vsel %vm1598, %v5907, %v5908
      %v5952 = vsel %vm1598, %v5906, %v5907
      %v5953 = vsel %vm1598, %v5905, %v5906
      %v5954 = vsel %vm1598, %v5904, %v5905
      %v5955 = vsel %vm1598, %v5903, %v5904
      %v5956 = vsel %vm1598, %v5902, %v5903
      %v5957 = vsel %vm1598, %v5901, %v5902
      %v5958 = vsel %vm1598, %v5900, %v5901
      %v5959 = vsel %vm1598, %v5899, %v5900
      %v5960 = vsel %vm1598, %v5898, %v5899
      %v5961 = vsel %vm1598, %v5897, %v5898
      %v5962 = vsel %vm1598, %v5896, %v5897
      %v5963 = vsel %vm1598, %v5895, %v5896
      %v5964 = vsel %vm1598, %v5894, %v5895
      %v5965 = vsel %vm1598, %v5893, %v5894
      %v5966 = vsel %vm1598, %v5892, %v5893
      %v5967 = vsel %vm1598, %v5891, %v5892
      %v5968 = vsel %vm1598, %v5890, %v5891
      %v5969 = vsel %vm1598, %v5889, %v5890
      %v5970 = vsel %vm1598, %v5929, %v5889
      %v5971 = vmul.f32 %v5931, %v2077
      %v5972 = vmul.f32 %v5930, %v2082
      %v5973 = vmul.f32 %v5970, %v2087
      %v5974 = vmul.f32 %v5969, %v2092
      %v5975 = vmul.f32 %v5968, %v2097
      %v5976 = vmul.f32 %v5967, %v2102
      %v5977 = vmul.f32 %v5966, %v2107
      %v5978 = vmul.f32 %v5965, %v2112
      %v5979 = vmul.f32 %v5964, %v2117
      %v5980 = vmul.f32 %v5963, %v2122
      %v5981 = vmul.f32 %v5962, %v2127
      %v5982 = vmul.f32 %v5961, %v2132
      %v5983 = vmul.f32 %v5960, %v2137
      %v5984 = vmul.f32 %v5959, %v2142
      %v5985 = vmul.f32 %v5958, %v2147
      %v5986 = vmul.f32 %v5957, %v2152
      %v5987 = vmul.f32 %v5956, %v2157
      %v5988 = vmul.f32 %v5955, %v2162
      %v5989 = vmul.f32 %v5954, %v2167
      %v5990 = vmul.f32 %v5953, %v2172
      %v5991 = vmul.f32 %v5952, %v2177
      %v5992 = vmul.f32 %v5951, %v2182
      %v5993 = vmul.f32 %v5950, %v2187
      %v5994 = vmul.f32 %v5949, %v2192
      %v5995 = vmul.f32 %v5948, %v2197
      %v5996 = vmul.f32 %v5947, %v2202
      %v5997 = vmul.f32 %v5946, %v2207
      %v5998 = vmul.f32 %v5945, %v2212
      %v5999 = vmul.f32 %v5944, %v2217
      %v6000 = vmul.f32 %v5943, %v2222
      %v6001 = vmul.f32 %v5942, %v2227
      %v6002 = vmul.f32 %v5941, %v2232
      %v6003 = vmul.f32 %v5940, %v2237
      %v6004 = vmul.f32 %v5939, %v2242
      %v6005 = vmul.f32 %v5938, %v2247
      %v6006 = vmul.f32 %v5937, %v2252
      %v6007 = vmul.f32 %v5936, %v2257
      %v6008 = vmul.f32 %v5935, %v2262
      %v6009 = vmul.f32 %v5934, %v2267
      %v6010 = vmul.f32 %v5933, %v2272
      %v6011 = vmul.f32 %v5932, %v2277
      %v6012 = vpack.c.bf16 %v5972, %v5971
      %v6013 = vpack.c.bf16 %v5974, %v5973
      %v6014 = vpack.c.bf16 %v5976, %v5975
      %v6015 = vpack.c.bf16 %v5978, %v5977
      %v6016 = vpack.c.bf16 %v5980, %v5979
      %v6017 = vpack.c.bf16 %v5982, %v5981
      %v6018 = vpack.c.bf16 %v5984, %v5983
      %v6019 = vpack.c.bf16 %v5986, %v5985
      %v6020 = vpack.c.bf16 %v5988, %v5987
      %v6021 = vpack.c.bf16 %v5990, %v5989
      %v6022 = vpack.c.bf16 %v5992, %v5991
      %v6023 = vpack.c.bf16 %v5994, %v5993
      %v6024 = vpack.c.bf16 %v5996, %v5995
      %v6025 = vpack.c.bf16 %v5998, %v5997
      %v6026 = vpack.c.bf16 %v6000, %v5999
      %v6027 = vpack.c.bf16 %v6002, %v6001
      %v6028 = vpack.c.bf16 %v6004, %v6003
      %v6029 = vpack.c.bf16 %v6006, %v6005
      %v6030 = vpack.c.bf16 %v6008, %v6007
      %v6031 = vpack.c.bf16 %v6010, %v6009
      %v6032 = vpack.c.bf16 %v6011, %v6011
      %v6033 = vld [vmem:[%s6] sm:$0xf]
      %v6034 = vld [vmem:[%s6 + $0x4] sm:$0xf]
      %v6035 = vld [vmem:[%s6 + $0x8] sm:$0xf]
      %v6036 = vld [vmem:[%s6 + $0xc] sm:$0xf]
      %v6037 = vld [vmem:[%s6 + $0x10] sm:$0xf]
      %v6038 = vld [vmem:[%s6 + $0x14] sm:$0xf]
      %v6039 = vld [vmem:[%s6 + $0x18] sm:$0xf]
      %v6040 = vld [vmem:[%s6 + $0x1c] sm:$0xf]
      %v6041 = vrot.slane %v5971, 1
      %v6042 = vrot.slane %v5972, 1
      %v6043 = vrot.slane %v5973, 1
      %v6044 = vrot.slane %v5974, 1
      %v6045 = vrot.slane %v5975, 1
      %v6046 = vrot.slane %v5976, 1
      %v6047 = vrot.slane %v5977, 1
      %v6048 = vrot.slane %v5978, 1
      %v6049 = vrot.slane %v5979, 1
      %v6050 = vrot.slane %v5980, 1
      %v6051 = vrot.slane %v5981, 1
      %v6052 = vrot.slane %v5982, 1
      %v6053 = vrot.slane %v5983, 1
      %v6054 = vrot.slane %v5984, 1
      %v6055 = vrot.slane %v5985, 1
      %v6056 = vrot.slane %v5986, 1
      %v6057 = vrot.slane %v5987, 1
      %v6058 = vrot.slane %v5988, 1
      %v6059 = vrot.slane %v5989, 1
      %v6060 = vrot.slane %v5990, 1
      %v6061 = vrot.slane %v5991, 1
      %v6062 = vrot.slane %v5992, 1
      %v6063 = vrot.slane %v5993, 1
      %v6064 = vrot.slane %v5994, 1
      %v6065 = vrot.slane %v5995, 1
      %v6066 = vrot.slane %v5996, 1
      %v6067 = vrot.slane %v5997, 1
      %v6068 = vrot.slane %v5998, 1
      %v6069 = vrot.slane %v5999, 1
      %v6070 = vrot.slane %v6000, 1
      %v6071 = vrot.slane %v6001, 1
      %v6072 = vrot.slane %v6002, 1
      %v6073 = vrot.slane %v6003, 1
      %v6074 = vrot.slane %v6004, 1
      %v6075 = vrot.slane %v6005, 1
      %v6076 = vrot.slane %v6006, 1
      %v6077 = vrot.slane %v6007, 1
      %v6078 = vrot.slane %v6008, 1
      %v6079 = vrot.slane %v6009, 1
      %v6080 = vrot.slane %v6010, 1
      %v6081 = vrot.slane %v6011, 1
      %v6082 = vsel %vm726, %v6080, %v6081
      %v6083 = vsel %vm726, %v6079, %v6080
      %v6084 = vsel %vm726, %v6078, %v6079
      %v6085 = vsel %vm726, %v6077, %v6078
      %v6086 = vsel %vm726, %v6076, %v6077
      %v6087 = vsel %vm726, %v6075, %v6076
      %v6088 = vsel %vm726, %v6074, %v6075
      %v6089 = vsel %vm726, %v6073, %v6074
      %v6090 = vsel %vm726, %v6072, %v6073
      %v6091 = vsel %vm726, %v6071, %v6072
      %v6092 = vsel %vm726, %v6070, %v6071
      %v6093 = vsel %vm726, %v6069, %v6070
      %v6094 = vsel %vm726, %v6068, %v6069
      %v6095 = vsel %vm726, %v6067, %v6068
      %v6096 = vsel %vm726, %v6066, %v6067
      %v6097 = vsel %vm726, %v6065, %v6066
      %v6098 = vsel %vm726, %v6064, %v6065
      %v6099 = vsel %vm726, %v6063, %v6064
      %v6100 = vsel %vm726, %v6062, %v6063
      %v6101 = vsel %vm726, %v6061, %v6062
      %v6102 = vsel %vm726, %v6060, %v6061
      %v6103 = vsel %vm726, %v6059, %v6060
      %v6104 = vsel %vm726, %v6058, %v6059
      %v6105 = vsel %vm726, %v6057, %v6058
      %v6106 = vsel %vm726, %v6056, %v6057
      %v6107 = vsel %vm726, %v6055, %v6056
      %v6108 = vsel %vm726, %v6054, %v6055
      %v6109 = vsel %vm726, %v6053, %v6054
      %v6110 = vsel %vm726, %v6052, %v6053
      %v6111 = vsel %vm726, %v6051, %v6052
      %v6112 = vsel %vm726, %v6050, %v6051
      %v6113 = vsel %vm726, %v6049, %v6050
      %v6114 = vsel %vm726, %v6048, %v6049
      %v6115 = vsel %vm726, %v6047, %v6048
      %v6116 = vsel %vm726, %v6046, %v6047
      %v6117 = vsel %vm726, %v6045, %v6046
      %v6118 = vsel %vm726, %v6044, %v6045
      %v6119 = vsel %vm726, %v6043, %v6044
      %v6120 = vsel %vm726, %v6042, %v6043
      %v6121 = vsel %vm726, %v6041, %v6042
      %v6122 = vsel %vm726, %v6081, %v6041
      %v6123 = vpack.c.bf16 %v6120, %v6121
      %v6124 = vpack.c.bf16 %v6118, %v6119
      %v6125 = vpack.c.bf16 %v6116, %v6117
      %v6126 = vpack.c.bf16 %v6114, %v6115
      %v6127 = vpack.c.bf16 %v6112, %v6113
      %v6128 = vpack.c.bf16 %v6110, %v6111
      %v6129 = vpack.c.bf16 %v6108, %v6109
      %v6130 = vpack.c.bf16 %v6106, %v6107
      %v6131 = vpack.c.bf16 %v6104, %v6105
      %v6132 = vpack.c.bf16 %v6102, %v6103
      %v6133 = vpack.c.bf16 %v6100, %v6101
      %v6134 = vpack.c.bf16 %v6098, %v6099
      %v6135 = vpack.c.bf16 %v6096, %v6097
      %v6136 = vpack.c.bf16 %v6094, %v6095
      %v6137 = vpack.c.bf16 %v6092, %v6093
      %v6138 = vpack.c.bf16 %v6090, %v6091
      %v6139 = vpack.c.bf16 %v6088, %v6089
      %v6140 = vpack.c.bf16 %v6086, %v6087
      %v6141 = vpack.c.bf16 %v6084, %v6085
      %v6142 = vpack.c.bf16 %v6082, %v6083
      %v6143 = vpack.c.bf16 %v6122, %v6122
      %s6144 = scalar_lea.vmem %s6, 32
      %v6145 = vld [vmem:[%s6144] sm:$0xf]
      %v6146 = vld [vmem:[%s6144 + $0x4] sm:$0xf]
      %v6147 = vld [vmem:[%s6144 + $0x8] sm:$0xf]
      %v6148 = vld [vmem:[%s6144 + $0xc] sm:$0xf]
      %v6149 = vld [vmem:[%s6144 + $0x10] sm:$0xf]
      %v6150 = vld [vmem:[%s6144 + $0x14] sm:$0xf]
      %v6151 = vld [vmem:[%s6144 + $0x18] sm:$0xf]
      %v6152 = vld [vmem:[%s6144 + $0x1c] sm:$0xf]
      %v6161 = vunpack.c.l.b16 %v6145
      %v6162 = vunpack.c.l.b16 %v6146
      %v6163 = vunpack.c.l.b16 %v6147
      %v6164 = vunpack.c.l.b16 %v6148
      %v6165 = vunpack.c.l.b16 %v6149
      %v6166 = vunpack.c.l.b16 %v6150
      %v6167 = vunpack.c.l.b16 %v6151
      %v6168 = vunpack.c.l.b16 %v6152
      %v6169 = vpack.c.b16 %v6162, %v6161
      %v6170 = vpack.c.b16 %v6164, %v6163
      %v6171 = vpack.c.b16 %v6166, %v6165
      %v6172 = vpack.c.b16 %v6168, %v6167
      %v6178 = vsel %vm2485, %v6123, 0
      %v6181 = vsel %vm2485, %v6124, 0
      %v6184 = vsel %vm2485, %v6125, 0
      %v6187 = vsel %vm2485, %v6126, 0
      %v6190 = vsel %vm2485, %v6127, 0
      %v6193 = vsel %vm2485, %v6128, 0
      %v6196 = vsel %vm2485, %v6129, 0
      %v6199 = vsel %vm2485, %v6130, 0
      %v6202 = vsel %vm2485, %v6131, 0
      %v6205 = vsel %vm2485, %v6132, 0
      %v6208 = vsel %vm2485, %v6133, 0
      %v6211 = vsel %vm2485, %v6134, 0
      %v6214 = vsel %vm2485, %v6135, 0
      %v6217 = vsel %vm2485, %v6136, 0
      %v6220 = vsel %vm2485, %v6137, 0
      %v6223 = vsel %vm2485, %v6138, 0
      %v6226 = vsel %vm2485, %v6139, 0
      %v6229 = vsel %vm2485, %v6140, 0
      %v6232 = vsel %vm2485, %v6141, 0
      %v6235 = vsel %vm2485, %v6142, 0
      %v6238 = vsel %vm2485, %v6143, 0
      %6240 = vmatprep.subr.bf16.mxu0 0
      %6241 = vmatpush1.bf16.msra.mxu0 %v6169
      %6242 = vmatprep.subr.bf16.mxu0 0
      %6243 = vmatpush1.bf16.msra.mxu0 %v6170
      %6244 = vmatprep.subr.bf16.mxu0 0
      %6245 = vmatpush1.bf16.msra.mxu0 %v6171
      %6246 = vmatprep.subr.bf16.mxu0 0
      %6247 = vmatpush1.bf16.msra.mxu0 %v6172
      %6248 = vmatprep.subr.bf16.mxu0 0
      %6249 = vmatpush1.bf16.msra.mxu0 0
      %6250 = vmatprep.subr.bf16.mxu0 0
      %6251 = vmatpush1.bf16.msra.mxu0 0
      %6252 = vmatprep.subr.bf16.mxu0 0
      %6253 = vmatpush1.bf16.msra.mxu0 0
      %6254 = vmatprep.subr.bf16.mxu0 0
      %6255 = vmatpush1.bf16.msra.mxu0 0
      %6256 = vmatprep.subr.bf16.mxu0 0
      %6257 = vmatpush1.bf16.msra.mxu0 0
      %6258 = vmatprep.subr.bf16.mxu0 0
      %6259 = vmatpush1.bf16.msra.mxu0 0
      %6260 = vmatprep.subr.bf16.mxu0 0
      %6261 = vmatpush1.bf16.msra.mxu0 0
      %6262 = vmatprep.subr.bf16.mxu0 0
      %6263 = vmatpush1.bf16.msra.mxu0 0
      %6264 = vmatprep.subr.bf16.mxu0 0
      %6265 = vmatpush1.bf16.msra.mxu0 0
      %6266 = vmatprep.subr.bf16.mxu0 0
      %6267 = vmatpush1.bf16.msra.mxu0 0
      %6268 = vmatprep.subr.bf16.mxu0 0
      %6269 = vmatpush1.bf16.msra.mxu0 0
      %6270 = vmatprep.subr.bf16.mxu0 0
      %6271 = vmatpush1.bf16.msra.mxu0 0
      %6272 = vmatprep.mubr.bf16.mxu0 0
      %6273 = vmatmul.mubr.bf16.gmra.mrb[0].mxu0 %v6178
      %v6274 = vpop.f32.mrb[0].mxu0
      %v6275 = vadd.f32 0.0, %v6274
      %v6276 = vpop.f32.mrb[0].mxu0
      %v6277 = vpop.f32.mrb[0].mxu0
      %v6278 = vadd.f32 0.0, %v6277
      %v6279 = vpop.f32.mrb[0].mxu0
      %6280 = vmatprep.mubr.bf16.mxu0 0
      %6281 = vmatmul.mubr.bf16.gmra.mrb[0].mxu0 %v6181
      %v6282 = vpop.f32.mrb[0].mxu0
      %v6283 = vadd.f32 0.0, %v6282
      %v6284 = vpop.f32.mrb[0].mxu0
      %v6285 = vpop.f32.mrb[0].mxu0
      %v6286 = vadd.f32 0.0, %v6285
      %v6287 = vpop.f32.mrb[0].mxu0
      %6288 = vmatprep.mubr.bf16.mxu0 0
      %6289 = vmatmul.mubr.bf16.gmra.mrb[0].mxu0 %v6184
      %v6290 = vpop.f32.mrb[0].mxu0
      %v6291 = vadd.f32 0.0, %v6290
      %v6292 = vpop.f32.mrb[0].mxu0
      %v6293 = vpop.f32.mrb[0].mxu0
      %v6294 = vadd.f32 0.0, %v6293
      %v6295 = vpop.f32.mrb[0].mxu0
      %6296 = vmatprep.mubr.bf16.mxu0 0
      %6297 = vmatmul.mubr.bf16.gmra.mrb[0].mxu0 %v6187
      %v6298 = vpop.f32.mrb[0].mxu0
      %v6299 = vadd.f32 0.0, %v6298
      %v6300 = vpop.f32.mrb[0].mxu0
      %v6301 = vpop.f32.mrb[0].mxu0
      %v6302 = vadd.f32 0.0, %v6301
      %v6303 = vpop.f32.mrb[0].mxu0
      %6304 = vmatprep.mubr.bf16.mxu0 0
      %6305 = vmatmul.mubr.bf16.gmra.mrb[0].mxu0 %v6190
      %v6306 = vpop.f32.mrb[0].mxu0
      %v6307 = vadd.f32 0.0, %v6306
      %v6308 = vpop.f32.mrb[0].mxu0
      %v6309 = vpop.f32.mrb[0].mxu0
      %v6310 = vadd.f32 0.0, %v6309
      %v6311 = vpop.f32.mrb[0].mxu0
      %6312 = vmatprep.mubr.bf16.mxu0 0
      %6313 = vmatmul.mubr.bf16.gmra.mrb[0].mxu0 %v6193
      %v6314 = vpop.f32.mrb[0].mxu0
      %v6315 = vadd.f32 0.0, %v6314
      %v6316 = vpop.f32.mrb[0].mxu0
      %v6317 = vpop.f32.mrb[0].mxu0
      %v6318 = vadd.f32 0.0, %v6317
      %v6319 = vpop.f32.mrb[0].mxu0
      %6320 = vmatprep.mubr.bf16.mxu0 0
      %6321 = vmatmul.mubr.bf16.gmra.mrb[0].mxu0 %v6196
      %v6322 = vpop.f32.mrb[0].mxu0
      %v6323 = vadd.f32 0.0, %v6322
      %v6324 = vpop.f32.mrb[0].mxu0
      %v6325 = vpop.f32.mrb[0].mxu0
      %v6326 = vadd.f32 0.0, %v6325
      %v6327 = vpop.f32.mrb[0].mxu0
      %6328 = vmatprep.mubr.bf16.mxu0 0
      %6329 = vmatmul.mubr.bf16.gmra.mrb[0].mxu0 %v6199
      %v6330 = vpop.f32.mrb[0].mxu0
      %v6331 = vadd.f32 0.0, %v6330
      %v6332 = vpop.f32.mrb[0].mxu0
      %v6333 = vpop.f32.mrb[0].mxu0
      %v6334 = vadd.f32 0.0, %v6333
      %v6335 = vpop.f32.mrb[0].mxu0
      %6336 = vmatprep.mubr.bf16.mxu0 0
      %6337 = vmatmul.mubr.bf16.gmra.mrb[0].mxu0 %v6202
      %v6338 = vpop.f32.mrb[0].mxu0
      %v6339 = vadd.f32 0.0, %v6338
      %v6340 = vpop.f32.mrb[0].mxu0
      %v6341 = vpop.f32.mrb[0].mxu0
      %v6342 = vadd.f32 0.0, %v6341
      %v6343 = vpop.f32.mrb[0].mxu0
      %6344 = vmatprep.mubr.bf16.mxu0 0
      %6345 = vmatmul.mubr.bf16.gmra.mrb[0].mxu0 %v6205
      %v6346 = vpop.f32.mrb[0].mxu0
      %v6347 = vadd.f32 0.0, %v6346
      %v6348 = vpop.f32.mrb[0].mxu0
      %v6349 = vpop.f32.mrb[0].mxu0
      %v6350 = vadd.f32 0.0, %v6349
      %v6351 = vpop.f32.mrb[0].mxu0
      %6352 = vmatprep.mubr.bf16.mxu0 0
      %6353 = vmatmul.mubr.bf16.gmra.mrb[0].mxu0 %v6208
      %v6354 = vpop.f32.mrb[0].mxu0
      %v6355 = vadd.f32 0.0, %v6354
      %v6356 = vpop.f32.mrb[0].mxu0
      %v6357 = vpop.f32.mrb[0].mxu0
      %v6358 = vadd.f32 0.0, %v6357
      %v6359 = vpop.f32.mrb[0].mxu0
      %6360 = vmatprep.mubr.bf16.mxu0 0
      %6361 = vmatmul.mubr.bf16.gmra.mrb[0].mxu0 %v6211
      %v6362 = vpop.f32.mrb[0].mxu0
      %v6363 = vadd.f32 0.0, %v6362
      %v6364 = vpop.f32.mrb[0].mxu0
      %v6365 = vpop.f32.mrb[0].mxu0
      %v6366 = vadd.f32 0.0, %v6365
      %v6367 = vpop.f32.mrb[0].mxu0
      %6368 = vmatprep.mubr.bf16.mxu0 0
      %6369 = vmatmul.mubr.bf16.gmra.mrb[0].mxu0 %v6214
      %v6370 = vpop.f32.mrb[0].mxu0
      %v6371 = vadd.f32 0.0, %v6370
      %v6372 = vpop.f32.mrb[0].mxu0
      %v6373 = vpop.f32.mrb[0].mxu0
      %v6374 = vadd.f32 0.0, %v6373
      %v6375 = vpop.f32.mrb[0].mxu0
      %6376 = vmatprep.mubr.bf16.mxu0 0
      %6377 = vmatmul.mubr.bf16.gmra.mrb[0].mxu0 %v6217
      %v6378 = vpop.f32.mrb[0].mxu0
      %v6379 = vadd.f32 0.0, %v6378
      %v6380 = vpop.f32.mrb[0].mxu0
      %v6381 = vpop.f32.mrb[0].mxu0
      %v6382 = vadd.f32 0.0, %v6381
      %v6383 = vpop.f32.mrb[0].mxu0
      %6384 = vmatprep.mubr.bf16.mxu0 0
      %6385 = vmatmul.mubr.bf16.gmra.mrb[0].mxu0 %v6220
      %v6386 = vpop.f32.mrb[0].mxu0
      %v6387 = vadd.f32 0.0, %v6386
      %v6388 = vpop.f32.mrb[0].mxu0
      %v6389 = vpop.f32.mrb[0].mxu0
      %v6390 = vadd.f32 0.0, %v6389
      %v6391 = vpop.f32.mrb[0].mxu0
      %6392 = vmatprep.mubr.bf16.mxu0 0
      %6393 = vmatmul.mubr.bf16.gmra.mrb[0].mxu0 %v6223
      %v6394 = vpop.f32.mrb[0].mxu0
      %v6395 = vadd.f32 0.0, %v6394
      %v6396 = vpop.f32.mrb[0].mxu0
      %v6397 = vpop.f32.mrb[0].mxu0
      %v6398 = vadd.f32 0.0, %v6397
      %v6399 = vpop.f32.mrb[0].mxu0
      %6400 = vmatprep.mubr.bf16.mxu0 0
      %6401 = vmatmul.mubr.bf16.gmra.mrb[0].mxu0 %v6226
      %v6402 = vpop.f32.mrb[0].mxu0
      %v6403 = vadd.f32 0.0, %v6402
      %v6404 = vpop.f32.mrb[0].mxu0
      %v6405 = vpop.f32.mrb[0].mxu0
      %v6406 = vadd.f32 0.0, %v6405
      %v6407 = vpop.f32.mrb[0].mxu0
      %6408 = vmatprep.mubr.bf16.mxu0 0
      %6409 = vmatmul.mubr.bf16.gmra.mrb[0].mxu0 %v6229
      %v6410 = vpop.f32.mrb[0].mxu0
      %v6411 = vadd.f32 0.0, %v6410
      %v6412 = vpop.f32.mrb[0].mxu0
      %v6413 = vpop.f32.mrb[0].mxu0
      %v6414 = vadd.f32 0.0, %v6413
      %v6415 = vpop.f32.mrb[0].mxu0
      %6416 = vmatprep.mubr.bf16.mxu0 0
      %6417 = vmatmul.mubr.bf16.gmra.mrb[0].mxu0 %v6232
      %v6418 = vpop.f32.mrb[0].mxu0
      %v6419 = vadd.f32 0.0, %v6418
      %v6420 = vpop.f32.mrb[0].mxu0
      %v6421 = vpop.f32.mrb[0].mxu0
      %v6422 = vadd.f32 0.0, %v6421
      %v6423 = vpop.f32.mrb[0].mxu0
      %6424 = vmatprep.mubr.bf16.mxu0 0
      %6425 = vmatmul.mubr.bf16.gmra.mrb[0].mxu0 %v6235
      %v6426 = vpop.f32.mrb[0].mxu0
      %v6427 = vadd.f32 0.0, %v6426
      %v6428 = vpop.f32.mrb[0].mxu0
      %v6429 = vpop.f32.mrb[0].mxu0
      %v6430 = vadd.f32 0.0, %v6429
      %v6431 = vpop.f32.mrb[0].mxu0
      %6432 = vmatprep.mubr.bf16.mxu0 0
      %6433 = vmatmul.mubr.bf16.gmra.mrb[0].mxu0 %v6238
      %v6434 = vpop.f32.mrb[0].mxu0
      %v6435 = vadd.f32 0.0, %v6434
      %v6436 = vpop.f32.mrb[0].mxu0
      %v6437 = vpop.f32.mrb[0].mxu0
      %v6438 = vpop.f32.mrb[0].mxu0
      %6439 = vdwg.mxu0
      %v6448 = vunpack.c.l.b16 %v6033
      %v6449 = vunpack.c.l.b16 %v6034
      %v6450 = vunpack.c.l.b16 %v6035
      %v6451 = vunpack.c.l.b16 %v6036
      %v6452 = vunpack.c.l.b16 %v6037
      %v6453 = vunpack.c.l.b16 %v6038
      %v6454 = vunpack.c.l.b16 %v6039
      %v6455 = vunpack.c.l.b16 %v6040
      %v6456 = vpack.c.b16 %v6449, %v6448
      %v6457 = vpack.c.b16 %v6451, %v6450
      %v6458 = vpack.c.b16 %v6453, %v6452
      %v6459 = vpack.c.b16 %v6455, %v6454
      %v6465 = vsel %vm2485, %v6012, 0
      %v6468 = vsel %vm2485, %v6013, 0
      %v6471 = vsel %vm2485, %v6014, 0
      %v6474 = vsel %vm2485, %v6015, 0
      %v6477 = vsel %vm2485, %v6016, 0
      %v6480 = vsel %vm2485, %v6017, 0
      %v6483 = vsel %vm2485, %v6018, 0
      %v6486 = vsel %vm2485, %v6019, 0
      %v6489 = vsel %vm2485, %v6020, 0
      %v6492 = vsel %vm2485, %v6021, 0
      %v6495 = vsel %vm2485, %v6022, 0
      %v6498 = vsel %vm2485, %v6023, 0
      %v6501 = vsel %vm2485, %v6024, 0
      %v6504 = vsel %vm2485, %v6025, 0
      %v6507 = vsel %vm2485, %v6026, 0
      %v6510 = vsel %vm2485, %v6027, 0
      %v6513 = vsel %vm2485, %v6028, 0
      %v6516 = vsel %vm2485, %v6029, 0
      %v6519 = vsel %vm2485, %v6030, 0
      %v6522 = vsel %vm2485, %v6031, 0
      %v6525 = vsel %vm2485, %v6032, 0
      %6527 = vmatprep.subr.bf16.mxu0 0
      %6528 = vmatpush1.bf16.msra.mxu0 %v6456
      %6529 = vmatprep.subr.bf16.mxu0 0
      %6530 = vmatpush1.bf16.msra.mxu0 %v6457
      %6531 = vmatprep.subr.bf16.mxu0 0
      %6532 = vmatpush1.bf16.msra.mxu0 %v6458
      %6533 = vmatprep.subr.bf16.mxu0 0
      %6534 = vmatpush1.bf16.msra.mxu0 %v6459
      %6535 = vmatprep.subr.bf16.mxu0 0
      %6536 = vmatpush1.bf16.msra.mxu0 0
      %6537 = vmatprep.subr.bf16.mxu0 0
      %6538 = vmatpush1.bf16.msra.mxu0 0
      %6539 = vmatprep.subr.bf16.mxu0 0
      %6540 = vmatpush1.bf16.msra.mxu0 0
      %6541 = vmatprep.subr.bf16.mxu0 0
      %6542 = vmatpush1.bf16.msra.mxu0 0
      %6543 = vmatprep.subr.bf16.mxu0 0
      %6544 = vmatpush1.bf16.msra.mxu0 0
      %6545 = vmatprep.subr.bf16.mxu0 0
      %6546 = vmatpush1.bf16.msra.mxu0 0
      %6547 = vmatprep.subr.bf16.mxu0 0
      %6548 = vmatpush1.bf16.msra.mxu0 0
      %6549 = vmatprep.subr.bf16.mxu0 0
      %6550 = vmatpush1.bf16.msra.mxu0 0
      %6551 = vmatprep.subr.bf16.mxu0 0
      %6552 = vmatpush1.bf16.msra.mxu0 0
      %6553 = vmatprep.subr.bf16.mxu0 0
      %6554 = vmatpush1.bf16.msra.mxu0 0
      %6555 = vmatprep.subr.bf16.mxu0 0
      %6556 = vmatpush1.bf16.msra.mxu0 0
      %6557 = vmatprep.subr.bf16.mxu0 0
      %6558 = vmatpush1.bf16.msra.mxu0 0
      %6559 = vmatprep.mubr.bf16.mxu0 0
      %6560 = vmatmul.mubr.bf16.gmra.mrb[0].mxu0 %v6465
      %v6561 = vpop.f32.mrb[0].mxu0
      %v6562 = vadd.f32 %v6275, %v6561
      %v6563 = vpop.f32.mrb[0].mxu0
      %v6564 = vpop.f32.mrb[0].mxu0
      %v6565 = vadd.f32 %v6278, %v6564
      %v6566 = vpop.f32.mrb[0].mxu0
      %6567 = vmatprep.mubr.bf16.mxu0 0
      %6568 = vmatmul.mubr.bf16.gmra.mrb[0].mxu0 %v6468
      %v6569 = vpop.f32.mrb[0].mxu0
      %v6570 = vadd.f32 %v6283, %v6569
      %v6571 = vpop.f32.mrb[0].mxu0
      %v6572 = vpop.f32.mrb[0].mxu0
      %v6573 = vadd.f32 %v6286, %v6572
      %v6574 = vpop.f32.mrb[0].mxu0
      %6575 = vmatprep.mubr.bf16.mxu0 0
      %6576 = vmatmul.mubr.bf16.gmra.mrb[0].mxu0 %v6471
      %v6577 = vpop.f32.mrb[0].mxu0
      %v6578 = vadd.f32 %v6291, %v6577
      %v6579 = vpop.f32.mrb[0].mxu0
      %v6580 = vpop.f32.mrb[0].mxu0
      %v6581 = vadd.f32 %v6294, %v6580
      %v6582 = vpop.f32.mrb[0].mxu0
      %6583 = vmatprep.mubr.bf16.mxu0 0
      %6584 = vmatmul.mubr.bf16.gmra.mrb[0].mxu0 %v6474
      %v6585 = vpop.f32.mrb[0].mxu0
      %v6586 = vadd.f32 %v6299, %v6585
      %v6587 = vpop.f32.mrb[0].mxu0
      %v6588 = vpop.f32.mrb[0].mxu0
      %v6589 = vadd.f32 %v6302, %v6588
      %v6590 = vpop.f32.mrb[0].mxu0
      %6591 = vmatprep.mubr.bf16.mxu0 0
      %6592 = vmatmul.mubr.bf16.gmra.mrb[0].mxu0 %v6477
      %v6593 = vpop.f32.mrb[0].mxu0
      %v6594 = vadd.f32 %v6307, %v6593
      %v6595 = vpop.f32.mrb[0].mxu0
      %v6596 = vpop.f32.mrb[0].mxu0
      %v6597 = vadd.f32 %v6310, %v6596
      %v6598 = vpop.f32.mrb[0].mxu0
      %6599 = vmatprep.mubr.bf16.mxu0 0
      %6600 = vmatmul.mubr.bf16.gmra.mrb[0].mxu0 %v6480
      %v6601 = vpop.f32.mrb[0].mxu0
      %v6602 = vadd.f32 %v6315, %v6601
      %v6603 = vpop.f32.mrb[0].mxu0
      %v6604 = vpop.f32.mrb[0].mxu0
      %v6605 = vadd.f32 %v6318, %v6604
      %v6606 = vpop.f32.mrb[0].mxu0
      %6607 = vmatprep.mubr.bf16.mxu0 0
      %6608 = vmatmul.mubr.bf16.gmra.mrb[0].mxu0 %v6483
      %v6609 = vpop.f32.mrb[0].mxu0
      %v6610 = vadd.f32 %v6323, %v6609
      %v6611 = vpop.f32.mrb[0].mxu0
      %v6612 = vpop.f32.mrb[0].mxu0
      %v6613 = vadd.f32 %v6326, %v6612
      %v6614 = vpop.f32.mrb[0].mxu0
      %6615 = vmatprep.mubr.bf16.mxu0 0
      %6616 = vmatmul.mubr.bf16.gmra.mrb[0].mxu0 %v6486
      %v6617 = vpop.f32.mrb[0].mxu0
      %v6618 = vadd.f32 %v6331, %v6617
      %v6619 = vpop.f32.mrb[0].mxu0
      %v6620 = vpop.f32.mrb[0].mxu0
      %v6621 = vadd.f32 %v6334, %v6620
      %v6622 = vpop.f32.mrb[0].mxu0
      %6623 = vmatprep.mubr.bf16.mxu0 0
      %6624 = vmatmul.mubr.bf16.gmra.mrb[0].mxu0 %v6489
      %v6625 = vpop.f32.mrb[0].mxu0
      %v6626 = vadd.f32 %v6339, %v6625
      %v6627 = vpop.f32.mrb[0].mxu0
      %v6628 = vpop.f32.mrb[0].mxu0
      %v6629 = vadd.f32 %v6342, %v6628
      %v6630 = vpop.f32.mrb[0].mxu0
      %6631 = vmatprep.mubr.bf16.mxu0 0
      %6632 = vmatmul.mubr.bf16.gmra.mrb[0].mxu0 %v6492
      %v6633 = vpop.f32.mrb[0].mxu0
      %v6634 = vadd.f32 %v6347, %v6633
      %v6635 = vpop.f32.mrb[0].mxu0
      %v6636 = vpop.f32.mrb[0].mxu0
      %v6637 = vadd.f32 %v6350, %v6636
      %v6638 = vpop.f32.mrb[0].mxu0
      %6639 = vmatprep.mubr.bf16.mxu0 0
      %6640 = vmatmul.mubr.bf16.gmra.mrb[0].mxu0 %v6495
      %v6641 = vpop.f32.mrb[0].mxu0
      %v6642 = vadd.f32 %v6355, %v6641
      %v6643 = vpop.f32.mrb[0].mxu0
      %v6644 = vpop.f32.mrb[0].mxu0
      %v6645 = vadd.f32 %v6358, %v6644
      %v6646 = vpop.f32.mrb[0].mxu0
      %6647 = vmatprep.mubr.bf16.mxu0 0
      %6648 = vmatmul.mubr.bf16.gmra.mrb[0].mxu0 %v6498
      %v6649 = vpop.f32.mrb[0].mxu0
      %v6650 = vadd.f32 %v6363, %v6649
      %v6651 = vpop.f32.mrb[0].mxu0
      %v6652 = vpop.f32.mrb[0].mxu0
      %v6653 = vadd.f32 %v6366, %v6652
      %v6654 = vpop.f32.mrb[0].mxu0
      %6655 = vmatprep.mubr.bf16.mxu0 0
      %6656 = vmatmul.mubr.bf16.gmra.mrb[0].mxu0 %v6501
      %v6657 = vpop.f32.mrb[0].mxu0
      %v6658 = vadd.f32 %v6371, %v6657
      %v6659 = vpop.f32.mrb[0].mxu0
      %v6660 = vpop.f32.mrb[0].mxu0
      %v6661 = vadd.f32 %v6374, %v6660
      %v6662 = vpop.f32.mrb[0].mxu0
      %6663 = vmatprep.mubr.bf16.mxu0 0
      %6664 = vmatmul.mubr.bf16.gmra.mrb[0].mxu0 %v6504
      %v6665 = vpop.f32.mrb[0].mxu0
      %v6666 = vadd.f32 %v6379, %v6665
      %v6667 = vpop.f32.mrb[0].mxu0
      %v6668 = vpop.f32.mrb[0].mxu0
      %v6669 = vadd.f32 %v6382, %v6668
      %v6670 = vpop.f32.mrb[0].mxu0
      %6671 = vmatprep.mubr.bf16.mxu0 0
      %6672 = vmatmul.mubr.bf16.gmra.mrb[0].mxu0 %v6507
      %v6673 = vpop.f32.mrb[0].mxu0
      %v6674 = vadd.f32 %v6387, %v6673
      %v6675 = vpop.f32.mrb[0].mxu0
      %v6676 = vpop.f32.mrb[0].mxu0
      %v6677 = vadd.f32 %v6390, %v6676
      %v6678 = vpop.f32.mrb[0].mxu0
      %6679 = vmatprep.mubr.bf16.mxu0 0
      %6680 = vmatmul.mubr.bf16.gmra.mrb[0].mxu0 %v6510
      %v6681 = vpop.f32.mrb[0].mxu0
      %v6682 = vadd.f32 %v6395, %v6681
      %v6683 = vpop.f32.mrb[0].mxu0
      %v6684 = vpop.f32.mrb[0].mxu0
      %v6685 = vadd.f32 %v6398, %v6684
      %v6686 = vpop.f32.mrb[0].mxu0
      %6687 = vmatprep.mubr.bf16.mxu0 0
      %6688 = vmatmul.mubr.bf16.gmra.mrb[0].mxu0 %v6513
      %v6689 = vpop.f32.mrb[0].mxu0
      %v6690 = vadd.f32 %v6403, %v6689
      %v6691 = vpop.f32.mrb[0].mxu0
      %v6692 = vpop.f32.mrb[0].mxu0
      %v6693 = vadd.f32 %v6406, %v6692
      %v6694 = vpop.f32.mrb[0].mxu0
      %6695 = vmatprep.mubr.bf16.mxu0 0
      %6696 = vmatmul.mubr.bf16.gmra.mrb[0].mxu0 %v6516
      %v6697 = vpop.f32.mrb[0].mxu0
      %v6698 = vadd.f32 %v6411, %v6697
      %v6699 = vpop.f32.mrb[0].mxu0
      %v6700 = vpop.f32.mrb[0].mxu0
      %v6701 = vadd.f32 %v6414, %v6700
      %v6702 = vpop.f32.mrb[0].mxu0
      %6703 = vmatprep.mubr.bf16.mxu0 0
      %6704 = vmatmul.mubr.bf16.gmra.mrb[0].mxu0 %v6519
      %v6705 = vpop.f32.mrb[0].mxu0
      %v6706 = vadd.f32 %v6419, %v6705
      %v6707 = vpop.f32.mrb[0].mxu0
      %v6708 = vpop.f32.mrb[0].mxu0
      %v6709 = vadd.f32 %v6422, %v6708
      %v6710 = vpop.f32.mrb[0].mxu0
      %6711 = vmatprep.mubr.bf16.mxu0 0
      %6712 = vmatmul.mubr.bf16.gmra.mrb[0].mxu0 %v6522
      %v6713 = vpop.f32.mrb[0].mxu0
      %v6714 = vadd.f32 %v6427, %v6713
      %v6715 = vpop.f32.mrb[0].mxu0
      %v6716 = vpop.f32.mrb[0].mxu0
      %v6717 = vadd.f32 %v6430, %v6716
      %v6718 = vpop.f32.mrb[0].mxu0
      %6719 = vmatprep.mubr.bf16.mxu0 0
      %6720 = vmatmul.mubr.bf16.gmra.mrb[0].mxu0 %v6525
      %v6721 = vpop.f32.mrb[0].mxu0
      %v6722 = vadd.f32 %v6435, %v6721
      %v6723 = vpop.f32.mrb[0].mxu0
      %v6724 = vpop.f32.mrb[0].mxu0
      %v6725 = vpop.f32.mrb[0].mxu0
      %6726 = vdwg.mxu0
      %v6727 = vrot.slane %v5971, 2
      %v6728 = vrot.slane %v5972, 2
      %v6729 = vrot.slane %v5973, 2
      %v6730 = vrot.slane %v5974, 2
      %v6731 = vrot.slane %v5975, 2
      %v6732 = vrot.slane %v5976, 2
      %v6733 = vrot.slane %v5977, 2
      %v6734 = vrot.slane %v5978, 2
      %v6735 = vrot.slane %v5979, 2
      %v6736 = vrot.slane %v5980, 2
      %v6737 = vrot.slane %v5981, 2
      %v6738 = vrot.slane %v5982, 2
      %v6739 = vrot.slane %v5983, 2
      %v6740 = vrot.slane %v5984, 2
      %v6741 = vrot.slane %v5985, 2
      %v6742 = vrot.slane %v5986, 2
      %v6743 = vrot.slane %v5987, 2
      %v6744 = vrot.slane %v5988, 2
      %v6745 = vrot.slane %v5989, 2
      %v6746 = vrot.slane %v5990, 2
      %v6747 = vrot.slane %v5991, 2
      %v6748 = vrot.slane %v5992, 2
      %v6749 = vrot.slane %v5993, 2
      %v6750 = vrot.slane %v5994, 2
      %v6751 = vrot.slane %v5995, 2
      %v6752 = vrot.slane %v5996, 2
      %v6753 = vrot.slane %v5997, 2
      %v6754 = vrot.slane %v5998, 2
      %v6755 = vrot.slane %v5999, 2
      %v6756 = vrot.slane %v6000, 2
      %v6757 = vrot.slane %v6001, 2
      %v6758 = vrot.slane %v6002, 2
      %v6759 = vrot.slane %v6003, 2
      %v6760 = vrot.slane %v6004, 2
      %v6761 = vrot.slane %v6005, 2
      %v6762 = vrot.slane %v6006, 2
      %v6763 = vrot.slane %v6007, 2
      %v6764 = vrot.slane %v6008, 2
      %v6765 = vrot.slane %v6009, 2
      %v6766 = vrot.slane %v6010, 2
      %v6767 = vrot.slane %v6011, 2
      %v6768 = vsel %vm899, %v6766, %v6767
      %v6769 = vsel %vm899, %v6765, %v6766
      %v6770 = vsel %vm899, %v6764, %v6765
      %v6771 = vsel %vm899, %v6763, %v6764
      %v6772 = vsel %vm899, %v6762, %v6763
      %v6773 = vsel %vm899, %v6761, %v6762
      %v6774 = vsel %vm899, %v6760, %v6761
      %v6775 = vsel %vm899, %v6759, %v6760
      %v6776 = vsel %vm899, %v6758, %v6759
      %v6777 = vsel %vm899, %v6757, %v6758
      %v6778 = vsel %vm899, %v6756, %v6757
      %v6779 = vsel %vm899, %v6755, %v6756
      %v6780 = vsel %vm899, %v6754, %v6755
      %v6781 = vsel %vm899, %v6753, %v6754
      %v6782 = vsel %vm899, %v6752, %v6753
      %v6783 = vsel %vm899, %v6751, %v6752
      %v6784 = vsel %vm899, %v6750, %v6751
      %v6785 = vsel %vm899, %v6749, %v6750
      %v6786 = vsel %vm899, %v6748, %v6749
      %v6787 = vsel %vm899, %v6747, %v6748
      %v6788 = vsel %vm899, %v6746, %v6747
      %v6789 = vsel %vm899, %v6745, %v6746
      %v6790 = vsel %vm899, %v6744, %v6745
      %v6791 = vsel %vm899, %v6743, %v6744
      %v6792 = vsel %vm899, %v6742, %v6743
      %v6793 = vsel %vm899, %v6741, %v6742
      %v6794 = vsel %vm899, %v6740, %v6741
      %v6795 = vsel %vm899, %v6739, %v6740
      %v6796 = vsel %vm899, %v6738, %v6739
      %v6797 = vsel %vm899, %v6737, %v6738
      %v6798 = vsel %vm899, %v6736, %v6737
      %v6799 = vsel %vm899, %v6735, %v6736
      %v6800 = vsel %vm899, %v6734, %v6735
      %v6801 = vsel %vm899, %v6733, %v6734
      %v6802 = vsel %vm899, %v6732, %v6733
      %v6803 = vsel %vm899, %v6731, %v6732
      %v6804 = vsel %vm899, %v6730, %v6731
      %v6805 = vsel %vm899, %v6729, %v6730
      %v6806 = vsel %vm899, %v6728, %v6729
      %v6807 = vsel %vm899, %v6727, %v6728
      %v6808 = vsel %vm899, %v6767, %v6727
      %v6809 = vpack.c.bf16 %v6806, %v6807
      %v6810 = vpack.c.bf16 %v6804, %v6805
      %v6811 = vpack.c.bf16 %v6802, %v6803
      %v6812 = vpack.c.bf16 %v6800, %v6801
      %v6813 = vpack.c.bf16 %v6798, %v6799
      %v6814 = vpack.c.bf16 %v6796, %v6797
      %v6815 = vpack.c.bf16 %v6794, %v6795
      %v6816 = vpack.c.bf16 %v6792, %v6793
      %v6817 = vpack.c.bf16 %v6790, %v6791
      %v6818 = vpack.c.bf16 %v6788, %v6789
      %v6819 = vpack.c.bf16 %v6786, %v6787
      %v6820 = vpack.c.bf16 %v6784, %v6785
      %v6821 = vpack.c.bf16 %v6782, %v6783
      %v6822 = vpack.c.bf16 %v6780, %v6781
      %v6823 = vpack.c.bf16 %v6778, %v6779
      %v6824 = vpack.c.bf16 %v6776, %v6777
      %v6825 = vpack.c.bf16 %v6774, %v6775
      %v6826 = vpack.c.bf16 %v6772, %v6773
      %v6827 = vpack.c.bf16 %v6770, %v6771
      %v6828 = vpack.c.bf16 %v6768, %v6769
      %v6829 = vpack.c.bf16 %v6808, %v6808
      %s6830 = scalar_lea.vmem %s6, 64
      %v6831 = vld [vmem:[%s6830] sm:$0xf]
      %v6832 = vld [vmem:[%s6830 + $0x4] sm:$0xf]
      %v6833 = vld [vmem:[%s6830 + $0x8] sm:$0xf]
      %v6834 = vld [vmem:[%s6830 + $0xc] sm:$0xf]
      %v6835 = vld [vmem:[%s6830 + $0x10] sm:$0xf]
      %v6836 = vld [vmem:[%s6830 + $0x14] sm:$0xf]
      %v6837 = vld [vmem:[%s6830 + $0x18] sm:$0xf]
      %v6838 = vld [vmem:[%s6830 + $0x1c] sm:$0xf]
      %v6847 = vunpack.c.l.b16 %v6831
      %v6848 = vunpack.c.l.b16 %v6832
      %v6849 = vunpack.c.l.b16 %v6833
      %v6850 = vunpack.c.l.b16 %v6834
      %v6851 = vunpack.c.l.b16 %v6835
      %v6852 = vunpack.c.l.b16 %v6836
      %v6853 = vunpack.c.l.b16 %v6837
      %v6854 = vunpack.c.l.b16 %v6838
      %v6855 = vpack.c.b16 %v6848, %v6847
      %v6856 = vpack.c.b16 %v6850, %v6849
      %v6857 = vpack.c.b16 %v6852, %v6851
      %v6858 = vpack.c.b16 %v6854, %v6853
      %v6864 = vsel %vm2485, %v6809, 0
      %v6867 = vsel %vm2485, %v6810, 0
      %v6870 = vsel %vm2485, %v6811, 0
      %v6873 = vsel %vm2485, %v6812, 0
      %v6876 = vsel %vm2485, %v6813, 0
      %v6879 = vsel %vm2485, %v6814, 0
      %v6882 = vsel %vm2485, %v6815, 0
      %v6885 = vsel %vm2485, %v6816, 0
      %v6888 = vsel %vm2485, %v6817, 0
      %v6891 = vsel %vm2485, %v6818, 0
      %v6894 = vsel %vm2485, %v6819, 0
      %v6897 = vsel %vm2485, %v6820, 0
      %v6900 = vsel %vm2485, %v6821, 0
      %v6903 = vsel %vm2485, %v6822, 0
      %v6906 = vsel %vm2485, %v6823, 0
      %v6909 = vsel %vm2485, %v6824, 0
      %v6912 = vsel %vm2485, %v6825, 0
      %v6915 = vsel %vm2485, %v6826, 0
      %v6918 = vsel %vm2485, %v6827, 0
      %v6921 = vsel %vm2485, %v6828, 0
      %v6924 = vsel %vm2485, %v6829, 0
      %6926 = vmatprep.subr.bf16.mxu0 0
      %6927 = vmatpush1.bf16.msra.mxu0 %v6855
      %6928 = vmatprep.subr.bf16.mxu0 0
      %6929 = vmatpush1.bf16.msra.mxu0 %v6856
      %6930 = vmatprep.subr.bf16.mxu0 0
      %6931 = vmatpush1.bf16.msra.mxu0 %v6857
      %6932 = vmatprep.subr.bf16.mxu0 0
      %6933 = vmatpush1.bf16.msra.mxu0 %v6858
      %6934 = vmatprep.subr.bf16.mxu0 0
      %6935 = vmatpush1.bf16.msra.mxu0 0
      %6936 = vmatprep.subr.bf16.mxu0 0
      %6937 = vmatpush1.bf16.msra.mxu0 0
      %6938 = vmatprep.subr.bf16.mxu0 0
      %6939 = vmatpush1.bf16.msra.mxu0 0
      %6940 = vmatprep.subr.bf16.mxu0 0
      %6941 = vmatpush1.bf16.msra.mxu0 0
      %6942 = vmatprep.subr.bf16.mxu0 0
      %6943 = vmatpush1.bf16.msra.mxu0 0
      %6944 = vmatprep.subr.bf16.mxu0 0
      %6945 = vmatpush1.bf16.msra.mxu0 0
      %6946 = vmatprep.subr.bf16.mxu0 0
      %6947 = vmatpush1.bf16.msra.mxu0 0
      %6948 = vmatprep.subr.bf16.mxu0 0
      %6949 = vmatpush1.bf16.msra.mxu0 0
      %6950 = vmatprep.subr.bf16.mxu0 0
      %6951 = vmatpush1.bf16.msra.mxu0 0
      %6952 = vmatprep.subr.bf16.mxu0 0
      %6953 = vmatpush1.bf16.msra.mxu0 0
      %6954 = vmatprep.subr.bf16.mxu0 0
      %6955 = vmatpush1.bf16.msra.mxu0 0
      %6956 = vmatprep.subr.bf16.mxu0 0
      %6957 = vmatpush1.bf16.msra.mxu0 0
      %6958 = vmatprep.mubr.bf16.mxu0 0
      %6959 = vmatmul.mubr.bf16.gmra.mrb[0].mxu0 %v6864
      %v6960 = vpop.f32.mrb[0].mxu0
      %v6961 = vadd.f32 0.0, %v6960
      %v6962 = vpop.f32.mrb[0].mxu0
      %v6963 = vpop.f32.mrb[0].mxu0
      %v6964 = vadd.f32 0.0, %v6963
      %v6965 = vpop.f32.mrb[0].mxu0
      %6966 = vmatprep.mubr.bf16.mxu0 0
      %6967 = vmatmul.mubr.bf16.gmra.mrb[0].mxu0 %v6867
      %v6968 = vpop.f32.mrb[0].mxu0
      %v6969 = vadd.f32 0.0, %v6968
      %v6970 = vpop.f32.mrb[0].mxu0
      %v6971 = vpop.f32.mrb[0].mxu0
      %v6972 = vadd.f32 0.0, %v6971
      %v6973 = vpop.f32.mrb[0].mxu0
      %6974 = vmatprep.mubr.bf16.mxu0 0
      %6975 = vmatmul.mubr.bf16.gmra.mrb[0].mxu0 %v6870
      %v6976 = vpop.f32.mrb[0].mxu0
      %v6977 = vadd.f32 0.0, %v6976
      %v6978 = vpop.f32.mrb[0].mxu0
      %v6979 = vpop.f32.mrb[0].mxu0
      %v6980 = vadd.f32 0.0, %v6979
      %v6981 = vpop.f32.mrb[0].mxu0
      %6982 = vmatprep.mubr.bf16.mxu0 0
      %6983 = vmatmul.mubr.bf16.gmra.mrb[0].mxu0 %v6873
      %v6984 = vpop.f32.mrb[0].mxu0
      %v6985 = vadd.f32 0.0, %v6984
      %v6986 = vpop.f32.mrb[0].mxu0
      %v6987 = vpop.f32.mrb[0].mxu0
      %v6988 = vadd.f32 0.0, %v6987
      %v6989 = vpop.f32.mrb[0].mxu0
      %6990 = vmatprep.mubr.bf16.mxu0 0
      %6991 = vmatmul.mubr.bf16.gmra.mrb[0].mxu0 %v6876
      %v6992 = vpop.f32.mrb[0].mxu0
      %v6993 = vadd.f32 0.0, %v6992
      %v6994 = vpop.f32.mrb[0].mxu0
      %v6995 = vpop.f32.mrb[0].mxu0
      %v6996 = vadd.f32 0.0, %v6995
      %v6997 = vpop.f32.mrb[0].mxu0
      %6998 = vmatprep.mubr.bf16.mxu0 0
      %6999 = vmatmul.mubr.bf16.gmra.mrb[0].mxu0 %v6879
      %v7000 = vpop.f32.mrb[0].mxu0
      %v7001 = vadd.f32 0.0, %v7000
      %v7002 = vpop.f32.mrb[0].mxu0
      %v7003 = vpop.f32.mrb[0].mxu0
      %v7004 = vadd.f32 0.0, %v7003
      %v7005 = vpop.f32.mrb[0].mxu0
      %7006 = vmatprep.mubr.bf16.mxu0 0
      %7007 = vmatmul.mubr.bf16.gmra.mrb[0].mxu0 %v6882
      %v7008 = vpop.f32.mrb[0].mxu0
      %v7009 = vadd.f32 0.0, %v7008
      %v7010 = vpop.f32.mrb[0].mxu0
      %v7011 = vpop.f32.mrb[0].mxu0
      %v7012 = vadd.f32 0.0, %v7011
      %v7013 = vpop.f32.mrb[0].mxu0
      %7014 = vmatprep.mubr.bf16.mxu0 0
      %7015 = vmatmul.mubr.bf16.gmra.mrb[0].mxu0 %v6885
      %v7016 = vpop.f32.mrb[0].mxu0
      %v7017 = vadd.f32 0.0, %v7016
      %v7018 = vpop.f32.mrb[0].mxu0
      %v7019 = vpop.f32.mrb[0].mxu0
      %v7020 = vadd.f32 0.0, %v7019
      %v7021 = vpop.f32.mrb[0].mxu0
      %7022 = vmatprep.mubr.bf16.mxu0 0
      %7023 = vmatmul.mubr.bf16.gmra.mrb[0].mxu0 %v6888
      %v7024 = vpop.f32.mrb[0].mxu0
      %v7025 = vadd.f32 0.0, %v7024
      %v7026 = vpop.f32.mrb[0].mxu0
      %v7027 = vpop.f32.mrb[0].mxu0
      %v7028 = vadd.f32 0.0, %v7027
      %v7029 = vpop.f32.mrb[0].mxu0
      %7030 = vmatprep.mubr.bf16.mxu0 0
      %7031 = vmatmul.mubr.bf16.gmra.mrb[0].mxu0 %v6891
      %v7032 = vpop.f32.mrb[0].mxu0
      %v7033 = vadd.f32 0.0, %v7032
      %v7034 = vpop.f32.mrb[0].mxu0
      %v7035 = vpop.f32.mrb[0].mxu0
      %v7036 = vadd.f32 0.0, %v7035
      %v7037 = vpop.f32.mrb[0].mxu0
      %7038 = vmatprep.mubr.bf16.mxu0 0
      %7039 = vmatmul.mubr.bf16.gmra.mrb[0].mxu0 %v6894
      %v7040 = vpop.f32.mrb[0].mxu0
      %v7041 = vadd.f32 0.0, %v7040
      %v7042 = vpop.f32.mrb[0].mxu0
      %v7043 = vpop.f32.mrb[0].mxu0
      %v7044 = vadd.f32 0.0, %v7043
      %v7045 = vpop.f32.mrb[0].mxu0
      %7046 = vmatprep.mubr.bf16.mxu0 0
      %7047 = vmatmul.mubr.bf16.gmra.mrb[0].mxu0 %v6897
      %v7048 = vpop.f32.mrb[0].mxu0
      %v7049 = vadd.f32 0.0, %v7048
      %v7050 = vpop.f32.mrb[0].mxu0
      %v7051 = vpop.f32.mrb[0].mxu0
      %v7052 = vadd.f32 0.0, %v7051
      %v7053 = vpop.f32.mrb[0].mxu0
      %7054 = vmatprep.mubr.bf16.mxu0 0
      %7055 = vmatmul.mubr.bf16.gmra.mrb[0].mxu0 %v6900
      %v7056 = vpop.f32.mrb[0].mxu0
      %v7057 = vadd.f32 0.0, %v7056
      %v7058 = vpop.f32.mrb[0].mxu0
      %v7059 = vpop.f32.mrb[0].mxu0
      %v7060 = vadd.f32 0.0, %v7059
      %v7061 = vpop.f32.mrb[0].mxu0
      %7062 = vmatprep.mubr.bf16.mxu0 0
      %7063 = vmatmul.mubr.bf16.gmra.mrb[0].mxu0 %v6903
      %v7064 = vpop.f32.mrb[0].mxu0
      %v7065 = vadd.f32 0.0, %v7064
      %v7066 = vpop.f32.mrb[0].mxu0
      %v7067 = vpop.f32.mrb[0].mxu0
      %v7068 = vadd.f32 0.0, %v7067
      %v7069 = vpop.f32.mrb[0].mxu0
      %7070 = vmatprep.mubr.bf16.mxu0 0
      %7071 = vmatmul.mubr.bf16.gmra.mrb[0].mxu0 %v6906
      %v7072 = vpop.f32.mrb[0].mxu0
      %v7073 = vadd.f32 0.0, %v7072
      %v7074 = vpop.f32.mrb[0].mxu0
      %v7075 = vpop.f32.mrb[0].mxu0
      %v7076 = vadd.f32 0.0, %v7075
      %v7077 = vpop.f32.mrb[0].mxu0
      %7078 = vmatprep.mubr.bf16.mxu0 0
      %7079 = vmatmul.mubr.bf16.gmra.mrb[0].mxu0 %v6909
      %v7080 = vpop.f32.mrb[0].mxu0
      %v7081 = vadd.f32 0.0, %v7080
      %v7082 = vpop.f32.mrb[0].mxu0
      %v7083 = vpop.f32.mrb[0].mxu0
      %v7084 = vadd.f32 0.0, %v7083
      %v7085 = vpop.f32.mrb[0].mxu0
      %7086 = vmatprep.mubr.bf16.mxu0 0
      %7087 = vmatmul.mubr.bf16.gmra.mrb[0].mxu0 %v6912
      %v7088 = vpop.f32.mrb[0].mxu0
      %v7089 = vadd.f32 0.0, %v7088
      %v7090 = vpop.f32.mrb[0].mxu0
      %v7091 = vpop.f32.mrb[0].mxu0
      %v7092 = vadd.f32 0.0, %v7091
      %v7093 = vpop.f32.mrb[0].mxu0
      %7094 = vmatprep.mubr.bf16.mxu0 0
      %7095 = vmatmul.mubr.bf16.gmra.mrb[0].mxu0 %v6915
      %v7096 = vpop.f32.mrb[0].mxu0
      %v7097 = vadd.f32 0.0, %v7096
      %v7098 = vpop.f32.mrb[0].mxu0
      %v7099 = vpop.f32.mrb[0].mxu0
      %v7100 = vadd.f32 0.0, %v7099
      %v7101 = vpop.f32.mrb[0].mxu0
      %7102 = vmatprep.mubr.bf16.mxu0 0
      %7103 = vmatmul.mubr.bf16.gmra.mrb[0].mxu0 %v6918
      %v7104 = vpop.f32.mrb[0].mxu0
      %v7105 = vadd.f32 0.0, %v7104
      %v7106 = vpop.f32.mrb[0].mxu0
      %v7107 = vpop.f32.mrb[0].mxu0
      %v7108 = vadd.f32 0.0, %v7107
      %v7109 = vpop.f32.mrb[0].mxu0
      %7110 = vmatprep.mubr.bf16.mxu0 0
      %7111 = vmatmul.mubr.bf16.gmra.mrb[0].mxu0 %v6921
      %v7112 = vpop.f32.mrb[0].mxu0
      %v7113 = vadd.f32 0.0, %v7112
      %v7114 = vpop.f32.mrb[0].mxu0
      %v7115 = vpop.f32.mrb[0].mxu0
      %v7116 = vadd.f32 0.0, %v7115
      %v7117 = vpop.f32.mrb[0].mxu0
      %7118 = vmatprep.mubr.bf16.mxu0 0
      %7119 = vmatmul.mubr.bf16.gmra.mrb[0].mxu0 %v6924
      %v7120 = vpop.f32.mrb[0].mxu0
      %v7121 = vadd.f32 0.0, %v7120
      %v7122 = vpop.f32.mrb[0].mxu0
      %v7123 = vpop.f32.mrb[0].mxu0
      %v7124 = vpop.f32.mrb[0].mxu0
      %7125 = vdwg.mxu0
      %v7126 = vadd.f32 %v6562, %v6961
      %v7127 = vadd.f32 %v6565, %v6964
      %v7128 = vadd.f32 %v6570, %v6969
      %v7129 = vadd.f32 %v6573, %v6972
      %v7130 = vadd.f32 %v6578, %v6977
      %v7131 = vadd.f32 %v6581, %v6980
      %v7132 = vadd.f32 %v6586, %v6985
      %v7133 = vadd.f32 %v6589, %v6988
      %v7134 = vadd.f32 %v6594, %v6993
      %v7135 = vadd.f32 %v6597, %v6996
      %v7136 = vadd.f32 %v6602, %v7001
      %v7137 = vadd.f32 %v6605, %v7004
      %v7138 = vadd.f32 %v6610, %v7009
      %v7139 = vadd.f32 %v6613, %v7012
      %v7140 = vadd.f32 %v6618, %v7017
      %v7141 = vadd.f32 %v6621, %v7020
      %v7142 = vadd.f32 %v6626, %v7025
      %v7143 = vadd.f32 %v6629, %v7028
      %v7144 = vadd.f32 %v6634, %v7033
      %v7145 = vadd.f32 %v6637, %v7036
      %v7146 = vadd.f32 %v6642, %v7041
      %v7147 = vadd.f32 %v6645, %v7044
      %v7148 = vadd.f32 %v6650, %v7049
      %v7149 = vadd.f32 %v6653, %v7052
      %v7150 = vadd.f32 %v6658, %v7057
      %v7151 = vadd.f32 %v6661, %v7060
      %v7152 = vadd.f32 %v6666, %v7065
      %v7153 = vadd.f32 %v6669, %v7068
      %v7154 = vadd.f32 %v6674, %v7073
      %v7155 = vadd.f32 %v6677, %v7076
      %v7156 = vadd.f32 %v6682, %v7081
      %v7157 = vadd.f32 %v6685, %v7084
      %v7158 = vadd.f32 %v6690, %v7089
      %v7159 = vadd.f32 %v6693, %v7092
      %v7160 = vadd.f32 %v6698, %v7097
      %v7161 = vadd.f32 %v6701, %v7100
      %v7162 = vadd.f32 %v6706, %v7105
      %v7163 = vadd.f32 %v6709, %v7108
      %v7164 = vadd.f32 %v6714, %v7113
      %v7165 = vadd.f32 %v6717, %v7116
      %v7166 = vadd.f32 %v6722, %v7121
      %v7167 = vpack.c.bf16 %v6807, %v6808
      %v7168 = vpack.c.bf16 %v6806, %v6806
      %s7169 = scalar_lea.vmem %s6, 96
      %v7170 = vld [vmem:[%s7169] sm:$0xf]
      %v7171 = vld [vmem:[%s7169 + $0x4] sm:$0xf]
      %v7172 = vld [vmem:[%s7169 + $0x8] sm:$0xf]
      %v7173 = vld [vmem:[%s7169 + $0xc] sm:$0xf]
      %v7174 = vld [vmem:[%s7169 + $0x10] sm:$0xf]
      %v7175 = vld [vmem:[%s7169 + $0x14] sm:$0xf]
      %v7176 = vld [vmem:[%s7169 + $0x18] sm:$0xf]
      %v7177 = vld [vmem:[%s7169 + $0x1c] sm:$0xf]
      %v7186 = vunpack.c.l.b16 %v7170
      %v7187 = vunpack.c.l.b16 %v7171
      %v7188 = vunpack.c.l.b16 %v7172
      %v7189 = vunpack.c.l.b16 %v7173
      %v7190 = vunpack.c.l.b16 %v7174
      %v7191 = vunpack.c.l.b16 %v7175
      %v7192 = vunpack.c.l.b16 %v7176
      %v7193 = vunpack.c.l.b16 %v7177
      %v7194 = vpack.c.b16 %v7187, %v7186
      %v7195 = vpack.c.b16 %v7189, %v7188
      %v7196 = vpack.c.b16 %v7191, %v7190
      %v7197 = vpack.c.b16 %v7193, %v7192
      %v7203 = vsel %vm2485, %v7167, 0
      %v7206 = vsel %vm2485, %v7168, 0
      %7208 = vmatprep.subr.bf16.mxu0 0
      %7209 = vmatpush1.bf16.msra.mxu0 %v7194
      %7210 = vmatprep.subr.bf16.mxu0 0
      %7211 = vmatpush1.bf16.msra.mxu0 %v7195
      %7212 = vmatprep.subr.bf16.mxu0 0
      %7213 = vmatpush1.bf16.msra.mxu0 %v7196
      %7214 = vmatprep.subr.bf16.mxu0 0
      %7215 = vmatpush1.bf16.msra.mxu0 %v7197
      %7216 = vmatprep.subr.bf16.mxu0 0
      %7217 = vmatpush1.bf16.msra.mxu0 0
      %7218 = vmatprep.subr.bf16.mxu0 0
      %7219 = vmatpush1.bf16.msra.mxu0 0
      %7220 = vmatprep.subr.bf16.mxu0 0
      %7221 = vmatpush1.bf16.msra.mxu0 0
      %7222 = vmatprep.subr.bf16.mxu0 0
      %7223 = vmatpush1.bf16.msra.mxu0 0
      %7224 = vmatprep.subr.bf16.mxu0 0
      %7225 = vmatpush1.bf16.msra.mxu0 0
      %7226 = vmatprep.subr.bf16.mxu0 0
      %7227 = vmatpush1.bf16.msra.mxu0 0
      %7228 = vmatprep.subr.bf16.mxu0 0
      %7229 = vmatpush1.bf16.msra.mxu0 0
      %7230 = vmatprep.subr.bf16.mxu0 0
      %7231 = vmatpush1.bf16.msra.mxu0 0
      %7232 = vmatprep.subr.bf16.mxu0 0
      %7233 = vmatpush1.bf16.msra.mxu0 0
      %7234 = vmatprep.subr.bf16.mxu0 0
      %7235 = vmatpush1.bf16.msra.mxu0 0
      %7236 = vmatprep.subr.bf16.mxu0 0
      %7237 = vmatpush1.bf16.msra.mxu0 0
      %7238 = vmatprep.subr.bf16.mxu0 0
      %7239 = vmatpush1.bf16.msra.mxu0 0
      %7240 = vmatprep.mubr.bf16.mxu0 0
      %7241 = vmatmul.mubr.bf16.gmra.mrb[0].mxu0 %v6867
      %v7242 = vpop.f32.mrb[0].mxu0
      %v7243 = vadd.f32 0.0, %v7242
      %v7244 = vpop.f32.mrb[0].mxu0
      %v7245 = vpop.f32.mrb[0].mxu0
      %v7246 = vadd.f32 0.0, %v7245
      %v7247 = vpop.f32.mrb[0].mxu0
      %7248 = vmatprep.mubr.bf16.mxu0 0
      %7249 = vmatmul.mubr.bf16.gmra.mrb[0].mxu0 %v6870
      %v7250 = vpop.f32.mrb[0].mxu0
      %v7251 = vadd.f32 0.0, %v7250
      %v7252 = vpop.f32.mrb[0].mxu0
      %v7253 = vpop.f32.mrb[0].mxu0
      %v7254 = vadd.f32 0.0, %v7253
      %v7255 = vpop.f32.mrb[0].mxu0
      %7256 = vmatprep.mubr.bf16.mxu0 0
      %7257 = vmatmul.mubr.bf16.gmra.mrb[0].mxu0 %v6873
      %v7258 = vpop.f32.mrb[0].mxu0
      %v7259 = vadd.f32 0.0, %v7258
      %v7260 = vpop.f32.mrb[0].mxu0
      %v7261 = vpop.f32.mrb[0].mxu0
      %v7262 = vadd.f32 0.0, %v7261
      %v7263 = vpop.f32.mrb[0].mxu0
      %7264 = vmatprep.mubr.bf16.mxu0 0
      %7265 = vmatmul.mubr.bf16.gmra.mrb[0].mxu0 %v6876
      %v7266 = vpop.f32.mrb[0].mxu0
      %v7267 = vadd.f32 0.0, %v7266
      %v7268 = vpop.f32.mrb[0].mxu0
      %v7269 = vpop.f32.mrb[0].mxu0
      %v7270 = vadd.f32 0.0, %v7269
      %v7271 = vpop.f32.mrb[0].mxu0
      %7272 = vmatprep.mubr.bf16.mxu0 0
      %7273 = vmatmul.mubr.bf16.gmra.mrb[0].mxu0 %v6879
      %v7274 = vpop.f32.mrb[0].mxu0
      %v7275 = vadd.f32 0.0, %v7274
      %v7276 = vpop.f32.mrb[0].mxu0
      %v7277 = vpop.f32.mrb[0].mxu0
      %v7278 = vadd.f32 0.0, %v7277
      %v7279 = vpop.f32.mrb[0].mxu0
      %7280 = vmatprep.mubr.bf16.mxu0 0
      %7281 = vmatmul.mubr.bf16.gmra.mrb[0].mxu0 %v6882
      %v7282 = vpop.f32.mrb[0].mxu0
      %v7283 = vadd.f32 0.0, %v7282
      %v7284 = vpop.f32.mrb[0].mxu0
      %v7285 = vpop.f32.mrb[0].mxu0
      %v7286 = vadd.f32 0.0, %v7285
      %v7287 = vpop.f32.mrb[0].mxu0
      %7288 = vmatprep.mubr.bf16.mxu0 0
      %7289 = vmatmul.mubr.bf16.gmra.mrb[0].mxu0 %v6885
      %v7290 = vpop.f32.mrb[0].mxu0
      %v7291 = vadd.f32 0.0, %v7290
      %v7292 = vpop.f32.mrb[0].mxu0
      %v7293 = vpop.f32.mrb[0].mxu0
      %v7294 = vadd.f32 0.0, %v7293
      %v7295 = vpop.f32.mrb[0].mxu0
      %7296 = vmatprep.mubr.bf16.mxu0 0
      %7297 = vmatmul.mubr.bf16.gmra.mrb[0].mxu0 %v6888
      %v7298 = vpop.f32.mrb[0].mxu0
      %v7299 = vadd.f32 0.0, %v7298
      %v7300 = vpop.f32.mrb[0].mxu0
      %v7301 = vpop.f32.mrb[0].mxu0
      %v7302 = vadd.f32 0.0, %v7301
      %v7303 = vpop.f32.mrb[0].mxu0
      %7304 = vmatprep.mubr.bf16.mxu0 0
      %7305 = vmatmul.mubr.bf16.gmra.mrb[0].mxu0 %v6891
      %v7306 = vpop.f32.mrb[0].mxu0
      %v7307 = vadd.f32 0.0, %v7306
      %v7308 = vpop.f32.mrb[0].mxu0
      %v7309 = vpop.f32.mrb[0].mxu0
      %v7310 = vadd.f32 0.0, %v7309
      %v7311 = vpop.f32.mrb[0].mxu0
      %7312 = vmatprep.mubr.bf16.mxu0 0
      %7313 = vmatmul.mubr.bf16.gmra.mrb[0].mxu0 %v6894
      %v7314 = vpop.f32.mrb[0].mxu0
      %v7315 = vadd.f32 0.0, %v7314
      %v7316 = vpop.f32.mrb[0].mxu0
      %v7317 = vpop.f32.mrb[0].mxu0
      %v7318 = vadd.f32 0.0, %v7317
      %v7319 = vpop.f32.mrb[0].mxu0
      %7320 = vmatprep.mubr.bf16.mxu0 0
      %7321 = vmatmul.mubr.bf16.gmra.mrb[0].mxu0 %v6897
      %v7322 = vpop.f32.mrb[0].mxu0
      %v7323 = vadd.f32 0.0, %v7322
      %v7324 = vpop.f32.mrb[0].mxu0
      %v7325 = vpop.f32.mrb[0].mxu0
      %v7326 = vadd.f32 0.0, %v7325
      %v7327 = vpop.f32.mrb[0].mxu0
      %7328 = vmatprep.mubr.bf16.mxu0 0
      %7329 = vmatmul.mubr.bf16.gmra.mrb[0].mxu0 %v6900
      %v7330 = vpop.f32.mrb[0].mxu0
      %v7331 = vadd.f32 0.0, %v7330
      %v7332 = vpop.f32.mrb[0].mxu0
      %v7333 = vpop.f32.mrb[0].mxu0
      %v7334 = vadd.f32 0.0, %v7333
      %v7335 = vpop.f32.mrb[0].mxu0
      %7336 = vmatprep.mubr.bf16.mxu0 0
      %7337 = vmatmul.mubr.bf16.gmra.mrb[0].mxu0 %v6903
      %v7338 = vpop.f32.mrb[0].mxu0
      %v7339 = vadd.f32 0.0, %v7338
      %v7340 = vpop.f32.mrb[0].mxu0
      %v7341 = vpop.f32.mrb[0].mxu0
      %v7342 = vadd.f32 0.0, %v7341
      %v7343 = vpop.f32.mrb[0].mxu0
      %7344 = vmatprep.mubr.bf16.mxu0 0
      %7345 = vmatmul.mubr.bf16.gmra.mrb[0].mxu0 %v6906
      %v7346 = vpop.f32.mrb[0].mxu0
      %v7347 = vadd.f32 0.0, %v7346
      %v7348 = vpop.f32.mrb[0].mxu0
      %v7349 = vpop.f32.mrb[0].mxu0
      %v7350 = vadd.f32 0.0, %v7349
      %v7351 = vpop.f32.mrb[0].mxu0
      %7352 = vmatprep.mubr.bf16.mxu0 0
      %7353 = vmatmul.mubr.bf16.gmra.mrb[0].mxu0 %v6909
      %v7354 = vpop.f32.mrb[0].mxu0
      %v7355 = vadd.f32 0.0, %v7354
      %v7356 = vpop.f32.mrb[0].mxu0
      %v7357 = vpop.f32.mrb[0].mxu0
      %v7358 = vadd.f32 0.0, %v7357
      %v7359 = vpop.f32.mrb[0].mxu0
      %7360 = vmatprep.mubr.bf16.mxu0 0
      %7361 = vmatmul.mubr.bf16.gmra.mrb[0].mxu0 %v6912
      %v7362 = vpop.f32.mrb[0].mxu0
      %v7363 = vadd.f32 0.0, %v7362
      %v7364 = vpop.f32.mrb[0].mxu0
      %v7365 = vpop.f32.mrb[0].mxu0
      %v7366 = vadd.f32 0.0, %v7365
      %v7367 = vpop.f32.mrb[0].mxu0
      %7368 = vmatprep.mubr.bf16.mxu0 0
      %7369 = vmatmul.mubr.bf16.gmra.mrb[0].mxu0 %v6915
      %v7370 = vpop.f32.mrb[0].mxu0
      %v7371 = vadd.f32 0.0, %v7370
      %v7372 = vpop.f32.mrb[0].mxu0
      %v7373 = vpop.f32.mrb[0].mxu0
      %v7374 = vadd.f32 0.0, %v7373
      %v7375 = vpop.f32.mrb[0].mxu0
      %7376 = vmatprep.mubr.bf16.mxu0 0
      %7377 = vmatmul.mubr.bf16.gmra.mrb[0].mxu0 %v6918
      %v7378 = vpop.f32.mrb[0].mxu0
      %v7379 = vadd.f32 0.0, %v7378
      %v7380 = vpop.f32.mrb[0].mxu0
      %v7381 = vpop.f32.mrb[0].mxu0
      %v7382 = vadd.f32 0.0, %v7381
      %v7383 = vpop.f32.mrb[0].mxu0
      %7384 = vmatprep.mubr.bf16.mxu0 0
      %7385 = vmatmul.mubr.bf16.gmra.mrb[0].mxu0 %v6921
      %v7386 = vpop.f32.mrb[0].mxu0
      %v7387 = vadd.f32 0.0, %v7386
      %v7388 = vpop.f32.mrb[0].mxu0
      %v7389 = vpop.f32.mrb[0].mxu0
      %v7390 = vadd.f32 0.0, %v7389
      %v7391 = vpop.f32.mrb[0].mxu0
      %7392 = vmatprep.mubr.bf16.mxu0 0
      %7393 = vmatmul.mubr.bf16.gmra.mrb[0].mxu0 %v7203
      %v7394 = vpop.f32.mrb[0].mxu0
      %v7395 = vadd.f32 0.0, %v7394
      %v7396 = vpop.f32.mrb[0].mxu0
      %v7397 = vpop.f32.mrb[0].mxu0
      %v7398 = vadd.f32 0.0, %v7397
      %v7399 = vpop.f32.mrb[0].mxu0
      %7400 = vmatprep.mubr.bf16.mxu0 0
      %7401 = vmatmul.mubr.bf16.gmra.mrb[0].mxu0 %v7206
      %v7402 = vpop.f32.mrb[0].mxu0
      %v7403 = vadd.f32 0.0, %v7402
      %v7404 = vpop.f32.mrb[0].mxu0
      %v7405 = vpop.f32.mrb[0].mxu0
      %v7406 = vpop.f32.mrb[0].mxu0
      %7407 = vdwg.mxu0
      %v7408 = vadd.f32 %v7126, %v7243
      %v7409 = vadd.f32 %v7127, %v7246
      %v7410 = vadd.f32 %v7128, %v7251
      %v7411 = vadd.f32 %v7129, %v7254
      %v7412 = vadd.f32 %v7130, %v7259
      %v7413 = vadd.f32 %v7131, %v7262
      %v7414 = vadd.f32 %v7132, %v7267
      %v7415 = vadd.f32 %v7133, %v7270
      %v7416 = vadd.f32 %v7134, %v7275
      %v7417 = vadd.f32 %v7135, %v7278
      %v7418 = vadd.f32 %v7136, %v7283
      %v7419 = vadd.f32 %v7137, %v7286
      %v7420 = vadd.f32 %v7138, %v7291
      %v7421 = vadd.f32 %v7139, %v7294
      %v7422 = vadd.f32 %v7140, %v7299
      %v7423 = vadd.f32 %v7141, %v7302
      %v7424 = vadd.f32 %v7142, %v7307
      %v7425 = vadd.f32 %v7143, %v7310
      %v7426 = vadd.f32 %v7144, %v7315
      %v7427 = vadd.f32 %v7145, %v7318
      %v7428 = vadd.f32 %v7146, %v7323
      %v7429 = vadd.f32 %v7147, %v7326
      %v7430 = vadd.f32 %v7148, %v7331
      %v7431 = vadd.f32 %v7149, %v7334
      %v7432 = vadd.f32 %v7150, %v7339
      %v7433 = vadd.f32 %v7151, %v7342
      %v7434 = vadd.f32 %v7152, %v7347
      %v7435 = vadd.f32 %v7153, %v7350
      %v7436 = vadd.f32 %v7154, %v7355
      %v7437 = vadd.f32 %v7155, %v7358
      %v7438 = vadd.f32 %v7156, %v7363
      %v7439 = vadd.f32 %v7157, %v7366
      %v7440 = vadd.f32 %v7158, %v7371
      %v7441 = vadd.f32 %v7159, %v7374
      %v7442 = vadd.f32 %v7160, %v7379
      %v7443 = vadd.f32 %v7161, %v7382
      %v7444 = vadd.f32 %v7162, %v7387
      %v7445 = vadd.f32 %v7163, %v7390
      %v7446 = vadd.f32 %v7164, %v7395
      %v7447 = vadd.f32 %v7165, %v7398
      %v7448 = vadd.f32 %v7166, %v7403
      %v7449 = vrot.slane %v5971, 3
      %v7450 = vrot.slane %v5972, 3
      %v7451 = vrot.slane %v5973, 3
      %v7452 = vrot.slane %v5974, 3
      %v7453 = vrot.slane %v5975, 3
      %v7454 = vrot.slane %v5976, 3
      %v7455 = vrot.slane %v5977, 3
      %v7456 = vrot.slane %v5978, 3
      %v7457 = vrot.slane %v5979, 3
      %v7458 = vrot.slane %v5980, 3
      %v7459 = vrot.slane %v5981, 3
      %v7460 = vrot.slane %v5982, 3
      %v7461 = vrot.slane %v5983, 3
      %v7462 = vrot.slane %v5984, 3
      %v7463 = vrot.slane %v5985, 3
      %v7464 = vrot.slane %v5986, 3
      %v7465 = vrot.slane %v5987, 3
      %v7466 = vrot.slane %v5988, 3
      %v7467 = vrot.slane %v5989, 3
      %v7468 = vrot.slane %v5990, 3
      %v7469 = vrot.slane %v5991, 3
      %v7470 = vrot.slane %v5992, 3
      %v7471 = vrot.slane %v5993, 3
      %v7472 = vrot.slane %v5994, 3
      %v7473 = vrot.slane %v5995, 3
      %v7474 = vrot.slane %v5996, 3
      %v7475 = vrot.slane %v5997, 3
      %v7476 = vrot.slane %v5998, 3
      %v7477 = vrot.slane %v5999, 3
      %v7478 = vrot.slane %v6000, 3
      %v7479 = vrot.slane %v6001, 3
      %v7480 = vrot.slane %v6002, 3
      %v7481 = vrot.slane %v6003, 3
      %v7482 = vrot.slane %v6004, 3
      %v7483 = vrot.slane %v6005, 3
      %v7484 = vrot.slane %v6006, 3
      %v7485 = vrot.slane %v6007, 3
      %v7486 = vrot.slane %v6008, 3
      %v7487 = vrot.slane %v6009, 3
      %v7488 = vrot.slane %v6010, 3
      %v7489 = vrot.slane %v6011, 3
      %v7490 = vsel %vm1162, %v7488, %v7489
      %v7491 = vsel %vm1162, %v7487, %v7488
      %v7492 = vsel %vm1162, %v7486, %v7487
      %v7493 = vsel %vm1162, %v7485, %v7486
      %v7494 = vsel %vm1162, %v7484, %v7485
      %v7495 = vsel %vm1162, %v7483, %v7484
      %v7496 = vsel %vm1162, %v7482, %v7483
      %v7497 = vsel %vm1162, %v7481, %v7482
      %v7498 = vsel %vm1162, %v7480, %v7481
      %v7499 = vsel %vm1162, %v7479, %v7480
      %v7500 = vsel %vm1162, %v7478, %v7479
      %v7501 = vsel %vm1162, %v7477, %v7478
      %v7502 = vsel %vm1162, %v7476, %v7477
      %v7503 = vsel %vm1162, %v7475, %v7476
      %v7504 = vsel %vm1162, %v7474, %v7475
      %v7505 = vsel %vm1162, %v7473, %v7474
      %v7506 = vsel %vm1162, %v7472, %v7473
      %v7507 = vsel %vm1162, %v7471, %v7472
      %v7508 = vsel %vm1162, %v7470, %v7471
      %v7509 = vsel %vm1162, %v7469, %v7470
      %v7510 = vsel %vm1162, %v7468, %v7469
      %v7511 = vsel %vm1162, %v7467, %v7468
      %v7512 = vsel %vm1162, %v7466, %v7467
      %v7513 = vsel %vm1162, %v7465, %v7466
      %v7514 = vsel %vm1162, %v7464, %v7465
      %v7515 = vsel %vm1162, %v7463, %v7464
      %v7516 = vsel %vm1162, %v7462, %v7463
      %v7517 = vsel %vm1162, %v7461, %v7462
      %v7518 = vsel %vm1162, %v7460, %v7461
      %v7519 = vsel %vm1162, %v7459, %v7460
      %v7520 = vsel %vm1162, %v7458, %v7459
      %v7521 = vsel %vm1162, %v7457, %v7458
      %v7522 = vsel %vm1162, %v7456, %v7457
      %v7523 = vsel %vm1162, %v7455, %v7456
      %v7524 = vsel %vm1162, %v7454, %v7455
      %v7525 = vsel %vm1162, %v7453, %v7454
      %v7526 = vsel %vm1162, %v7452, %v7453
      %v7527 = vsel %vm1162, %v7451, %v7452
      %v7528 = vsel %vm1162, %v7450, %v7451
      %v7529 = vsel %vm1162, %v7449, %v7450
      %v7530 = vsel %vm1162, %v7489, %v7449
      %v7531 = vpack.c.bf16 %v7526, %v7527
      %v7532 = vpack.c.bf16 %v7524, %v7525
      %v7533 = vpack.c.bf16 %v7522, %v7523
      %v7534 = vpack.c.bf16 %v7520, %v7521
      %v7535 = vpack.c.bf16 %v7518, %v7519
      %v7536 = vpack.c.bf16 %v7516, %v7517
      %v7537 = vpack.c.bf16 %v7514, %v7515
      %v7538 = vpack.c.bf16 %v7512, %v7513
      %v7539 = vpack.c.bf16 %v7510, %v7511
      %v7540 = vpack.c.bf16 %v7508, %v7509
      %v7541 = vpack.c.bf16 %v7506, %v7507
      %v7542 = vpack.c.bf16 %v7504, %v7505
      %v7543 = vpack.c.bf16 %v7502, %v7503
      %v7544 = vpack.c.bf16 %v7500, %v7501
      %v7545 = vpack.c.bf16 %v7498, %v7499
      %v7546 = vpack.c.bf16 %v7496, %v7497
      %v7547 = vpack.c.bf16 %v7494, %v7495
      %v7548 = vpack.c.bf16 %v7492, %v7493
      %v7549 = vpack.c.bf16 %v7490, %v7491
      %v7550 = vpack.c.bf16 %v7529, %v7530
      %v7551 = vpack.c.bf16 %v7528, %v7528
      %s7552 = scalar_lea.vmem %s6, 128
      %v7553 = vld [vmem:[%s7552] sm:$0xf]
      %v7554 = vld [vmem:[%s7552 + $0x4] sm:$0xf]
      %v7555 = vld [vmem:[%s7552 + $0x8] sm:$0xf]
      %v7556 = vld [vmem:[%s7552 + $0xc] sm:$0xf]
      %v7557 = vld [vmem:[%s7552 + $0x10] sm:$0xf]
      %v7558 = vld [vmem:[%s7552 + $0x14] sm:$0xf]
      %v7559 = vld [vmem:[%s7552 + $0x18] sm:$0xf]
      %v7560 = vld [vmem:[%s7552 + $0x1c] sm:$0xf]
      %v7569 = vunpack.c.l.b16 %v7553
      %v7570 = vunpack.c.l.b16 %v7554
      %v7571 = vunpack.c.l.b16 %v7555
      %v7572 = vunpack.c.l.b16 %v7556
      %v7573 = vunpack.c.l.b16 %v7557
      %v7574 = vunpack.c.l.b16 %v7558
      %v7575 = vunpack.c.l.b16 %v7559
      %v7576 = vunpack.c.l.b16 %v7560
      %v7577 = vpack.c.b16 %v7570, %v7569
      %v7578 = vpack.c.b16 %v7572, %v7571
      %v7579 = vpack.c.b16 %v7574, %v7573
      %v7580 = vpack.c.b16 %v7576, %v7575
      %v7586 = vsel %vm2485, %v7531, 0
      %v7589 = vsel %vm2485, %v7532, 0
      %v7592 = vsel %vm2485, %v7533, 0
      %v7595 = vsel %vm2485, %v7534, 0
      %v7598 = vsel %vm2485, %v7535, 0
      %v7601 = vsel %vm2485, %v7536, 0
      %v7604 = vsel %vm2485, %v7537, 0
      %v7607 = vsel %vm2485, %v7538, 0
      %v7610 = vsel %vm2485, %v7539, 0
      %v7613 = vsel %vm2485, %v7540, 0
      %v7616 = vsel %vm2485, %v7541, 0
      %v7619 = vsel %vm2485, %v7542, 0
      %v7622 = vsel %vm2485, %v7543, 0
      %v7625 = vsel %vm2485, %v7544, 0
      %v7628 = vsel %vm2485, %v7545, 0
      %v7631 = vsel %vm2485, %v7546, 0
      %v7634 = vsel %vm2485, %v7547, 0
      %v7637 = vsel %vm2485, %v7548, 0
      %v7640 = vsel %vm2485, %v7549, 0
      %v7643 = vsel %vm2485, %v7550, 0
      %v7646 = vsel %vm2485, %v7551, 0
      %7648 = vmatprep.subr.bf16.mxu0 0
      %7649 = vmatpush1.bf16.msra.mxu0 %v7577
      %7650 = vmatprep.subr.bf16.mxu0 0
      %7651 = vmatpush1.bf16.msra.mxu0 %v7578
      %7652 = vmatprep.subr.bf16.mxu0 0
      %7653 = vmatpush1.bf16.msra.mxu0 %v7579
      %7654 = vmatprep.subr.bf16.mxu0 0
      %7655 = vmatpush1.bf16.msra.mxu0 %v7580
      %7656 = vmatprep.subr.bf16.mxu0 0
      %7657 = vmatpush1.bf16.msra.mxu0 0
      %7658 = vmatprep.subr.bf16.mxu0 0
      %7659 = vmatpush1.bf16.msra.mxu0 0
      %7660 = vmatprep.subr.bf16.mxu0 0
      %7661 = vmatpush1.bf16.msra.mxu0 0
      %7662 = vmatprep.subr.bf16.mxu0 0
      %7663 = vmatpush1.bf16.msra.mxu0 0
      %7664 = vmatprep.subr.bf16.mxu0 0
      %7665 = vmatpush1.bf16.msra.mxu0 0
      %7666 = vmatprep.subr.bf16.mxu0 0
      %7667 = vmatpush1.bf16.msra.mxu0 0
      %7668 = vmatprep.subr.bf16.mxu0 0
      %7669 = vmatpush1.bf16.msra.mxu0 0
      %7670 = vmatprep.subr.bf16.mxu0 0
      %7671 = vmatpush1.bf16.msra.mxu0 0
      %7672 = vmatprep.subr.bf16.mxu0 0
      %7673 = vmatpush1.bf16.msra.mxu0 0
      %7674 = vmatprep.subr.bf16.mxu0 0
      %7675 = vmatpush1.bf16.msra.mxu0 0
      %7676 = vmatprep.subr.bf16.mxu0 0
      %7677 = vmatpush1.bf16.msra.mxu0 0
      %7678 = vmatprep.subr.bf16.mxu0 0
      %7679 = vmatpush1.bf16.msra.mxu0 0
      %7680 = vmatprep.mubr.bf16.mxu0 0
      %7681 = vmatmul.mubr.bf16.gmra.mrb[0].mxu0 %v7586
      %v7682 = vpop.f32.mrb[0].mxu0
      %v7683 = vadd.f32 0.0, %v7682
      %v7684 = vpop.f32.mrb[0].mxu0
      %v7685 = vpop.f32.mrb[0].mxu0
      %v7686 = vadd.f32 0.0, %v7685
      %v7687 = vpop.f32.mrb[0].mxu0
      %7688 = vmatprep.mubr.bf16.mxu0 0
      %7689 = vmatmul.mubr.bf16.gmra.mrb[0].mxu0 %v7589
      %v7690 = vpop.f32.mrb[0].mxu0
      %v7691 = vadd.f32 0.0, %v7690
      %v7692 = vpop.f32.mrb[0].mxu0
      %v7693 = vpop.f32.mrb[0].mxu0
      %v7694 = vadd.f32 0.0, %v7693
      %v7695 = vpop.f32.mrb[0].mxu0
      %7696 = vmatprep.mubr.bf16.mxu0 0
      %7697 = vmatmul.mubr.bf16.gmra.mrb[0].mxu0 %v7592
      %v7698 = vpop.f32.mrb[0].mxu0
      %v7699 = vadd.f32 0.0, %v7698
      %v7700 = vpop.f32.mrb[0].mxu0
      %v7701 = vpop.f32.mrb[0].mxu0
      %v7702 = vadd.f32 0.0, %v7701
      %v7703 = vpop.f32.mrb[0].mxu0
      %7704 = vmatprep.mubr.bf16.mxu0 0
      %7705 = vmatmul.mubr.bf16.gmra.mrb[0].mxu0 %v7595
      %v7706 = vpop.f32.mrb[0].mxu0
      %v7707 = vadd.f32 0.0, %v7706
      %v7708 = vpop.f32.mrb[0].mxu0
      %v7709 = vpop.f32.mrb[0].mxu0
      %v7710 = vadd.f32 0.0, %v7709
      %v7711 = vpop.f32.mrb[0].mxu0
      %7712 = vmatprep.mubr.bf16.mxu0 0
      %7713 = vmatmul.mubr.bf16.gmra.mrb[0].mxu0 %v7598
      %v7714 = vpop.f32.mrb[0].mxu0
      %v7715 = vadd.f32 0.0, %v7714
      %v7716 = vpop.f32.mrb[0].mxu0
      %v7717 = vpop.f32.mrb[0].mxu0
      %v7718 = vadd.f32 0.0, %v7717
      %v7719 = vpop.f32.mrb[0].mxu0
      %7720 = vmatprep.mubr.bf16.mxu0 0
      %7721 = vmatmul.mubr.bf16.gmra.mrb[0].mxu0 %v7601
      %v7722 = vpop.f32.mrb[0].mxu0
      %v7723 = vadd.f32 0.0, %v7722
      %v7724 = vpop.f32.mrb[0].mxu0
      %v7725 = vpop.f32.mrb[0].mxu0
      %v7726 = vadd.f32 0.0, %v7725
      %v7727 = vpop.f32.mrb[0].mxu0
      %7728 = vmatprep.mubr.bf16.mxu0 0
      %7729 = vmatmul.mubr.bf16.gmra.mrb[0].mxu0 %v7604
      %v7730 = vpop.f32.mrb[0].mxu0
      %v7731 = vadd.f32 0.0, %v7730
      %v7732 = vpop.f32.mrb[0].mxu0
      %v7733 = vpop.f32.mrb[0].mxu0
      %v7734 = vadd.f32 0.0, %v7733
      %v7735 = vpop.f32.mrb[0].mxu0
      %7736 = vmatprep.mubr.bf16.mxu0 0
      %7737 = vmatmul.mubr.bf16.gmra.mrb[0].mxu0 %v7607
      %v7738 = vpop.f32.mrb[0].mxu0
      %v7739 = vadd.f32 0.0, %v7738
      %v7740 = vpop.f32.mrb[0].mxu0
      %v7741 = vpop.f32.mrb[0].mxu0
      %v7742 = vadd.f32 0.0, %v7741
      %v7743 = vpop.f32.mrb[0].mxu0
      %7744 = vmatprep.mubr.bf16.mxu0 0
      %7745 = vmatmul.mubr.bf16.gmra.mrb[0].mxu0 %v7610
      %v7746 = vpop.f32.mrb[0].mxu0
      %v7747 = vadd.f32 0.0, %v7746
      %v7748 = vpop.f32.mrb[0].mxu0
      %v7749 = vpop.f32.mrb[0].mxu0
      %v7750 = vadd.f32 0.0, %v7749
      %v7751 = vpop.f32.mrb[0].mxu0
      %7752 = vmatprep.mubr.bf16.mxu0 0
      %7753 = vmatmul.mubr.bf16.gmra.mrb[0].mxu0 %v7613
      %v7754 = vpop.f32.mrb[0].mxu0
      %v7755 = vadd.f32 0.0, %v7754
      %v7756 = vpop.f32.mrb[0].mxu0
      %v7757 = vpop.f32.mrb[0].mxu0
      %v7758 = vadd.f32 0.0, %v7757
      %v7759 = vpop.f32.mrb[0].mxu0
      %7760 = vmatprep.mubr.bf16.mxu0 0
      %7761 = vmatmul.mubr.bf16.gmra.mrb[0].mxu0 %v7616
      %v7762 = vpop.f32.mrb[0].mxu0
      %v7763 = vadd.f32 0.0, %v7762
      %v7764 = vpop.f32.mrb[0].mxu0
      %v7765 = vpop.f32.mrb[0].mxu0
      %v7766 = vadd.f32 0.0, %v7765
      %v7767 = vpop.f32.mrb[0].mxu0
      %7768 = vmatprep.mubr.bf16.mxu0 0
      %7769 = vmatmul.mubr.bf16.gmra.mrb[0].mxu0 %v7619
      %v7770 = vpop.f32.mrb[0].mxu0
      %v7771 = vadd.f32 0.0, %v7770
      %v7772 = vpop.f32.mrb[0].mxu0
      %v7773 = vpop.f32.mrb[0].mxu0
      %v7774 = vadd.f32 0.0, %v7773
      %v7775 = vpop.f32.mrb[0].mxu0
      %7776 = vmatprep.mubr.bf16.mxu0 0
      %7777 = vmatmul.mubr.bf16.gmra.mrb[0].mxu0 %v7622
      %v7778 = vpop.f32.mrb[0].mxu0
      %v7779 = vadd.f32 0.0, %v7778
      %v7780 = vpop.f32.mrb[0].mxu0
      %v7781 = vpop.f32.mrb[0].mxu0
      %v7782 = vadd.f32 0.0, %v7781
      %v7783 = vpop.f32.mrb[0].mxu0
      %7784 = vmatprep.mubr.bf16.mxu0 0
      %7785 = vmatmul.mubr.bf16.gmra.mrb[0].mxu0 %v7625
      %v7786 = vpop.f32.mrb[0].mxu0
      %v7787 = vadd.f32 0.0, %v7786
      %v7788 = vpop.f32.mrb[0].mxu0
      %v7789 = vpop.f32.mrb[0].mxu0
      %v7790 = vadd.f32 0.0, %v7789
      %v7791 = vpop.f32.mrb[0].mxu0
      %7792 = vmatprep.mubr.bf16.mxu0 0
      %7793 = vmatmul.mubr.bf16.gmra.mrb[0].mxu0 %v7628
      %v7794 = vpop.f32.mrb[0].mxu0
      %v7795 = vadd.f32 0.0, %v7794
      %v7796 = vpop.f32.mrb[0].mxu0
      %v7797 = vpop.f32.mrb[0].mxu0
      %v7798 = vadd.f32 0.0, %v7797
      %v7799 = vpop.f32.mrb[0].mxu0
      %7800 = vmatprep.mubr.bf16.mxu0 0
      %7801 = vmatmul.mubr.bf16.gmra.mrb[0].mxu0 %v7631
      %v7802 = vpop.f32.mrb[0].mxu0
      %v7803 = vadd.f32 0.0, %v7802
      %v7804 = vpop.f32.mrb[0].mxu0
      %v7805 = vpop.f32.mrb[0].mxu0
      %v7806 = vadd.f32 0.0, %v7805
      %v7807 = vpop.f32.mrb[0].mxu0
      %7808 = vmatprep.mubr.bf16.mxu0 0
      %7809 = vmatmul.mubr.bf16.gmra.mrb[0].mxu0 %v7634
      %v7810 = vpop.f32.mrb[0].mxu0
      %v7811 = vadd.f32 0.0, %v7810
      %v7812 = vpop.f32.mrb[0].mxu0
      %v7813 = vpop.f32.mrb[0].mxu0
      %v7814 = vadd.f32 0.0, %v7813
      %v7815 = vpop.f32.mrb[0].mxu0
      %7816 = vmatprep.mubr.bf16.mxu0 0
      %7817 = vmatmul.mubr.bf16.gmra.mrb[0].mxu0 %v7637
      %v7818 = vpop.f32.mrb[0].mxu0
      %v7819 = vadd.f32 0.0, %v7818
      %v7820 = vpop.f32.mrb[0].mxu0
      %v7821 = vpop.f32.mrb[0].mxu0
      %v7822 = vadd.f32 0.0, %v7821
      %v7823 = vpop.f32.mrb[0].mxu0
      %7824 = vmatprep.mubr.bf16.mxu0 0
      %7825 = vmatmul.mubr.bf16.gmra.mrb[0].mxu0 %v7640
      %v7826 = vpop.f32.mrb[0].mxu0
      %v7827 = vadd.f32 0.0, %v7826
      %v7828 = vpop.f32.mrb[0].mxu0
      %v7829 = vpop.f32.mrb[0].mxu0
      %v7830 = vadd.f32 0.0, %v7829
      %v7831 = vpop.f32.mrb[0].mxu0
      %7832 = vmatprep.mubr.bf16.mxu0 0
      %7833 = vmatmul.mubr.bf16.gmra.mrb[0].mxu0 %v7643
      %v7834 = vpop.f32.mrb[0].mxu0
      %v7835 = vadd.f32 0.0, %v7834
      %v7836 = vpop.f32.mrb[0].mxu0
      %v7837 = vpop.f32.mrb[0].mxu0
      %v7838 = vadd.f32 0.0, %v7837
      %v7839 = vpop.f32.mrb[0].mxu0
      %7840 = vmatprep.mubr.bf16.mxu0 0
      %7841 = vmatmul.mubr.bf16.gmra.mrb[0].mxu0 %v7646
      %v7842 = vpop.f32.mrb[0].mxu0
      %v7843 = vadd.f32 0.0, %v7842
      %v7844 = vpop.f32.mrb[0].mxu0
      %v7845 = vpop.f32.mrb[0].mxu0
      %v7846 = vpop.f32.mrb[0].mxu0
      %7847 = vdwg.mxu0
      %v7848 = vadd.f32 %v7408, %v7683
      %v7849 = vadd.f32 %v7409, %v7686
      %v7850 = vadd.f32 %v7410, %v7691
      %v7851 = vadd.f32 %v7411, %v7694
      %v7852 = vadd.f32 %v7412, %v7699
      %v7853 = vadd.f32 %v7413, %v7702
      %v7854 = vadd.f32 %v7414, %v7707
      %v7855 = vadd.f32 %v7415, %v7710
      %v7856 = vadd.f32 %v7416, %v7715
      %v7857 = vadd.f32 %v7417, %v7718
      %v7858 = vadd.f32 %v7418, %v7723
      %v7859 = vadd.f32 %v7419, %v7726
      %v7860 = vadd.f32 %v7420, %v7731
      %v7861 = vadd.f32 %v7421, %v7734
      %v7862 = vadd.f32 %v7422, %v7739
      %v7863 = vadd.f32 %v7423, %v7742
      %v7864 = vadd.f32 %v7424, %v7747
      %v7865 = vadd.f32 %v7425, %v7750
      %v7866 = vadd.f32 %v7426, %v7755
      %v7867 = vadd.f32 %v7427, %v7758
      %v7868 = vadd.f32 %v7428, %v7763
      %v7869 = vadd.f32 %v7429, %v7766
      %v7870 = vadd.f32 %v7430, %v7771
      %v7871 = vadd.f32 %v7431, %v7774
      %v7872 = vadd.f32 %v7432, %v7779
      %v7873 = vadd.f32 %v7433, %v7782
      %v7874 = vadd.f32 %v7434, %v7787
      %v7875 = vadd.f32 %v7435, %v7790
      %v7876 = vadd.f32 %v7436, %v7795
      %v7877 = vadd.f32 %v7437, %v7798
      %v7878 = vadd.f32 %v7438, %v7803
      %v7879 = vadd.f32 %v7439, %v7806
      %v7880 = vadd.f32 %v7440, %v7811
      %v7881 = vadd.f32 %v7441, %v7814
      %v7882 = vadd.f32 %v7442, %v7819
      %v7883 = vadd.f32 %v7443, %v7822
      %v7884 = vadd.f32 %v7444, %v7827
      %v7885 = vadd.f32 %v7445, %v7830
      %v7886 = vadd.f32 %v7446, %v7835
      %v7887 = vadd.f32 %v7447, %v7838
      %v7888 = vadd.f32 %v7448, %v7843
      %v7889 = vrot.slane %v5971, 4
      %v7890 = vrot.slane %v5972, 4
      %v7891 = vrot.slane %v5973, 4
      %v7892 = vrot.slane %v5974, 4
      %v7893 = vrot.slane %v5975, 4
      %v7894 = vrot.slane %v5976, 4
      %v7895 = vrot.slane %v5977, 4
      %v7896 = vrot.slane %v5978, 4
      %v7897 = vrot.slane %v5979, 4
      %v7898 = vrot.slane %v5980, 4
      %v7899 = vrot.slane %v5981, 4
      %v7900 = vrot.slane %v5982, 4
      %v7901 = vrot.slane %v5983, 4
      %v7902 = vrot.slane %v5984, 4
      %v7903 = vrot.slane %v5985, 4
      %v7904 = vrot.slane %v5986, 4
      %v7905 = vrot.slane %v5987, 4
      %v7906 = vrot.slane %v5988, 4
      %v7907 = vrot.slane %v5989, 4
      %v7908 = vrot.slane %v5990, 4
      %v7909 = vrot.slane %v5991, 4
      %v7910 = vrot.slane %v5992, 4
      %v7911 = vrot.slane %v5993, 4
      %v7912 = vrot.slane %v5994, 4
      %v7913 = vrot.slane %v5995, 4
      %v7914 = vrot.slane %v5996, 4
      %v7915 = vrot.slane %v5997, 4
      %v7916 = vrot.slane %v5998, 4
      %v7917 = vrot.slane %v5999, 4
      %v7918 = vrot.slane %v6000, 4
      %v7919 = vrot.slane %v6001, 4
      %v7920 = vrot.slane %v6002, 4
      %v7921 = vrot.slane %v6003, 4
      %v7922 = vrot.slane %v6004, 4
      %v7923 = vrot.slane %v6005, 4
      %v7924 = vrot.slane %v6006, 4
      %v7925 = vrot.slane %v6007, 4
      %v7926 = vrot.slane %v6008, 4
      %v7927 = vrot.slane %v6009, 4
      %v7928 = vrot.slane %v6010, 4
      %v7929 = vrot.slane %v6011, 4
      %v7930 = vsel %vm1335, %v7928, %v7929
      %v7931 = vsel %vm1335, %v7927, %v7928
      %v7932 = vsel %vm1335, %v7926, %v7927
      %v7933 = vsel %vm1335, %v7925, %v7926
      %v7934 = vsel %vm1335, %v7924, %v7925
      %v7935 = vsel %vm1335, %v7923, %v7924
      %v7936 = vsel %vm1335, %v7922, %v7923
      %v7937 = vsel %vm1335, %v7921, %v7922
      %v7938 = vsel %vm1335, %v7920, %v7921
      %v7939 = vsel %vm1335, %v7919, %v7920
      %v7940 = vsel %vm1335, %v7918, %v7919
      %v7941 = vsel %vm1335, %v7917, %v7918
      %v7942 = vsel %vm1335, %v7916, %v7917
      %v7943 = vsel %vm1335, %v7915, %v7916
      %v7944 = vsel %vm1335, %v7914, %v7915
      %v7945 = vsel %vm1335, %v7913, %v7914
      %v7946 = vsel %vm1335, %v7912, %v7913
      %v7947 = vsel %vm1335, %v7911, %v7912
      %v7948 = vsel %vm1335, %v7910, %v7911
      %v7949 = vsel %vm1335, %v7909, %v7910
      %v7950 = vsel %vm1335, %v7908, %v7909
      %v7951 = vsel %vm1335, %v7907, %v7908
      %v7952 = vsel %vm1335, %v7906, %v7907
      %v7953 = vsel %vm1335, %v7905, %v7906
      %v7954 = vsel %vm1335, %v7904, %v7905
      %v7955 = vsel %vm1335, %v7903, %v7904
      %v7956 = vsel %vm1335, %v7902, %v7903
      %v7957 = vsel %vm1335, %v7901, %v7902
      %v7958 = vsel %vm1335, %v7900, %v7901
      %v7959 = vsel %vm1335, %v7899, %v7900
      %v7960 = vsel %vm1335, %v7898, %v7899
      %v7961 = vsel %vm1335, %v7897, %v7898
      %v7962 = vsel %vm1335, %v7896, %v7897
      %v7963 = vsel %vm1335, %v7895, %v7896
      %v7964 = vsel %vm1335, %v7894, %v7895
      %v7965 = vsel %vm1335, %v7893, %v7894
      %v7966 = vsel %vm1335, %v7892, %v7893
      %v7967 = vsel %vm1335, %v7891, %v7892
      %v7968 = vsel %vm1335, %v7890, %v7891
      %v7969 = vsel %vm1335, %v7889, %v7890
      %v7970 = vsel %vm1335, %v7929, %v7889
      %v7971 = vpack.c.bf16 %v7966, %v7967
      %v7972 = vpack.c.bf16 %v7964, %v7965
      %v7973 = vpack.c.bf16 %v7962, %v7963
      %v7974 = vpack.c.bf16 %v7960, %v7961
      %v7975 = vpack.c.bf16 %v7958, %v7959
      %v7976 = vpack.c.bf16 %v7956, %v7957
      %v7977 = vpack.c.bf16 %v7954, %v7955
      %v7978 = vpack.c.bf16 %v7952, %v7953
      %v7979 = vpack.c.bf16 %v7950, %v7951
      %v7980 = vpack.c.bf16 %v7948, %v7949
      %v7981 = vpack.c.bf16 %v7946, %v7947
      %v7982 = vpack.c.bf16 %v7944, %v7945
      %v7983 = vpack.c.bf16 %v7942, %v7943
      %v7984 = vpack.c.bf16 %v7940, %v7941
      %v7985 = vpack.c.bf16 %v7938, %v7939
      %v7986 = vpack.c.bf16 %v7936, %v7937
      %v7987 = vpack.c.bf16 %v7934, %v7935
      %v7988 = vpack.c.bf16 %v7932, %v7933
      %v7989 = vpack.c.bf16 %v7930, %v7931
      %v7990 = vpack.c.bf16 %v7969, %v7970
      %v7991 = vpack.c.bf16 %v7968, %v7968
      %s7992 = scalar_lea.vmem %s6, 160
      %v7993 = vld [vmem:[%s7992] sm:$0xf]
      %v7994 = vld [vmem:[%s7992 + $0x4] sm:$0xf]
      %v7995 = vld [vmem:[%s7992 + $0x8] sm:$0xf]
      %v7996 = vld [vmem:[%s7992 + $0xc] sm:$0xf]
      %v7997 = vld [vmem:[%s7992 + $0x10] sm:$0xf]
      %v7998 = vld [vmem:[%s7992 + $0x14] sm:$0xf]
      %v7999 = vld [vmem:[%s7992 + $0x18] sm:$0xf]
      %v8000 = vld [vmem:[%s7992 + $0x1c] sm:$0xf]
      %v8009 = vunpack.c.l.b16 %v7993
      %v8010 = vunpack.c.l.b16 %v7994
      %v8011 = vunpack.c.l.b16 %v7995
      %v8012 = vunpack.c.l.b16 %v7996
      %v8013 = vunpack.c.l.b16 %v7997
      %v8014 = vunpack.c.l.b16 %v7998
      %v8015 = vunpack.c.l.b16 %v7999
      %v8016 = vunpack.c.l.b16 %v8000
      %v8017 = vpack.c.b16 %v8010, %v8009
      %v8018 = vpack.c.b16 %v8012, %v8011
      %v8019 = vpack.c.b16 %v8014, %v8013
      %v8020 = vpack.c.b16 %v8016, %v8015
      %v8026 = vsel %vm2485, %v7971, 0
      %v8029 = vsel %vm2485, %v7972, 0
      %v8032 = vsel %vm2485, %v7973, 0
      %v8035 = vsel %vm2485, %v7974, 0
      %v8038 = vsel %vm2485, %v7975, 0
      %v8041 = vsel %vm2485, %v7976, 0
      %v8044 = vsel %vm2485, %v7977, 0
      %v8047 = vsel %vm2485, %v7978, 0
      %v8050 = vsel %vm2485, %v7979, 0
      %v8053 = vsel %vm2485, %v7980, 0
      %v8056 = vsel %vm2485, %v7981, 0
      %v8059 = vsel %vm2485, %v7982, 0
      %v8062 = vsel %vm2485, %v7983, 0
      %v8065 = vsel %vm2485, %v7984, 0
      %v8068 = vsel %vm2485, %v7985, 0
      %v8071 = vsel %vm2485, %v7986, 0
      %v8074 = vsel %vm2485, %v7987, 0
      %v8077 = vsel %vm2485, %v7988, 0
      %v8080 = vsel %vm2485, %v7989, 0
      %v8083 = vsel %vm2485, %v7990, 0
      %v8086 = vsel %vm2485, %v7991, 0
      %8088 = vmatprep.subr.bf16.mxu0 0
      %8089 = vmatpush1.bf16.msra.mxu0 %v8017
      %8090 = vmatprep.subr.bf16.mxu0 0
      %8091 = vmatpush1.bf16.msra.mxu0 %v8018
      %8092 = vmatprep.subr.bf16.mxu0 0
      %8093 = vmatpush1.bf16.msra.mxu0 %v8019
      %8094 = vmatprep.subr.bf16.mxu0 0
      %8095 = vmatpush1.bf16.msra.mxu0 %v8020
      %8096 = vmatprep.subr.bf16.mxu0 0
      %8097 = vmatpush1.bf16.msra.mxu0 0
      %8098 = vmatprep.subr.bf16.mxu0 0
      %8099 = vmatpush1.bf16.msra.mxu0 0
      %8100 = vmatprep.subr.bf16.mxu0 0
      %8101 = vmatpush1.bf16.msra.mxu0 0
      %8102 = vmatprep.subr.bf16.mxu0 0
      %8103 = vmatpush1.bf16.msra.mxu0 0
      %8104 = vmatprep.subr.bf16.mxu0 0
      %8105 = vmatpush1.bf16.msra.mxu0 0
      %8106 = vmatprep.subr.bf16.mxu0 0
      %8107 = vmatpush1.bf16.msra.mxu0 0
      %8108 = vmatprep.subr.bf16.mxu0 0
      %8109 = vmatpush1.bf16.msra.mxu0 0
      %8110 = vmatprep.subr.bf16.mxu0 0
      %8111 = vmatpush1.bf16.msra.mxu0 0
      %8112 = vmatprep.subr.bf16.mxu0 0
      %8113 = vmatpush1.bf16.msra.mxu0 0
      %8114 = vmatprep.subr.bf16.mxu0 0
      %8115 = vmatpush1.bf16.msra.mxu0 0
      %8116 = vmatprep.subr.bf16.mxu0 0
      %8117 = vmatpush1.bf16.msra.mxu0 0
      %8118 = vmatprep.subr.bf16.mxu0 0
      %8119 = vmatpush1.bf16.msra.mxu0 0
      %8120 = vmatprep.mubr.bf16.mxu0 0
      %8121 = vmatmul.mubr.bf16.gmra.mrb[0].mxu0 %v8026
      %v8122 = vpop.f32.mrb[0].mxu0
      %v8123 = vadd.f32 0.0, %v8122
      %v8124 = vpop.f32.mrb[0].mxu0
      %v8125 = vpop.f32.mrb[0].mxu0
      %v8126 = vadd.f32 0.0, %v8125
      %v8127 = vpop.f32.mrb[0].mxu0
      %8128 = vmatprep.mubr.bf16.mxu0 0
      %8129 = vmatmul.mubr.bf16.gmra.mrb[0].mxu0 %v8029
      %v8130 = vpop.f32.mrb[0].mxu0
      %v8131 = vadd.f32 0.0, %v8130
      %v8132 = vpop.f32.mrb[0].mxu0
      %v8133 = vpop.f32.mrb[0].mxu0
      %v8134 = vadd.f32 0.0, %v8133
      %v8135 = vpop.f32.mrb[0].mxu0
      %8136 = vmatprep.mubr.bf16.mxu0 0
      %8137 = vmatmul.mubr.bf16.gmra.mrb[0].mxu0 %v8032
      %v8138 = vpop.f32.mrb[0].mxu0
      %v8139 = vadd.f32 0.0, %v8138
      %v8140 = vpop.f32.mrb[0].mxu0
      %v8141 = vpop.f32.mrb[0].mxu0
      %v8142 = vadd.f32 0.0, %v8141
      %v8143 = vpop.f32.mrb[0].mxu0
      %8144 = vmatprep.mubr.bf16.mxu0 0
      %8145 = vmatmul.mubr.bf16.gmra.mrb[0].mxu0 %v8035
      %v8146 = vpop.f32.mrb[0].mxu0
      %v8147 = vadd.f32 0.0, %v8146
      %v8148 = vpop.f32.mrb[0].mxu0
      %v8149 = vpop.f32.mrb[0].mxu0
      %v8150 = vadd.f32 0.0, %v8149
      %v8151 = vpop.f32.mrb[0].mxu0
      %8152 = vmatprep.mubr.bf16.mxu0 0
      %8153 = vmatmul.mubr.bf16.gmra.mrb[0].mxu0 %v8038
      %v8154 = vpop.f32.mrb[0].mxu0
      %v8155 = vadd.f32 0.0, %v8154
      %v8156 = vpop.f32.mrb[0].mxu0
      %v8157 = vpop.f32.mrb[0].mxu0
      %v8158 = vadd.f32 0.0, %v8157
      %v8159 = vpop.f32.mrb[0].mxu0
      %8160 = vmatprep.mubr.bf16.mxu0 0
      %8161 = vmatmul.mubr.bf16.gmra.mrb[0].mxu0 %v8041
      %v8162 = vpop.f32.mrb[0].mxu0
      %v8163 = vadd.f32 0.0, %v8162
      %v8164 = vpop.f32.mrb[0].mxu0
      %v8165 = vpop.f32.mrb[0].mxu0
      %v8166 = vadd.f32 0.0, %v8165
      %v8167 = vpop.f32.mrb[0].mxu0
      %8168 = vmatprep.mubr.bf16.mxu0 0
      %8169 = vmatmul.mubr.bf16.gmra.mrb[0].mxu0 %v8044
      %v8170 = vpop.f32.mrb[0].mxu0
      %v8171 = vadd.f32 0.0, %v8170
      %v8172 = vpop.f32.mrb[0].mxu0
      %v8173 = vpop.f32.mrb[0].mxu0
      %v8174 = vadd.f32 0.0, %v8173
      %v8175 = vpop.f32.mrb[0].mxu0
      %8176 = vmatprep.mubr.bf16.mxu0 0
      %8177 = vmatmul.mubr.bf16.gmra.mrb[0].mxu0 %v8047
      %v8178 = vpop.f32.mrb[0].mxu0
      %v8179 = vadd.f32 0.0, %v8178
      %v8180 = vpop.f32.mrb[0].mxu0
      %v8181 = vpop.f32.mrb[0].mxu0
      %v8182 = vadd.f32 0.0, %v8181
      %v8183 = vpop.f32.mrb[0].mxu0
      %8184 = vmatprep.mubr.bf16.mxu0 0
      %8185 = vmatmul.mubr.bf16.gmra.mrb[0].mxu0 %v8050
      %v8186 = vpop.f32.mrb[0].mxu0
      %v8187 = vadd.f32 0.0, %v8186
      %v8188 = vpop.f32.mrb[0].mxu0
      %v8189 = vpop.f32.mrb[0].mxu0
      %v8190 = vadd.f32 0.0, %v8189
      %v8191 = vpop.f32.mrb[0].mxu0
      %8192 = vmatprep.mubr.bf16.mxu0 0
      %8193 = vmatmul.mubr.bf16.gmra.mrb[0].mxu0 %v8053
      %v8194 = vpop.f32.mrb[0].mxu0
      %v8195 = vadd.f32 0.0, %v8194
      %v8196 = vpop.f32.mrb[0].mxu0
      %v8197 = vpop.f32.mrb[0].mxu0
      %v8198 = vadd.f32 0.0, %v8197
      %v8199 = vpop.f32.mrb[0].mxu0
      %8200 = vmatprep.mubr.bf16.mxu0 0
      %8201 = vmatmul.mubr.bf16.gmra.mrb[0].mxu0 %v8056
      %v8202 = vpop.f32.mrb[0].mxu0
      %v8203 = vadd.f32 0.0, %v8202
      %v8204 = vpop.f32.mrb[0].mxu0
      %v8205 = vpop.f32.mrb[0].mxu0
      %v8206 = vadd.f32 0.0, %v8205
      %v8207 = vpop.f32.mrb[0].mxu0
      %8208 = vmatprep.mubr.bf16.mxu0 0
      %8209 = vmatmul.mubr.bf16.gmra.mrb[0].mxu0 %v8059
      %v8210 = vpop.f32.mrb[0].mxu0
      %v8211 = vadd.f32 0.0, %v8210
      %v8212 = vpop.f32.mrb[0].mxu0
      %v8213 = vpop.f32.mrb[0].mxu0
      %v8214 = vadd.f32 0.0, %v8213
      %v8215 = vpop.f32.mrb[0].mxu0
      %8216 = vmatprep.mubr.bf16.mxu0 0
      %8217 = vmatmul.mubr.bf16.gmra.mrb[0].mxu0 %v8062
      %v8218 = vpop.f32.mrb[0].mxu0
      %v8219 = vadd.f32 0.0, %v8218
      %v8220 = vpop.f32.mrb[0].mxu0
      %v8221 = vpop.f32.mrb[0].mxu0
      %v8222 = vadd.f32 0.0, %v8221
      %v8223 = vpop.f32.mrb[0].mxu0
      %8224 = vmatprep.mubr.bf16.mxu0 0
      %8225 = vmatmul.mubr.bf16.gmra.mrb[0].mxu0 %v8065
      %v8226 = vpop.f32.mrb[0].mxu0
      %v8227 = vadd.f32 0.0, %v8226
      %v8228 = vpop.f32.mrb[0].mxu0
      %v8229 = vpop.f32.mrb[0].mxu0
      %v8230 = vadd.f32 0.0, %v8229
      %v8231 = vpop.f32.mrb[0].mxu0
      %8232 = vmatprep.mubr.bf16.mxu0 0
      %8233 = vmatmul.mubr.bf16.gmra.mrb[0].mxu0 %v8068
      %v8234 = vpop.f32.mrb[0].mxu0
      %v8235 = vadd.f32 0.0, %v8234
      %v8236 = vpop.f32.mrb[0].mxu0
      %v8237 = vpop.f32.mrb[0].mxu0
      %v8238 = vadd.f32 0.0, %v8237
      %v8239 = vpop.f32.mrb[0].mxu0
      %8240 = vmatprep.mubr.bf16.mxu0 0
      %8241 = vmatmul.mubr.bf16.gmra.mrb[0].mxu0 %v8071
      %v8242 = vpop.f32.mrb[0].mxu0
      %v8243 = vadd.f32 0.0, %v8242
      %v8244 = vpop.f32.mrb[0].mxu0
      %v8245 = vpop.f32.mrb[0].mxu0
      %v8246 = vadd.f32 0.0, %v8245
      %v8247 = vpop.f32.mrb[0].mxu0
      %8248 = vmatprep.mubr.bf16.mxu0 0
      %8249 = vmatmul.mubr.bf16.gmra.mrb[0].mxu0 %v8074
      %v8250 = vpop.f32.mrb[0].mxu0
      %v8251 = vadd.f32 0.0, %v8250
      %v8252 = vpop.f32.mrb[0].mxu0
      %v8253 = vpop.f32.mrb[0].mxu0
      %v8254 = vadd.f32 0.0, %v8253
      %v8255 = vpop.f32.mrb[0].mxu0
      %8256 = vmatprep.mubr.bf16.mxu0 0
      %8257 = vmatmul.mubr.bf16.gmra.mrb[0].mxu0 %v8077
      %v8258 = vpop.f32.mrb[0].mxu0
      %v8259 = vadd.f32 0.0, %v8258
      %v8260 = vpop.f32.mrb[0].mxu0
      %v8261 = vpop.f32.mrb[0].mxu0
      %v8262 = vadd.f32 0.0, %v8261
      %v8263 = vpop.f32.mrb[0].mxu0
      %8264 = vmatprep.mubr.bf16.mxu0 0
      %8265 = vmatmul.mubr.bf16.gmra.mrb[0].mxu0 %v8080
      %v8266 = vpop.f32.mrb[0].mxu0
      %v8267 = vadd.f32 0.0, %v8266
      %v8268 = vpop.f32.mrb[0].mxu0
      %v8269 = vpop.f32.mrb[0].mxu0
      %v8270 = vadd.f32 0.0, %v8269
      %v8271 = vpop.f32.mrb[0].mxu0
      %8272 = vmatprep.mubr.bf16.mxu0 0
      %8273 = vmatmul.mubr.bf16.gmra.mrb[0].mxu0 %v8083
      %v8274 = vpop.f32.mrb[0].mxu0
      %v8275 = vadd.f32 0.0, %v8274
      %v8276 = vpop.f32.mrb[0].mxu0
      %v8277 = vpop.f32.mrb[0].mxu0
      %v8278 = vadd.f32 0.0, %v8277
      %v8279 = vpop.f32.mrb[0].mxu0
      %8280 = vmatprep.mubr.bf16.mxu0 0
      %8281 = vmatmul.mubr.bf16.gmra.mrb[0].mxu0 %v8086
      %v8282 = vpop.f32.mrb[0].mxu0
      %v8283 = vadd.f32 0.0, %v8282
      %v8284 = vpop.f32.mrb[0].mxu0
      %v8285 = vpop.f32.mrb[0].mxu0
      %v8286 = vpop.f32.mrb[0].mxu0
      %8287 = vdwg.mxu0
      %v8288 = vadd.f32 %v7848, %v8123
      %v8289 = vadd.f32 %v7849, %v8126
      %v8290 = vadd.f32 %v7850, %v8131
      %v8291 = vadd.f32 %v7851, %v8134
      %v8292 = vadd.f32 %v7852, %v8139
      %v8293 = vadd.f32 %v7853, %v8142
      %v8294 = vadd.f32 %v7854, %v8147
      %v8295 = vadd.f32 %v7855, %v8150
      %v8296 = vadd.f32 %v7856, %v8155
      %v8297 = vadd.f32 %v7857, %v8158
      %v8298 = vadd.f32 %v7858, %v8163
      %v8299 = vadd.f32 %v7859, %v8166
      %v8300 = vadd.f32 %v7860, %v8171
      %v8301 = vadd.f32 %v7861, %v8174
      %v8302 = vadd.f32 %v7862, %v8179
      %v8303 = vadd.f32 %v7863, %v8182
      %v8304 = vadd.f32 %v7864, %v8187
      %v8305 = vadd.f32 %v7865, %v8190
      %v8306 = vadd.f32 %v7866, %v8195
      %v8307 = vadd.f32 %v7867, %v8198
      %v8308 = vadd.f32 %v7868, %v8203
      %v8309 = vadd.f32 %v7869, %v8206
      %v8310 = vadd.f32 %v7870, %v8211
      %v8311 = vadd.f32 %v7871, %v8214
      %v8312 = vadd.f32 %v7872, %v8219
      %v8313 = vadd.f32 %v7873, %v8222
      %v8314 = vadd.f32 %v7874, %v8227
      %v8315 = vadd.f32 %v7875, %v8230
      %v8316 = vadd.f32 %v7876, %v8235
      %v8317 = vadd.f32 %v7877, %v8238
      %v8318 = vadd.f32 %v7878, %v8243
      %v8319 = vadd.f32 %v7879, %v8246
      %v8320 = vadd.f32 %v7880, %v8251
      %v8321 = vadd.f32 %v7881, %v8254
      %v8322 = vadd.f32 %v7882, %v8259
      %v8323 = vadd.f32 %v7883, %v8262
      %v8324 = vadd.f32 %v7884, %v8267
      %v8325 = vadd.f32 %v7885, %v8270
      %v8326 = vadd.f32 %v7886, %v8275
      %v8327 = vadd.f32 %v7887, %v8278
      %v8328 = vadd.f32 %v7888, %v8283
      %v8329 = vpack.c.bf16 %v7967, %v7968
      %v8330 = vpack.c.bf16 %v7966, %v7966
      %s8331 = scalar_lea.vmem %s6, 192
      %v8332 = vld [vmem:[%s8331] sm:$0xf]
      %v8333 = vld [vmem:[%s8331 + $0x4] sm:$0xf]
      %v8334 = vld [vmem:[%s8331 + $0x8] sm:$0xf]
      %v8335 = vld [vmem:[%s8331 + $0xc] sm:$0xf]
      %v8336 = vld [vmem:[%s8331 + $0x10] sm:$0xf]
      %v8337 = vld [vmem:[%s8331 + $0x14] sm:$0xf]
      %v8338 = vld [vmem:[%s8331 + $0x18] sm:$0xf]
      %v8339 = vld [vmem:[%s8331 + $0x1c] sm:$0xf]
      %v8348 = vunpack.c.l.b16 %v8332
      %v8349 = vunpack.c.l.b16 %v8333
      %v8350 = vunpack.c.l.b16 %v8334
      %v8351 = vunpack.c.l.b16 %v8335
      %v8352 = vunpack.c.l.b16 %v8336
      %v8353 = vunpack.c.l.b16 %v8337
      %v8354 = vunpack.c.l.b16 %v8338
      %v8355 = vunpack.c.l.b16 %v8339
      %v8356 = vpack.c.b16 %v8349, %v8348
      %v8357 = vpack.c.b16 %v8351, %v8350
      %v8358 = vpack.c.b16 %v8353, %v8352
      %v8359 = vpack.c.b16 %v8355, %v8354
      %v8365 = vsel %vm2485, %v8329, 0
      %v8368 = vsel %vm2485, %v8330, 0
      %8370 = vmatprep.subr.bf16.mxu0 0
      %8371 = vmatpush1.bf16.msra.mxu0 %v8356
      %8372 = vmatprep.subr.bf16.mxu0 0
      %8373 = vmatpush1.bf16.msra.mxu0 %v8357
      %8374 = vmatprep.subr.bf16.mxu0 0
      %8375 = vmatpush1.bf16.msra.mxu0 %v8358
      %8376 = vmatprep.subr.bf16.mxu0 0
      %8377 = vmatpush1.bf16.msra.mxu0 %v8359
      %8378 = vmatprep.subr.bf16.mxu0 0
      %8379 = vmatpush1.bf16.msra.mxu0 0
      %8380 = vmatprep.subr.bf16.mxu0 0
      %8381 = vmatpush1.bf16.msra.mxu0 0
      %8382 = vmatprep.subr.bf16.mxu0 0
      %8383 = vmatpush1.bf16.msra.mxu0 0
      %8384 = vmatprep.subr.bf16.mxu0 0
      %8385 = vmatpush1.bf16.msra.mxu0 0
      %8386 = vmatprep.subr.bf16.mxu0 0
      %8387 = vmatpush1.bf16.msra.mxu0 0
      %8388 = vmatprep.subr.bf16.mxu0 0
      %8389 = vmatpush1.bf16.msra.mxu0 0
      %8390 = vmatprep.subr.bf16.mxu0 0
      %8391 = vmatpush1.bf16.msra.mxu0 0
      %8392 = vmatprep.subr.bf16.mxu0 0
      %8393 = vmatpush1.bf16.msra.mxu0 0
      %8394 = vmatprep.subr.bf16.mxu0 0
      %8395 = vmatpush1.bf16.msra.mxu0 0
      %8396 = vmatprep.subr.bf16.mxu0 0
      %8397 = vmatpush1.bf16.msra.mxu0 0
      %8398 = vmatprep.subr.bf16.mxu0 0
      %8399 = vmatpush1.bf16.msra.mxu0 0
      %8400 = vmatprep.subr.bf16.mxu0 0
      %8401 = vmatpush1.bf16.msra.mxu0 0
      %8402 = vmatprep.mubr.bf16.mxu0 0
      %8403 = vmatmul.mubr.bf16.gmra.mrb[0].mxu0 %v8029
      %v8404 = vpop.f32.mrb[0].mxu0
      %v8405 = vadd.f32 0.0, %v8404
      %v8406 = vpop.f32.mrb[0].mxu0
      %v8407 = vpop.f32.mrb[0].mxu0
      %v8408 = vadd.f32 0.0, %v8407
      %v8409 = vpop.f32.mrb[0].mxu0
      %8410 = vmatprep.mubr.bf16.mxu0 0
      %8411 = vmatmul.mubr.bf16.gmra.mrb[0].mxu0 %v8032
      %v8412 = vpop.f32.mrb[0].mxu0
      %v8413 = vadd.f32 0.0, %v8412
      %v8414 = vpop.f32.mrb[0].mxu0
      %v8415 = vpop.f32.mrb[0].mxu0
      %v8416 = vadd.f32 0.0, %v8415
      %v8417 = vpop.f32.mrb[0].mxu0
      %8418 = vmatprep.mubr.bf16.mxu0 0
      %8419 = vmatmul.mubr.bf16.gmra.mrb[0].mxu0 %v8035
      %v8420 = vpop.f32.mrb[0].mxu0
      %v8421 = vadd.f32 0.0, %v8420
      %v8422 = vpop.f32.mrb[0].mxu0
      %v8423 = vpop.f32.mrb[0].mxu0
      %v8424 = vadd.f32 0.0, %v8423
      %v8425 = vpop.f32.mrb[0].mxu0
      %8426 = vmatprep.mubr.bf16.mxu0 0
      %8427 = vmatmul.mubr.bf16.gmra.mrb[0].mxu0 %v8038
      %v8428 = vpop.f32.mrb[0].mxu0
      %v8429 = vadd.f32 0.0, %v8428
      %v8430 = vpop.f32.mrb[0].mxu0
      %v8431 = vpop.f32.mrb[0].mxu0
      %v8432 = vadd.f32 0.0, %v8431
      %v8433 = vpop.f32.mrb[0].mxu0
      %8434 = vmatprep.mubr.bf16.mxu0 0
      %8435 = vmatmul.mubr.bf16.gmra.mrb[0].mxu0 %v8041
      %v8436 = vpop.f32.mrb[0].mxu0
      %v8437 = vadd.f32 0.0, %v8436
      %v8438 = vpop.f32.mrb[0].mxu0
      %v8439 = vpop.f32.mrb[0].mxu0
      %v8440 = vadd.f32 0.0, %v8439
      %v8441 = vpop.f32.mrb[0].mxu0
      %8442 = vmatprep.mubr.bf16.mxu0 0
      %8443 = vmatmul.mubr.bf16.gmra.mrb[0].mxu0 %v8044
      %v8444 = vpop.f32.mrb[0].mxu0
      %v8445 = vadd.f32 0.0, %v8444
      %v8446 = vpop.f32.mrb[0].mxu0
      %v8447 = vpop.f32.mrb[0].mxu0
      %v8448 = vadd.f32 0.0, %v8447
      %v8449 = vpop.f32.mrb[0].mxu0
      %8450 = vmatprep.mubr.bf16.mxu0 0
      %8451 = vmatmul.mubr.bf16.gmra.mrb[0].mxu0 %v8047
      %v8452 = vpop.f32.mrb[0].mxu0
      %v8453 = vadd.f32 0.0, %v8452
      %v8454 = vpop.f32.mrb[0].mxu0
      %v8455 = vpop.f32.mrb[0].mxu0
      %v8456 = vadd.f32 0.0, %v8455
      %v8457 = vpop.f32.mrb[0].mxu0
      %8458 = vmatprep.mubr.bf16.mxu0 0
      %8459 = vmatmul.mubr.bf16.gmra.mrb[0].mxu0 %v8050
      %v8460 = vpop.f32.mrb[0].mxu0
      %v8461 = vadd.f32 0.0, %v8460
      %v8462 = vpop.f32.mrb[0].mxu0
      %v8463 = vpop.f32.mrb[0].mxu0
      %v8464 = vadd.f32 0.0, %v8463
      %v8465 = vpop.f32.mrb[0].mxu0
      %8466 = vmatprep.mubr.bf16.mxu0 0
      %8467 = vmatmul.mubr.bf16.gmra.mrb[0].mxu0 %v8053
      %v8468 = vpop.f32.mrb[0].mxu0
      %v8469 = vadd.f32 0.0, %v8468
      %v8470 = vpop.f32.mrb[0].mxu0
      %v8471 = vpop.f32.mrb[0].mxu0
      %v8472 = vadd.f32 0.0, %v8471
      %v8473 = vpop.f32.mrb[0].mxu0
      %8474 = vmatprep.mubr.bf16.mxu0 0
      %8475 = vmatmul.mubr.bf16.gmra.mrb[0].mxu0 %v8056
      %v8476 = vpop.f32.mrb[0].mxu0
      %v8477 = vadd.f32 0.0, %v8476
      %v8478 = vpop.f32.mrb[0].mxu0
      %v8479 = vpop.f32.mrb[0].mxu0
      %v8480 = vadd.f32 0.0, %v8479
      %v8481 = vpop.f32.mrb[0].mxu0
      %8482 = vmatprep.mubr.bf16.mxu0 0
      %8483 = vmatmul.mubr.bf16.gmra.mrb[0].mxu0 %v8059
      %v8484 = vpop.f32.mrb[0].mxu0
      %v8485 = vadd.f32 0.0, %v8484
      %v8486 = vpop.f32.mrb[0].mxu0
      %v8487 = vpop.f32.mrb[0].mxu0
      %v8488 = vadd.f32 0.0, %v8487
      %v8489 = vpop.f32.mrb[0].mxu0
      %8490 = vmatprep.mubr.bf16.mxu0 0
      %8491 = vmatmul.mubr.bf16.gmra.mrb[0].mxu0 %v8062
      %v8492 = vpop.f32.mrb[0].mxu0
      %v8493 = vadd.f32 0.0, %v8492
      %v8494 = vpop.f32.mrb[0].mxu0
      %v8495 = vpop.f32.mrb[0].mxu0
      %v8496 = vadd.f32 0.0, %v8495
      %v8497 = vpop.f32.mrb[0].mxu0
      %8498 = vmatprep.mubr.bf16.mxu0 0
      %8499 = vmatmul.mubr.bf16.gmra.mrb[0].mxu0 %v8065
      %v8500 = vpop.f32.mrb[0].mxu0
      %v8501 = vadd.f32 0.0, %v8500
      %v8502 = vpop.f32.mrb[0].mxu0
      %v8503 = vpop.f32.mrb[0].mxu0
      %v8504 = vadd.f32 0.0, %v8503
      %v8505 = vpop.f32.mrb[0].mxu0
      %8506 = vmatprep.mubr.bf16.mxu0 0
      %8507 = vmatmul.mubr.bf16.gmra.mrb[0].mxu0 %v8068
      %v8508 = vpop.f32.mrb[0].mxu0
      %v8509 = vadd.f32 0.0, %v8508
      %v8510 = vpop.f32.mrb[0].mxu0
      %v8511 = vpop.f32.mrb[0].mxu0
      %v8512 = vadd.f32 0.0, %v8511
      %v8513 = vpop.f32.mrb[0].mxu0
      %8514 = vmatprep.mubr.bf16.mxu0 0
      %8515 = vmatmul.mubr.bf16.gmra.mrb[0].mxu0 %v8071
      %v8516 = vpop.f32.mrb[0].mxu0
      %v8517 = vadd.f32 0.0, %v8516
      %v8518 = vpop.f32.mrb[0].mxu0
      %v8519 = vpop.f32.mrb[0].mxu0
      %v8520 = vadd.f32 0.0, %v8519
      %v8521 = vpop.f32.mrb[0].mxu0
      %8522 = vmatprep.mubr.bf16.mxu0 0
      %8523 = vmatmul.mubr.bf16.gmra.mrb[0].mxu0 %v8074
      %v8524 = vpop.f32.mrb[0].mxu0
      %v8525 = vadd.f32 0.0, %v8524
      %v8526 = vpop.f32.mrb[0].mxu0
      %v8527 = vpop.f32.mrb[0].mxu0
      %v8528 = vadd.f32 0.0, %v8527
      %v8529 = vpop.f32.mrb[0].mxu0
      %8530 = vmatprep.mubr.bf16.mxu0 0
      %8531 = vmatmul.mubr.bf16.gmra.mrb[0].mxu0 %v8077
      %v8532 = vpop.f32.mrb[0].mxu0
      %v8533 = vadd.f32 0.0, %v8532
      %v8534 = vpop.f32.mrb[0].mxu0
      %v8535 = vpop.f32.mrb[0].mxu0
      %v8536 = vadd.f32 0.0, %v8535
      %v8537 = vpop.f32.mrb[0].mxu0
      %8538 = vmatprep.mubr.bf16.mxu0 0
      %8539 = vmatmul.mubr.bf16.gmra.mrb[0].mxu0 %v8080
      %v8540 = vpop.f32.mrb[0].mxu0
      %v8541 = vadd.f32 0.0, %v8540
      %v8542 = vpop.f32.mrb[0].mxu0
      %v8543 = vpop.f32.mrb[0].mxu0
      %v8544 = vadd.f32 0.0, %v8543
      %v8545 = vpop.f32.mrb[0].mxu0
      %8546 = vmatprep.mubr.bf16.mxu0 0
      %8547 = vmatmul.mubr.bf16.gmra.mrb[0].mxu0 %v8083
      %v8548 = vpop.f32.mrb[0].mxu0
      %v8549 = vadd.f32 0.0, %v8548
      %v8550 = vpop.f32.mrb[0].mxu0
      %v8551 = vpop.f32.mrb[0].mxu0
      %v8552 = vadd.f32 0.0, %v8551
      %v8553 = vpop.f32.mrb[0].mxu0
      %8554 = vmatprep.mubr.bf16.mxu0 0
      %8555 = vmatmul.mubr.bf16.gmra.mrb[0].mxu0 %v8365
      %v8556 = vpop.f32.mrb[0].mxu0
      %v8557 = vadd.f32 0.0, %v8556
      %v8558 = vpop.f32.mrb[0].mxu0
      %v8559 = vpop.f32.mrb[0].mxu0
      %v8560 = vadd.f32 0.0, %v8559
      %v8561 = vpop.f32.mrb[0].mxu0
      %8562 = vmatprep.mubr.bf16.mxu0 0
      %8563 = vmatmul.mubr.bf16.gmra.mrb[0].mxu0 %v8368
      %v8564 = vpop.f32.mrb[0].mxu0
      %v8565 = vadd.f32 0.0, %v8564
      %v8566 = vpop.f32.mrb[0].mxu0
      %v8567 = vpop.f32.mrb[0].mxu0
      %v8568 = vpop.f32.mrb[0].mxu0
      %8569 = vdwg.mxu0
      %v8570 = vadd.f32 %v8288, %v8405
      %v8571 = vadd.f32 %v8289, %v8408
      %v8572 = vadd.f32 %v8290, %v8413
      %v8573 = vadd.f32 %v8291, %v8416
      %v8574 = vadd.f32 %v8292, %v8421
      %v8575 = vadd.f32 %v8293, %v8424
      %v8576 = vadd.f32 %v8294, %v8429
      %v8577 = vadd.f32 %v8295, %v8432
      %v8578 = vadd.f32 %v8296, %v8437
      %v8579 = vadd.f32 %v8297, %v8440
      %v8580 = vadd.f32 %v8298, %v8445
      %v8581 = vadd.f32 %v8299, %v8448
      %v8582 = vadd.f32 %v8300, %v8453
      %v8583 = vadd.f32 %v8301, %v8456
      %v8584 = vadd.f32 %v8302, %v8461
      %v8585 = vadd.f32 %v8303, %v8464
      %v8586 = vadd.f32 %v8304, %v8469
      %v8587 = vadd.f32 %v8305, %v8472
      %v8588 = vadd.f32 %v8306, %v8477
      %v8589 = vadd.f32 %v8307, %v8480
      %v8590 = vadd.f32 %v8308, %v8485
      %v8591 = vadd.f32 %v8309, %v8488
      %v8592 = vadd.f32 %v8310, %v8493
      %v8593 = vadd.f32 %v8311, %v8496
      %v8594 = vadd.f32 %v8312, %v8501
      %v8595 = vadd.f32 %v8313, %v8504
      %v8596 = vadd.f32 %v8314, %v8509
      %v8597 = vadd.f32 %v8315, %v8512
      %v8598 = vadd.f32 %v8316, %v8517
      %v8599 = vadd.f32 %v8317, %v8520
      %v8600 = vadd.f32 %v8318, %v8525
      %v8601 = vadd.f32 %v8319, %v8528
      %v8602 = vadd.f32 %v8320, %v8533
      %v8603 = vadd.f32 %v8321, %v8536
      %v8604 = vadd.f32 %v8322, %v8541
      %v8605 = vadd.f32 %v8323, %v8544
      %v8606 = vadd.f32 %v8324, %v8549
      %v8607 = vadd.f32 %v8325, %v8552
      %v8608 = vadd.f32 %v8326, %v8557
      %v8609 = vadd.f32 %v8327, %v8560
      %v8610 = vadd.f32 %v8328, %v8565
      %v8611 = vrot.slane %v5971, 5
      %v8612 = vrot.slane %v5972, 5
      %v8613 = vrot.slane %v5973, 5
      %v8614 = vrot.slane %v5974, 5
      %v8615 = vrot.slane %v5975, 5
      %v8616 = vrot.slane %v5976, 5
      %v8617 = vrot.slane %v5977, 5
      %v8618 = vrot.slane %v5978, 5
      %v8619 = vrot.slane %v5979, 5
      %v8620 = vrot.slane %v5980, 5
      %v8621 = vrot.slane %v5981, 5
      %v8622 = vrot.slane %v5982, 5
      %v8623 = vrot.slane %v5983, 5
      %v8624 = vrot.slane %v5984, 5
      %v8625 = vrot.slane %v5985, 5
      %v8626 = vrot.slane %v5986, 5
      %v8627 = vrot.slane %v5987, 5
      %v8628 = vrot.slane %v5988, 5
      %v8629 = vrot.slane %v5989, 5
      %v8630 = vrot.slane %v5990, 5
      %v8631 = vrot.slane %v5991, 5
      %v8632 = vrot.slane %v5992, 5
      %v8633 = vrot.slane %v5993, 5
      %v8634 = vrot.slane %v5994, 5
      %v8635 = vrot.slane %v5995, 5
      %v8636 = vrot.slane %v5996, 5
      %v8637 = vrot.slane %v5997, 5
      %v8638 = vrot.slane %v5998, 5
      %v8639 = vrot.slane %v5999, 5
      %v8640 = vrot.slane %v6000, 5
      %v8641 = vrot.slane %v6001, 5
      %v8642 = vrot.slane %v6002, 5
      %v8643 = vrot.slane %v6003, 5
      %v8644 = vrot.slane %v6004, 5
      %v8645 = vrot.slane %v6005, 5
      %v8646 = vrot.slane %v6006, 5
      %v8647 = vrot.slane %v6007, 5
      %v8648 = vrot.slane %v6008, 5
      %v8649 = vrot.slane %v6009, 5
      %v8650 = vrot.slane %v6010, 5
      %v8651 = vrot.slane %v6011, 5
      %v8652 = vsel %vm1598, %v8650, %v8651
      %v8653 = vsel %vm1598, %v8649, %v8650
      %v8654 = vsel %vm1598, %v8648, %v8649
      %v8655 = vsel %vm1598, %v8647, %v8648
      %v8656 = vsel %vm1598, %v8646, %v8647
      %v8657 = vsel %vm1598, %v8645, %v8646
      %v8658 = vsel %vm1598, %v8644, %v8645
      %v8659 = vsel %vm1598, %v8643, %v8644
      %v8660 = vsel %vm1598, %v8642, %v8643
      %v8661 = vsel %vm1598, %v8641, %v8642
      %v8662 = vsel %vm1598, %v8640, %v8641
      %v8663 = vsel %vm1598, %v8639, %v8640
      %v8664 = vsel %vm1598, %v8638, %v8639
      %v8665 = vsel %vm1598, %v8637, %v8638
      %v8666 = vsel %vm1598, %v8636, %v8637
      %v8667 = vsel %vm1598, %v8635, %v8636
      %v8668 = vsel %vm1598, %v8634, %v8635
      %v8669 = vsel %vm1598, %v8633, %v8634
      %v8670 = vsel %vm1598, %v8632, %v8633
      %v8671 = vsel %vm1598, %v8631, %v8632
      %v8672 = vsel %vm1598, %v8630, %v8631
      %v8673 = vsel %vm1598, %v8629, %v8630
      %v8674 = vsel %vm1598, %v8628, %v8629
      %v8675 = vsel %vm1598, %v8627, %v8628
      %v8676 = vsel %vm1598, %v8626, %v8627
      %v8677 = vsel %vm1598, %v8625, %v8626
      %v8678 = vsel %vm1598, %v8624, %v8625
      %v8679 = vsel %vm1598, %v8623, %v8624
      %v8680 = vsel %vm1598, %v8622, %v8623
      %v8681 = vsel %vm1598, %v8621, %v8622
      %v8682 = vsel %vm1598, %v8620, %v8621
      %v8683 = vsel %vm1598, %v8619, %v8620
      %v8684 = vsel %vm1598, %v8618, %v8619
      %v8685 = vsel %vm1598, %v8617, %v8618
      %v8686 = vsel %vm1598, %v8616, %v8617
      %v8687 = vsel %vm1598, %v8615, %v8616
      %v8688 = vsel %vm1598, %v8614, %v8615
      %v8689 = vsel %vm1598, %v8613, %v8614
      %v8690 = vsel %vm1598, %v8612, %v8613
      %v8691 = vsel %vm1598, %v8611, %v8612
      %v8692 = vsel %vm1598, %v8651, %v8611
      %v8693 = vpack.c.bf16 %v8686, %v8687
      %v8694 = vpack.c.bf16 %v8684, %v8685
      %v8695 = vpack.c.bf16 %v8682, %v8683
      %v8696 = vpack.c.bf16 %v8680, %v8681
      %v8697 = vpack.c.bf16 %v8678, %v8679
      %v8698 = vpack.c.bf16 %v8676, %v8677
      %v8699 = vpack.c.bf16 %v8674, %v8675
      %v8700 = vpack.c.bf16 %v8672, %v8673
      %v8701 = vpack.c.bf16 %v8670, %v8671
      %v8702 = vpack.c.bf16 %v8668, %v8669
      %v8703 = vpack.c.bf16 %v8666, %v8667
      %v8704 = vpack.c.bf16 %v8664, %v8665
      %v8705 = vpack.c.bf16 %v8662, %v8663
      %v8706 = vpack.c.bf16 %v8660, %v8661
      %v8707 = vpack.c.bf16 %v8658, %v8659
      %v8708 = vpack.c.bf16 %v8656, %v8657
      %v8709 = vpack.c.bf16 %v8654, %v8655
      %v8710 = vpack.c.bf16 %v8652, %v8653
      %v8711 = vpack.c.bf16 %v8691, %v8692
      %v8712 = vpack.c.bf16 %v8689, %v8690
      %v8713 = vpack.c.bf16 %v8688, %v8688
      %s8714 = scalar_lea.vmem %s6, 224
      %v8715 = vld [vmem:[%s8714] sm:$0xf]
      %v8716 = vld [vmem:[%s8714 + $0x4] sm:$0xf]
      %v8717 = vld [vmem:[%s8714 + $0x8] sm:$0xf]
      %v8718 = vld [vmem:[%s8714 + $0xc] sm:$0xf]
      %v8719 = vld [vmem:[%s8714 + $0x10] sm:$0xf]
      %v8720 = vld [vmem:[%s8714 + $0x14] sm:$0xf]
      %v8721 = vld [vmem:[%s8714 + $0x18] sm:$0xf]
      %v8722 = vld [vmem:[%s8714 + $0x1c] sm:$0xf]
      %v8731 = vunpack.c.l.b16 %v8715
      %v8732 = vunpack.c.l.b16 %v8716
      %v8733 = vunpack.c.l.b16 %v8717
      %v8734 = vunpack.c.l.b16 %v8718
      %v8735 = vunpack.c.l.b16 %v8719
      %v8736 = vunpack.c.l.b16 %v8720
      %v8737 = vunpack.c.l.b16 %v8721
      %v8738 = vunpack.c.l.b16 %v8722
      %v8739 = vpack.c.b16 %v8732, %v8731
      %v8740 = vpack.c.b16 %v8734, %v8733
      %v8741 = vpack.c.b16 %v8736, %v8735
      %v8742 = vpack.c.b16 %v8738, %v8737
      %v8748 = vsel %vm2485, %v8693, 0
      %v8751 = vsel %vm2485, %v8694, 0
      %v8754 = vsel %vm2485, %v8695, 0
      %v8757 = vsel %vm2485, %v8696, 0
      %v8760 = vsel %vm2485, %v8697, 0
      %v8763 = vsel %vm2485, %v8698, 0
      %v8766 = vsel %vm2485, %v8699, 0
      %v8769 = vsel %vm2485, %v8700, 0
      %v8772 = vsel %vm2485, %v8701, 0
      %v8775 = vsel %vm2485, %v8702, 0
      %v8778 = vsel %vm2485, %v8703, 0
      %v8781 = vsel %vm2485, %v8704, 0
      %v8784 = vsel %vm2485, %v8705, 0
      %v8787 = vsel %vm2485, %v8706, 0
      %v8790 = vsel %vm2485, %v8707, 0
      %v8793 = vsel %vm2485, %v8708, 0
      %v8796 = vsel %vm2485, %v8709, 0
      %v8799 = vsel %vm2485, %v8710, 0
      %v8802 = vsel %vm2485, %v8711, 0
      %v8805 = vsel %vm2485, %v8712, 0
      %v8808 = vsel %vm2485, %v8713, 0
      %8810 = vmatprep.subr.bf16.mxu0 0
      %8811 = vmatpush1.bf16.msra.mxu0 %v8739
      %8812 = vmatprep.subr.bf16.mxu0 0
      %8813 = vmatpush1.bf16.msra.mxu0 %v8740
      %8814 = vmatprep.subr.bf16.mxu0 0
      %8815 = vmatpush1.bf16.msra.mxu0 %v8741
      %8816 = vmatprep.subr.bf16.mxu0 0
      %8817 = vmatpush1.bf16.msra.mxu0 %v8742
      %8818 = vmatprep.subr.bf16.mxu0 0
      %8819 = vmatpush1.bf16.msra.mxu0 0
      %8820 = vmatprep.subr.bf16.mxu0 0
      %8821 = vmatpush1.bf16.msra.mxu0 0
      %8822 = vmatprep.subr.bf16.mxu0 0
      %8823 = vmatpush1.bf16.msra.mxu0 0
      %8824 = vmatprep.subr.bf16.mxu0 0
      %8825 = vmatpush1.bf16.msra.mxu0 0
      %8826 = vmatprep.subr.bf16.mxu0 0
      %8827 = vmatpush1.bf16.msra.mxu0 0
      %8828 = vmatprep.subr.bf16.mxu0 0
      %8829 = vmatpush1.bf16.msra.mxu0 0
      %8830 = vmatprep.subr.bf16.mxu0 0
      %8831 = vmatpush1.bf16.msra.mxu0 0
      %8832 = vmatprep.subr.bf16.mxu0 0
      %8833 = vmatpush1.bf16.msra.mxu0 0
      %8834 = vmatprep.subr.bf16.mxu0 0
      %8835 = vmatpush1.bf16.msra.mxu0 0
      %8836 = vmatprep.subr.bf16.mxu0 0
      %8837 = vmatpush1.bf16.msra.mxu0 0
      %8838 = vmatprep.subr.bf16.mxu0 0
      %8839 = vmatpush1.bf16.msra.mxu0 0
      %8840 = vmatprep.subr.bf16.mxu0 0
      %8841 = vmatpush1.bf16.msra.mxu0 0
      %8842 = vmatprep.mubr.bf16.mxu0 0
      %8843 = vmatmul.mubr.bf16.gmra.mrb[0].mxu0 %v8748
      %v8844 = vpop.f32.mrb[0].mxu0
      %v8845 = vadd.f32 0.0, %v8844
      %v8846 = vpop.f32.mrb[0].mxu0
      %v8847 = vpop.f32.mrb[0].mxu0
      %v8848 = vadd.f32 0.0, %v8847
      %v8849 = vpop.f32.mrb[0].mxu0
      %8850 = vmatprep.mubr.bf16.mxu0 0
      %8851 = vmatmul.mubr.bf16.gmra.mrb[0].mxu0 %v8751
      %v8852 = vpop.f32.mrb[0].mxu0
      %v8853 = vadd.f32 0.0, %v8852
      %v8854 = vpop.f32.mrb[0].mxu0
      %v8855 = vpop.f32.mrb[0].mxu0
      %v8856 = vadd.f32 0.0, %v8855
      %v8857 = vpop.f32.mrb[0].mxu0
      %8858 = vmatprep.mubr.bf16.mxu0 0
      %8859 = vmatmul.mubr.bf16.gmra.mrb[0].mxu0 %v8754
      %v8860 = vpop.f32.mrb[0].mxu0
      %v8861 = vadd.f32 0.0, %v8860
      %v8862 = vpop.f32.mrb[0].mxu0
      %v8863 = vpop.f32.mrb[0].mxu0
      %v8864 = vadd.f32 0.0, %v8863
      %v8865 = vpop.f32.mrb[0].mxu0
      %8866 = vmatprep.mubr.bf16.mxu0 0
      %8867 = vmatmul.mubr.bf16.gmra.mrb[0].mxu0 %v8757
      %v8868 = vpop.f32.mrb[0].mxu0
      %v8869 = vadd.f32 0.0, %v8868
      %v8870 = vpop.f32.mrb[0].mxu0
      %v8871 = vpop.f32.mrb[0].mxu0
      %v8872 = vadd.f32 0.0, %v8871
      %v8873 = vpop.f32.mrb[0].mxu0
      %8874 = vmatprep.mubr.bf16.mxu0 0
      %8875 = vmatmul.mubr.bf16.gmra.mrb[0].mxu0 %v8760
      %v8876 = vpop.f32.mrb[0].mxu0
      %v8877 = vadd.f32 0.0, %v8876
      %v8878 = vpop.f32.mrb[0].mxu0
      %v8879 = vpop.f32.mrb[0].mxu0
      %v8880 = vadd.f32 0.0, %v8879
      %v8881 = vpop.f32.mrb[0].mxu0
      %8882 = vmatprep.mubr.bf16.mxu0 0
      %8883 = vmatmul.mubr.bf16.gmra.mrb[0].mxu0 %v8763
      %v8884 = vpop.f32.mrb[0].mxu0
      %v8885 = vadd.f32 0.0, %v8884
      %v8886 = vpop.f32.mrb[0].mxu0
      %v8887 = vpop.f32.mrb[0].mxu0
      %v8888 = vadd.f32 0.0, %v8887
      %v8889 = vpop.f32.mrb[0].mxu0
      %8890 = vmatprep.mubr.bf16.mxu0 0
      %8891 = vmatmul.mubr.bf16.gmra.mrb[0].mxu0 %v8766
      %v8892 = vpop.f32.mrb[0].mxu0
      %v8893 = vadd.f32 0.0, %v8892
      %v8894 = vpop.f32.mrb[0].mxu0
      %v8895 = vpop.f32.mrb[0].mxu0
      %v8896 = vadd.f32 0.0, %v8895
      %v8897 = vpop.f32.mrb[0].mxu0
      %8898 = vmatprep.mubr.bf16.mxu0 0
      %8899 = vmatmul.mubr.bf16.gmra.mrb[0].mxu0 %v8769
      %v8900 = vpop.f32.mrb[0].mxu0
      %v8901 = vadd.f32 0.0, %v8900
      %v8902 = vpop.f32.mrb[0].mxu0
      %v8903 = vpop.f32.mrb[0].mxu0
      %v8904 = vadd.f32 0.0, %v8903
      %v8905 = vpop.f32.mrb[0].mxu0
      %8906 = vmatprep.mubr.bf16.mxu0 0
      %8907 = vmatmul.mubr.bf16.gmra.mrb[0].mxu0 %v8772
      %v8908 = vpop.f32.mrb[0].mxu0
      %v8909 = vadd.f32 0.0, %v8908
      %v8910 = vpop.f32.mrb[0].mxu0
      %v8911 = vpop.f32.mrb[0].mxu0
      %v8912 = vadd.f32 0.0, %v8911
      %v8913 = vpop.f32.mrb[0].mxu0
      %8914 = vmatprep.mubr.bf16.mxu0 0
      %8915 = vmatmul.mubr.bf16.gmra.mrb[0].mxu0 %v8775
      %v8916 = vpop.f32.mrb[0].mxu0
      %v8917 = vadd.f32 0.0, %v8916
      %v8918 = vpop.f32.mrb[0].mxu0
      %v8919 = vpop.f32.mrb[0].mxu0
      %v8920 = vadd.f32 0.0, %v8919
      %v8921 = vpop.f32.mrb[0].mxu0
      %8922 = vmatprep.mubr.bf16.mxu0 0
      %8923 = vmatmul.mubr.bf16.gmra.mrb[0].mxu0 %v8778
      %v8924 = vpop.f32.mrb[0].mxu0
      %v8925 = vadd.f32 0.0, %v8924
      %v8926 = vpop.f32.mrb[0].mxu0
      %v8927 = vpop.f32.mrb[0].mxu0
      %v8928 = vadd.f32 0.0, %v8927
      %v8929 = vpop.f32.mrb[0].mxu0
      %8930 = vmatprep.mubr.bf16.mxu0 0
      %8931 = vmatmul.mubr.bf16.gmra.mrb[0].mxu0 %v8781
      %v8932 = vpop.f32.mrb[0].mxu0
      %v8933 = vadd.f32 0.0, %v8932
      %v8934 = vpop.f32.mrb[0].mxu0
      %v8935 = vpop.f32.mrb[0].mxu0
      %v8936 = vadd.f32 0.0, %v8935
      %v8937 = vpop.f32.mrb[0].mxu0
      %8938 = vmatprep.mubr.bf16.mxu0 0
      %8939 = vmatmul.mubr.bf16.gmra.mrb[0].mxu0 %v8784
      %v8940 = vpop.f32.mrb[0].mxu0
      %v8941 = vadd.f32 0.0, %v8940
      %v8942 = vpop.f32.mrb[0].mxu0
      %v8943 = vpop.f32.mrb[0].mxu0
      %v8944 = vadd.f32 0.0, %v8943
      %v8945 = vpop.f32.mrb[0].mxu0
      %8946 = vmatprep.mubr.bf16.mxu0 0
      %8947 = vmatmul.mubr.bf16.gmra.mrb[0].mxu0 %v8787
      %v8948 = vpop.f32.mrb[0].mxu0
      %v8949 = vadd.f32 0.0, %v8948
      %v8950 = vpop.f32.mrb[0].mxu0
      %v8951 = vpop.f32.mrb[0].mxu0
      %v8952 = vadd.f32 0.0, %v8951
      %v8953 = vpop.f32.mrb[0].mxu0
      %8954 = vmatprep.mubr.bf16.mxu0 0
      %8955 = vmatmul.mubr.bf16.gmra.mrb[0].mxu0 %v8790
      %v8956 = vpop.f32.mrb[0].mxu0
      %v8957 = vadd.f32 0.0, %v8956
      %v8958 = vpop.f32.mrb[0].mxu0
      %v8959 = vpop.f32.mrb[0].mxu0
      %v8960 = vadd.f32 0.0, %v8959
      %v8961 = vpop.f32.mrb[0].mxu0
      %8962 = vmatprep.mubr.bf16.mxu0 0
      %8963 = vmatmul.mubr.bf16.gmra.mrb[0].mxu0 %v8793
      %v8964 = vpop.f32.mrb[0].mxu0
      %v8965 = vadd.f32 0.0, %v8964
      %v8966 = vpop.f32.mrb[0].mxu0
      %v8967 = vpop.f32.mrb[0].mxu0
      %v8968 = vadd.f32 0.0, %v8967
      %v8969 = vpop.f32.mrb[0].mxu0
      %8970 = vmatprep.mubr.bf16.mxu0 0
      %8971 = vmatmul.mubr.bf16.gmra.mrb[0].mxu0 %v8796
      %v8972 = vpop.f32.mrb[0].mxu0
      %v8973 = vadd.f32 0.0, %v8972
      %v8974 = vpop.f32.mrb[0].mxu0
      %v8975 = vpop.f32.mrb[0].mxu0
      %v8976 = vadd.f32 0.0, %v8975
      %v8977 = vpop.f32.mrb[0].mxu0
      %8978 = vmatprep.mubr.bf16.mxu0 0
      %8979 = vmatmul.mubr.bf16.gmra.mrb[0].mxu0 %v8799
      %v8980 = vpop.f32.mrb[0].mxu0
      %v8981 = vadd.f32 0.0, %v8980
      %v8982 = vpop.f32.mrb[0].mxu0
      %v8983 = vpop.f32.mrb[0].mxu0
      %v8984 = vadd.f32 0.0, %v8983
      %v8985 = vpop.f32.mrb[0].mxu0
      %8986 = vmatprep.mubr.bf16.mxu0 0
      %8987 = vmatmul.mubr.bf16.gmra.mrb[0].mxu0 %v8802
      %v8988 = vpop.f32.mrb[0].mxu0
      %v8989 = vadd.f32 0.0, %v8988
      %v8990 = vpop.f32.mrb[0].mxu0
      %v8991 = vpop.f32.mrb[0].mxu0
      %v8992 = vadd.f32 0.0, %v8991
      %v8993 = vpop.f32.mrb[0].mxu0
      %8994 = vmatprep.mubr.bf16.mxu0 0
      %8995 = vmatmul.mubr.bf16.gmra.mrb[0].mxu0 %v8805
      %v8996 = vpop.f32.mrb[0].mxu0
      %v8997 = vadd.f32 0.0, %v8996
      %v8998 = vpop.f32.mrb[0].mxu0
      %v8999 = vpop.f32.mrb[0].mxu0
      %v9000 = vadd.f32 0.0, %v8999
      %v9001 = vpop.f32.mrb[0].mxu0
      %9002 = vmatprep.mubr.bf16.mxu0 0
      %9003 = vmatmul.mubr.bf16.gmra.mrb[0].mxu0 %v8808
      %v9004 = vpop.f32.mrb[0].mxu0
      %v9005 = vadd.f32 0.0, %v9004
      %v9006 = vpop.f32.mrb[0].mxu0
      %v9007 = vpop.f32.mrb[0].mxu0
      %v9008 = vpop.f32.mrb[0].mxu0
      %9009 = vdwg.mxu0
      %v9010 = vadd.f32 %v8570, %v8845
      %v9011 = vadd.f32 %v8571, %v8848
      %v9012 = vadd.f32 %v8572, %v8853
      %v9013 = vadd.f32 %v8573, %v8856
      %v9014 = vadd.f32 %v8574, %v8861
      %v9015 = vadd.f32 %v8575, %v8864
      %v9016 = vadd.f32 %v8576, %v8869
      %v9017 = vadd.f32 %v8577, %v8872
      %v9018 = vadd.f32 %v8578, %v8877
      %v9019 = vadd.f32 %v8579, %v8880
      %v9020 = vadd.f32 %v8580, %v8885
      %v9021 = vadd.f32 %v8581, %v8888
      %v9022 = vadd.f32 %v8582, %v8893
      %v9023 = vadd.f32 %v8583, %v8896
      %v9024 = vadd.f32 %v8584, %v8901
      %v9025 = vadd.f32 %v8585, %v8904
      %v9026 = vadd.f32 %v8586, %v8909
      %v9027 = vadd.f32 %v8587, %v8912
      %v9028 = vadd.f32 %v8588, %v8917
      %v9029 = vadd.f32 %v8589, %v8920
      %v9030 = vadd.f32 %v8590, %v8925
      %v9031 = vadd.f32 %v8591, %v8928
      %v9032 = vadd.f32 %v8592, %v8933
      %v9033 = vadd.f32 %v8593, %v8936
      %v9034 = vadd.f32 %v8594, %v8941
      %v9035 = vadd.f32 %v8595, %v8944
      %v9036 = vadd.f32 %v8596, %v8949
      %v9037 = vadd.f32 %v8597, %v8952
      %v9038 = vadd.f32 %v8598, %v8957
      %v9039 = vadd.f32 %v8599, %v8960
      %v9040 = vadd.f32 %v8600, %v8965
      %v9041 = vadd.f32 %v8601, %v8968
      %v9042 = vadd.f32 %v8602, %v8973
      %v9043 = vadd.f32 %v8603, %v8976
      %v9044 = vadd.f32 %v8604, %v8981
      %v9045 = vadd.f32 %v8605, %v8984
      %v9046 = vadd.f32 %v8606, %v8989
      %v9047 = vadd.f32 %v8607, %v8992
      %v9048 = vadd.f32 %v8608, %v8997
      %v9049 = vadd.f32 %v8609, %v9000
      %v9050 = vadd.f32 %v8610, %v9005
      %v9051 = vrot.slane %v5971, 6
      %v9052 = vrot.slane %v5972, 6
      %v9053 = vrot.slane %v5973, 6
      %v9054 = vrot.slane %v5974, 6
      %v9055 = vrot.slane %v5975, 6
      %v9056 = vrot.slane %v5976, 6
      %v9057 = vrot.slane %v5977, 6
      %v9058 = vrot.slane %v5978, 6
      %v9059 = vrot.slane %v5979, 6
      %v9060 = vrot.slane %v5980, 6
      %v9061 = vrot.slane %v5981, 6
      %v9062 = vrot.slane %v5982, 6
      %v9063 = vrot.slane %v5983, 6
      %v9064 = vrot.slane %v5984, 6
      %v9065 = vrot.slane %v5985, 6
      %v9066 = vrot.slane %v5986, 6
      %v9067 = vrot.slane %v5987, 6
      %v9068 = vrot.slane %v5988, 6
      %v9069 = vrot.slane %v5989, 6
      %v9070 = vrot.slane %v5990, 6
      %v9071 = vrot.slane %v5991, 6
      %v9072 = vrot.slane %v5992, 6
      %v9073 = vrot.slane %v5993, 6
      %v9074 = vrot.slane %v5994, 6
      %v9075 = vrot.slane %v5995, 6
      %v9076 = vrot.slane %v5996, 6
      %v9077 = vrot.slane %v5997, 6
      %v9078 = vrot.slane %v5998, 6
      %v9079 = vrot.slane %v5999, 6
      %v9080 = vrot.slane %v6000, 6
      %v9081 = vrot.slane %v6001, 6
      %v9082 = vrot.slane %v6002, 6
      %v9083 = vrot.slane %v6003, 6
      %v9084 = vrot.slane %v6004, 6
      %v9085 = vrot.slane %v6005, 6
      %v9086 = vrot.slane %v6006, 6
      %v9087 = vrot.slane %v6007, 6
      %v9088 = vrot.slane %v6008, 6
      %v9089 = vrot.slane %v6009, 6
      %v9090 = vrot.slane %v6010, 6
      %v9091 = vrot.slane %v6011, 6
      %v9092 = vsel %vm1771, %v9090, %v9091
      %v9093 = vsel %vm1771, %v9089, %v9090
      %v9094 = vsel %vm1771, %v9088, %v9089
      %v9095 = vsel %vm1771, %v9087, %v9088
      %v9096 = vsel %vm1771, %v9086, %v9087
      %v9097 = vsel %vm1771, %v9085, %v9086
      %v9098 = vsel %vm1771, %v9084, %v9085
      %v9099 = vsel %vm1771, %v9083, %v9084
      %v9100 = vsel %vm1771, %v9082, %v9083
      %v9101 = vsel %vm1771, %v9081, %v9082
      %v9102 = vsel %vm1771, %v9080, %v9081
      %v9103 = vsel %vm1771, %v9079, %v9080
      %v9104 = vsel %vm1771, %v9078, %v9079
      %v9105 = vsel %vm1771, %v9077, %v9078
      %v9106 = vsel %vm1771, %v9076, %v9077
      %v9107 = vsel %vm1771, %v9075, %v9076
      %v9108 = vsel %vm1771, %v9074, %v9075
      %v9109 = vsel %vm1771, %v9073, %v9074
      %v9110 = vsel %vm1771, %v9072, %v9073
      %v9111 = vsel %vm1771, %v9071, %v9072
      %v9112 = vsel %vm1771, %v9070, %v9071
      %v9113 = vsel %vm1771, %v9069, %v9070
      %v9114 = vsel %vm1771, %v9068, %v9069
      %v9115 = vsel %vm1771, %v9067, %v9068
      %v9116 = vsel %vm1771, %v9066, %v9067
      %v9117 = vsel %vm1771, %v9065, %v9066
      %v9118 = vsel %vm1771, %v9064, %v9065
      %v9119 = vsel %vm1771, %v9063, %v9064
      %v9120 = vsel %vm1771, %v9062, %v9063
      %v9121 = vsel %vm1771, %v9061, %v9062
      %v9122 = vsel %vm1771, %v9060, %v9061
      %v9123 = vsel %vm1771, %v9059, %v9060
      %v9124 = vsel %vm1771, %v9058, %v9059
      %v9125 = vsel %vm1771, %v9057, %v9058
      %v9126 = vsel %vm1771, %v9056, %v9057
      %v9127 = vsel %vm1771, %v9055, %v9056
      %v9128 = vsel %vm1771, %v9054, %v9055
      %v9129 = vsel %vm1771, %v9053, %v9054
      %v9130 = vsel %vm1771, %v9052, %v9053
      %v9131 = vsel %vm1771, %v9051, %v9052
      %v9132 = vsel %vm1771, %v9091, %v9051
      %v9133 = vpack.c.bf16 %v9126, %v9127
      %v9134 = vpack.c.bf16 %v9124, %v9125
      %v9135 = vpack.c.bf16 %v9122, %v9123
      %v9136 = vpack.c.bf16 %v9120, %v9121
      %v9137 = vpack.c.bf16 %v9118, %v9119
      %v9138 = vpack.c.bf16 %v9116, %v9117
      %v9139 = vpack.c.bf16 %v9114, %v9115
      %v9140 = vpack.c.bf16 %v9112, %v9113
      %v9141 = vpack.c.bf16 %v9110, %v9111
      %v9142 = vpack.c.bf16 %v9108, %v9109
      %v9143 = vpack.c.bf16 %v9106, %v9107
      %v9144 = vpack.c.bf16 %v9104, %v9105
      %v9145 = vpack.c.bf16 %v9102, %v9103
      %v9146 = vpack.c.bf16 %v9100, %v9101
      %v9147 = vpack.c.bf16 %v9098, %v9099
      %v9148 = vpack.c.bf16 %v9096, %v9097
      %v9149 = vpack.c.bf16 %v9094, %v9095
      %v9150 = vpack.c.bf16 %v9092, %v9093
      %v9151 = vpack.c.bf16 %v9131, %v9132
      %v9152 = vpack.c.bf16 %v9129, %v9130
      %v9153 = vpack.c.bf16 %v9128, %v9128
      %s9154 = scalar_lea.vmem %s6, 256
      %v9155 = vld [vmem:[%s9154] sm:$0xf]
      %v9156 = vld [vmem:[%s9154 + $0x4] sm:$0xf]
      %v9157 = vld [vmem:[%s9154 + $0x8] sm:$0xf]
      %v9158 = vld [vmem:[%s9154 + $0xc] sm:$0xf]
      %v9159 = vld [vmem:[%s9154 + $0x10] sm:$0xf]
      %v9160 = vld [vmem:[%s9154 + $0x14] sm:$0xf]
      %v9161 = vld [vmem:[%s9154 + $0x18] sm:$0xf]
      %v9162 = vld [vmem:[%s9154 + $0x1c] sm:$0xf]
      %v9171 = vunpack.c.l.b16 %v9155
      %v9172 = vunpack.c.l.b16 %v9156
      %v9173 = vunpack.c.l.b16 %v9157
      %v9174 = vunpack.c.l.b16 %v9158
      %v9175 = vunpack.c.l.b16 %v9159
      %v9176 = vunpack.c.l.b16 %v9160
      %v9177 = vunpack.c.l.b16 %v9161
      %v9178 = vunpack.c.l.b16 %v9162
      %v9179 = vpack.c.b16 %v9172, %v9171
      %v9180 = vpack.c.b16 %v9174, %v9173
      %v9181 = vpack.c.b16 %v9176, %v9175
      %v9182 = vpack.c.b16 %v9178, %v9177
      %v9188 = vsel %vm2485, %v9133, 0
      %v9191 = vsel %vm2485, %v9134, 0
      %v9194 = vsel %vm2485, %v9135, 0
      %v9197 = vsel %vm2485, %v9136, 0
      %v9200 = vsel %vm2485, %v9137, 0
      %v9203 = vsel %vm2485, %v9138, 0
      %v9206 = vsel %vm2485, %v9139, 0
      %v9209 = vsel %vm2485, %v9140, 0
      %v9212 = vsel %vm2485, %v9141, 0
      %v9215 = vsel %vm2485, %v9142, 0
      %v9218 = vsel %vm2485, %v9143, 0
      %v9221 = vsel %vm2485, %v9144, 0
      %v9224 = vsel %vm2485, %v9145, 0
      %v9227 = vsel %vm2485, %v9146, 0
      %v9230 = vsel %vm2485, %v9147, 0
      %v9233 = vsel %vm2485, %v9148, 0
      %v9236 = vsel %vm2485, %v9149, 0
      %v9239 = vsel %vm2485, %v9150, 0
      %v9242 = vsel %vm2485, %v9151, 0
      %v9245 = vsel %vm2485, %v9152, 0
      %v9248 = vsel %vm2485, %v9153, 0
      %9250 = vmatprep.subr.bf16.mxu0 0
      %9251 = vmatpush1.bf16.msra.mxu0 %v9179
      %9252 = vmatprep.subr.bf16.mxu0 0
      %9253 = vmatpush1.bf16.msra.mxu0 %v9180
      %9254 = vmatprep.subr.bf16.mxu0 0
      %9255 = vmatpush1.bf16.msra.mxu0 %v9181
      %9256 = vmatprep.subr.bf16.mxu0 0
      %9257 = vmatpush1.bf16.msra.mxu0 %v9182
      %9258 = vmatprep.subr.bf16.mxu0 0
      %9259 = vmatpush1.bf16.msra.mxu0 0
      %9260 = vmatprep.subr.bf16.mxu0 0
      %9261 = vmatpush1.bf16.msra.mxu0 0
      %9262 = vmatprep.subr.bf16.mxu0 0
      %9263 = vmatpush1.bf16.msra.mxu0 0
      %9264 = vmatprep.subr.bf16.mxu0 0
      %9265 = vmatpush1.bf16.msra.mxu0 0
      %9266 = vmatprep.subr.bf16.mxu0 0
      %9267 = vmatpush1.bf16.msra.mxu0 0
      %9268 = vmatprep.subr.bf16.mxu0 0
      %9269 = vmatpush1.bf16.msra.mxu0 0
      %9270 = vmatprep.subr.bf16.mxu0 0
      %9271 = vmatpush1.bf16.msra.mxu0 0
      %9272 = vmatprep.subr.bf16.mxu0 0
      %9273 = vmatpush1.bf16.msra.mxu0 0
      %9274 = vmatprep.subr.bf16.mxu0 0
      %9275 = vmatpush1.bf16.msra.mxu0 0
      %9276 = vmatprep.subr.bf16.mxu0 0
      %9277 = vmatpush1.bf16.msra.mxu0 0
      %9278 = vmatprep.subr.bf16.mxu0 0
      %9279 = vmatpush1.bf16.msra.mxu0 0
      %9280 = vmatprep.subr.bf16.mxu0 0
      %9281 = vmatpush1.bf16.msra.mxu0 0
      %9282 = vmatprep.mubr.bf16.mxu0 0
      %9283 = vmatmul.mubr.bf16.gmra.mrb[0].mxu0 %v9188
      %v9284 = vpop.f32.mrb[0].mxu0
      %v9285 = vadd.f32 0.0, %v9284
      %v9286 = vpop.f32.mrb[0].mxu0
      %v9287 = vpop.f32.mrb[0].mxu0
      %v9288 = vadd.f32 0.0, %v9287
      %v9289 = vpop.f32.mrb[0].mxu0
      %9290 = vmatprep.mubr.bf16.mxu0 0
      %9291 = vmatmul.mubr.bf16.gmra.mrb[0].mxu0 %v9191
      %v9292 = vpop.f32.mrb[0].mxu0
      %v9293 = vadd.f32 0.0, %v9292
      %v9294 = vpop.f32.mrb[0].mxu0
      %v9295 = vpop.f32.mrb[0].mxu0
      %v9296 = vadd.f32 0.0, %v9295
      %v9297 = vpop.f32.mrb[0].mxu0
      %9298 = vmatprep.mubr.bf16.mxu0 0
      %9299 = vmatmul.mubr.bf16.gmra.mrb[0].mxu0 %v9194
      %v9300 = vpop.f32.mrb[0].mxu0
      %v9301 = vadd.f32 0.0, %v9300
      %v9302 = vpop.f32.mrb[0].mxu0
      %v9303 = vpop.f32.mrb[0].mxu0
      %v9304 = vadd.f32 0.0, %v9303
      %v9305 = vpop.f32.mrb[0].mxu0
      %9306 = vmatprep.mubr.bf16.mxu0 0
      %9307 = vmatmul.mubr.bf16.gmra.mrb[0].mxu0 %v9197
      %v9308 = vpop.f32.mrb[0].mxu0
      %v9309 = vadd.f32 0.0, %v9308
      %v9310 = vpop.f32.mrb[0].mxu0
      %v9311 = vpop.f32.mrb[0].mxu0
      %v9312 = vadd.f32 0.0, %v9311
      %v9313 = vpop.f32.mrb[0].mxu0
      %9314 = vmatprep.mubr.bf16.mxu0 0
      %9315 = vmatmul.mubr.bf16.gmra.mrb[0].mxu0 %v9200
      %v9316 = vpop.f32.mrb[0].mxu0
      %v9317 = vadd.f32 0.0, %v9316
      %v9318 = vpop.f32.mrb[0].mxu0
      %v9319 = vpop.f32.mrb[0].mxu0
      %v9320 = vadd.f32 0.0, %v9319
      %v9321 = vpop.f32.mrb[0].mxu0
      %9322 = vmatprep.mubr.bf16.mxu0 0
      %9323 = vmatmul.mubr.bf16.gmra.mrb[0].mxu0 %v9203
      %v9324 = vpop.f32.mrb[0].mxu0
      %v9325 = vadd.f32 0.0, %v9324
      %v9326 = vpop.f32.mrb[0].mxu0
      %v9327 = vpop.f32.mrb[0].mxu0
      %v9328 = vadd.f32 0.0, %v9327
      %v9329 = vpop.f32.mrb[0].mxu0
      %9330 = vmatprep.mubr.bf16.mxu0 0
      %9331 = vmatmul.mubr.bf16.gmra.mrb[0].mxu0 %v9206
      %v9332 = vpop.f32.mrb[0].mxu0
      %v9333 = vadd.f32 0.0, %v9332
      %v9334 = vpop.f32.mrb[0].mxu0
      %v9335 = vpop.f32.mrb[0].mxu0
      %v9336 = vadd.f32 0.0, %v9335
      %v9337 = vpop.f32.mrb[0].mxu0
      %9338 = vmatprep.mubr.bf16.mxu0 0
      %9339 = vmatmul.mubr.bf16.gmra.mrb[0].mxu0 %v9209
      %v9340 = vpop.f32.mrb[0].mxu0
      %v9341 = vadd.f32 0.0, %v9340
      %v9342 = vpop.f32.mrb[0].mxu0
      %v9343 = vpop.f32.mrb[0].mxu0
      %v9344 = vadd.f32 0.0, %v9343
      %v9345 = vpop.f32.mrb[0].mxu0
      %9346 = vmatprep.mubr.bf16.mxu0 0
      %9347 = vmatmul.mubr.bf16.gmra.mrb[0].mxu0 %v9212
      %v9348 = vpop.f32.mrb[0].mxu0
      %v9349 = vadd.f32 0.0, %v9348
      %v9350 = vpop.f32.mrb[0].mxu0
      %v9351 = vpop.f32.mrb[0].mxu0
      %v9352 = vadd.f32 0.0, %v9351
      %v9353 = vpop.f32.mrb[0].mxu0
      %9354 = vmatprep.mubr.bf16.mxu0 0
      %9355 = vmatmul.mubr.bf16.gmra.mrb[0].mxu0 %v9215
      %v9356 = vpop.f32.mrb[0].mxu0
      %v9357 = vadd.f32 0.0, %v9356
      %v9358 = vpop.f32.mrb[0].mxu0
      %v9359 = vpop.f32.mrb[0].mxu0
      %v9360 = vadd.f32 0.0, %v9359
      %v9361 = vpop.f32.mrb[0].mxu0
      %9362 = vmatprep.mubr.bf16.mxu0 0
      %9363 = vmatmul.mubr.bf16.gmra.mrb[0].mxu0 %v9218
      %v9364 = vpop.f32.mrb[0].mxu0
      %v9365 = vadd.f32 0.0, %v9364
      %v9366 = vpop.f32.mrb[0].mxu0
      %v9367 = vpop.f32.mrb[0].mxu0
      %v9368 = vadd.f32 0.0, %v9367
      %v9369 = vpop.f32.mrb[0].mxu0
      %9370 = vmatprep.mubr.bf16.mxu0 0
      %9371 = vmatmul.mubr.bf16.gmra.mrb[0].mxu0 %v9221
      %v9372 = vpop.f32.mrb[0].mxu0
      %v9373 = vadd.f32 0.0, %v9372
      %v9374 = vpop.f32.mrb[0].mxu0
      %v9375 = vpop.f32.mrb[0].mxu0
      %v9376 = vadd.f32 0.0, %v9375
      %v9377 = vpop.f32.mrb[0].mxu0
      %9378 = vmatprep.mubr.bf16.mxu0 0
      %9379 = vmatmul.mubr.bf16.gmra.mrb[0].mxu0 %v9224
      %v9380 = vpop.f32.mrb[0].mxu0
      %v9381 = vadd.f32 0.0, %v9380
      %v9382 = vpop.f32.mrb[0].mxu0
      %v9383 = vpop.f32.mrb[0].mxu0
      %v9384 = vadd.f32 0.0, %v9383
      %v9385 = vpop.f32.mrb[0].mxu0
      %9386 = vmatprep.mubr.bf16.mxu0 0
      %9387 = vmatmul.mubr.bf16.gmra.mrb[0].mxu0 %v9227
      %v9388 = vpop.f32.mrb[0].mxu0
      %v9389 = vadd.f32 0.0, %v9388
      %v9390 = vpop.f32.mrb[0].mxu0
      %v9391 = vpop.f32.mrb[0].mxu0
      %v9392 = vadd.f32 0.0, %v9391
      %v9393 = vpop.f32.mrb[0].mxu0
      %9394 = vmatprep.mubr.bf16.mxu0 0
      %9395 = vmatmul.mubr.bf16.gmra.mrb[0].mxu0 %v9230
      %v9396 = vpop.f32.mrb[0].mxu0
      %v9397 = vadd.f32 0.0, %v9396
      %v9398 = vpop.f32.mrb[0].mxu0
      %v9399 = vpop.f32.mrb[0].mxu0
      %v9400 = vadd.f32 0.0, %v9399
      %v9401 = vpop.f32.mrb[0].mxu0
      %9402 = vmatprep.mubr.bf16.mxu0 0
      %9403 = vmatmul.mubr.bf16.gmra.mrb[0].mxu0 %v9233
      %v9404 = vpop.f32.mrb[0].mxu0
      %v9405 = vadd.f32 0.0, %v9404
      %v9406 = vpop.f32.mrb[0].mxu0
      %v9407 = vpop.f32.mrb[0].mxu0
      %v9408 = vadd.f32 0.0, %v9407
      %v9409 = vpop.f32.mrb[0].mxu0
      %9410 = vmatprep.mubr.bf16.mxu0 0
      %9411 = vmatmul.mubr.bf16.gmra.mrb[0].mxu0 %v9236
      %v9412 = vpop.f32.mrb[0].mxu0
      %v9413 = vadd.f32 0.0, %v9412
      %v9414 = vpop.f32.mrb[0].mxu0
      %v9415 = vpop.f32.mrb[0].mxu0
      %v9416 = vadd.f32 0.0, %v9415
      %v9417 = vpop.f32.mrb[0].mxu0
      %9418 = vmatprep.mubr.bf16.mxu0 0
      %9419 = vmatmul.mubr.bf16.gmra.mrb[0].mxu0 %v9239
      %v9420 = vpop.f32.mrb[0].mxu0
      %v9421 = vadd.f32 0.0, %v9420
      %v9422 = vpop.f32.mrb[0].mxu0
      %v9423 = vpop.f32.mrb[0].mxu0
      %v9424 = vadd.f32 0.0, %v9423
      %v9425 = vpop.f32.mrb[0].mxu0
      %9426 = vmatprep.mubr.bf16.mxu0 0
      %9427 = vmatmul.mubr.bf16.gmra.mrb[0].mxu0 %v9242
      %v9428 = vpop.f32.mrb[0].mxu0
      %v9429 = vadd.f32 0.0, %v9428
      %v9430 = vpop.f32.mrb[0].mxu0
      %v9431 = vpop.f32.mrb[0].mxu0
      %v9432 = vadd.f32 0.0, %v9431
      %v9433 = vpop.f32.mrb[0].mxu0
      %9434 = vmatprep.mubr.bf16.mxu0 0
      %9435 = vmatmul.mubr.bf16.gmra.mrb[0].mxu0 %v9245
      %v9436 = vpop.f32.mrb[0].mxu0
      %v9437 = vadd.f32 0.0, %v9436
      %v9438 = vpop.f32.mrb[0].mxu0
      %v9439 = vpop.f32.mrb[0].mxu0
      %v9440 = vadd.f32 0.0, %v9439
      %v9441 = vpop.f32.mrb[0].mxu0
      %9442 = vmatprep.mubr.bf16.mxu0 0
      %9443 = vmatmul.mubr.bf16.gmra.mrb[0].mxu0 %v9248
      %v9444 = vpop.f32.mrb[0].mxu0
      %v9445 = vadd.f32 0.0, %v9444
      %v9446 = vpop.f32.mrb[0].mxu0
      %v9447 = vpop.f32.mrb[0].mxu0
      %v9448 = vpop.f32.mrb[0].mxu0
      %9449 = vdwg.mxu0
      %v9450 = vadd.f32 %v9010, %v9285
      %v9451 = vadd.f32 %v9011, %v9288
      %v9452 = vadd.f32 %v9012, %v9293
      %v9453 = vadd.f32 %v9013, %v9296
      %v9454 = vadd.f32 %v9014, %v9301
      %v9455 = vadd.f32 %v9015, %v9304
      %v9456 = vadd.f32 %v9016, %v9309
      %v9457 = vadd.f32 %v9017, %v9312
      %v9458 = vadd.f32 %v9018, %v9317
      %v9459 = vadd.f32 %v9019, %v9320
      %v9460 = vadd.f32 %v9020, %v9325
      %v9461 = vadd.f32 %v9021, %v9328
      %v9462 = vadd.f32 %v9022, %v9333
      %v9463 = vadd.f32 %v9023, %v9336
      %v9464 = vadd.f32 %v9024, %v9341
      %v9465 = vadd.f32 %v9025, %v9344
      %v9466 = vadd.f32 %v9026, %v9349
      %v9467 = vadd.f32 %v9027, %v9352
      %v9468 = vadd.f32 %v9028, %v9357
      %v9469 = vadd.f32 %v9029, %v9360
      %v9470 = vadd.f32 %v9030, %v9365
      %v9471 = vadd.f32 %v9031, %v9368
      %v9472 = vadd.f32 %v9032, %v9373
      %v9473 = vadd.f32 %v9033, %v9376
      %v9474 = vadd.f32 %v9034, %v9381
      %v9475 = vadd.f32 %v9035, %v9384
      %v9476 = vadd.f32 %v9036, %v9389
      %v9477 = vadd.f32 %v9037, %v9392
      %v9478 = vadd.f32 %v9038, %v9397
      %v9479 = vadd.f32 %v9039, %v9400
      %v9480 = vadd.f32 %v9040, %v9405
      %v9481 = vadd.f32 %v9041, %v9408
      %v9482 = vadd.f32 %v9042, %v9413
      %v9483 = vadd.f32 %v9043, %v9416
      %v9484 = vadd.f32 %v9044, %v9421
      %v9485 = vadd.f32 %v9045, %v9424
      %v9486 = vadd.f32 %v9046, %v9429
      %v9487 = vadd.f32 %v9047, %v9432
      %v9488 = vadd.f32 %v9048, %v9437
      %v9489 = vadd.f32 %v9049, %v9440
      %v9490 = vadd.f32 %v9050, %v9445
      %v9491 = vld [vmem:[%s7] sm:$0x1]
      %v9493 = vlaneseq
      %v9494 = vshrl.u32 %v9493, 7
      %v9495 = vsub.s32 0, %v9494
      %v9496 = vrot.slane %v9491, %v9495
      %v9498 = vadd.f32 %v9450, %v9496
      %v9499 = vadd.f32 %v9451, %v9496
      %v9500 = vadd.f32 %v9452, %v9496
      %v9501 = vadd.f32 %v9453, %v9496
      %v9502 = vadd.f32 %v9454, %v9496
      %v9503 = vadd.f32 %v9455, %v9496
      %v9504 = vadd.f32 %v9456, %v9496
      %v9505 = vadd.f32 %v9457, %v9496
      %v9506 = vadd.f32 %v9458, %v9496
      %v9507 = vadd.f32 %v9459, %v9496
      %v9508 = vadd.f32 %v9460, %v9496
      %v9509 = vadd.f32 %v9461, %v9496
      %v9510 = vadd.f32 %v9462, %v9496
      %v9511 = vadd.f32 %v9463, %v9496
      %v9512 = vadd.f32 %v9464, %v9496
      %v9513 = vadd.f32 %v9465, %v9496
      %v9514 = vadd.f32 %v9466, %v9496
      %v9515 = vadd.f32 %v9467, %v9496
      %v9516 = vadd.f32 %v9468, %v9496
      %v9517 = vadd.f32 %v9469, %v9496
      %v9518 = vadd.f32 %v9470, %v9496
      %v9519 = vadd.f32 %v9471, %v9496
      %v9520 = vadd.f32 %v9472, %v9496
      %v9521 = vadd.f32 %v9473, %v9496
      %v9522 = vadd.f32 %v9474, %v9496
      %v9523 = vadd.f32 %v9475, %v9496
      %v9524 = vadd.f32 %v9476, %v9496
      %v9525 = vadd.f32 %v9477, %v9496
      %v9526 = vadd.f32 %v9478, %v9496
      %v9527 = vadd.f32 %v9479, %v9496
      %v9528 = vadd.f32 %v9480, %v9496
      %v9529 = vadd.f32 %v9481, %v9496
      %v9530 = vadd.f32 %v9482, %v9496
      %v9531 = vadd.f32 %v9483, %v9496
      %v9532 = vadd.f32 %v9484, %v9496
      %v9533 = vadd.f32 %v9485, %v9496
      %v9534 = vadd.f32 %v9486, %v9496
      %v9535 = vadd.f32 %v9487, %v9496
      %v9536 = vadd.f32 %v9488, %v9496
      %v9537 = vadd.f32 %v9489, %v9496
      %v9538 = vadd.f32 %v9490, %v9496
      %v9539 = vmax.f32 %v9498, 0.0
      %v9540 = vmax.f32 %v9499, 0.0
      %v9541 = vmax.f32 %v9500, 0.0
      %v9542 = vmax.f32 %v9501, 0.0
      %v9543 = vmax.f32 %v9502, 0.0
      %v9544 = vmax.f32 %v9503, 0.0
      %v9545 = vmax.f32 %v9504, 0.0
      %v9546 = vmax.f32 %v9505, 0.0
      %v9547 = vmax.f32 %v9506, 0.0
      %v9548 = vmax.f32 %v9507, 0.0
      %v9549 = vmax.f32 %v9508, 0.0
      %v9550 = vmax.f32 %v9509, 0.0
      %v9551 = vmax.f32 %v9510, 0.0
      %v9552 = vmax.f32 %v9511, 0.0
      %v9553 = vmax.f32 %v9512, 0.0
      %v9554 = vmax.f32 %v9513, 0.0
      %v9555 = vmax.f32 %v9514, 0.0
      %v9556 = vmax.f32 %v9515, 0.0
      %v9557 = vmax.f32 %v9516, 0.0
      %v9558 = vmax.f32 %v9517, 0.0
      %v9559 = vmax.f32 %v9518, 0.0
      %v9560 = vmax.f32 %v9519, 0.0
      %v9561 = vmax.f32 %v9520, 0.0
      %v9562 = vmax.f32 %v9521, 0.0
      %v9563 = vmax.f32 %v9522, 0.0
      %v9564 = vmax.f32 %v9523, 0.0
      %v9565 = vmax.f32 %v9524, 0.0
      %v9566 = vmax.f32 %v9525, 0.0
      %v9567 = vmax.f32 %v9526, 0.0
      %v9568 = vmax.f32 %v9527, 0.0
      %v9569 = vmax.f32 %v9528, 0.0
      %v9570 = vmax.f32 %v9529, 0.0
      %v9571 = vmax.f32 %v9530, 0.0
      %v9572 = vmax.f32 %v9531, 0.0
      %v9573 = vmax.f32 %v9532, 0.0
      %v9574 = vmax.f32 %v9533, 0.0
      %v9575 = vmax.f32 %v9534, 0.0
      %v9576 = vmax.f32 %v9535, 0.0
      %v9577 = vmax.f32 %v9536, 0.0
      %v9578 = vmax.f32 %v9537, 0.0
      %v9579 = vmax.f32 %v9538, 0.0
      %9580 = vst [vmem:[%s305] sm:$0xff] %v9539
      %9581 = vst [vmem:[%s305 + $0x8] sm:$0xff] %v9540
      %9582 = vst [vmem:[%s305 + $0x10] sm:$0xff] %v9541
      %9583 = vst [vmem:[%s305 + $0x18] sm:$0xff] %v9542
      %9584 = vst [vmem:[%s305 + $0x20] sm:$0xff] %v9543
      %9585 = vst [vmem:[%s305 + $0x28] sm:$0xff] %v9544
      %9586 = vst [vmem:[%s305 + $0x30] sm:$0xff] %v9545
      %9587 = vst [vmem:[%s305 + $0x38] sm:$0xff] %v9546
      %9588 = vst [vmem:[%s305 + $0x40] sm:$0xff] %v9547
      %9589 = vst [vmem:[%s305 + $0x48] sm:$0xff] %v9548
      %9590 = vst [vmem:[%s305 + $0x50] sm:$0xff] %v9549
      %9591 = vst [vmem:[%s305 + $0x58] sm:$0xff] %v9550
      %9592 = vst [vmem:[%s305 + $0x60] sm:$0xff] %v9551
      %9593 = vst [vmem:[%s305 + $0x68] sm:$0xff] %v9552
      %9594 = vst [vmem:[%s305 + $0x70] sm:$0xff] %v9553
      %9595 = vst [vmem:[%s305 + $0x78] sm:$0xff] %v9554
      %9596 = vst [vmem:[%s305 + $0x80] sm:$0xff] %v9555
      %9597 = vst [vmem:[%s305 + $0x88] sm:$0xff] %v9556
      %9598 = vst [vmem:[%s305 + $0x90] sm:$0xff] %v9557
      %9599 = vst [vmem:[%s305 + $0x98] sm:$0xff] %v9558
      %9600 = vst [vmem:[%s305 + $0xa0] sm:$0xff] %v9559
      %9601 = vst [vmem:[%s305 + $0xa8] sm:$0xff] %v9560
      %9602 = vst [vmem:[%s305 + $0xb0] sm:$0xff] %v9561
      %9603 = vst [vmem:[%s305 + $0xb8] sm:$0xff] %v9562
      %9604 = vst [vmem:[%s305 + $0xc0] sm:$0xff] %v9563
      %9605 = vst [vmem:[%s305 + $0xc8] sm:$0xff] %v9564
      %9606 = vst [vmem:[%s305 + $0xd0] sm:$0xff] %v9565
      %9607 = vst [vmem:[%s305 + $0xd8] sm:$0xff] %v9566
      %9608 = vst [vmem:[%s305 + $0xe0] sm:$0xff] %v9567
      %9609 = vst [vmem:[%s305 + $0xe8] sm:$0xff] %v9568
      %9610 = vst [vmem:[%s305 + $0xf0] sm:$0xff] %v9569
      %9611 = vst [vmem:[%s305 + $0xf8] sm:$0xff] %v9570
      %9612 = vst [vmem:[%s305 + $0x100] sm:$0xff] %v9571
      %9613 = vst [vmem:[%s305 + $0x108] sm:$0xff] %v9572
      %9614 = vst [vmem:[%s305 + $0x110] sm:$0xff] %v9573
      %9615 = vst [vmem:[%s305 + $0x118] sm:$0xff] %v9574
      %9616 = vst [vmem:[%s305 + $0x120] sm:$0xff] %v9575
      %9617 = vst [vmem:[%s305 + $0x128] sm:$0xff] %v9576
      %9618 = vst [vmem:[%s305 + $0x130] sm:$0xff] %v9577
      %9619 = vst [vmem:[%s305 + $0x138] sm:$0xff] %v9578
      %9620 = vst [vmem:[%s305 + $0x140] sm:$0xff] %v9579
      %p9621 = scmp.lt.s32.totalorder %s19, 1
      %s9622 = scalar_select %p9621, %s19, 1
      %s9623 = smul.addr %s9622, 41
      %s9624 = smul.addr %s9623, 8
      %s9625 = scalar_lea.vmem %s8, %s9624
      // Predicated region
      $region53: #{cnn_forward_pallas.1} parent=51 // pred_check
        %p9626 = pneg %p210
      $region54: #{cnn_forward_pallas.1} parent=51 // pred_check_branch
        %9628 = sbr.rel (%p9626) target = $region56
      $region55: #{cnn_forward_pallas.1} parent=51 // pred_region
        _
      $region56: #{cnn_forward_pallas.1} parent=51 // pred_fallthru
        _
    $region52: #{cnn_forward_pallas.1} parent=5 // pred_fallthru
      _
    %p9629 = scmp.le.s32.totalorder 2, %s14
    // Predicated region
    $region57: #{cnn_forward_pallas.1} parent=5 // pred_check
      %p9630 = pneg %p9629
    $region58: #{cnn_forward_pallas.1} parent=5 // pred_check_branch
      %9632 = sbr.rel (%p9630) target = $region60
    $region59: #{cnn_forward_pallas.1} parent=5 // pred_region
      %s9633 = ssub.s32 %s14, 2
      // Predicated region
      $region61: #{cnn_forward_pallas.1} parent=59 // pred_check
        %p9634 = pneg %p216
      $region62: #{cnn_forward_pallas.1} parent=59 // pred_check_branch
        %9636 = sbr.rel (%p9634) target = $region64
      $region63: #{cnn_forward_pallas.1} parent=59 // pred_region
        %p9637 = scmp.lt.s32.totalorder %s20, 1
        %s9638 = scalar_select %p9637, %s20, 1
        %s9639 = smul.addr %s9638, 41
        %s9640 = smul.addr %s9639, 8
        %s9641 = scalar_lea.vmem %s8, %s9640
      $region64: #{cnn_forward_pallas.1} parent=59 // pred_fallthru
        _
    $region60: #{cnn_forward_pallas.1} parent=5 // pred_fallthru
      _
  $region6: #{cnn_forward_pallas.1} parent=0 // loop_footer
    %s18 = sadd.s32 1, %s14
  $region7: #{cnn_forward_pallas.1} parent=0 // loop_footer_branch
    %13 = sbr.rel target = $region3
  $region8: #{cnn_forward_pallas.1} parent=0 // loop_exit
    _

</llo_original>
